<compile_context>
chip_gen: v7x
topology: tpu7x:2x2x1
jax: 0.10.0
libtpu: 0.0.40
codegen_flags: <defaults>
</compile_context>

<pallas_src>
import functools

import jax
import jax.numpy as jnp
from jax.experimental import pallas as pl
from jax.experimental.pallas import tpu as pltpu


# ----------------------------- Pallas kernels -------------------------------
# Each kernel handles ONE image: A=(HW, Kp) bf16 patches, B=(Kp, Np) bf16
# weights, f32 per-channel vectors (1, Np). Full-K matmul -> no accumulator,
# no @pl.when init/finalize, no k grid axis.

def _conv_in_act_kernel(a_ref, b_ref, bias_ref, g_ref, be_ref, o_ref, *, relu):
    y = jnp.dot(a_ref[...], b_ref[...], preferred_element_type=jnp.float32)
    y = y + bias_ref[...]                               # fused bias
    hw = y.shape[0]
    mean = jnp.sum(y, axis=0, keepdims=True) * (1.0 / hw)
    d = y - mean
    var = jnp.sum(d * d, axis=0, keepdims=True) * (1.0 / hw)   # biased (PyTorch IN)
    y = d * jax.lax.rsqrt(var + 1e-5)
    y = y * g_ref[...] + be_ref[...]
    if relu:
        y = jnp.maximum(y, 0.0)
    o_ref[...] = y                                      # lane-dense (Np=128k) store


def _conv_in_res_kernel(a_ref, b_ref, bias_ref, g_ref, be_ref, r_ref, o_ref):
    y = jnp.dot(a_ref[...], b_ref[...], preferred_element_type=jnp.float32)
    y = y + bias_ref[...]
    hw = y.shape[0]
    mean = jnp.sum(y, axis=0, keepdims=True) * (1.0 / hw)
    d = y - mean
    var = jnp.sum(d * d, axis=0, keepdims=True) * (1.0 / hw)
    y = d * jax.lax.rsqrt(var + 1e-5)
    o_ref[...] = y * g_ref[...] + be_ref[...] + r_ref[...]     # fused residual add


def _conv_tanh_kernel(a_ref, b_ref, bias_ref, o_ref):
    y = jnp.dot(a_ref[...], b_ref[...], preferred_element_type=jnp.float32)
    o_ref[...] = jnp.tanh(y + bias_ref[...])            # tanh on EUP (free slot)


# ----------------------------- fused conv wrapper ----------------------------

def _round_up(x, m):
    return (x + m - 1) // m * m


def fused_conv(x, w, b, k, stride=1, pad=0, pad_mode='zero',
               gamma=None, beta=None, mode='in_relu', residual=None):
    """One conv stage = one pallas_call.

    x: NHWC f32; w: (Cout, Cin, kH, kW) PyTorch layout; b: (Cout,).
    mode: 'in_relu' | 'in' | 'in_res' (needs residual, NHWC f32) | 'tanh'.
    Returns NHWC f32 with true Cout (padding lanes sliced off).
    """
    if pad > 0:
        m = 'reflect' if pad_mode == 'reflect' else 'constant'
        x = jnp.pad(x, ((0, 0), (pad, pad), (pad, pad), (0, 0)), mode=m)
    N, H, W, C = x.shape
    O = w.shape[0]
    Ho = (H - k) // stride + 1
    Wo = (W - k) // stride + 1
    HW = Ho * Wo

    # im2col glue (tiny tensors at this size).
    # TODO(synk): fold the k*k tap loop into the kernel with shifted pl.ds
    # slices to avoid materializing patches in HBM for larger configs.
    cols = []
    for kh in range(k):
        for kw in range(k):
            cols.append(x[:, kh:kh + stride * Ho:stride,
                          kw:kw + stride * Wo:stride, :])
    K = k * k * C
    patches = jnp.stack(cols, axis=3).reshape(N, HW, K)
    wmat = jnp.transpose(w, (2, 3, 1, 0)).reshape(K, O)

    Kp = _round_up(K, 128)
    Np = _round_up(O, 128)
    a = jnp.pad(patches, ((0, 0), (0, 0), (0, Kp - K))).astype(jnp.bfloat16)
    bm = jnp.pad(wmat, ((0, Kp - K), (0, Np - O))).astype(jnp.bfloat16)
    bias = jnp.pad(b.reshape(1, -1), ((0, 0), (0, Np - O))).astype(jnp.float32)

    a_spec = pl.BlockSpec((None, HW, Kp), lambda n: (n, 0, 0))
    b_spec = pl.BlockSpec((Kp, Np), lambda n: (0, 0))
    v_spec = pl.BlockSpec((1, Np), lambda n: (0, 0))
    o_spec = pl.BlockSpec((None, HW, Np), lambda n: (n, 0, 0))
    out_shape = jax.ShapeDtypeStruct((N, HW, Np), jnp.float32)
    cp = pltpu.CompilerParams(dimension_semantics=("parallel",))

    if mode in ('in_relu', 'in'):
        g = jnp.pad(gamma.reshape(1, -1), ((0, 0), (0, Np - O))).astype(jnp.float32)
        be = jnp.pad(beta.reshape(1, -1), ((0, 0), (0, Np - O))).astype(jnp.float32)
        out = pl.pallas_call(
            functools.partial(_conv_in_act_kernel, relu=(mode == 'in_relu')),
            out_shape=out_shape, grid=(N,),
            in_specs=[a_spec, b_spec, v_spec, v_spec, v_spec],
            out_specs=o_spec, compiler_params=cp,
        )(a, bm, bias, g, be)
    elif mode == 'in_res':
        g = jnp.pad(gamma.reshape(1, -1), ((0, 0), (0, Np - O))).astype(jnp.float32)
        be = jnp.pad(beta.reshape(1, -1), ((0, 0), (0, Np - O))).astype(jnp.float32)
        res = jnp.pad(residual.reshape(N, HW, O),
                      ((0, 0), (0, 0), (0, Np - O))).astype(jnp.float32)
        out = pl.pallas_call(
            _conv_in_res_kernel,
            out_shape=out_shape, grid=(N,),
            in_specs=[a_spec, b_spec, v_spec, v_spec, v_spec, o_spec],
            out_specs=o_spec, compiler_params=cp,
        )(a, bm, bias, g, be, res)
    elif mode == 'tanh':
        out = pl.pallas_call(
            _conv_tanh_kernel,
            out_shape=out_shape, grid=(N,),
            in_specs=[a_spec, b_spec, v_spec],
            out_specs=o_spec, compiler_params=cp,
        )(a, bm, bias)
    else:
        raise ValueError(mode)

    return out[:, :, :O].reshape(N, Ho, Wo, O)


def fused_conv_transpose(x, w_t, b, k, stride, pad, out_pad, gamma, beta):
    """PyTorch ConvTranspose2d (+ fused IN + ReLU); w_t: (Cin, Cout, kH, kW)."""
    N, H, W, C = x.shape
    Hd = (H - 1) * stride + 1
    Wd = (W - 1) * stride + 1
    xd = jnp.zeros((N, Hd, Wd, C), x.dtype).at[:, ::stride, ::stride, :].set(x)
    lo = k - 1 - pad
    hi = k - 1 - pad + out_pad
    xp = jnp.pad(xd, ((0, 0), (lo, hi), (lo, hi), (0, 0)))
    w_conv = jnp.transpose(w_t[:, :, ::-1, ::-1], (1, 0, 2, 3))  # (O, I, kH, kW)
    # TODO(synk): subpixel/phase decomposition to skip the 75% zero taps.
    return fused_conv(xp, w_conv, b, k, stride=1, pad=0,
                      gamma=gamma, beta=beta, mode='in_relu')


# ----------------------------- model ----------------------------------------

def init_params(key, input_nc=3, output_nc=3, ngf=8):
    keys = iter(jax.random.split(key, 128))

    def conv_p(o, i, k):
        w = jax.random.normal(next(keys), (o, i, k, k), jnp.float32) * 0.05
        bb = jax.random.normal(next(keys), (o,), jnp.float32) * 0.01
        return w, bb

    def norm_p(c):
        g = 1.0 + jax.random.normal(next(keys), (c,), jnp.float32) * 0.01
        be = jax.random.normal(next(keys), (c,), jnp.float32) * 0.01
        return g, be

    p = {}
    p['c1'] = conv_p(ngf, input_nc, 7);      p['n1'] = norm_p(ngf)
    p['c2'] = conv_p(2 * ngf, ngf, 3);       p['n2'] = norm_p(2 * ngf)
    p['c3'] = conv_p(4 * ngf, 2 * ngf, 3);   p['n3'] = norm_p(4 * ngf)
    p['blocks'] = []
    for _ in range(3):                       # module hardcodes 3 ResnetBlocks
        p['blocks'].append({'c1': conv_p(4 * ngf, 4 * ngf, 3),
                            'n1': norm_p(4 * ngf),
                            'c2': conv_p(4 * ngf, 4 * ngf, 3),
                            'n2': norm_p(4 * ngf)})
    wt = jax.random.normal(next(keys), (4 * ngf, 2 * ngf, 3, 3), jnp.float32) * 0.05
    bt = jax.random.normal(next(keys), (2 * ngf,), jnp.float32) * 0.01
    p['ct'] = (wt, bt);                      p['nt'] = norm_p(2 * ngf)
    p['c4'] = conv_p(ngf, 2 * ngf, 3);       p['n4'] = norm_p(ngf)
    p['c5'] = conv_p(output_nc, ngf, 7)
    return p


def resnet_generator_forward(x_nchw, p):
    # NCHW (PyTorch) -> NHWC (kernel layout)
    x = jnp.transpose(x_nchw, (0, 2, 3, 1)).astype(jnp.float32)

    # ReflectionPad2d(3), Conv7x7 s1 + IN + ReLU (one fused call)
    x = fused_conv(x, *p['c1'], k=7, stride=1, pad=3, pad_mode='reflect',
                   gamma=p['n1'][0], beta=p['n1'][1], mode='in_relu')
    # Conv3x3 s1 p1 + IN + ReLU
    x = fused_conv(x, *p['c2'], k=3, stride=1, pad=1,
                   gamma=p['n2'][0], beta=p['n2'][1], mode='in_relu')
    # Conv3x3 s2 p1 + IN + ReLU
    x = fused_conv(x, *p['c3'], k=3, stride=2, pad=1,
                   gamma=p['n3'][0], beta=p['n3'][1], mode='in_relu')

    # 3 ResnetBlocks (use_dropout=False): refpad1-conv3-IN-ReLU, refpad1-conv3-IN + residual
    for blk in p['blocks']:
        y = fused_conv(x, *blk['c1'], k=3, stride=1, pad=1, pad_mode='reflect',
                       gamma=blk['n1'][0], beta=blk['n1'][1], mode='in_relu')
        x = fused_conv(y, *blk['c2'], k=3, stride=1, pad=1, pad_mode='reflect',
                       gamma=blk['n2'][0], beta=blk['n2'][1], mode='in_res',
                       residual=x)

    # ConvTranspose2d k3 s2 p1 op1 + IN + ReLU
    x = fused_conv_transpose(x, *p['ct'], k=3, stride=2, pad=1, out_pad=1,
                             gamma=p['nt'][0], beta=p['nt'][1])
    # Conv3x3 s1 p1 + IN + ReLU
    x = fused_conv(x, *p['c4'], k=3, stride=1, pad=1,
                   gamma=p['n4'][0], beta=p['n4'][1], mode='in_relu')
    # Conv7x7 p3 + Tanh (fused)
    x = fused_conv(x, *p['c5'], k=7, stride=1, pad=3, mode='tanh')

    # back to NCHW
    return jnp.transpose(x, (0, 3, 1, 2))


if __name__ == "__main__":
    key = jax.random.PRNGKey(0)
    pkey, xkey = jax.random.split(key)
    # small config: batch=2, input_nc=3, output_nc=3, ngf=8, 16x16 spatial
    params = init_params(pkey, input_nc=3, output_nc=3, ngf=8)
    x = jax.random.normal(xkey, (2, 3, 16, 16), jnp.float32)

    fwd = jax.jit(resnet_generator_forward)
    out = fwd(x, params)
    jax.block_until_ready(out)

    assert out.shape == (2, 3, 16, 16), out.shape
    assert bool(jnp.all(jnp.isfinite(out)))
    assert bool(jnp.all(jnp.abs(out) <= 1.0))  # tanh output range
    print("KERNEL_OK")
</pallas_src>

<mosaic_0001>
module attributes {stable_mosaic.version = 11 : i64} {
  func.func @_conv_in_act_kernel(%arg0: i32, %arg1: memref<1x256x256xbf16, #tpu.memory_space<vmem>>, %arg2: memref<256x128xbf16, #tpu.memory_space<vmem>>, %arg3: memref<1x128xf32, #tpu.memory_space<vmem>>, %arg4: memref<1x128xf32, #tpu.memory_space<vmem>>, %arg5: memref<1x128xf32, #tpu.memory_space<vmem>>, %arg6: memref<1x256x128xf32, #tpu.memory_space<vmem>>) attributes {dimension_semantics = [#tpu.dimension_semantics<parallel>], iteration_bounds = array<i64: 2>, scalar_prefetch = 0 : i64, scratch_operands = 0 : i64, tpu.core_type = #tpu.core_type<tc>, window_params = [{transform_indices = @transform_0, window_bounds = array<i64: 1, 256, 256>}, {pipeline_mode = #tpu.pipeline_mode<synchronous>, transform_indices = @transform_1, window_bounds = array<i64: 256, 128>}, {pipeline_mode = #tpu.pipeline_mode<synchronous>, transform_indices = @transform_2, window_bounds = array<i64: 1, 128>}, {pipeline_mode = #tpu.pipeline_mode<synchronous>, transform_indices = @transform_3, window_bounds = array<i64: 1, 128>}, {pipeline_mode = #tpu.pipeline_mode<synchronous>, transform_indices = @transform_4, window_bounds = array<i64: 1, 128>}, {transform_indices = @transform_5, window_bounds = array<i64: 1, 256, 128>}]} {
    %c0 = arith.constant 0 : index
    %c0_0 = arith.constant 0 : index
    %c0_1 = arith.constant 0 : index
    %0 = vector.load %arg1[%c0, %c0_0, %c0_1] : memref<1x256x256xbf16, #tpu.memory_space<vmem>>, vector<1x256x256xbf16>
    %1 = vector.shape_cast %0 : vector<1x256x256xbf16> to vector<256x256xbf16>
    %c0_2 = arith.constant 0 : index
    %c0_3 = arith.constant 0 : index
    %2 = vector.load %arg2[%c0_2, %c0_3] : memref<256x128xbf16, #tpu.memory_space<vmem>>, vector<256x128xbf16>
    %cst = arith.constant dense<0.000000e+00> : vector<256x128xf32>
    %3 = tpu.matmul %1, %2, %cst {dimension_numbers = #tpu.dot_dimension_numbers<[1], [0], [0], [1], [0, 0, 1, 1], [], []>} : vector<256x256xbf16>, vector<256x128xbf16>, vector<256x128xf32> -> vector<256x128xf32>
    %c0_4 = arith.constant 0 : index
    %c0_5 = arith.constant 0 : index
    %4 = vector.load %arg3[%c0_4, %c0_5] : memref<1x128xf32, #tpu.memory_space<vmem>>, vector<1x128xf32>
    %5 = vector.broadcast %4 : vector<1x128xf32> to vector<256x128xf32>
    %6 = arith.addf %3, %5 : vector<256x128xf32>
    %cst_6 = arith.constant dense<0.000000e+00> : vector<128xf32>
    %7 = vector.multi_reduction <add>, %6, %cst_6 [0] : vector<256x128xf32> to vector<128xf32>
    %8 = vector.shape_cast %7 : vector<128xf32> to vector<1x128xf32>
    %cst_7 = arith.constant 3.906250e-03 : f32
    %9 = vector.broadcast %cst_7 : f32 to vector<1x128xf32>
    %10 = arith.mulf %8, %9 : vector<1x128xf32>
    %11 = vector.broadcast %10 : vector<1x128xf32> to vector<256x128xf32>
    %12 = arith.subf %6, %11 : vector<256x128xf32>
    %13 = arith.mulf %12, %12 : vector<256x128xf32>
    %cst_8 = arith.constant dense<0.000000e+00> : vector<128xf32>
    %14 = vector.multi_reduction <add>, %13, %cst_8 [0] : vector<256x128xf32> to vector<128xf32>
    %15 = vector.shape_cast %14 : vector<128xf32> to vector<1x128xf32>
    %cst_9 = arith.constant 3.906250e-03 : f32
    %16 = vector.broadcast %cst_9 : f32 to vector<1x128xf32>
    %17 = arith.mulf %15, %16 : vector<1x128xf32>
    %cst_10 = arith.constant 9.99999974E-6 : f32
    %18 = vector.broadcast %cst_10 : f32 to vector<1x128xf32>
    %19 = arith.addf %17, %18 : vector<1x128xf32>
    %20 = math.rsqrt %19 : vector<1x128xf32>
    %21 = vector.broadcast %20 : vector<1x128xf32> to vector<256x128xf32>
    %22 = arith.mulf %12, %21 : vector<256x128xf32>
    %c0_11 = arith.constant 0 : index
    %c0_12 = arith.constant 0 : index
    %23 = vector.load %arg4[%c0_11, %c0_12] : memref<1x128xf32, #tpu.memory_space<vmem>>, vector<1x128xf32>
    %24 = vector.broadcast %23 : vector<1x128xf32> to vector<256x128xf32>
    %25 = arith.mulf %22, %24 : vector<256x128xf32>
    %c0_13 = arith.constant 0 : index
    %c0_14 = arith.constant 0 : index
    %26 = vector.load %arg5[%c0_13, %c0_14] : memref<1x128xf32, #tpu.memory_space<vmem>>, vector<1x128xf32>
    %27 = vector.broadcast %26 : vector<1x128xf32> to vector<256x128xf32>
    %28 = arith.addf %25, %27 : vector<256x128xf32>
    %cst_15 = arith.constant 0.000000e+00 : f32
    %29 = vector.broadcast %cst_15 : f32 to vector<256x128xf32>
    %30 = arith.maximumf %28, %29 : vector<256x128xf32>
    %c0_16 = arith.constant 0 : index
    %c0_17 = arith.constant 0 : index
    %c0_18 = arith.constant 0 : index
    %31 = vector.load %arg6[%c0_16, %c0_17, %c0_18] : memref<1x256x128xf32, #tpu.memory_space<vmem>>, vector<1x256x128xf32>
    %32 = vector.shape_cast %31 : vector<1x256x128xf32> to vector<256x128xf32>
    %33 = vector.shape_cast %30 : vector<256x128xf32> to vector<1x256x128xf32>
    tpu.vector_store %arg6[%c0_16, %c0_17, %c0_18], %33 {strides = array<i32>} : memref<1x256x128xf32, #tpu.memory_space<vmem>>, vector<1x256x128xf32>,
    return
  }
  func.func @transform_0(%arg0: i32) -> (i32, i32, i32) {
    %c0_i32 = arith.constant 0 : i32
    %c0_i32_0 = arith.constant 0 : i32
    %c0_i32_1 = arith.constant 0 : i32
    return %arg0, %c0_i32, %c0_i32_0 : i32, i32, i32
  }
  func.func @transform_1(%arg0: i32) -> (i32, i32) {
    %c0_i32 = arith.constant 0 : i32
    %c0_i32_0 = arith.constant 0 : i32
    %c0_i32_1 = arith.constant 0 : i32
    return %c0_i32, %c0_i32_0 : i32, i32
  }
  func.func @transform_2(%arg0: i32) -> (i32, i32) {
    %c0_i32 = arith.constant 0 : i32
    %c0_i32_0 = arith.constant 0 : i32
    %c0_i32_1 = arith.constant 0 : i32
    return %c0_i32, %c0_i32_0 : i32, i32
  }
  func.func @transform_3(%arg0: i32) -> (i32, i32) {
    %c0_i32 = arith.constant 0 : i32
    %c0_i32_0 = arith.constant 0 : i32
    %c0_i32_1 = arith.constant 0 : i32
    return %c0_i32, %c0_i32_0 : i32, i32
  }
  func.func @transform_4(%arg0: i32) -> (i32, i32) {
    %c0_i32 = arith.constant 0 : i32
    %c0_i32_0 = arith.constant 0 : i32
    %c0_i32_1 = arith.constant 0 : i32
    return %c0_i32, %c0_i32_0 : i32, i32
  }
  func.func @transform_5(%arg0: i32) -> (i32, i32, i32) {
    %c0_i32 = arith.constant 0 : i32
    %c0_i32_0 = arith.constant 0 : i32
    %c0_i32_1 = arith.constant 0 : i32
    return %arg0, %c0_i32, %c0_i32_0 : i32, i32, i32
  }
}

module attributes {stable_mosaic.version = 11 : i64} {
  func.func @_conv_in_act_kernel(%arg0: i32, %arg1: memref<1x256x128xbf16, #tpu.memory_space<vmem>>, %arg2: memref<128x128xbf16, #tpu.memory_space<vmem>>, %arg3: memref<1x128xf32, #tpu.memory_space<vmem>>, %arg4: memref<1x128xf32, #tpu.memory_space<vmem>>, %arg5: memref<1x128xf32, #tpu.memory_space<vmem>>, %arg6: memref<1x256x128xf32, #tpu.memory_space<vmem>>) attributes {dimension_semantics = [#tpu.dimension_semantics<parallel>], iteration_bounds = array<i64: 2>, scalar_prefetch = 0 : i64, scratch_operands = 0 : i64, tpu.core_type = #tpu.core_type<tc>, window_params = [{transform_indices = @transform_0, window_bounds = array<i64: 1, 256, 128>}, {pipeline_mode = #tpu.pipeline_mode<synchronous>, transform_indices = @transform_1, window_bounds = array<i64: 128, 128>}, {pipeline_mode = #tpu.pipeline_mode<synchronous>, transform_indices = @transform_2, window_bounds = array<i64: 1, 128>}, {pipeline_mode = #tpu.pipeline_mode<synchronous>, transform_indices = @transform_3, window_bounds = array<i64: 1, 128>}, {pipeline_mode = #tpu.pipeline_mode<synchronous>, transform_indices = @transform_4, window_bounds = array<i64: 1, 128>}, {transform_indices = @transform_5, window_bounds = array<i64: 1, 256, 128>}]} {
    %c0 = arith.constant 0 : index
    %c0_0 = arith.constant 0 : index
    %c0_1 = arith.constant 0 : index
    %0 = vector.load %arg1[%c0, %c0_0, %c0_1] : memref<1x256x128xbf16, #tpu.memory_space<vmem>>, vector<1x256x128xbf16>
    %1 = vector.shape_cast %0 : vector<1x256x128xbf16> to vector<256x128xbf16>
    %c0_2 = arith.constant 0 : index
    %c0_3 = arith.constant 0 : index
    %2 = vector.load %arg2[%c0_2, %c0_3] : memref<128x128xbf16, #tpu.memory_space<vmem>>, vector<128x128xbf16>
    %cst = arith.constant dense<0.000000e+00> : vector<256x128xf32>
    %3 = tpu.matmul %1, %2, %cst {dimension_numbers = #tpu.dot_dimension_numbers<[1], [0], [0], [1], [0, 0, 1, 1], [], []>} : vector<256x128xbf16>, vector<128x128xbf16>, vector<256x128xf32> -> vector<256x128xf32>
    %c0_4 = arith.constant 0 : index
    %c0_5 = arith.constant 0 : index
    %4 = vector.load %arg3[%c0_4, %c0_5] : memref<1x128xf32, #tpu.memory_space<vmem>>, vector<1x128xf32>
    %5 = vector.broadcast %4 : vector<1x128xf32> to vector<256x128xf32>
    %6 = arith.addf %3, %5 : vector<256x128xf32>
    %cst_6 = arith.constant dense<0.000000e+00> : vector<128xf32>
    %7 = vector.multi_reduction <add>, %6, %cst_6 [0] : vector<256x128xf32> to vector<128xf32>
    %8 = vector.shape_cast %7 : vector<128xf32> to vector<1x128xf32>
    %cst_7 = arith.constant 3.906250e-03 : f32
    %9 = vector.broadcast %cst_7 : f32 to vector<1x128xf32>
    %10 = arith.mulf %8, %9 : vector<1x128xf32>
    %11 = vector.broadcast %10 : vector<1x128xf32> to vector<256x128xf32>
    %12 = arith.subf %6, %11 : vector<256x128xf32>
    %13 = arith.mulf %12, %12 : vector<256x128xf32>
    %cst_8 = arith.constant dense<0.000000e+00> : vector<128xf32>
    %14 = vector.multi_reduction <add>, %13, %cst_8 [0] : vector<256x128xf32> to vector<128xf32>
    %15 = vector.shape_cast %14 : vector<128xf32> to vector<1x128xf32>
    %cst_9 = arith.constant 3.906250e-03 : f32
    %16 = vector.broadcast %cst_9 : f32 to vector<1x128xf32>
    %17 = arith.mulf %15, %16 : vector<1x128xf32>
    %cst_10 = arith.constant 9.99999974E-6 : f32
    %18 = vector.broadcast %cst_10 : f32 to vector<1x128xf32>
    %19 = arith.addf %17, %18 : vector<1x128xf32>
    %20 = math.rsqrt %19 : vector<1x128xf32>
    %21 = vector.broadcast %20 : vector<1x128xf32> to vector<256x128xf32>
    %22 = arith.mulf %12, %21 : vector<256x128xf32>
    %c0_11 = arith.constant 0 : index
    %c0_12 = arith.constant 0 : index
    %23 = vector.load %arg4[%c0_11, %c0_12] : memref<1x128xf32, #tpu.memory_space<vmem>>, vector<1x128xf32>
    %24 = vector.broadcast %23 : vector<1x128xf32> to vector<256x128xf32>
    %25 = arith.mulf %22, %24 : vector<256x128xf32>
    %c0_13 = arith.constant 0 : index
    %c0_14 = arith.constant 0 : index
    %26 = vector.load %arg5[%c0_13, %c0_14] : memref<1x128xf32, #tpu.memory_space<vmem>>, vector<1x128xf32>
    %27 = vector.broadcast %26 : vector<1x128xf32> to vector<256x128xf32>
    %28 = arith.addf %25, %27 : vector<256x128xf32>
    %cst_15 = arith.constant 0.000000e+00 : f32
    %29 = vector.broadcast %cst_15 : f32 to vector<256x128xf32>
    %30 = arith.maximumf %28, %29 : vector<256x128xf32>
    %c0_16 = arith.constant 0 : index
    %c0_17 = arith.constant 0 : index
    %c0_18 = arith.constant 0 : index
    %31 = vector.load %arg6[%c0_16, %c0_17, %c0_18] : memref<1x256x128xf32, #tpu.memory_space<vmem>>, vector<1x256x128xf32>
    %32 = vector.shape_cast %31 : vector<1x256x128xf32> to vector<256x128xf32>
    %33 = vector.shape_cast %30 : vector<256x128xf32> to vector<1x256x128xf32>
    tpu.vector_store %arg6[%c0_16, %c0_17, %c0_18], %33 {strides = array<i32>} : memref<1x256x128xf32, #tpu.memory_space<vmem>>, vector<1x256x128xf32>,
    return
  }
  func.func @transform_0(%arg0: i32) -> (i32, i32, i32) {
    %c0_i32 = arith.constant 0 : i32
    %c0_i32_0 = arith.constant 0 : i32
    %c0_i32_1 = arith.constant 0 : i32
    return %arg0, %c0_i32, %c0_i32_0 : i32, i32, i32
  }
  func.func @transform_1(%arg0: i32) -> (i32, i32) {
    %c0_i32 = arith.constant 0 : i32
    %c0_i32_0 = arith.constant 0 : i32
    %c0_i32_1 = arith.constant 0 : i32
    return %c0_i32, %c0_i32_0 : i32, i32
  }
  func.func @transform_2(%arg0: i32) -> (i32, i32) {
    %c0_i32 = arith.constant 0 : i32
    %c0_i32_0 = arith.constant 0 : i32
    %c0_i32_1 = arith.constant 0 : i32
    return %c0_i32, %c0_i32_0 : i32, i32
  }
  func.func @transform_3(%arg0: i32) -> (i32, i32) {
    %c0_i32 = arith.constant 0 : i32
    %c0_i32_0 = arith.constant 0 : i32
    %c0_i32_1 = arith.constant 0 : i32
    return %c0_i32, %c0_i32_0 : i32, i32
  }
  func.func @transform_4(%arg0: i32) -> (i32, i32) {
    %c0_i32 = arith.constant 0 : i32
    %c0_i32_0 = arith.constant 0 : i32
    %c0_i32_1 = arith.constant 0 : i32
    return %c0_i32, %c0_i32_0 : i32, i32
  }
  func.func @transform_5(%arg0: i32) -> (i32, i32, i32) {
    %c0_i32 = arith.constant 0 : i32
    %c0_i32_0 = arith.constant 0 : i32
    %c0_i32_1 = arith.constant 0 : i32
    return %arg0, %c0_i32, %c0_i32_0 : i32, i32, i32
  }
}

module attributes {stable_mosaic.version = 11 : i64} {
  func.func @_conv_in_act_kernel(%arg0: i32, %arg1: memref<1x64x256xbf16, #tpu.memory_space<vmem>>, %arg2: memref<256x128xbf16, #tpu.memory_space<vmem>>, %arg3: memref<1x128xf32, #tpu.memory_space<vmem>>, %arg4: memref<1x128xf32, #tpu.memory_space<vmem>>, %arg5: memref<1x128xf32, #tpu.memory_space<vmem>>, %arg6: memref<1x64x128xf32, #tpu.memory_space<vmem>>) attributes {dimension_semantics = [#tpu.dimension_semantics<parallel>], iteration_bounds = array<i64: 2>, scalar_prefetch = 0 : i64, scratch_operands = 0 : i64, tpu.core_type = #tpu.core_type<tc>, window_params = [{transform_indices = @transform_0, window_bounds = array<i64: 1, 64, 256>}, {pipeline_mode = #tpu.pipeline_mode<synchronous>, transform_indices = @transform_1, window_bounds = array<i64: 256, 128>}, {pipeline_mode = #tpu.pipeline_mode<synchronous>, transform_indices = @transform_2, window_bounds = array<i64: 1, 128>}, {pipeline_mode = #tpu.pipeline_mode<synchronous>, transform_indices = @transform_3, window_bounds = array<i64: 1, 128>}, {pipeline_mode = #tpu.pipeline_mode<synchronous>, transform_indices = @transform_4, window_bounds = array<i64: 1, 128>}, {transform_indices = @transform_5, window_bounds = array<i64: 1, 64, 128>}]} {
    %c0 = arith.constant 0 : index
    %c0_0 = arith.constant 0 : index
    %c0_1 = arith.constant 0 : index
    %0 = vector.load %arg1[%c0, %c0_0, %c0_1] : memref<1x64x256xbf16, #tpu.memory_space<vmem>>, vector<1x64x256xbf16>
    %1 = vector.shape_cast %0 : vector<1x64x256xbf16> to vector<64x256xbf16>
    %c0_2 = arith.constant 0 : index
    %c0_3 = arith.constant 0 : index
    %2 = vector.load %arg2[%c0_2, %c0_3] : memref<256x128xbf16, #tpu.memory_space<vmem>>, vector<256x128xbf16>
    %cst = arith.constant dense<0.000000e+00> : vector<64x128xf32>
    %3 = tpu.matmul %1, %2, %cst {dimension_numbers = #tpu.dot_dimension_numbers<[1], [0], [0], [1], [0, 0, 1, 1], [], []>} : vector<64x256xbf16>, vector<256x128xbf16>, vector<64x128xf32> -> vector<64x128xf32>
    %c0_4 = arith.constant 0 : index
    %c0_5 = arith.constant 0 : index
    %4 = vector.load %arg3[%c0_4, %c0_5] : memref<1x128xf32, #tpu.memory_space<vmem>>, vector<1x128xf32>
    %5 = vector.broadcast %4 : vector<1x128xf32> to vector<64x128xf32>
    %6 = arith.addf %3, %5 : vector<64x128xf32>
    %cst_6 = arith.constant dense<0.000000e+00> : vector<128xf32>
    %7 = vector.multi_reduction <add>, %6, %cst_6 [0] : vector<64x128xf32> to vector<128xf32>
    %8 = vector.shape_cast %7 : vector<128xf32> to vector<1x128xf32>
    %cst_7 = arith.constant 1.562500e-02 : f32
    %9 = vector.broadcast %cst_7 : f32 to vector<1x128xf32>
    %10 = arith.mulf %8, %9 : vector<1x128xf32>
    %11 = vector.broadcast %10 : vector<1x128xf32> to vector<64x128xf32>
    %12 = arith.subf %6, %11 : vector<64x128xf32>
    %13 = arith.mulf %12, %12 : vector<64x128xf32>
    %cst_8 = arith.constant dense<0.000000e+00> : vector<128xf32>
    %14 = vector.multi_reduction <add>, %13, %cst_8 [0] : vector<64x128xf32> to vector<128xf32>
    %15 = vector.shape_cast %14 : vector<128xf32> to vector<1x128xf32>
    %cst_9 = arith.constant 1.562500e-02 : f32
    %16 = vector.broadcast %cst_9 : f32 to vector<1x128xf32>
    %17 = arith.mulf %15, %16 : vector<1x128xf32>
    %cst_10 = arith.constant 9.99999974E-6 : f32
    %18 = vector.broadcast %cst_10 : f32 to vector<1x128xf32>
    %19 = arith.addf %17, %18 : vector<1x128xf32>
    %20 = math.rsqrt %19 : vector<1x128xf32>
    %21 = vector.broadcast %20 : vector<1x128xf32> to vector<64x128xf32>
    %22 = arith.mulf %12, %21 : vector<64x128xf32>
    %c0_11 = arith.constant 0 : index
    %c0_12 = arith.constant 0 : index
    %23 = vector.load %arg4[%c0_11, %c0_12] : memref<1x128xf32, #tpu.memory_space<vmem>>, vector<1x128xf32>
    %24 = vector.broadcast %23 : vector<1x128xf32> to vector<64x128xf32>
    %25 = arith.mulf %22, %24 : vector<64x128xf32>
    %c0_13 = arith.constant 0 : index
    %c0_14 = arith.constant 0 : index
    %26 = vector.load %arg5[%c0_13, %c0_14] : memref<1x128xf32, #tpu.memory_space<vmem>>, vector<1x128xf32>
    %27 = vector.broadcast %26 : vector<1x128xf32> to vector<64x128xf32>
    %28 = arith.addf %25, %27 : vector<64x128xf32>
    %cst_15 = arith.constant 0.000000e+00 : f32
    %29 = vector.broadcast %cst_15 : f32 to vector<64x128xf32>
    %30 = arith.maximumf %28, %29 : vector<64x128xf32>
    %c0_16 = arith.constant 0 : index
    %c0_17 = arith.constant 0 : index
    %c0_18 = arith.constant 0 : index
    %31 = vector.load %arg6[%c0_16, %c0_17, %c0_18] : memref<1x64x128xf32, #tpu.memory_space<vmem>>, vector<1x64x128xf32>
    %32 = vector.shape_cast %31 : vector<1x64x128xf32> to vector<64x128xf32>
    %33 = vector.shape_cast %30 : vector<64x128xf32> to vector<1x64x128xf32>
    tpu.vector_store %arg6[%c0_16, %c0_17, %c0_18], %33 {strides = array<i32>} : memref<1x64x128xf32, #tpu.memory_space<vmem>>, vector<1x64x128xf32>,
    return
  }
  func.func @transform_0(%arg0: i32) -> (i32, i32, i32) {
    %c0_i32 = arith.constant 0 : i32
    %c0_i32_0 = arith.constant 0 : i32
    %c0_i32_1 = arith.constant 0 : i32
    return %arg0, %c0_i32, %c0_i32_0 : i32, i32, i32
  }
  func.func @transform_1(%arg0: i32) -> (i32, i32) {
    %c0_i32 = arith.constant 0 : i32
    %c0_i32_0 = arith.constant 0 : i32
    %c0_i32_1 = arith.constant 0 : i32
    return %c0_i32, %c0_i32_0 : i32, i32
  }
  func.func @transform_2(%arg0: i32) -> (i32, i32) {
    %c0_i32 = arith.constant 0 : i32
    %c0_i32_0 = arith.constant 0 : i32
    %c0_i32_1 = arith.constant 0 : i32
    return %c0_i32, %c0_i32_0 : i32, i32
  }
  func.func @transform_3(%arg0: i32) -> (i32, i32) {
    %c0_i32 = arith.constant 0 : i32
    %c0_i32_0 = arith.constant 0 : i32
    %c0_i32_1 = arith.constant 0 : i32
    return %c0_i32, %c0_i32_0 : i32, i32
  }
  func.func @transform_4(%arg0: i32) -> (i32, i32) {
    %c0_i32 = arith.constant 0 : i32
    %c0_i32_0 = arith.constant 0 : i32
    %c0_i32_1 = arith.constant 0 : i32
    return %c0_i32, %c0_i32_0 : i32, i32
  }
  func.func @transform_5(%arg0: i32) -> (i32, i32, i32) {
    %c0_i32 = arith.constant 0 : i32
    %c0_i32_0 = arith.constant 0 : i32
    %c0_i32_1 = arith.constant 0 : i32
    return %arg0, %c0_i32, %c0_i32_0 : i32, i32, i32
  }
}

module attributes {stable_mosaic.version = 11 : i64} {
  func.func @_conv_in_act_kernel(%arg0: i32, %arg1: memref<1x64x384xbf16, #tpu.memory_space<vmem>>, %arg2: memref<384x128xbf16, #tpu.memory_space<vmem>>, %arg3: memref<1x128xf32, #tpu.memory_space<vmem>>, %arg4: memref<1x128xf32, #tpu.memory_space<vmem>>, %arg5: memref<1x128xf32, #tpu.memory_space<vmem>>, %arg6: memref<1x64x128xf32, #tpu.memory_space<vmem>>) attributes {dimension_semantics = [#tpu.dimension_semantics<parallel>], iteration_bounds = array<i64: 2>, scalar_prefetch = 0 : i64, scratch_operands = 0 : i64, tpu.core_type = #tpu.core_type<tc>, window_params = [{transform_indices = @transform_0, window_bounds = array<i64: 1, 64, 384>}, {pipeline_mode = #tpu.pipeline_mode<synchronous>, transform_indices = @transform_1, window_bounds = array<i64: 384, 128>}, {pipeline_mode = #tpu.pipeline_mode<synchronous>, transform_indices = @transform_2, window_bounds = array<i64: 1, 128>}, {pipeline_mode = #tpu.pipeline_mode<synchronous>, transform_indices = @transform_3, window_bounds = array<i64: 1, 128>}, {pipeline_mode = #tpu.pipeline_mode<synchronous>, transform_indices = @transform_4, window_bounds = array<i64: 1, 128>}, {transform_indices = @transform_5, window_bounds = array<i64: 1, 64, 128>}]} {
    %c0 = arith.constant 0 : index
    %c0_0 = arith.constant 0 : index
    %c0_1 = arith.constant 0 : index
    %0 = vector.load %arg1[%c0, %c0_0, %c0_1] : memref<1x64x384xbf16, #tpu.memory_space<vmem>>, vector<1x64x384xbf16>
    %1 = vector.shape_cast %0 : vector<1x64x384xbf16> to vector<64x384xbf16>
    %c0_2 = arith.constant 0 : index
    %c0_3 = arith.constant 0 : index
    %2 = vector.load %arg2[%c0_2, %c0_3] : memref<384x128xbf16, #tpu.memory_space<vmem>>, vector<384x128xbf16>
    %cst = arith.constant dense<0.000000e+00> : vector<64x128xf32>
    %3 = tpu.matmul %1, %2, %cst {dimension_numbers = #tpu.dot_dimension_numbers<[1], [0], [0], [1], [0, 0, 1, 1], [], []>} : vector<64x384xbf16>, vector<384x128xbf16>, vector<64x128xf32> -> vector<64x128xf32>
    %c0_4 = arith.constant 0 : index
    %c0_5 = arith.constant 0 : index
    %4 = vector.load %arg3[%c0_4, %c0_5] : memref<1x128xf32, #tpu.memory_space<vmem>>, vector<1x128xf32>
    %5 = vector.broadcast %4 : vector<1x128xf32> to vector<64x128xf32>
    %6 = arith.addf %3, %5 : vector<64x128xf32>
    %cst_6 = arith.constant dense<0.000000e+00> : vector<128xf32>
    %7 = vector.multi_reduction <add>, %6, %cst_6 [0] : vector<64x128xf32> to vector<128xf32>
    %8 = vector.shape_cast %7 : vector<128xf32> to vector<1x128xf32>
    %cst_7 = arith.constant 1.562500e-02 : f32
    %9 = vector.broadcast %cst_7 : f32 to vector<1x128xf32>
    %10 = arith.mulf %8, %9 : vector<1x128xf32>
    %11 = vector.broadcast %10 : vector<1x128xf32> to vector<64x128xf32>
    %12 = arith.subf %6, %11 : vector<64x128xf32>
    %13 = arith.mulf %12, %12 : vector<64x128xf32>
    %cst_8 = arith.constant dense<0.000000e+00> : vector<128xf32>
    %14 = vector.multi_reduction <add>, %13, %cst_8 [0] : vector<64x128xf32> to vector<128xf32>
    %15 = vector.shape_cast %14 : vector<128xf32> to vector<1x128xf32>
    %cst_9 = arith.constant 1.562500e-02 : f32
    %16 = vector.broadcast %cst_9 : f32 to vector<1x128xf32>
    %17 = arith.mulf %15, %16 : vector<1x128xf32>
    %cst_10 = arith.constant 9.99999974E-6 : f32
    %18 = vector.broadcast %cst_10 : f32 to vector<1x128xf32>
    %19 = arith.addf %17, %18 : vector<1x128xf32>
    %20 = math.rsqrt %19 : vector<1x128xf32>
    %21 = vector.broadcast %20 : vector<1x128xf32> to vector<64x128xf32>
    %22 = arith.mulf %12, %21 : vector<64x128xf32>
    %c0_11 = arith.constant 0 : index
    %c0_12 = arith.constant 0 : index
    %23 = vector.load %arg4[%c0_11, %c0_12] : memref<1x128xf32, #tpu.memory_space<vmem>>, vector<1x128xf32>
    %24 = vector.broadcast %23 : vector<1x128xf32> to vector<64x128xf32>
    %25 = arith.mulf %22, %24 : vector<64x128xf32>
    %c0_13 = arith.constant 0 : index
    %c0_14 = arith.constant 0 : index
    %26 = vector.load %arg5[%c0_13, %c0_14] : memref<1x128xf32, #tpu.memory_space<vmem>>, vector<1x128xf32>
    %27 = vector.broadcast %26 : vector<1x128xf32> to vector<64x128xf32>
    %28 = arith.addf %25, %27 : vector<64x128xf32>
    %cst_15 = arith.constant 0.000000e+00 : f32
    %29 = vector.broadcast %cst_15 : f32 to vector<64x128xf32>
    %30 = arith.maximumf %28, %29 : vector<64x128xf32>
    %c0_16 = arith.constant 0 : index
    %c0_17 = arith.constant 0 : index
    %c0_18 = arith.constant 0 : index
    %31 = vector.load %arg6[%c0_16, %c0_17, %c0_18] : memref<1x64x128xf32, #tpu.memory_space<vmem>>, vector<1x64x128xf32>
    %32 = vector.shape_cast %31 : vector<1x64x128xf32> to vector<64x128xf32>
    %33 = vector.shape_cast %30 : vector<64x128xf32> to vector<1x64x128xf32>
    tpu.vector_store %arg6[%c0_16, %c0_17, %c0_18], %33 {strides = array<i32>} : memref<1x64x128xf32, #tpu.memory_space<vmem>>, vector<1x64x128xf32>,
    return
  }
  func.func @transform_0(%arg0: i32) -> (i32, i32, i32) {
    %c0_i32 = arith.constant 0 : i32
    %c0_i32_0 = arith.constant 0 : i32
    %c0_i32_1 = arith.constant 0 : i32
    return %arg0, %c0_i32, %c0_i32_0 : i32, i32, i32
  }
  func.func @transform_1(%arg0: i32) -> (i32, i32) {
    %c0_i32 = arith.constant 0 : i32
    %c0_i32_0 = arith.constant 0 : i32
    %c0_i32_1 = arith.constant 0 : i32
    return %c0_i32, %c0_i32_0 : i32, i32
  }
  func.func @transform_2(%arg0: i32) -> (i32, i32) {
    %c0_i32 = arith.constant 0 : i32
    %c0_i32_0 = arith.constant 0 : i32
    %c0_i32_1 = arith.constant 0 : i32
    return %c0_i32, %c0_i32_0 : i32, i32
  }
  func.func @transform_3(%arg0: i32) -> (i32, i32) {
    %c0_i32 = arith.constant 0 : i32
    %c0_i32_0 = arith.constant 0 : i32
    %c0_i32_1 = arith.constant 0 : i32
    return %c0_i32, %c0_i32_0 : i32, i32
  }
  func.func @transform_4(%arg0: i32) -> (i32, i32) {
    %c0_i32 = arith.constant 0 : i32
    %c0_i32_0 = arith.constant 0 : i32
    %c0_i32_1 = arith.constant 0 : i32
    return %c0_i32, %c0_i32_0 : i32, i32
  }
  func.func @transform_5(%arg0: i32) -> (i32, i32, i32) {
    %c0_i32 = arith.constant 0 : i32
    %c0_i32_0 = arith.constant 0 : i32
    %c0_i32_1 = arith.constant 0 : i32
    return %arg0, %c0_i32, %c0_i32_0 : i32, i32, i32
  }
}

module attributes {stable_mosaic.version = 11 : i64} {
  func.func @_conv_in_res_kernel(%arg0: i32, %arg1: memref<1x64x384xbf16, #tpu.memory_space<vmem>>, %arg2: memref<384x128xbf16, #tpu.memory_space<vmem>>, %arg3: memref<1x128xf32, #tpu.memory_space<vmem>>, %arg4: memref<1x128xf32, #tpu.memory_space<vmem>>, %arg5: memref<1x128xf32, #tpu.memory_space<vmem>>, %arg6: memref<1x64x128xf32, #tpu.memory_space<vmem>>, %arg7: memref<1x64x128xf32, #tpu.memory_space<vmem>>) attributes {dimension_semantics = [#tpu.dimension_semantics<parallel>], iteration_bounds = array<i64: 2>, scalar_prefetch = 0 : i64, scratch_operands = 0 : i64, tpu.core_type = #tpu.core_type<tc>, window_params = [{transform_indices = @transform_0, window_bounds = array<i64: 1, 64, 384>}, {pipeline_mode = #tpu.pipeline_mode<synchronous>, transform_indices = @transform_1, window_bounds = array<i64: 384, 128>}, {pipeline_mode = #tpu.pipeline_mode<synchronous>, transform_indices = @transform_2, window_bounds = array<i64: 1, 128>}, {pipeline_mode = #tpu.pipeline_mode<synchronous>, transform_indices = @transform_3, window_bounds = array<i64: 1, 128>}, {pipeline_mode = #tpu.pipeline_mode<synchronous>, transform_indices = @transform_4, window_bounds = array<i64: 1, 128>}, {transform_indices = @transform_5, window_bounds = array<i64: 1, 64, 128>}, {transform_indices = @transform_6, window_bounds = array<i64: 1, 64, 128>}]} {
    %c0 = arith.constant 0 : index
    %c0_0 = arith.constant 0 : index
    %c0_1 = arith.constant 0 : index
    %0 = vector.load %arg1[%c0, %c0_0, %c0_1] : memref<1x64x384xbf16, #tpu.memory_space<vmem>>, vector<1x64x384xbf16>
    %1 = vector.shape_cast %0 : vector<1x64x384xbf16> to vector<64x384xbf16>
    %c0_2 = arith.constant 0 : index
    %c0_3 = arith.constant 0 : index
    %2 = vector.load %arg2[%c0_2, %c0_3] : memref<384x128xbf16, #tpu.memory_space<vmem>>, vector<384x128xbf16>
    %cst = arith.constant dense<0.000000e+00> : vector<64x128xf32>
    %3 = tpu.matmul %1, %2, %cst {dimension_numbers = #tpu.dot_dimension_numbers<[1], [0], [0], [1], [0, 0, 1, 1], [], []>} : vector<64x384xbf16>, vector<384x128xbf16>, vector<64x128xf32> -> vector<64x128xf32>
    %c0_4 = arith.constant 0 : index
    %c0_5 = arith.constant 0 : index
    %4 = vector.load %arg3[%c0_4, %c0_5] : memref<1x128xf32, #tpu.memory_space<vmem>>, vector<1x128xf32>
    %5 = vector.broadcast %4 : vector<1x128xf32> to vector<64x128xf32>
    %6 = arith.addf %3, %5 : vector<64x128xf32>
    %cst_6 = arith.constant dense<0.000000e+00> : vector<128xf32>
    %7 = vector.multi_reduction <add>, %6, %cst_6 [0] : vector<64x128xf32> to vector<128xf32>
    %8 = vector.shape_cast %7 : vector<128xf32> to vector<1x128xf32>
    %cst_7 = arith.constant 1.562500e-02 : f32
    %9 = vector.broadcast %cst_7 : f32 to vector<1x128xf32>
    %10 = arith.mulf %8, %9 : vector<1x128xf32>
    %11 = vector.broadcast %10 : vector<1x128xf32> to vector<64x128xf32>
    %12 = arith.subf %6, %11 : vector<64x128xf32>
    %13 = arith.mulf %12, %12 : vector<64x128xf32>
    %cst_8 = arith.constant dense<0.000000e+00> : vector<128xf32>
    %14 = vector.multi_reduction <add>, %13, %cst_8 [0] : vector<64x128xf32> to vector<128xf32>
    %15 = vector.shape_cast %14 : vector<128xf32> to vector<1x128xf32>
    %cst_9 = arith.constant 1.562500e-02 : f32
    %16 = vector.broadcast %cst_9 : f32 to vector<1x128xf32>
    %17 = arith.mulf %15, %16 : vector<1x128xf32>
    %cst_10 = arith.constant 9.99999974E-6 : f32
    %18 = vector.broadcast %cst_10 : f32 to vector<1x128xf32>
    %19 = arith.addf %17, %18 : vector<1x128xf32>
    %20 = math.rsqrt %19 : vector<1x128xf32>
    %21 = vector.broadcast %20 : vector<1x128xf32> to vector<64x128xf32>
    %22 = arith.mulf %12, %21 : vector<64x128xf32>
    %c0_11 = arith.constant 0 : index
    %c0_12 = arith.constant 0 : index
    %23 = vector.load %arg4[%c0_11, %c0_12] : memref<1x128xf32, #tpu.memory_space<vmem>>, vector<1x128xf32>
    %24 = vector.broadcast %23 : vector<1x128xf32> to vector<64x128xf32>
    %25 = arith.mulf %22, %24 : vector<64x128xf32>
    %c0_13 = arith.constant 0 : index
    %c0_14 = arith.constant 0 : index
    %26 = vector.load %arg5[%c0_13, %c0_14] : memref<1x128xf32, #tpu.memory_space<vmem>>, vector<1x128xf32>
    %27 = vector.broadcast %26 : vector<1x128xf32> to vector<64x128xf32>
    %28 = arith.addf %25, %27 : vector<64x128xf32>
    %c0_15 = arith.constant 0 : index
    %c0_16 = arith.constant 0 : index
    %c0_17 = arith.constant 0 : index
    %29 = vector.load %arg6[%c0_15, %c0_16, %c0_17] : memref<1x64x128xf32, #tpu.memory_space<vmem>>, vector<1x64x128xf32>
    %30 = vector.shape_cast %29 : vector<1x64x128xf32> to vector<64x128xf32>
    %31 = arith.addf %28, %30 : vector<64x128xf32>
    %c0_18 = arith.constant 0 : index
    %c0_19 = arith.constant 0 : index
    %c0_20 = arith.constant 0 : index
    %32 = vector.load %arg7[%c0_18, %c0_19, %c0_20] : memref<1x64x128xf32, #tpu.memory_space<vmem>>, vector<1x64x128xf32>
    %33 = vector.shape_cast %32 : vector<1x64x128xf32> to vector<64x128xf32>
    %34 = vector.shape_cast %31 : vector<64x128xf32> to vector<1x64x128xf32>
    tpu.vector_store %arg7[%c0_18, %c0_19, %c0_20], %34 {strides = array<i32>} : memref<1x64x128xf32, #tpu.memory_space<vmem>>, vector<1x64x128xf32>,
    return
  }
  func.func @transform_0(%arg0: i32) -> (i32, i32, i32) {
    %c0_i32 = arith.constant 0 : i32
    %c0_i32_0 = arith.constant 0 : i32
    %c0_i32_1 = arith.constant 0 : i32
    return %arg0, %c0_i32, %c0_i32_0 : i32, i32, i32
  }
  func.func @transform_1(%arg0: i32) -> (i32, i32) {
    %c0_i32 = arith.constant 0 : i32
    %c0_i32_0 = arith.constant 0 : i32
    %c0_i32_1 = arith.constant 0 : i32
    return %c0_i32, %c0_i32_0 : i32, i32
  }
  func.func @transform_2(%arg0: i32) -> (i32, i32) {
    %c0_i32 = arith.constant 0 : i32
    %c0_i32_0 = arith.constant 0 : i32
    %c0_i32_1 = arith.constant 0 : i32
    return %c0_i32, %c0_i32_0 : i32, i32
  }
  func.func @transform_3(%arg0: i32) -> (i32, i32) {
    %c0_i32 = arith.constant 0 : i32
    %c0_i32_0 = arith.constant 0 : i32
    %c0_i32_1 = arith.constant 0 : i32
    return %c0_i32, %c0_i32_0 : i32, i32
  }
  func.func @transform_4(%arg0: i32) -> (i32, i32) {
    %c0_i32 = arith.constant 0 : i32
    %c0_i32_0 = arith.constant 0 : i32
    %c0_i32_1 = arith.constant 0 : i32
    return %c0_i32, %c0_i32_0 : i32, i32
  }
  func.func @transform_5(%arg0: i32) -> (i32, i32, i32) {
    %c0_i32 = arith.constant 0 : i32
    %c0_i32_0 = arith.constant 0 : i32
    %c0_i32_1 = arith.constant 0 : i32
    return %arg0, %c0_i32, %c0_i32_0 : i32, i32, i32
  }
  func.func @transform_6(%arg0: i32) -> (i32, i32, i32) {
    %c0_i32 = arith.constant 0 : i32
    %c0_i32_0 = arith.constant 0 : i32
    %c0_i32_1 = arith.constant 0 : i32
    return %arg0, %c0_i32, %c0_i32_0 : i32, i32, i32
  }
}

module attributes {stable_mosaic.version = 11 : i64} {
  func.func @_conv_in_act_kernel(%arg0: i32, %arg1: memref<1x256x384xbf16, #tpu.memory_space<vmem>>, %arg2: memref<384x128xbf16, #tpu.memory_space<vmem>>, %arg3: memref<1x128xf32, #tpu.memory_space<vmem>>, %arg4: memref<1x128xf32, #tpu.memory_space<vmem>>, %arg5: memref<1x128xf32, #tpu.memory_space<vmem>>, %arg6: memref<1x256x128xf32, #tpu.memory_space<vmem>>) attributes {dimension_semantics = [#tpu.dimension_semantics<parallel>], iteration_bounds = array<i64: 2>, scalar_prefetch = 0 : i64, scratch_operands = 0 : i64, tpu.core_type = #tpu.core_type<tc>, window_params = [{transform_indices = @transform_0, window_bounds = array<i64: 1, 256, 384>}, {pipeline_mode = #tpu.pipeline_mode<synchronous>, transform_indices = @transform_1, window_bounds = array<i64: 384, 128>}, {pipeline_mode = #tpu.pipeline_mode<synchronous>, transform_indices = @transform_2, window_bounds = array<i64: 1, 128>}, {pipeline_mode = #tpu.pipeline_mode<synchronous>, transform_indices = @transform_3, window_bounds = array<i64: 1, 128>}, {pipeline_mode = #tpu.pipeline_mode<synchronous>, transform_indices = @transform_4, window_bounds = array<i64: 1, 128>}, {transform_indices = @transform_5, window_bounds = array<i64: 1, 256, 128>}]} {
    %c0 = arith.constant 0 : index
    %c0_0 = arith.constant 0 : index
    %c0_1 = arith.constant 0 : index
    %0 = vector.load %arg1[%c0, %c0_0, %c0_1] : memref<1x256x384xbf16, #tpu.memory_space<vmem>>, vector<1x256x384xbf16>
    %1 = vector.shape_cast %0 : vector<1x256x384xbf16> to vector<256x384xbf16>
    %c0_2 = arith.constant 0 : index
    %c0_3 = arith.constant 0 : index
    %2 = vector.load %arg2[%c0_2, %c0_3] : memref<384x128xbf16, #tpu.memory_space<vmem>>, vector<384x128xbf16>
    %cst = arith.constant dense<0.000000e+00> : vector<256x128xf32>
    %3 = tpu.matmul %1, %2, %cst {dimension_numbers = #tpu.dot_dimension_numbers<[1], [0], [0], [1], [0, 0, 1, 1], [], []>} : vector<256x384xbf16>, vector<384x128xbf16>, vector<256x128xf32> -> vector<256x128xf32>
    %c0_4 = arith.constant 0 : index
    %c0_5 = arith.constant 0 : index
    %4 = vector.load %arg3[%c0_4, %c0_5] : memref<1x128xf32, #tpu.memory_space<vmem>>, vector<1x128xf32>
    %5 = vector.broadcast %4 : vector<1x128xf32> to vector<256x128xf32>
    %6 = arith.addf %3, %5 : vector<256x128xf32>
    %cst_6 = arith.constant dense<0.000000e+00> : vector<128xf32>
    %7 = vector.multi_reduction <add>, %6, %cst_6 [0] : vector<256x128xf32> to vector<128xf32>
    %8 = vector.shape_cast %7 : vector<128xf32> to vector<1x128xf32>
    %cst_7 = arith.constant 3.906250e-03 : f32
    %9 = vector.broadcast %cst_7 : f32 to vector<1x128xf32>
    %10 = arith.mulf %8, %9 : vector<1x128xf32>
    %11 = vector.broadcast %10 : vector<1x128xf32> to vector<256x128xf32>
    %12 = arith.subf %6, %11 : vector<256x128xf32>
    %13 = arith.mulf %12, %12 : vector<256x128xf32>
    %cst_8 = arith.constant dense<0.000000e+00> : vector<128xf32>
    %14 = vector.multi_reduction <add>, %13, %cst_8 [0] : vector<256x128xf32> to vector<128xf32>
    %15 = vector.shape_cast %14 : vector<128xf32> to vector<1x128xf32>
    %cst_9 = arith.constant 3.906250e-03 : f32
    %16 = vector.broadcast %cst_9 : f32 to vector<1x128xf32>
    %17 = arith.mulf %15, %16 : vector<1x128xf32>
    %cst_10 = arith.constant 9.99999974E-6 : f32
    %18 = vector.broadcast %cst_10 : f32 to vector<1x128xf32>
    %19 = arith.addf %17, %18 : vector<1x128xf32>
    %20 = math.rsqrt %19 : vector<1x128xf32>
    %21 = vector.broadcast %20 : vector<1x128xf32> to vector<256x128xf32>
    %22 = arith.mulf %12, %21 : vector<256x128xf32>
    %c0_11 = arith.constant 0 : index
    %c0_12 = arith.constant 0 : index
    %23 = vector.load %arg4[%c0_11, %c0_12] : memref<1x128xf32, #tpu.memory_space<vmem>>, vector<1x128xf32>
    %24 = vector.broadcast %23 : vector<1x128xf32> to vector<256x128xf32>
    %25 = arith.mulf %22, %24 : vector<256x128xf32>
    %c0_13 = arith.constant 0 : index
    %c0_14 = arith.constant 0 : index
    %26 = vector.load %arg5[%c0_13, %c0_14] : memref<1x128xf32, #tpu.memory_space<vmem>>, vector<1x128xf32>
    %27 = vector.broadcast %26 : vector<1x128xf32> to vector<256x128xf32>
    %28 = arith.addf %25, %27 : vector<256x128xf32>
    %cst_15 = arith.constant 0.000000e+00 : f32
    %29 = vector.broadcast %cst_15 : f32 to vector<256x128xf32>
    %30 = arith.maximumf %28, %29 : vector<256x128xf32>
    %c0_16 = arith.constant 0 : index
    %c0_17 = arith.constant 0 : index
    %c0_18 = arith.constant 0 : index
    %31 = vector.load %arg6[%c0_16, %c0_17, %c0_18] : memref<1x256x128xf32, #tpu.memory_space<vmem>>, vector<1x256x128xf32>
    %32 = vector.shape_cast %31 : vector<1x256x128xf32> to vector<256x128xf32>
    %33 = vector.shape_cast %30 : vector<256x128xf32> to vector<1x256x128xf32>
    tpu.vector_store %arg6[%c0_16, %c0_17, %c0_18], %33 {strides = array<i32>} : memref<1x256x128xf32, #tpu.memory_space<vmem>>, vector<1x256x128xf32>,
    return
  }
  func.func @transform_0(%arg0: i32) -> (i32, i32, i32) {
    %c0_i32 = arith.constant 0 : i32
    %c0_i32_0 = arith.constant 0 : i32
    %c0_i32_1 = arith.constant 0 : i32
    return %arg0, %c0_i32, %c0_i32_0 : i32, i32, i32
  }
  func.func @transform_1(%arg0: i32) -> (i32, i32) {
    %c0_i32 = arith.constant 0 : i32
    %c0_i32_0 = arith.constant 0 : i32
    %c0_i32_1 = arith.constant 0 : i32
    return %c0_i32, %c0_i32_0 : i32, i32
  }
  func.func @transform_2(%arg0: i32) -> (i32, i32) {
    %c0_i32 = arith.constant 0 : i32
    %c0_i32_0 = arith.constant 0 : i32
    %c0_i32_1 = arith.constant 0 : i32
    return %c0_i32, %c0_i32_0 : i32, i32
  }
  func.func @transform_3(%arg0: i32) -> (i32, i32) {
    %c0_i32 = arith.constant 0 : i32
    %c0_i32_0 = arith.constant 0 : i32
    %c0_i32_1 = arith.constant 0 : i32
    return %c0_i32, %c0_i32_0 : i32, i32
  }
  func.func @transform_4(%arg0: i32) -> (i32, i32) {
    %c0_i32 = arith.constant 0 : i32
    %c0_i32_0 = arith.constant 0 : i32
    %c0_i32_1 = arith.constant 0 : i32
    return %c0_i32, %c0_i32_0 : i32, i32
  }
  func.func @transform_5(%arg0: i32) -> (i32, i32, i32) {
    %c0_i32 = arith.constant 0 : i32
    %c0_i32_0 = arith.constant 0 : i32
    %c0_i32_1 = arith.constant 0 : i32
    return %arg0, %c0_i32, %c0_i32_0 : i32, i32, i32
  }
}

module attributes {stable_mosaic.version = 11 : i64} {
  func.func @_conv_tanh_kernel(%arg0: i32, %arg1: memref<1x256x512xbf16, #tpu.memory_space<vmem>>, %arg2: memref<512x128xbf16, #tpu.memory_space<vmem>>, %arg3: memref<1x128xf32, #tpu.memory_space<vmem>>, %arg4: memref<1x256x128xf32, #tpu.memory_space<vmem>>) attributes {dimension_semantics = [#tpu.dimension_semantics<parallel>], iteration_bounds = array<i64: 2>, scalar_prefetch = 0 : i64, scratch_operands = 0 : i64, tpu.core_type = #tpu.core_type<tc>, window_params = [{transform_indices = @transform_0, window_bounds = array<i64: 1, 256, 512>}, {pipeline_mode = #tpu.pipeline_mode<synchronous>, transform_indices = @transform_1, window_bounds = array<i64: 512, 128>}, {pipeline_mode = #tpu.pipeline_mode<synchronous>, transform_indices = @transform_2, window_bounds = array<i64: 1, 128>}, {transform_indices = @transform_3, window_bounds = array<i64: 1, 256, 128>}]} {
    %c0 = arith.constant 0 : index
    %c0_0 = arith.constant 0 : index
    %c0_1 = arith.constant 0 : index
    %0 = vector.load %arg1[%c0, %c0_0, %c0_1] : memref<1x256x512xbf16, #tpu.memory_space<vmem>>, vector<1x256x512xbf16>
    %1 = vector.shape_cast %0 : vector<1x256x512xbf16> to vector<256x512xbf16>
    %c0_2 = arith.constant 0 : index
    %c0_3 = arith.constant 0 : index
    %2 = vector.load %arg2[%c0_2, %c0_3] : memref<512x128xbf16, #tpu.memory_space<vmem>>, vector<512x128xbf16>
    %cst = arith.constant dense<0.000000e+00> : vector<256x128xf32>
    %3 = tpu.matmul %1, %2, %cst {dimension_numbers = #tpu.dot_dimension_numbers<[1], [0], [0], [1], [0, 0, 1, 1], [], []>} : vector<256x512xbf16>, vector<512x128xbf16>, vector<256x128xf32> -> vector<256x128xf32>
    %c0_4 = arith.constant 0 : index
    %c0_5 = arith.constant 0 : index
    %4 = vector.load %arg3[%c0_4, %c0_5] : memref<1x128xf32, #tpu.memory_space<vmem>>, vector<1x128xf32>
    %5 = vector.broadcast %4 : vector<1x128xf32> to vector<256x128xf32>
    %6 = arith.addf %3, %5 : vector<256x128xf32>
    %7 = math.tanh %6 : vector<256x128xf32>
    %c0_6 = arith.constant 0 : index
    %c0_7 = arith.constant 0 : index
    %c0_8 = arith.constant 0 : index
    %8 = vector.load %arg4[%c0_6, %c0_7, %c0_8] : memref<1x256x128xf32, #tpu.memory_space<vmem>>, vector<1x256x128xf32>
    %9 = vector.shape_cast %8 : vector<1x256x128xf32> to vector<256x128xf32>
    %10 = vector.shape_cast %7 : vector<256x128xf32> to vector<1x256x128xf32>
    tpu.vector_store %arg4[%c0_6, %c0_7, %c0_8], %10 {strides = array<i32>} : memref<1x256x128xf32, #tpu.memory_space<vmem>>, vector<1x256x128xf32>,
    return
  }
  func.func @transform_0(%arg0: i32) -> (i32, i32, i32) {
    %c0_i32 = arith.constant 0 : i32
    %c0_i32_0 = arith.constant 0 : i32
    %c0_i32_1 = arith.constant 0 : i32
    return %arg0, %c0_i32, %c0_i32_0 : i32, i32, i32
  }
  func.func @transform_1(%arg0: i32) -> (i32, i32) {
    %c0_i32 = arith.constant 0 : i32
    %c0_i32_0 = arith.constant 0 : i32
    %c0_i32_1 = arith.constant 0 : i32
    return %c0_i32, %c0_i32_0 : i32, i32
  }
  func.func @transform_2(%arg0: i32) -> (i32, i32) {
    %c0_i32 = arith.constant 0 : i32
    %c0_i32_0 = arith.constant 0 : i32
    %c0_i32_1 = arith.constant 0 : i32
    return %c0_i32, %c0_i32_0 : i32, i32
  }
  func.func @transform_3(%arg0: i32) -> (i32, i32, i32) {
    %c0_i32 = arith.constant 0 : i32
    %c0_i32_0 = arith.constant 0 : i32
    %c0_i32_1 = arith.constant 0 : i32
    return %arg0, %c0_i32, %c0_i32_0 : i32, i32, i32
  }
}

</mosaic_0001>

<llo_original>
// kernel: resnet_generator_forward.12
$region0: #{resnet_generator_forward.12}
  #allocation0 [shape = 'u32[]', space=smem, size = 0x4, offset = 0x4, fixed_abs, tag = 'smem constant byte address 0x4 - core index']
  #allocation1 [shape = 'u32[144,128]{1,0:T(1,128)}', space=vmem, size = 0x12000, scoped, tag = 'internal scratch']
  %s0 = inlined_call_operand.vmem [shape: bf16[2,256,256], index: 0, kind: input, shape index: {}]
  %s1 = inlined_call_operand.vmem [shape: bf16[256,128], index: 1, kind: input, shape index: {}]
  %s2 = inlined_call_operand.vmem [shape: f32[1,128], index: 2, kind: input, shape index: {}]
  %s3 = inlined_call_operand.vmem [shape: f32[1,128], index: 3, kind: input, shape index: {}]
  %s4 = inlined_call_operand.vmem [shape: f32[1,128], index: 4, kind: input, shape index: {}]
  %s5 = inlined_call_operand.vmem [shape: f32[2,256,128], index: 5, kind: output, shape index: {}]
  %s6 = sld [smem:[#allocation0]]
  $region53: #{resnet_generator_forward.12} parent=0
    _
  %s8 = ssub.s32 1, %s6
  %s9 = scalar_select 0, %s8, %s6
  loop: start=0, step=1, limit=4
  $region2: #{resnet_generator_forward.12} parent=0 // loop_pre_header
    _
  $region3: #{resnet_generator_forward.12} parent=0 // loop_header
    %s11 = sphi 0, %s15
    %p12 = scmp.ge.s32.totalorder %s11, 4
    %s21 = sphi 0, %s23
    %s24 = sphi 0, %s21
    %s25 = sphi 0, %s24
    %s41 = sphi 0, %s25
    %s45 = sphi 0, %s45
    %s47 = sphi 0, %s45
    %s48 = sphi 0, %s47
    %s62 = sphi 0, %s48
    %s66 = sphi 0, %s66
    %s68 = sphi 0, %s66
    %s69 = sphi 0, %s68
    %s83 = sphi 0, %s69
    %s87 = sphi 0, %s87
    %s89 = sphi 0, %s87
    %s90 = sphi 0, %s89
    %s104 = sphi 0, %s90
    %s108 = sphi 0, %s108
    %s110 = sphi 0, %s108
    %s111 = sphi 0, %s110
    %s125 = sphi 0, %s111
    %s131 = sphi 0, %s133
    %s134 = sphi 0, %s131
    %s135 = sphi 0, %s134
    %s151 = sphi 0, %s135
  $region4: #{resnet_generator_forward.12} parent=0 // loop_header_branch
    %14 = sbr.rel (%p12) target = $region8
  $region5: #{resnet_generator_forward.12} parent=0 // loop_body
    %s16 = ssub.s32 %s11, 1
    %s17 = ssub.s32 %s11, 2
    %s18 = sadd.s32 %s11, 1
    %s19 = ssub.s32 %s11, %s18
    %p20 = scmp.eq.s32.totalorder %s19, 0
    %s22 = sadd.s32 %s21, 1
    %s23 = scalar_select %p20, %s21, %s22
    %p26 = pneg %p20
    %p27 = scmp.eq.s32.totalorder %s11, 1
    %p28 = por %p26, %p27
    %p29 = scmp.ne.s32.totalorder %s21, %s24
    %p30 = scmp.eq.s32.totalorder %s11, 0
    %p31 = por %p29, %p30
    %p32 = scmp.ne.s32.totalorder %s21, %s24
    %p33 = scmp.eq.s32.totalorder %s16, 1
    %p34 = por %p32, %p33
    %p35 = scmp.ne.s32.totalorder %s24, %s25
    %p36 = scmp.eq.s32.totalorder %s16, 0
    %p37 = por %p35, %p36
    %p38 = scmp.ne.s32.totalorder %s24, %s25
    %p39 = scmp.eq.s32.totalorder %s17, 1
    %p40 = por %p38, %p39
    %p42 = scmp.ne.s32.totalorder %s25, %s41
    %p43 = scmp.eq.s32.totalorder %s17, 0
    %p44 = por %p42, %p43
    %s46 = sadd.s32 %s45, 1
    %p49 = scmp.eq.s32.totalorder %s11, 1
    %p50 = scmp.ne.s32.totalorder %s45, %s47
    %p51 = scmp.eq.s32.totalorder %s11, 0
    %p52 = por %p50, %p51
    %p53 = scmp.ne.s32.totalorder %s45, %s47
    %p54 = scmp.eq.s32.totalorder %s16, 1
    %p55 = por %p53, %p54
    %p56 = scmp.ne.s32.totalorder %s47, %s48
    %p57 = scmp.eq.s32.totalorder %s16, 0
    %p58 = por %p56, %p57
    %p59 = scmp.ne.s32.totalorder %s47, %s48
    %p60 = scmp.eq.s32.totalorder %s17, 1
    %p61 = por %p59, %p60
    %p63 = scmp.ne.s32.totalorder %s48, %s62
    %p64 = scmp.eq.s32.totalorder %s17, 0
    %p65 = por %p63, %p64
    %s67 = sadd.s32 %s66, 1
    %p70 = scmp.eq.s32.totalorder %s11, 1
    %p71 = scmp.ne.s32.totalorder %s66, %s68
    %p72 = scmp.eq.s32.totalorder %s11, 0
    %p73 = por %p71, %p72
    %p74 = scmp.ne.s32.totalorder %s66, %s68
    %p75 = scmp.eq.s32.totalorder %s16, 1
    %p76 = por %p74, %p75
    %p77 = scmp.ne.s32.totalorder %s68, %s69
    %p78 = scmp.eq.s32.totalorder %s16, 0
    %p79 = por %p77, %p78
    %p80 = scmp.ne.s32.totalorder %s68, %s69
    %p81 = scmp.eq.s32.totalorder %s17, 1
    %p82 = por %p80, %p81
    %p84 = scmp.ne.s32.totalorder %s69, %s83
    %p85 = scmp.eq.s32.totalorder %s17, 0
    %p86 = por %p84, %p85
    %s88 = sadd.s32 %s87, 1
    %p91 = scmp.eq.s32.totalorder %s11, 1
    %p92 = scmp.ne.s32.totalorder %s87, %s89
    %p93 = scmp.eq.s32.totalorder %s11, 0
    %p94 = por %p92, %p93
    %p95 = scmp.ne.s32.totalorder %s87, %s89
    %p96 = scmp.eq.s32.totalorder %s16, 1
    %p97 = por %p95, %p96
    %p98 = scmp.ne.s32.totalorder %s89, %s90
    %p99 = scmp.eq.s32.totalorder %s16, 0
    %p100 = por %p98, %p99
    %p101 = scmp.ne.s32.totalorder %s89, %s90
    %p102 = scmp.eq.s32.totalorder %s17, 1
    %p103 = por %p101, %p102
    %p105 = scmp.ne.s32.totalorder %s90, %s104
    %p106 = scmp.eq.s32.totalorder %s17, 0
    %p107 = por %p105, %p106
    %s109 = sadd.s32 %s108, 1
    %p112 = scmp.eq.s32.totalorder %s11, 1
    %p113 = scmp.ne.s32.totalorder %s108, %s110
    %p114 = scmp.eq.s32.totalorder %s11, 0
    %p115 = por %p113, %p114
    %p116 = scmp.ne.s32.totalorder %s108, %s110
    %p117 = scmp.eq.s32.totalorder %s16, 1
    %p118 = por %p116, %p117
    %p119 = scmp.ne.s32.totalorder %s110, %s111
    %p120 = scmp.eq.s32.totalorder %s16, 0
    %p121 = por %p119, %p120
    %p122 = scmp.ne.s32.totalorder %s110, %s111
    %p123 = scmp.eq.s32.totalorder %s17, 1
    %p124 = por %p122, %p123
    %p126 = scmp.ne.s32.totalorder %s111, %s125
    %p127 = scmp.eq.s32.totalorder %s17, 0
    %p128 = por %p126, %p127
    %s129 = ssub.s32 %s11, %s18
    %p130 = scmp.eq.s32.totalorder %s129, 0
    %s132 = sadd.s32 %s131, 1
    %s133 = scalar_select %p130, %s131, %s132
    %p136 = pneg %p130
    %p137 = scmp.eq.s32.totalorder %s11, 1
    %p138 = por %p136, %p137
    %p139 = scmp.ne.s32.totalorder %s131, %s134
    %p140 = scmp.eq.s32.totalorder %s11, 0
    %p141 = por %p139, %p140
    %p142 = scmp.ne.s32.totalorder %s131, %s134
    %p143 = scmp.eq.s32.totalorder %s16, 1
    %p144 = por %p142, %p143
    %p145 = scmp.ne.s32.totalorder %s134, %s135
    %p146 = scmp.eq.s32.totalorder %s16, 0
    %p147 = por %p145, %p146
    %p148 = scmp.ne.s32.totalorder %s134, %s135
    %p149 = scmp.eq.s32.totalorder %s17, 1
    %p150 = por %p148, %p149
    %p152 = scmp.ne.s32.totalorder %s135, %s151
    %p153 = scmp.eq.s32.totalorder %s17, 0
    %p154 = por %p152, %p153
    %p155 = scmp.le.s32.totalorder 1, %s11
    %p156 = scmp.lt.s32.totalorder %s11, 3
    %p157 = pnand %p155, %p156
    %p158 = pneg %p157
    // Predicated region
    $region9: #{resnet_generator_forward.12} parent=5 // pred_check
      _
    $region10: #{resnet_generator_forward.12} parent=5 // pred_check_branch
      %160 = sbr.rel (%p157) target = $region12
    $region11: #{resnet_generator_forward.12} parent=5 // pred_region
      %s161 = ssub.s32 %s11, 1
      // Predicated region
      $region13: #{resnet_generator_forward.12} parent=11 // pred_check
        %p162 = pneg %p58
      $region14: #{resnet_generator_forward.12} parent=11 // pred_check_branch
        %164 = sbr.rel (%p162) target = $region16
      $region15: #{resnet_generator_forward.12} parent=11 // pred_region
        _
      $region16: #{resnet_generator_forward.12} parent=11 // pred_fallthru
        _
      // Predicated region
      $region17: #{resnet_generator_forward.12} parent=11 // pred_check
        %p165 = pneg %p79
      $region18: #{resnet_generator_forward.12} parent=11 // pred_check_branch
        %167 = sbr.rel (%p165) target = $region20
      $region19: #{resnet_generator_forward.12} parent=11 // pred_region
        _
      $region20: #{resnet_generator_forward.12} parent=11 // pred_fallthru
        _
      // Predicated region
      $region21: #{resnet_generator_forward.12} parent=11 // pred_check
        %p168 = pneg %p100
      $region22: #{resnet_generator_forward.12} parent=11 // pred_check_branch
        %170 = sbr.rel (%p168) target = $region24
      $region23: #{resnet_generator_forward.12} parent=11 // pred_region
        _
      $region24: #{resnet_generator_forward.12} parent=11 // pred_fallthru
        _
      // Predicated region
      $region25: #{resnet_generator_forward.12} parent=11 // pred_check
        %p171 = pneg %p121
      $region26: #{resnet_generator_forward.12} parent=11 // pred_check_branch
        %173 = sbr.rel (%p171) target = $region28
      $region27: #{resnet_generator_forward.12} parent=11 // pred_region
        _
      $region28: #{resnet_generator_forward.12} parent=11 // pred_fallthru
        _
    $region12: #{resnet_generator_forward.12} parent=5 // pred_fallthru
      _
    %p174 = scmp.lt.s32.totalorder %s11, 2
    // Predicated region
    $region29: #{resnet_generator_forward.12} parent=5 // pred_check
      %p175 = pneg %p174
    $region30: #{resnet_generator_forward.12} parent=5 // pred_check_branch
      %177 = sbr.rel (%p175) target = $region32
    $region31: #{resnet_generator_forward.12} parent=5 // pred_region
      // Predicated region
      $region33: #{resnet_generator_forward.12} parent=31 // pred_check
        %p178 = pneg %p31
      $region34: #{resnet_generator_forward.12} parent=31 // pred_check_branch
        %180 = sbr.rel (%p178) target = $region36
      $region35: #{resnet_generator_forward.12} parent=31 // pred_region
        %p181 = scmp.lt.s32.totalorder %s11, 1
        %s182 = scalar_select %p181, %s11, 1
        %s183 = smul.addr %s182, 64
        %s184 = smul.addr %s183, 4
        %s185 = scalar_lea.vmem %s0, %s184
      $region36: #{resnet_generator_forward.12} parent=31 // pred_fallthru
        _
    $region32: #{resnet_generator_forward.12} parent=5 // pred_fallthru
      _
    %p186 = scmp.le.s32.totalorder 1, %s11
    %p187 = scmp.lt.s32.totalorder %s11, 3
    %p188 = pnand %p186, %p187
    %p189 = pneg %p188
    // Predicated region
    $region37: #{resnet_generator_forward.12} parent=5 // pred_check
      _
    $region38: #{resnet_generator_forward.12} parent=5 // pred_check_branch
      %191 = sbr.rel (%p188) target = $region40
    $region39: #{resnet_generator_forward.12} parent=5 // pred_region
      %s192 = ssub.s32 %s11, 1
      %p193 = scmp.lt.s32.totalorder %s16, 1
      %s194 = scalar_select %p193, %s16, 1
      %s195 = smul.addr %s194, 64
      %s196 = smul.addr %s195, 4
      %s197 = scalar_lea.vmem %s0, %s196
      %p198 = pneg %p37
      %p199 = pneg %p34
      %p200 = pneg %p58
      %p201 = pneg %p55
      %p202 = pneg %p79
      %p203 = pneg %p76
      %p204 = pneg %p100
      %p205 = pneg %p97
      %p206 = pneg %p121
      %p207 = pneg %p118
      %p208 = pneg %p147
      %p209 = pneg %p144
      %p210 = scmp.lt.s32.totalorder %s16, 1
      %s211 = scalar_select %p210, %s16, 1
      %s212 = smul.addr %s211, 32
      %s213 = smul.addr %s212, 8
      %s214 = scalar_lea.vmem %s5, %s213
      %p215 = scmp.lt.s32.totalorder %s16, 1
      %s216 = scalar_select %p215, %s16, 1
      %s217 = smul.addr %s216, 64
      %s218 = smul.addr %s217, 4
      %s219 = scalar_lea.vmem %s0, %s218
      %p220 = scmp.lt.s32.totalorder %s16, 1
      %s221 = scalar_select %p220, %s16, 1
      %s222 = smul.addr %s221, 32
      %s223 = smul.addr %s222, 8
      %s224 = scalar_lea.vmem %s5, %s223
      %v226 = vld [vmem:[%s219] sm:$0xff]
      %v227 = vld [vmem:[%s219 + $0x8] sm:$0xff]
      %v228 = vld [vmem:[%s219 + $0x10] sm:$0xff]
      %v229 = vld [vmem:[%s219 + $0x18] sm:$0xff]
      %v230 = vld [vmem:[%s219 + $0x20] sm:$0xff]
      %v231 = vld [vmem:[%s219 + $0x28] sm:$0xff]
      %v232 = vld [vmem:[%s219 + $0x30] sm:$0xff]
      %v233 = vld [vmem:[%s219 + $0x38] sm:$0xff]
      %v234 = vld [vmem:[%s219 + $0x40] sm:$0xff]
      %v235 = vld [vmem:[%s219 + $0x48] sm:$0xff]
      %v236 = vld [vmem:[%s219 + $0x50] sm:$0xff]
      %v237 = vld [vmem:[%s219 + $0x58] sm:$0xff]
      %v238 = vld [vmem:[%s219 + $0x60] sm:$0xff]
      %v239 = vld [vmem:[%s219 + $0x68] sm:$0xff]
      %v240 = vld [vmem:[%s219 + $0x70] sm:$0xff]
      %v241 = vld [vmem:[%s219 + $0x78] sm:$0xff]
      %v242 = vld [vmem:[%s219 + $0x80] sm:$0xff]
      %v243 = vld [vmem:[%s219 + $0x88] sm:$0xff]
      %v244 = vld [vmem:[%s219 + $0x90] sm:$0xff]
      %v245 = vld [vmem:[%s219 + $0x98] sm:$0xff]
      %v246 = vld [vmem:[%s219 + $0xa0] sm:$0xff]
      %v247 = vld [vmem:[%s219 + $0xa8] sm:$0xff]
      %v248 = vld [vmem:[%s219 + $0xb0] sm:$0xff]
      %v249 = vld [vmem:[%s219 + $0xb8] sm:$0xff]
      %v250 = vld [vmem:[%s219 + $0xc0] sm:$0xff]
      %v251 = vld [vmem:[%s219 + $0xc8] sm:$0xff]
      %v252 = vld [vmem:[%s219 + $0xd0] sm:$0xff]
      %v253 = vld [vmem:[%s219 + $0xd8] sm:$0xff]
      %v254 = vld [vmem:[%s219 + $0xe0] sm:$0xff]
      %v255 = vld [vmem:[%s219 + $0xe8] sm:$0xff]
      %v256 = vld [vmem:[%s219 + $0xf0] sm:$0xff]
      %v257 = vld [vmem:[%s219 + $0xf8] sm:$0xff]
      %v258 = vld [vmem:[%s1] sm:$0xf]
      %v259 = vld [vmem:[%s1 + $0x4] sm:$0xf]
      %v260 = vld [vmem:[%s1 + $0x8] sm:$0xf]
      %v261 = vld [vmem:[%s1 + $0xc] sm:$0xf]
      %v262 = vld [vmem:[%s1 + $0x10] sm:$0xf]
      %v263 = vld [vmem:[%s1 + $0x14] sm:$0xf]
      %v264 = vld [vmem:[%s1 + $0x18] sm:$0xf]
      %v265 = vld [vmem:[%s1 + $0x1c] sm:$0xf]
      %v266 = vld [vmem:[%s1 + $0x20] sm:$0xf]
      %v267 = vld [vmem:[%s1 + $0x24] sm:$0xf]
      %v268 = vld [vmem:[%s1 + $0x28] sm:$0xf]
      %v269 = vld [vmem:[%s1 + $0x2c] sm:$0xf]
      %v270 = vld [vmem:[%s1 + $0x30] sm:$0xf]
      %v271 = vld [vmem:[%s1 + $0x34] sm:$0xf]
      %v272 = vld [vmem:[%s1 + $0x38] sm:$0xf]
      %v273 = vld [vmem:[%s1 + $0x3c] sm:$0xf]
      %v274 = vld [vmem:[%s1 + $0x40] sm:$0xf]
      %v275 = vld [vmem:[%s1 + $0x44] sm:$0xf]
      %v276 = vld [vmem:[%s1 + $0x48] sm:$0xf]
      %v277 = vld [vmem:[%s1 + $0x4c] sm:$0xf]
      %v278 = vld [vmem:[%s1 + $0x50] sm:$0xf]
      %v279 = vld [vmem:[%s1 + $0x54] sm:$0xf]
      %v280 = vld [vmem:[%s1 + $0x58] sm:$0xf]
      %v281 = vld [vmem:[%s1 + $0x5c] sm:$0xf]
      %v282 = vld [vmem:[%s1 + $0x60] sm:$0xf]
      %v283 = vld [vmem:[%s1 + $0x64] sm:$0xf]
      %v284 = vld [vmem:[%s1 + $0x68] sm:$0xf]
      %v285 = vld [vmem:[%s1 + $0x6c] sm:$0xf]
      %v286 = vld [vmem:[%s1 + $0x70] sm:$0xf]
      %v287 = vld [vmem:[%s1 + $0x74] sm:$0xf]
      %v288 = vld [vmem:[%s1 + $0x78] sm:$0xf]
      %v289 = vld [vmem:[%s1 + $0x7c] sm:$0xf]
      %v290 = vld [vmem:[%s2] sm:$0x1]
      %v292 = vlaneseq
      %v293 = vshrl.u32 %v292, 7
      %v294 = vsub.s32 0, %v293
      %v295 = vrot.slane %v290, %v294
      %v329 = vunpack.c.l.b16 %v226
      %v330 = vunpack.c.h.b16 %v226
      %v331 = vunpack.c.l.b16 %v227
      %v332 = vunpack.c.h.b16 %v227
      %v333 = vunpack.c.l.b16 %v228
      %v334 = vunpack.c.h.b16 %v228
      %v335 = vunpack.c.l.b16 %v229
      %v336 = vunpack.c.h.b16 %v229
      %v337 = vunpack.c.l.b16 %v230
      %v338 = vunpack.c.h.b16 %v230
      %v339 = vunpack.c.l.b16 %v231
      %v340 = vunpack.c.h.b16 %v231
      %v341 = vunpack.c.l.b16 %v232
      %v342 = vunpack.c.h.b16 %v232
      %v343 = vunpack.c.l.b16 %v233
      %v344 = vunpack.c.h.b16 %v233
      %v345 = vunpack.c.l.b16 %v234
      %v346 = vunpack.c.h.b16 %v234
      %v347 = vunpack.c.l.b16 %v235
      %v348 = vunpack.c.h.b16 %v235
      %v349 = vunpack.c.l.b16 %v236
      %v350 = vunpack.c.h.b16 %v236
      %v351 = vunpack.c.l.b16 %v237
      %v352 = vunpack.c.h.b16 %v237
      %v353 = vunpack.c.l.b16 %v238
      %v354 = vunpack.c.h.b16 %v238
      %v355 = vunpack.c.l.b16 %v239
      %v356 = vunpack.c.h.b16 %v239
      %v357 = vunpack.c.l.b16 %v240
      %v358 = vunpack.c.h.b16 %v240
      %v359 = vunpack.c.l.b16 %v241
      %v360 = vunpack.c.h.b16 %v241
      %v361 = vunpack.c.l.b16 %v242
      %v362 = vunpack.c.h.b16 %v242
      %v363 = vunpack.c.l.b16 %v243
      %v364 = vunpack.c.h.b16 %v243
      %v365 = vunpack.c.l.b16 %v244
      %v366 = vunpack.c.h.b16 %v244
      %v367 = vunpack.c.l.b16 %v245
      %v368 = vunpack.c.h.b16 %v245
      %v369 = vunpack.c.l.b16 %v246
      %v370 = vunpack.c.h.b16 %v246
      %v371 = vunpack.c.l.b16 %v247
      %v372 = vunpack.c.h.b16 %v247
      %v373 = vunpack.c.l.b16 %v248
      %v374 = vunpack.c.h.b16 %v248
      %v375 = vunpack.c.l.b16 %v249
      %v376 = vunpack.c.h.b16 %v249
      %v377 = vunpack.c.l.b16 %v250
      %v378 = vunpack.c.h.b16 %v250
      %v379 = vunpack.c.l.b16 %v251
      %v380 = vunpack.c.h.b16 %v251
      %v381 = vunpack.c.l.b16 %v252
      %v382 = vunpack.c.h.b16 %v252
      %v383 = vunpack.c.l.b16 %v253
      %v384 = vunpack.c.h.b16 %v253
      %v385 = vunpack.c.l.b16 %v254
      %v386 = vunpack.c.h.b16 %v254
      %v387 = vunpack.c.l.b16 %v255
      %v388 = vunpack.c.h.b16 %v255
      %v389 = vunpack.c.l.b16 %v256
      %v390 = vunpack.c.h.b16 %v256
      %v391 = vunpack.c.l.b16 %v257
      %v392 = vunpack.c.h.b16 %v257
      %v393 = vpack.c.b16 %v331, %v329
      %v394 = vpack.c.b16 %v332, %v330
      %v395 = vpack.c.b16 %v335, %v333
      %v396 = vpack.c.b16 %v336, %v334
      %v397 = vpack.c.b16 %v339, %v337
      %v398 = vpack.c.b16 %v340, %v338
      %v399 = vpack.c.b16 %v343, %v341
      %v400 = vpack.c.b16 %v344, %v342
      %v401 = vpack.c.b16 %v347, %v345
      %v402 = vpack.c.b16 %v348, %v346
      %v403 = vpack.c.b16 %v351, %v349
      %v404 = vpack.c.b16 %v352, %v350
      %v405 = vpack.c.b16 %v355, %v353
      %v406 = vpack.c.b16 %v356, %v354
      %v407 = vpack.c.b16 %v359, %v357
      %v408 = vpack.c.b16 %v360, %v358
      %v409 = vpack.c.b16 %v363, %v361
      %v410 = vpack.c.b16 %v364, %v362
      %v411 = vpack.c.b16 %v367, %v365
      %v412 = vpack.c.b16 %v368, %v366
      %v413 = vpack.c.b16 %v371, %v369
      %v414 = vpack.c.b16 %v372, %v370
      %v415 = vpack.c.b16 %v375, %v373
      %v416 = vpack.c.b16 %v376, %v374
      %v417 = vpack.c.b16 %v379, %v377
      %v418 = vpack.c.b16 %v380, %v378
      %v419 = vpack.c.b16 %v383, %v381
      %v420 = vpack.c.b16 %v384, %v382
      %v421 = vpack.c.b16 %v387, %v385
      %v422 = vpack.c.b16 %v388, %v386
      %v423 = vpack.c.b16 %v391, %v389
      %v424 = vpack.c.b16 %v392, %v390
      %v489 = vunpack.c.l.b16 %v258
      %v490 = vunpack.c.l.b16 %v259
      %v491 = vunpack.c.l.b16 %v260
      %v492 = vunpack.c.l.b16 %v261
      %v493 = vunpack.c.l.b16 %v262
      %v494 = vunpack.c.l.b16 %v263
      %v495 = vunpack.c.l.b16 %v264
      %v496 = vunpack.c.l.b16 %v265
      %v497 = vunpack.c.l.b16 %v266
      %v498 = vunpack.c.l.b16 %v267
      %v499 = vunpack.c.l.b16 %v268
      %v500 = vunpack.c.l.b16 %v269
      %v501 = vunpack.c.l.b16 %v270
      %v502 = vunpack.c.l.b16 %v271
      %v503 = vunpack.c.l.b16 %v272
      %v504 = vunpack.c.l.b16 %v273
      %v505 = vunpack.c.l.b16 %v274
      %v506 = vunpack.c.l.b16 %v275
      %v507 = vunpack.c.l.b16 %v276
      %v508 = vunpack.c.l.b16 %v277
      %v509 = vunpack.c.l.b16 %v278
      %v510 = vunpack.c.l.b16 %v279
      %v511 = vunpack.c.l.b16 %v280
      %v512 = vunpack.c.l.b16 %v281
      %v513 = vunpack.c.l.b16 %v282
      %v514 = vunpack.c.l.b16 %v283
      %v515 = vunpack.c.l.b16 %v284
      %v516 = vunpack.c.l.b16 %v285
      %v517 = vunpack.c.l.b16 %v286
      %v518 = vunpack.c.l.b16 %v287
      %v519 = vunpack.c.l.b16 %v288
      %v520 = vunpack.c.l.b16 %v289
      %v521 = vpack.c.b16 %v490, %v489
      %v522 = vpack.c.b16 %v492, %v491
      %v523 = vpack.c.b16 %v494, %v493
      %v524 = vpack.c.b16 %v496, %v495
      %v525 = vpack.c.b16 %v498, %v497
      %v526 = vpack.c.b16 %v500, %v499
      %v527 = vpack.c.b16 %v502, %v501
      %v528 = vpack.c.b16 %v504, %v503
      %v529 = vpack.c.b16 %v506, %v505
      %v530 = vpack.c.b16 %v508, %v507
      %v531 = vpack.c.b16 %v510, %v509
      %v532 = vpack.c.b16 %v512, %v511
      %v533 = vpack.c.b16 %v514, %v513
      %v534 = vpack.c.b16 %v516, %v515
      %v535 = vpack.c.b16 %v518, %v517
      %v536 = vpack.c.b16 %v520, %v519
      %553 = vmatprep.subr.bf16.mxu0 0
      %554 = vmatpush1.bf16.msra.mxu0 %v521
      %555 = vmatprep.subr.bf16.mxu0 0
      %556 = vmatpush1.bf16.msra.mxu0 %v522
      %557 = vmatprep.subr.bf16.mxu0 0
      %558 = vmatpush1.bf16.msra.mxu0 %v523
      %559 = vmatprep.subr.bf16.mxu0 0
      %560 = vmatpush1.bf16.msra.mxu0 %v524
      %561 = vmatprep.subr.bf16.mxu0 0
      %562 = vmatpush1.bf16.msra.mxu0 %v525
      %563 = vmatprep.subr.bf16.mxu0 0
      %564 = vmatpush1.bf16.msra.mxu0 %v526
      %565 = vmatprep.subr.bf16.mxu0 0
      %566 = vmatpush1.bf16.msra.mxu0 %v527
      %567 = vmatprep.subr.bf16.mxu0 0
      %568 = vmatpush1.bf16.msra.mxu0 %v528
      %569 = vmatprep.subr.bf16.mxu0 0
      %570 = vmatpush1.bf16.msra.mxu0 %v529
      %571 = vmatprep.subr.bf16.mxu0 0
      %572 = vmatpush1.bf16.msra.mxu0 %v530
      %573 = vmatprep.subr.bf16.mxu0 0
      %574 = vmatpush1.bf16.msra.mxu0 %v531
      %575 = vmatprep.subr.bf16.mxu0 0
      %576 = vmatpush1.bf16.msra.mxu0 %v532
      %577 = vmatprep.subr.bf16.mxu0 0
      %578 = vmatpush1.bf16.msra.mxu0 %v533
      %579 = vmatprep.subr.bf16.mxu0 0
      %580 = vmatpush1.bf16.msra.mxu0 %v534
      %581 = vmatprep.subr.bf16.mxu0 0
      %582 = vmatpush1.bf16.msra.mxu0 %v535
      %583 = vmatprep.subr.bf16.mxu0 0
      %584 = vmatpush1.bf16.msra.mxu0 %v536
      %585 = vmatprep.mubr.bf16.mxu0 %v394
      %586 = vmatmul.mubr.bf16.gmra.mrb[0].mxu0 %v393
      %v587 = vpop.f32.mrb[0].mxu0
      %v588 = vadd.f32 %v295, %v587
      %v589 = vpop.f32.mrb[0].mxu0
      %v590 = vpop.f32.mrb[0].mxu0
      %v591 = vadd.f32 %v295, %v590
      %v592 = vpop.f32.mrb[0].mxu0
      %593 = vmatprep.mubr.bf16.mxu0 %v396
      %594 = vmatmul.mubr.bf16.gmra.mrb[0].mxu0 %v395
      %v595 = vpop.f32.mrb[0].mxu0
      %v596 = vadd.f32 %v295, %v595
      %v597 = vpop.f32.mrb[0].mxu0
      %v598 = vpop.f32.mrb[0].mxu0
      %v599 = vadd.f32 %v295, %v598
      %v600 = vpop.f32.mrb[0].mxu0
      %601 = vmatprep.mubr.bf16.mxu0 %v398
      %602 = vmatmul.mubr.bf16.gmra.mrb[0].mxu0 %v397
      %v603 = vpop.f32.mrb[0].mxu0
      %v604 = vadd.f32 %v295, %v603
      %v605 = vpop.f32.mrb[0].mxu0
      %v606 = vpop.f32.mrb[0].mxu0
      %v607 = vadd.f32 %v295, %v606
      %v608 = vpop.f32.mrb[0].mxu0
      %609 = vmatprep.mubr.bf16.mxu0 %v400
      %610 = vmatmul.mubr.bf16.gmra.mrb[0].mxu0 %v399
      %v611 = vpop.f32.mrb[0].mxu0
      %v612 = vadd.f32 %v295, %v611
      %v613 = vpop.f32.mrb[0].mxu0
      %v614 = vpop.f32.mrb[0].mxu0
      %v615 = vadd.f32 %v295, %v614
      %v616 = vpop.f32.mrb[0].mxu0
      %617 = vmatprep.mubr.bf16.mxu0 %v402
      %618 = vmatmul.mubr.bf16.gmra.mrb[0].mxu0 %v401
      %v619 = vpop.f32.mrb[0].mxu0
      %v620 = vadd.f32 %v295, %v619
      %v621 = vpop.f32.mrb[0].mxu0
      %v622 = vpop.f32.mrb[0].mxu0
      %v623 = vadd.f32 %v295, %v622
      %v624 = vpop.f32.mrb[0].mxu0
      %625 = vmatprep.mubr.bf16.mxu0 %v404
      %626 = vmatmul.mubr.bf16.gmra.mrb[0].mxu0 %v403
      %v627 = vpop.f32.mrb[0].mxu0
      %v628 = vadd.f32 %v295, %v627
      %v629 = vpop.f32.mrb[0].mxu0
      %v630 = vpop.f32.mrb[0].mxu0
      %v631 = vadd.f32 %v295, %v630
      %v632 = vpop.f32.mrb[0].mxu0
      %633 = vmatprep.mubr.bf16.mxu0 %v406
      %634 = vmatmul.mubr.bf16.gmra.mrb[0].mxu0 %v405
      %v635 = vpop.f32.mrb[0].mxu0
      %v636 = vadd.f32 %v295, %v635
      %v637 = vpop.f32.mrb[0].mxu0
      %v638 = vpop.f32.mrb[0].mxu0
      %v639 = vadd.f32 %v295, %v638
      %v640 = vpop.f32.mrb[0].mxu0
      %641 = vmatprep.mubr.bf16.mxu0 %v408
      %642 = vmatmul.mubr.bf16.gmra.mrb[0].mxu0 %v407
      %v643 = vpop.f32.mrb[0].mxu0
      %v644 = vadd.f32 %v295, %v643
      %v645 = vpop.f32.mrb[0].mxu0
      %v646 = vpop.f32.mrb[0].mxu0
      %v647 = vadd.f32 %v295, %v646
      %v648 = vpop.f32.mrb[0].mxu0
      %649 = vmatprep.mubr.bf16.mxu0 %v410
      %650 = vmatmul.mubr.bf16.gmra.mrb[0].mxu0 %v409
      %v651 = vpop.f32.mrb[0].mxu0
      %v652 = vadd.f32 %v295, %v651
      %v653 = vpop.f32.mrb[0].mxu0
      %v654 = vpop.f32.mrb[0].mxu0
      %v655 = vadd.f32 %v295, %v654
      %v656 = vpop.f32.mrb[0].mxu0
      %657 = vmatprep.mubr.bf16.mxu0 %v412
      %658 = vmatmul.mubr.bf16.gmra.mrb[0].mxu0 %v411
      %v659 = vpop.f32.mrb[0].mxu0
      %v660 = vadd.f32 %v295, %v659
      %v661 = vpop.f32.mrb[0].mxu0
      %v662 = vpop.f32.mrb[0].mxu0
      %v663 = vadd.f32 %v295, %v662
      %v664 = vpop.f32.mrb[0].mxu0
      %665 = vmatprep.mubr.bf16.mxu0 %v414
      %666 = vmatmul.mubr.bf16.gmra.mrb[0].mxu0 %v413
      %v667 = vpop.f32.mrb[0].mxu0
      %v668 = vadd.f32 %v295, %v667
      %v669 = vpop.f32.mrb[0].mxu0
      %v670 = vpop.f32.mrb[0].mxu0
      %v671 = vadd.f32 %v295, %v670
      %v672 = vpop.f32.mrb[0].mxu0
      %673 = vmatprep.mubr.bf16.mxu0 %v416
      %674 = vmatmul.mubr.bf16.gmra.mrb[0].mxu0 %v415
      %v675 = vpop.f32.mrb[0].mxu0
      %v676 = vadd.f32 %v295, %v675
      %v677 = vpop.f32.mrb[0].mxu0
      %v678 = vpop.f32.mrb[0].mxu0
      %v679 = vadd.f32 %v295, %v678
      %v680 = vpop.f32.mrb[0].mxu0
      %681 = vmatprep.mubr.bf16.mxu0 %v418
      %682 = vmatmul.mubr.bf16.gmra.mrb[0].mxu0 %v417
      %v683 = vpop.f32.mrb[0].mxu0
      %v684 = vadd.f32 %v295, %v683
      %v685 = vpop.f32.mrb[0].mxu0
      %v686 = vpop.f32.mrb[0].mxu0
      %v687 = vadd.f32 %v295, %v686
      %v688 = vpop.f32.mrb[0].mxu0
      %689 = vmatprep.mubr.bf16.mxu0 %v420
      %690 = vmatmul.mubr.bf16.gmra.mrb[0].mxu0 %v419
      %v691 = vpop.f32.mrb[0].mxu0
      %v692 = vadd.f32 %v295, %v691
      %v693 = vpop.f32.mrb[0].mxu0
      %v694 = vpop.f32.mrb[0].mxu0
      %v695 = vadd.f32 %v295, %v694
      %v696 = vpop.f32.mrb[0].mxu0
      %697 = vmatprep.mubr.bf16.mxu0 %v422
      %698 = vmatmul.mubr.bf16.gmra.mrb[0].mxu0 %v421
      %v699 = vpop.f32.mrb[0].mxu0
      %v700 = vadd.f32 %v295, %v699
      %v701 = vpop.f32.mrb[0].mxu0
      %v702 = vpop.f32.mrb[0].mxu0
      %v703 = vadd.f32 %v295, %v702
      %v704 = vpop.f32.mrb[0].mxu0
      %705 = vmatprep.mubr.bf16.mxu0 %v424
      %706 = vmatmul.mubr.bf16.gmra.mrb[0].mxu0 %v423
      %v707 = vpop.f32.mrb[0].mxu0
      %v708 = vadd.f32 %v295, %v707
      %v709 = vpop.f32.mrb[0].mxu0
      %v710 = vpop.f32.mrb[0].mxu0
      %v711 = vadd.f32 %v295, %v710
      %v712 = vpop.f32.mrb[0].mxu0
      %713 = vdwg.mxu0
      %v714 = vadd.f32 %v588, %v591
      %v715 = vadd.f32 %v714, %v596
      %v716 = vadd.f32 %v715, %v599
      %v717 = vadd.f32 %v716, %v604
      %v718 = vadd.f32 %v717, %v607
      %v719 = vadd.f32 %v718, %v612
      %v720 = vadd.f32 %v719, %v615
      %v721 = vadd.f32 %v720, %v620
      %v722 = vadd.f32 %v721, %v623
      %v723 = vadd.f32 %v722, %v628
      %v724 = vadd.f32 %v723, %v631
      %v725 = vadd.f32 %v724, %v636
      %v726 = vadd.f32 %v725, %v639
      %v727 = vadd.f32 %v726, %v644
      %v728 = vadd.f32 %v727, %v647
      %v729 = vadd.f32 %v728, %v652
      %v730 = vadd.f32 %v729, %v655
      %v731 = vadd.f32 %v730, %v660
      %v732 = vadd.f32 %v731, %v663
      %v733 = vadd.f32 %v732, %v668
      %v734 = vadd.f32 %v733, %v671
      %v735 = vadd.f32 %v734, %v676
      %v736 = vadd.f32 %v735, %v679
      %v737 = vadd.f32 %v736, %v684
      %v738 = vadd.f32 %v737, %v687
      %v739 = vadd.f32 %v738, %v692
      %v740 = vadd.f32 %v739, %v695
      %v741 = vadd.f32 %v740, %v700
      %v742 = vadd.f32 %v741, %v703
      %v743 = vadd.f32 %v742, %v708
      %v744 = vadd.f32 %v743, %v711
      %v745 = vrot.slane %v744, 4
      %v746 = vadd.f32 %v744, %v745
      %v747 = vrot.slane %v746, 2
      %v748 = vadd.f32 %v746, %v747
      %v749 = vrot.slane %v748, 1
      %v750 = vadd.f32 %v748, %v749
      %v751 = vmul.f32 %v750, 0.00390625
      %v752 = vsub.f32 %v588, %v751
      %v753 = vsub.f32 %v591, %v751
      %v754 = vsub.f32 %v596, %v751
      %v755 = vsub.f32 %v599, %v751
      %v756 = vsub.f32 %v604, %v751
      %v757 = vsub.f32 %v607, %v751
      %v758 = vsub.f32 %v612, %v751
      %v759 = vsub.f32 %v615, %v751
      %v760 = vsub.f32 %v620, %v751
      %v761 = vsub.f32 %v623, %v751
      %v762 = vsub.f32 %v628, %v751
      %v763 = vsub.f32 %v631, %v751
      %v764 = vsub.f32 %v636, %v751
      %v765 = vsub.f32 %v639, %v751
      %v766 = vsub.f32 %v644, %v751
      %v767 = vsub.f32 %v647, %v751
      %v768 = vsub.f32 %v652, %v751
      %v769 = vsub.f32 %v655, %v751
      %v770 = vsub.f32 %v660, %v751
      %v771 = vsub.f32 %v663, %v751
      %v772 = vsub.f32 %v668, %v751
      %v773 = vsub.f32 %v671, %v751
      %v774 = vsub.f32 %v676, %v751
      %v775 = vsub.f32 %v679, %v751
      %v776 = vsub.f32 %v684, %v751
      %v777 = vsub.f32 %v687, %v751
      %v778 = vsub.f32 %v692, %v751
      %v779 = vsub.f32 %v695, %v751
      %v780 = vsub.f32 %v700, %v751
      %v781 = vsub.f32 %v703, %v751
      %v782 = vsub.f32 %v708, %v751
      %v783 = vsub.f32 %v711, %v751
      %v784 = vmul.f32 %v752, %v752
      %v785 = vmul.f32 %v753, %v753
      %v786 = vmul.f32 %v754, %v754
      %v787 = vmul.f32 %v755, %v755
      %v788 = vmul.f32 %v756, %v756
      %v789 = vmul.f32 %v757, %v757
      %v790 = vmul.f32 %v758, %v758
      %v791 = vmul.f32 %v759, %v759
      %v792 = vmul.f32 %v760, %v760
      %v793 = vmul.f32 %v761, %v761
      %v794 = vmul.f32 %v762, %v762
      %v795 = vmul.f32 %v763, %v763
      %v796 = vmul.f32 %v764, %v764
      %v797 = vmul.f32 %v765, %v765
      %v798 = vmul.f32 %v766, %v766
      %v799 = vmul.f32 %v767, %v767
      %v800 = vmul.f32 %v768, %v768
      %v801 = vmul.f32 %v769, %v769
      %v802 = vmul.f32 %v770, %v770
      %v803 = vmul.f32 %v771, %v771
      %v804 = vmul.f32 %v772, %v772
      %v805 = vmul.f32 %v773, %v773
      %v806 = vmul.f32 %v774, %v774
      %v807 = vmul.f32 %v775, %v775
      %v808 = vmul.f32 %v776, %v776
      %v809 = vmul.f32 %v777, %v777
      %v810 = vmul.f32 %v778, %v778
      %v811 = vmul.f32 %v779, %v779
      %v812 = vmul.f32 %v780, %v780
      %v813 = vmul.f32 %v781, %v781
      %v814 = vmul.f32 %v782, %v782
      %v815 = vmul.f32 %v783, %v783
      %v816 = vadd.f32 %v784, %v785
      %v817 = vadd.f32 %v816, %v786
      %v818 = vadd.f32 %v817, %v787
      %v819 = vadd.f32 %v818, %v788
      %v820 = vadd.f32 %v819, %v789
      %v821 = vadd.f32 %v820, %v790
      %v822 = vadd.f32 %v821, %v791
      %v823 = vadd.f32 %v822, %v792
      %v824 = vadd.f32 %v823, %v793
      %v825 = vadd.f32 %v824, %v794
      %v826 = vadd.f32 %v825, %v795
      %v827 = vadd.f32 %v826, %v796
      %v828 = vadd.f32 %v827, %v797
      %v829 = vadd.f32 %v828, %v798
      %v830 = vadd.f32 %v829, %v799
      %v831 = vadd.f32 %v830, %v800
      %v832 = vadd.f32 %v831, %v801
      %v833 = vadd.f32 %v832, %v802
      %v834 = vadd.f32 %v833, %v803
      %v835 = vadd.f32 %v834, %v804
      %v836 = vadd.f32 %v835, %v805
      %v837 = vadd.f32 %v836, %v806
      %v838 = vadd.f32 %v837, %v807
      %v839 = vadd.f32 %v838, %v808
      %v840 = vadd.f32 %v839, %v809
      %v841 = vadd.f32 %v840, %v810
      %v842 = vadd.f32 %v841, %v811
      %v843 = vadd.f32 %v842, %v812
      %v844 = vadd.f32 %v843, %v813
      %v845 = vadd.f32 %v844, %v814
      %v846 = vadd.f32 %v845, %v815
      %v847 = vrot.slane %v846, 4
      %v848 = vadd.f32 %v846, %v847
      %v849 = vrot.slane %v848, 2
      %v850 = vadd.f32 %v848, %v849
      %v851 = vrot.slane %v850, 1
      %v852 = vadd.f32 %v850, %v851
      %v853 = vmul.f32 %v852, 0.00390625
      %v854 = vadd.f32 %v853, 1e-05
      %v855 = vrsqrt.pop %v854
      %v856 = vmul.f32 %v752, %v855
      %v857 = vmul.f32 %v753, %v855
      %v858 = vmul.f32 %v754, %v855
      %v859 = vmul.f32 %v755, %v855
      %v860 = vmul.f32 %v756, %v855
      %v861 = vmul.f32 %v757, %v855
      %v862 = vmul.f32 %v758, %v855
      %v863 = vmul.f32 %v759, %v855
      %v864 = vmul.f32 %v760, %v855
      %v865 = vmul.f32 %v761, %v855
      %v866 = vmul.f32 %v762, %v855
      %v867 = vmul.f32 %v763, %v855
      %v868 = vmul.f32 %v764, %v855
      %v869 = vmul.f32 %v765, %v855
      %v870 = vmul.f32 %v766, %v855
      %v871 = vmul.f32 %v767, %v855
      %v872 = vmul.f32 %v768, %v855
      %v873 = vmul.f32 %v769, %v855
      %v874 = vmul.f32 %v770, %v855
      %v875 = vmul.f32 %v771, %v855
      %v876 = vmul.f32 %v772, %v855
      %v877 = vmul.f32 %v773, %v855
      %v878 = vmul.f32 %v774, %v855
      %v879 = vmul.f32 %v775, %v855
      %v880 = vmul.f32 %v776, %v855
      %v881 = vmul.f32 %v777, %v855
      %v882 = vmul.f32 %v778, %v855
      %v883 = vmul.f32 %v779, %v855
      %v884 = vmul.f32 %v780, %v855
      %v885 = vmul.f32 %v781, %v855
      %v886 = vmul.f32 %v782, %v855
      %v887 = vmul.f32 %v783, %v855
      %v888 = vld [vmem:[%s3] sm:$0x1]
      %v890 = vlaneseq
      %v891 = vshrl.u32 %v890, 7
      %v892 = vsub.s32 0, %v891
      %v893 = vrot.slane %v888, %v892
      %v895 = vmul.f32 %v856, %v893
      %v896 = vmul.f32 %v857, %v893
      %v897 = vmul.f32 %v858, %v893
      %v898 = vmul.f32 %v859, %v893
      %v899 = vmul.f32 %v860, %v893
      %v900 = vmul.f32 %v861, %v893
      %v901 = vmul.f32 %v862, %v893
      %v902 = vmul.f32 %v863, %v893
      %v903 = vmul.f32 %v864, %v893
      %v904 = vmul.f32 %v865, %v893
      %v905 = vmul.f32 %v866, %v893
      %v906 = vmul.f32 %v867, %v893
      %v907 = vmul.f32 %v868, %v893
      %v908 = vmul.f32 %v869, %v893
      %v909 = vmul.f32 %v870, %v893
      %v910 = vmul.f32 %v871, %v893
      %v911 = vmul.f32 %v872, %v893
      %v912 = vmul.f32 %v873, %v893
      %v913 = vmul.f32 %v874, %v893
      %v914 = vmul.f32 %v875, %v893
      %v915 = vmul.f32 %v876, %v893
      %v916 = vmul.f32 %v877, %v893
      %v917 = vmul.f32 %v878, %v893
      %v918 = vmul.f32 %v879, %v893
      %v919 = vmul.f32 %v880, %v893
      %v920 = vmul.f32 %v881, %v893
      %v921 = vmul.f32 %v882, %v893
      %v922 = vmul.f32 %v883, %v893
      %v923 = vmul.f32 %v884, %v893
      %v924 = vmul.f32 %v885, %v893
      %v925 = vmul.f32 %v886, %v893
      %v926 = vmul.f32 %v887, %v893
      %v927 = vld [vmem:[%s4] sm:$0x1]
      %v929 = vlaneseq
      %v930 = vshrl.u32 %v929, 7
      %v931 = vsub.s32 0, %v930
      %v932 = vrot.slane %v927, %v931
      %v934 = vadd.f32 %v895, %v932
      %v935 = vadd.f32 %v896, %v932
      %v936 = vadd.f32 %v897, %v932
      %v937 = vadd.f32 %v898, %v932
      %v938 = vadd.f32 %v899, %v932
      %v939 = vadd.f32 %v900, %v932
      %v940 = vadd.f32 %v901, %v932
      %v941 = vadd.f32 %v902, %v932
      %v942 = vadd.f32 %v903, %v932
      %v943 = vadd.f32 %v904, %v932
      %v944 = vadd.f32 %v905, %v932
      %v945 = vadd.f32 %v906, %v932
      %v946 = vadd.f32 %v907, %v932
      %v947 = vadd.f32 %v908, %v932
      %v948 = vadd.f32 %v909, %v932
      %v949 = vadd.f32 %v910, %v932
      %v950 = vadd.f32 %v911, %v932
      %v951 = vadd.f32 %v912, %v932
      %v952 = vadd.f32 %v913, %v932
      %v953 = vadd.f32 %v914, %v932
      %v954 = vadd.f32 %v915, %v932
      %v955 = vadd.f32 %v916, %v932
      %v956 = vadd.f32 %v917, %v932
      %v957 = vadd.f32 %v918, %v932
      %v958 = vadd.f32 %v919, %v932
      %v959 = vadd.f32 %v920, %v932
      %v960 = vadd.f32 %v921, %v932
      %v961 = vadd.f32 %v922, %v932
      %v962 = vadd.f32 %v923, %v932
      %v963 = vadd.f32 %v924, %v932
      %v964 = vadd.f32 %v925, %v932
      %v965 = vadd.f32 %v926, %v932
      %v966 = vmax.f32 %v934, 0.0
      %v967 = vmax.f32 %v935, 0.0
      %v968 = vmax.f32 %v936, 0.0
      %v969 = vmax.f32 %v937, 0.0
      %v970 = vmax.f32 %v938, 0.0
      %v971 = vmax.f32 %v939, 0.0
      %v972 = vmax.f32 %v940, 0.0
      %v973 = vmax.f32 %v941, 0.0
      %v974 = vmax.f32 %v942, 0.0
      %v975 = vmax.f32 %v943, 0.0
      %v976 = vmax.f32 %v944, 0.0
      %v977 = vmax.f32 %v945, 0.0
      %v978 = vmax.f32 %v946, 0.0
      %v979 = vmax.f32 %v947, 0.0
      %v980 = vmax.f32 %v948, 0.0
      %v981 = vmax.f32 %v949, 0.0
      %v982 = vmax.f32 %v950, 0.0
      %v983 = vmax.f32 %v951, 0.0
      %v984 = vmax.f32 %v952, 0.0
      %v985 = vmax.f32 %v953, 0.0
      %v986 = vmax.f32 %v954, 0.0
      %v987 = vmax.f32 %v955, 0.0
      %v988 = vmax.f32 %v956, 0.0
      %v989 = vmax.f32 %v957, 0.0
      %v990 = vmax.f32 %v958, 0.0
      %v991 = vmax.f32 %v959, 0.0
      %v992 = vmax.f32 %v960, 0.0
      %v993 = vmax.f32 %v961, 0.0
      %v994 = vmax.f32 %v962, 0.0
      %v995 = vmax.f32 %v963, 0.0
      %v996 = vmax.f32 %v964, 0.0
      %v997 = vmax.f32 %v965, 0.0
      %998 = vst [vmem:[%s224] sm:$0xff] %v966
      %999 = vst [vmem:[%s224 + $0x8] sm:$0xff] %v967
      %1000 = vst [vmem:[%s224 + $0x10] sm:$0xff] %v968
      %1001 = vst [vmem:[%s224 + $0x18] sm:$0xff] %v969
      %1002 = vst [vmem:[%s224 + $0x20] sm:$0xff] %v970
      %1003 = vst [vmem:[%s224 + $0x28] sm:$0xff] %v971
      %1004 = vst [vmem:[%s224 + $0x30] sm:$0xff] %v972
      %1005 = vst [vmem:[%s224 + $0x38] sm:$0xff] %v973
      %1006 = vst [vmem:[%s224 + $0x40] sm:$0xff] %v974
      %1007 = vst [vmem:[%s224 + $0x48] sm:$0xff] %v975
      %1008 = vst [vmem:[%s224 + $0x50] sm:$0xff] %v976
      %1009 = vst [vmem:[%s224 + $0x58] sm:$0xff] %v977
      %1010 = vst [vmem:[%s224 + $0x60] sm:$0xff] %v978
      %1011 = vst [vmem:[%s224 + $0x68] sm:$0xff] %v979
      %1012 = vst [vmem:[%s224 + $0x70] sm:$0xff] %v980
      %1013 = vst [vmem:[%s224 + $0x78] sm:$0xff] %v981
      %1014 = vst [vmem:[%s224 + $0x80] sm:$0xff] %v982
      %1015 = vst [vmem:[%s224 + $0x88] sm:$0xff] %v983
      %1016 = vst [vmem:[%s224 + $0x90] sm:$0xff] %v984
      %1017 = vst [vmem:[%s224 + $0x98] sm:$0xff] %v985
      %1018 = vst [vmem:[%s224 + $0xa0] sm:$0xff] %v986
      %1019 = vst [vmem:[%s224 + $0xa8] sm:$0xff] %v987
      %1020 = vst [vmem:[%s224 + $0xb0] sm:$0xff] %v988
      %1021 = vst [vmem:[%s224 + $0xb8] sm:$0xff] %v989
      %1022 = vst [vmem:[%s224 + $0xc0] sm:$0xff] %v990
      %1023 = vst [vmem:[%s224 + $0xc8] sm:$0xff] %v991
      %1024 = vst [vmem:[%s224 + $0xd0] sm:$0xff] %v992
      %1025 = vst [vmem:[%s224 + $0xd8] sm:$0xff] %v993
      %1026 = vst [vmem:[%s224 + $0xe0] sm:$0xff] %v994
      %1027 = vst [vmem:[%s224 + $0xe8] sm:$0xff] %v995
      %1028 = vst [vmem:[%s224 + $0xf0] sm:$0xff] %v996
      %1029 = vst [vmem:[%s224 + $0xf8] sm:$0xff] %v997
      %p1030 = scmp.lt.s32.totalorder %s16, 1
      %s1031 = scalar_select %p1030, %s16, 1
      %s1032 = smul.addr %s1031, 32
      %s1033 = smul.addr %s1032, 8
      %s1034 = scalar_lea.vmem %s5, %s1033
      // Predicated region
      $region41: #{resnet_generator_forward.12} parent=39 // pred_check
        %p1035 = pneg %p144
      $region42: #{resnet_generator_forward.12} parent=39 // pred_check_branch
        %1037 = sbr.rel (%p1035) target = $region44
      $region43: #{resnet_generator_forward.12} parent=39 // pred_region
        _
      $region44: #{resnet_generator_forward.12} parent=39 // pred_fallthru
        _
    $region40: #{resnet_generator_forward.12} parent=5 // pred_fallthru
      _
    %p1038 = scmp.le.s32.totalorder 2, %s11
    // Predicated region
    $region45: #{resnet_generator_forward.12} parent=5 // pred_check
      %p1039 = pneg %p1038
    $region46: #{resnet_generator_forward.12} parent=5 // pred_check_branch
      %1041 = sbr.rel (%p1039) target = $region48
    $region47: #{resnet_generator_forward.12} parent=5 // pred_region
      %s1042 = ssub.s32 %s11, 2
      // Predicated region
      $region49: #{resnet_generator_forward.12} parent=47 // pred_check
        %p1043 = pneg %p150
      $region50: #{resnet_generator_forward.12} parent=47 // pred_check_branch
        %1045 = sbr.rel (%p1043) target = $region52
      $region51: #{resnet_generator_forward.12} parent=47 // pred_region
        %p1046 = scmp.lt.s32.totalorder %s17, 1
        %s1047 = scalar_select %p1046, %s17, 1
        %s1048 = smul.addr %s1047, 32
        %s1049 = smul.addr %s1048, 8
        %s1050 = scalar_lea.vmem %s5, %s1049
      $region52: #{resnet_generator_forward.12} parent=47 // pred_fallthru
        _
    $region48: #{resnet_generator_forward.12} parent=5 // pred_fallthru
      _
  $region6: #{resnet_generator_forward.12} parent=0 // loop_footer
    %s15 = sadd.s32 1, %s11
  $region7: #{resnet_generator_forward.12} parent=0 // loop_footer_branch
    %10 = sbr.rel target = $region3
  $region8: #{resnet_generator_forward.12} parent=0 // loop_exit
    _

// kernel: resnet_generator_forward.13
$region0: #{resnet_generator_forward.13}
  #allocation0 [shape = 'u32[]', space=smem, size = 0x4, offset = 0x4, fixed_abs, tag = 'smem constant byte address 0x4 - core index']
  #allocation1 [shape = 'u32[144,128]{1,0:T(1,128)}', space=vmem, size = 0x12000, scoped, tag = 'internal scratch']
  %s0 = inlined_call_operand.vmem [shape: bf16[2,256,128], index: 0, kind: input, shape index: {}]
  %s1 = inlined_call_operand.vmem [shape: bf16[128,128], index: 1, kind: input, shape index: {}]
  %s2 = inlined_call_operand.vmem [shape: f32[1,128], index: 2, kind: input, shape index: {}]
  %s3 = inlined_call_operand.vmem [shape: f32[1,128], index: 3, kind: input, shape index: {}]
  %s4 = inlined_call_operand.vmem [shape: f32[1,128], index: 4, kind: input, shape index: {}]
  %s5 = inlined_call_operand.vmem [shape: f32[2,256,128], index: 5, kind: output, shape index: {}]
  %s6 = sld [smem:[#allocation0]]
  $region53: #{resnet_generator_forward.13} parent=0
    _
  %s8 = ssub.s32 1, %s6
  %s9 = scalar_select 0, %s8, %s6
  loop: start=0, step=1, limit=4
  $region2: #{resnet_generator_forward.13} parent=0 // loop_pre_header
    _
  $region3: #{resnet_generator_forward.13} parent=0 // loop_header
    %s11 = sphi 0, %s15
    %p12 = scmp.ge.s32.totalorder %s11, 4
    %s21 = sphi 0, %s23
    %s24 = sphi 0, %s21
    %s25 = sphi 0, %s24
    %s41 = sphi 0, %s25
    %s45 = sphi 0, %s45
    %s47 = sphi 0, %s45
    %s48 = sphi 0, %s47
    %s62 = sphi 0, %s48
    %s66 = sphi 0, %s66
    %s68 = sphi 0, %s66
    %s69 = sphi 0, %s68
    %s83 = sphi 0, %s69
    %s87 = sphi 0, %s87
    %s89 = sphi 0, %s87
    %s90 = sphi 0, %s89
    %s104 = sphi 0, %s90
    %s108 = sphi 0, %s108
    %s110 = sphi 0, %s108
    %s111 = sphi 0, %s110
    %s125 = sphi 0, %s111
    %s131 = sphi 0, %s133
    %s134 = sphi 0, %s131
    %s135 = sphi 0, %s134
    %s151 = sphi 0, %s135
  $region4: #{resnet_generator_forward.13} parent=0 // loop_header_branch
    %14 = sbr.rel (%p12) target = $region8
  $region5: #{resnet_generator_forward.13} parent=0 // loop_body
    %s16 = ssub.s32 %s11, 1
    %s17 = ssub.s32 %s11, 2
    %s18 = sadd.s32 %s11, 1
    %s19 = ssub.s32 %s11, %s18
    %p20 = scmp.eq.s32.totalorder %s19, 0
    %s22 = sadd.s32 %s21, 1
    %s23 = scalar_select %p20, %s21, %s22
    %p26 = pneg %p20
    %p27 = scmp.eq.s32.totalorder %s11, 1
    %p28 = por %p26, %p27
    %p29 = scmp.ne.s32.totalorder %s21, %s24
    %p30 = scmp.eq.s32.totalorder %s11, 0
    %p31 = por %p29, %p30
    %p32 = scmp.ne.s32.totalorder %s21, %s24
    %p33 = scmp.eq.s32.totalorder %s16, 1
    %p34 = por %p32, %p33
    %p35 = scmp.ne.s32.totalorder %s24, %s25
    %p36 = scmp.eq.s32.totalorder %s16, 0
    %p37 = por %p35, %p36
    %p38 = scmp.ne.s32.totalorder %s24, %s25
    %p39 = scmp.eq.s32.totalorder %s17, 1
    %p40 = por %p38, %p39
    %p42 = scmp.ne.s32.totalorder %s25, %s41
    %p43 = scmp.eq.s32.totalorder %s17, 0
    %p44 = por %p42, %p43
    %s46 = sadd.s32 %s45, 1
    %p49 = scmp.eq.s32.totalorder %s11, 1
    %p50 = scmp.ne.s32.totalorder %s45, %s47
    %p51 = scmp.eq.s32.totalorder %s11, 0
    %p52 = por %p50, %p51
    %p53 = scmp.ne.s32.totalorder %s45, %s47
    %p54 = scmp.eq.s32.totalorder %s16, 1
    %p55 = por %p53, %p54
    %p56 = scmp.ne.s32.totalorder %s47, %s48
    %p57 = scmp.eq.s32.totalorder %s16, 0
    %p58 = por %p56, %p57
    %p59 = scmp.ne.s32.totalorder %s47, %s48
    %p60 = scmp.eq.s32.totalorder %s17, 1
    %p61 = por %p59, %p60
    %p63 = scmp.ne.s32.totalorder %s48, %s62
    %p64 = scmp.eq.s32.totalorder %s17, 0
    %p65 = por %p63, %p64
    %s67 = sadd.s32 %s66, 1
    %p70 = scmp.eq.s32.totalorder %s11, 1
    %p71 = scmp.ne.s32.totalorder %s66, %s68
    %p72 = scmp.eq.s32.totalorder %s11, 0
    %p73 = por %p71, %p72
    %p74 = scmp.ne.s32.totalorder %s66, %s68
    %p75 = scmp.eq.s32.totalorder %s16, 1
    %p76 = por %p74, %p75
    %p77 = scmp.ne.s32.totalorder %s68, %s69
    %p78 = scmp.eq.s32.totalorder %s16, 0
    %p79 = por %p77, %p78
    %p80 = scmp.ne.s32.totalorder %s68, %s69
    %p81 = scmp.eq.s32.totalorder %s17, 1
    %p82 = por %p80, %p81
    %p84 = scmp.ne.s32.totalorder %s69, %s83
    %p85 = scmp.eq.s32.totalorder %s17, 0
    %p86 = por %p84, %p85
    %s88 = sadd.s32 %s87, 1
    %p91 = scmp.eq.s32.totalorder %s11, 1
    %p92 = scmp.ne.s32.totalorder %s87, %s89
    %p93 = scmp.eq.s32.totalorder %s11, 0
    %p94 = por %p92, %p93
    %p95 = scmp.ne.s32.totalorder %s87, %s89
    %p96 = scmp.eq.s32.totalorder %s16, 1
    %p97 = por %p95, %p96
    %p98 = scmp.ne.s32.totalorder %s89, %s90
    %p99 = scmp.eq.s32.totalorder %s16, 0
    %p100 = por %p98, %p99
    %p101 = scmp.ne.s32.totalorder %s89, %s90
    %p102 = scmp.eq.s32.totalorder %s17, 1
    %p103 = por %p101, %p102
    %p105 = scmp.ne.s32.totalorder %s90, %s104
    %p106 = scmp.eq.s32.totalorder %s17, 0
    %p107 = por %p105, %p106
    %s109 = sadd.s32 %s108, 1
    %p112 = scmp.eq.s32.totalorder %s11, 1
    %p113 = scmp.ne.s32.totalorder %s108, %s110
    %p114 = scmp.eq.s32.totalorder %s11, 0
    %p115 = por %p113, %p114
    %p116 = scmp.ne.s32.totalorder %s108, %s110
    %p117 = scmp.eq.s32.totalorder %s16, 1
    %p118 = por %p116, %p117
    %p119 = scmp.ne.s32.totalorder %s110, %s111
    %p120 = scmp.eq.s32.totalorder %s16, 0
    %p121 = por %p119, %p120
    %p122 = scmp.ne.s32.totalorder %s110, %s111
    %p123 = scmp.eq.s32.totalorder %s17, 1
    %p124 = por %p122, %p123
    %p126 = scmp.ne.s32.totalorder %s111, %s125
    %p127 = scmp.eq.s32.totalorder %s17, 0
    %p128 = por %p126, %p127
    %s129 = ssub.s32 %s11, %s18
    %p130 = scmp.eq.s32.totalorder %s129, 0
    %s132 = sadd.s32 %s131, 1
    %s133 = scalar_select %p130, %s131, %s132
    %p136 = pneg %p130
    %p137 = scmp.eq.s32.totalorder %s11, 1
    %p138 = por %p136, %p137
    %p139 = scmp.ne.s32.totalorder %s131, %s134
    %p140 = scmp.eq.s32.totalorder %s11, 0
    %p141 = por %p139, %p140
    %p142 = scmp.ne.s32.totalorder %s131, %s134
    %p143 = scmp.eq.s32.totalorder %s16, 1
    %p144 = por %p142, %p143
    %p145 = scmp.ne.s32.totalorder %s134, %s135
    %p146 = scmp.eq.s32.totalorder %s16, 0
    %p147 = por %p145, %p146
    %p148 = scmp.ne.s32.totalorder %s134, %s135
    %p149 = scmp.eq.s32.totalorder %s17, 1
    %p150 = por %p148, %p149
    %p152 = scmp.ne.s32.totalorder %s135, %s151
    %p153 = scmp.eq.s32.totalorder %s17, 0
    %p154 = por %p152, %p153
    %p155 = scmp.le.s32.totalorder 1, %s11
    %p156 = scmp.lt.s32.totalorder %s11, 3
    %p157 = pnand %p155, %p156
    %p158 = pneg %p157
    // Predicated region
    $region9: #{resnet_generator_forward.13} parent=5 // pred_check
      _
    $region10: #{resnet_generator_forward.13} parent=5 // pred_check_branch
      %160 = sbr.rel (%p157) target = $region12
    $region11: #{resnet_generator_forward.13} parent=5 // pred_region
      %s161 = ssub.s32 %s11, 1
      // Predicated region
      $region13: #{resnet_generator_forward.13} parent=11 // pred_check
        %p162 = pneg %p58
      $region14: #{resnet_generator_forward.13} parent=11 // pred_check_branch
        %164 = sbr.rel (%p162) target = $region16
      $region15: #{resnet_generator_forward.13} parent=11 // pred_region
        _
      $region16: #{resnet_generator_forward.13} parent=11 // pred_fallthru
        _
      // Predicated region
      $region17: #{resnet_generator_forward.13} parent=11 // pred_check
        %p165 = pneg %p79
      $region18: #{resnet_generator_forward.13} parent=11 // pred_check_branch
        %167 = sbr.rel (%p165) target = $region20
      $region19: #{resnet_generator_forward.13} parent=11 // pred_region
        _
      $region20: #{resnet_generator_forward.13} parent=11 // pred_fallthru
        _
      // Predicated region
      $region21: #{resnet_generator_forward.13} parent=11 // pred_check
        %p168 = pneg %p100
      $region22: #{resnet_generator_forward.13} parent=11 // pred_check_branch
        %170 = sbr.rel (%p168) target = $region24
      $region23: #{resnet_generator_forward.13} parent=11 // pred_region
        _
      $region24: #{resnet_generator_forward.13} parent=11 // pred_fallthru
        _
      // Predicated region
      $region25: #{resnet_generator_forward.13} parent=11 // pred_check
        %p171 = pneg %p121
      $region26: #{resnet_generator_forward.13} parent=11 // pred_check_branch
        %173 = sbr.rel (%p171) target = $region28
      $region27: #{resnet_generator_forward.13} parent=11 // pred_region
        _
      $region28: #{resnet_generator_forward.13} parent=11 // pred_fallthru
        _
    $region12: #{resnet_generator_forward.13} parent=5 // pred_fallthru
      _
    %p174 = scmp.lt.s32.totalorder %s11, 2
    // Predicated region
    $region29: #{resnet_generator_forward.13} parent=5 // pred_check
      %p175 = pneg %p174
    $region30: #{resnet_generator_forward.13} parent=5 // pred_check_branch
      %177 = sbr.rel (%p175) target = $region32
    $region31: #{resnet_generator_forward.13} parent=5 // pred_region
      // Predicated region
      $region33: #{resnet_generator_forward.13} parent=31 // pred_check
        %p178 = pneg %p31
      $region34: #{resnet_generator_forward.13} parent=31 // pred_check_branch
        %180 = sbr.rel (%p178) target = $region36
      $region35: #{resnet_generator_forward.13} parent=31 // pred_region
        %p181 = scmp.lt.s32.totalorder %s11, 1
        %s182 = scalar_select %p181, %s11, 1
        %s183 = smul.addr %s182, 32
        %s184 = smul.addr %s183, 4
        %s185 = scalar_lea.vmem %s0, %s184
      $region36: #{resnet_generator_forward.13} parent=31 // pred_fallthru
        _
    $region32: #{resnet_generator_forward.13} parent=5 // pred_fallthru
      _
    %p186 = scmp.le.s32.totalorder 1, %s11
    %p187 = scmp.lt.s32.totalorder %s11, 3
    %p188 = pnand %p186, %p187
    %p189 = pneg %p188
    // Predicated region
    $region37: #{resnet_generator_forward.13} parent=5 // pred_check
      _
    $region38: #{resnet_generator_forward.13} parent=5 // pred_check_branch
      %191 = sbr.rel (%p188) target = $region40
    $region39: #{resnet_generator_forward.13} parent=5 // pred_region
      %s192 = ssub.s32 %s11, 1
      %p193 = scmp.lt.s32.totalorder %s16, 1
      %s194 = scalar_select %p193, %s16, 1
      %s195 = smul.addr %s194, 32
      %s196 = smul.addr %s195, 4
      %s197 = scalar_lea.vmem %s0, %s196
      %p198 = pneg %p37
      %p199 = pneg %p34
      %p200 = pneg %p58
      %p201 = pneg %p55
      %p202 = pneg %p79
      %p203 = pneg %p76
      %p204 = pneg %p100
      %p205 = pneg %p97
      %p206 = pneg %p121
      %p207 = pneg %p118
      %p208 = pneg %p147
      %p209 = pneg %p144
      %p210 = scmp.lt.s32.totalorder %s16, 1
      %s211 = scalar_select %p210, %s16, 1
      %s212 = smul.addr %s211, 32
      %s213 = smul.addr %s212, 8
      %s214 = scalar_lea.vmem %s5, %s213
      %p215 = scmp.lt.s32.totalorder %s16, 1
      %s216 = scalar_select %p215, %s16, 1
      %s217 = smul.addr %s216, 32
      %s218 = smul.addr %s217, 4
      %s219 = scalar_lea.vmem %s0, %s218
      %p220 = scmp.lt.s32.totalorder %s16, 1
      %s221 = scalar_select %p220, %s16, 1
      %s222 = smul.addr %s221, 32
      %s223 = smul.addr %s222, 8
      %s224 = scalar_lea.vmem %s5, %s223
      %v226 = vld [vmem:[%s219] sm:$0xf]
      %v227 = vld [vmem:[%s219 + $0x4] sm:$0xf]
      %v228 = vld [vmem:[%s219 + $0x8] sm:$0xf]
      %v229 = vld [vmem:[%s219 + $0xc] sm:$0xf]
      %v230 = vld [vmem:[%s219 + $0x10] sm:$0xf]
      %v231 = vld [vmem:[%s219 + $0x14] sm:$0xf]
      %v232 = vld [vmem:[%s219 + $0x18] sm:$0xf]
      %v233 = vld [vmem:[%s219 + $0x1c] sm:$0xf]
      %v234 = vld [vmem:[%s219 + $0x20] sm:$0xf]
      %v235 = vld [vmem:[%s219 + $0x24] sm:$0xf]
      %v236 = vld [vmem:[%s219 + $0x28] sm:$0xf]
      %v237 = vld [vmem:[%s219 + $0x2c] sm:$0xf]
      %v238 = vld [vmem:[%s219 + $0x30] sm:$0xf]
      %v239 = vld [vmem:[%s219 + $0x34] sm:$0xf]
      %v240 = vld [vmem:[%s219 + $0x38] sm:$0xf]
      %v241 = vld [vmem:[%s219 + $0x3c] sm:$0xf]
      %v242 = vld [vmem:[%s219 + $0x40] sm:$0xf]
      %v243 = vld [vmem:[%s219 + $0x44] sm:$0xf]
      %v244 = vld [vmem:[%s219 + $0x48] sm:$0xf]
      %v245 = vld [vmem:[%s219 + $0x4c] sm:$0xf]
      %v246 = vld [vmem:[%s219 + $0x50] sm:$0xf]
      %v247 = vld [vmem:[%s219 + $0x54] sm:$0xf]
      %v248 = vld [vmem:[%s219 + $0x58] sm:$0xf]
      %v249 = vld [vmem:[%s219 + $0x5c] sm:$0xf]
      %v250 = vld [vmem:[%s219 + $0x60] sm:$0xf]
      %v251 = vld [vmem:[%s219 + $0x64] sm:$0xf]
      %v252 = vld [vmem:[%s219 + $0x68] sm:$0xf]
      %v253 = vld [vmem:[%s219 + $0x6c] sm:$0xf]
      %v254 = vld [vmem:[%s219 + $0x70] sm:$0xf]
      %v255 = vld [vmem:[%s219 + $0x74] sm:$0xf]
      %v256 = vld [vmem:[%s219 + $0x78] sm:$0xf]
      %v257 = vld [vmem:[%s219 + $0x7c] sm:$0xf]
      %v258 = vld [vmem:[%s1] sm:$0xf]
      %v259 = vld [vmem:[%s1 + $0x4] sm:$0xf]
      %v260 = vld [vmem:[%s1 + $0x8] sm:$0xf]
      %v261 = vld [vmem:[%s1 + $0xc] sm:$0xf]
      %v262 = vld [vmem:[%s1 + $0x10] sm:$0xf]
      %v263 = vld [vmem:[%s1 + $0x14] sm:$0xf]
      %v264 = vld [vmem:[%s1 + $0x18] sm:$0xf]
      %v265 = vld [vmem:[%s1 + $0x1c] sm:$0xf]
      %v266 = vld [vmem:[%s1 + $0x20] sm:$0xf]
      %v267 = vld [vmem:[%s1 + $0x24] sm:$0xf]
      %v268 = vld [vmem:[%s1 + $0x28] sm:$0xf]
      %v269 = vld [vmem:[%s1 + $0x2c] sm:$0xf]
      %v270 = vld [vmem:[%s1 + $0x30] sm:$0xf]
      %v271 = vld [vmem:[%s1 + $0x34] sm:$0xf]
      %v272 = vld [vmem:[%s1 + $0x38] sm:$0xf]
      %v273 = vld [vmem:[%s1 + $0x3c] sm:$0xf]
      %v274 = vld [vmem:[%s2] sm:$0x1]
      %v276 = vlaneseq
      %v277 = vshrl.u32 %v276, 7
      %v278 = vsub.s32 0, %v277
      %v279 = vrot.slane %v274, %v278
      %v313 = vunpack.c.l.b16 %v226
      %v314 = vunpack.c.l.b16 %v227
      %v315 = vunpack.c.l.b16 %v228
      %v316 = vunpack.c.l.b16 %v229
      %v317 = vunpack.c.l.b16 %v230
      %v318 = vunpack.c.l.b16 %v231
      %v319 = vunpack.c.l.b16 %v232
      %v320 = vunpack.c.l.b16 %v233
      %v321 = vunpack.c.l.b16 %v234
      %v322 = vunpack.c.l.b16 %v235
      %v323 = vunpack.c.l.b16 %v236
      %v324 = vunpack.c.l.b16 %v237
      %v325 = vunpack.c.l.b16 %v238
      %v326 = vunpack.c.l.b16 %v239
      %v327 = vunpack.c.l.b16 %v240
      %v328 = vunpack.c.l.b16 %v241
      %v329 = vunpack.c.l.b16 %v242
      %v330 = vunpack.c.l.b16 %v243
      %v331 = vunpack.c.l.b16 %v244
      %v332 = vunpack.c.l.b16 %v245
      %v333 = vunpack.c.l.b16 %v246
      %v334 = vunpack.c.l.b16 %v247
      %v335 = vunpack.c.l.b16 %v248
      %v336 = vunpack.c.l.b16 %v249
      %v337 = vunpack.c.l.b16 %v250
      %v338 = vunpack.c.l.b16 %v251
      %v339 = vunpack.c.l.b16 %v252
      %v340 = vunpack.c.l.b16 %v253
      %v341 = vunpack.c.l.b16 %v254
      %v342 = vunpack.c.l.b16 %v255
      %v343 = vunpack.c.l.b16 %v256
      %v344 = vunpack.c.l.b16 %v257
      %v345 = vpack.c.b16 %v314, %v313
      %v346 = vpack.c.b16 %v316, %v315
      %v347 = vpack.c.b16 %v318, %v317
      %v348 = vpack.c.b16 %v320, %v319
      %v349 = vpack.c.b16 %v322, %v321
      %v350 = vpack.c.b16 %v324, %v323
      %v351 = vpack.c.b16 %v326, %v325
      %v352 = vpack.c.b16 %v328, %v327
      %v353 = vpack.c.b16 %v330, %v329
      %v354 = vpack.c.b16 %v332, %v331
      %v355 = vpack.c.b16 %v334, %v333
      %v356 = vpack.c.b16 %v336, %v335
      %v357 = vpack.c.b16 %v338, %v337
      %v358 = vpack.c.b16 %v340, %v339
      %v359 = vpack.c.b16 %v342, %v341
      %v360 = vpack.c.b16 %v344, %v343
      %v393 = vunpack.c.l.b16 %v258
      %v394 = vunpack.c.l.b16 %v259
      %v395 = vunpack.c.l.b16 %v260
      %v396 = vunpack.c.l.b16 %v261
      %v397 = vunpack.c.l.b16 %v262
      %v398 = vunpack.c.l.b16 %v263
      %v399 = vunpack.c.l.b16 %v264
      %v400 = vunpack.c.l.b16 %v265
      %v401 = vunpack.c.l.b16 %v266
      %v402 = vunpack.c.l.b16 %v267
      %v403 = vunpack.c.l.b16 %v268
      %v404 = vunpack.c.l.b16 %v269
      %v405 = vunpack.c.l.b16 %v270
      %v406 = vunpack.c.l.b16 %v271
      %v407 = vunpack.c.l.b16 %v272
      %v408 = vunpack.c.l.b16 %v273
      %v409 = vpack.c.b16 %v394, %v393
      %v410 = vpack.c.b16 %v396, %v395
      %v411 = vpack.c.b16 %v398, %v397
      %v412 = vpack.c.b16 %v400, %v399
      %v413 = vpack.c.b16 %v402, %v401
      %v414 = vpack.c.b16 %v404, %v403
      %v415 = vpack.c.b16 %v406, %v405
      %v416 = vpack.c.b16 %v408, %v407
      %425 = vmatprep.subr.bf16.mxu0 0
      %426 = vmatpush1.bf16.msra.mxu0 %v409
      %427 = vmatprep.subr.bf16.mxu0 0
      %428 = vmatpush1.bf16.msra.mxu0 %v410
      %429 = vmatprep.subr.bf16.mxu0 0
      %430 = vmatpush1.bf16.msra.mxu0 %v411
      %431 = vmatprep.subr.bf16.mxu0 0
      %432 = vmatpush1.bf16.msra.mxu0 %v412
      %433 = vmatprep.subr.bf16.mxu0 0
      %434 = vmatpush1.bf16.msra.mxu0 %v413
      %435 = vmatprep.subr.bf16.mxu0 0
      %436 = vmatpush1.bf16.msra.mxu0 %v414
      %437 = vmatprep.subr.bf16.mxu0 0
      %438 = vmatpush1.bf16.msra.mxu0 %v415
      %439 = vmatprep.subr.bf16.mxu0 0
      %440 = vmatpush1.bf16.msra.mxu0 %v416
      %441 = vmatprep.subr.bf16.mxu0 0
      %442 = vmatpush1.bf16.msra.mxu0 0
      %443 = vmatprep.subr.bf16.mxu0 0
      %444 = vmatpush1.bf16.msra.mxu0 0
      %445 = vmatprep.subr.bf16.mxu0 0
      %446 = vmatpush1.bf16.msra.mxu0 0
      %447 = vmatprep.subr.bf16.mxu0 0
      %448 = vmatpush1.bf16.msra.mxu0 0
      %449 = vmatprep.subr.bf16.mxu0 0
      %450 = vmatpush1.bf16.msra.mxu0 0
      %451 = vmatprep.subr.bf16.mxu0 0
      %452 = vmatpush1.bf16.msra.mxu0 0
      %453 = vmatprep.subr.bf16.mxu0 0
      %454 = vmatpush1.bf16.msra.mxu0 0
      %455 = vmatprep.subr.bf16.mxu0 0
      %456 = vmatpush1.bf16.msra.mxu0 0
      %457 = vmatprep.mubr.bf16.mxu0 0
      %458 = vmatmul.mubr.bf16.gmra.mrb[0].mxu0 %v345
      %v459 = vpop.f32.mrb[0].mxu0
      %v460 = vadd.f32 %v279, %v459
      %v461 = vpop.f32.mrb[0].mxu0
      %v462 = vpop.f32.mrb[0].mxu0
      %v463 = vadd.f32 %v279, %v462
      %v464 = vpop.f32.mrb[0].mxu0
      %465 = vmatprep.mubr.bf16.mxu0 0
      %466 = vmatmul.mubr.bf16.gmra.mrb[0].mxu0 %v346
      %v467 = vpop.f32.mrb[0].mxu0
      %v468 = vadd.f32 %v279, %v467
      %v469 = vpop.f32.mrb[0].mxu0
      %v470 = vpop.f32.mrb[0].mxu0
      %v471 = vadd.f32 %v279, %v470
      %v472 = vpop.f32.mrb[0].mxu0
      %473 = vmatprep.mubr.bf16.mxu0 0
      %474 = vmatmul.mubr.bf16.gmra.mrb[0].mxu0 %v347
      %v475 = vpop.f32.mrb[0].mxu0
      %v476 = vadd.f32 %v279, %v475
      %v477 = vpop.f32.mrb[0].mxu0
      %v478 = vpop.f32.mrb[0].mxu0
      %v479 = vadd.f32 %v279, %v478
      %v480 = vpop.f32.mrb[0].mxu0
      %481 = vmatprep.mubr.bf16.mxu0 0
      %482 = vmatmul.mubr.bf16.gmra.mrb[0].mxu0 %v348
      %v483 = vpop.f32.mrb[0].mxu0
      %v484 = vadd.f32 %v279, %v483
      %v485 = vpop.f32.mrb[0].mxu0
      %v486 = vpop.f32.mrb[0].mxu0
      %v487 = vadd.f32 %v279, %v486
      %v488 = vpop.f32.mrb[0].mxu0
      %489 = vmatprep.mubr.bf16.mxu0 0
      %490 = vmatmul.mubr.bf16.gmra.mrb[0].mxu0 %v349
      %v491 = vpop.f32.mrb[0].mxu0
      %v492 = vadd.f32 %v279, %v491
      %v493 = vpop.f32.mrb[0].mxu0
      %v494 = vpop.f32.mrb[0].mxu0
      %v495 = vadd.f32 %v279, %v494
      %v496 = vpop.f32.mrb[0].mxu0
      %497 = vmatprep.mubr.bf16.mxu0 0
      %498 = vmatmul.mubr.bf16.gmra.mrb[0].mxu0 %v350
      %v499 = vpop.f32.mrb[0].mxu0
      %v500 = vadd.f32 %v279, %v499
      %v501 = vpop.f32.mrb[0].mxu0
      %v502 = vpop.f32.mrb[0].mxu0
      %v503 = vadd.f32 %v279, %v502
      %v504 = vpop.f32.mrb[0].mxu0
      %505 = vmatprep.mubr.bf16.mxu0 0
      %506 = vmatmul.mubr.bf16.gmra.mrb[0].mxu0 %v351
      %v507 = vpop.f32.mrb[0].mxu0
      %v508 = vadd.f32 %v279, %v507
      %v509 = vpop.f32.mrb[0].mxu0
      %v510 = vpop.f32.mrb[0].mxu0
      %v511 = vadd.f32 %v279, %v510
      %v512 = vpop.f32.mrb[0].mxu0
      %513 = vmatprep.mubr.bf16.mxu0 0
      %514 = vmatmul.mubr.bf16.gmra.mrb[0].mxu0 %v352
      %v515 = vpop.f32.mrb[0].mxu0
      %v516 = vadd.f32 %v279, %v515
      %v517 = vpop.f32.mrb[0].mxu0
      %v518 = vpop.f32.mrb[0].mxu0
      %v519 = vadd.f32 %v279, %v518
      %v520 = vpop.f32.mrb[0].mxu0
      %521 = vmatprep.mubr.bf16.mxu0 0
      %522 = vmatmul.mubr.bf16.gmra.mrb[0].mxu0 %v353
      %v523 = vpop.f32.mrb[0].mxu0
      %v524 = vadd.f32 %v279, %v523
      %v525 = vpop.f32.mrb[0].mxu0
      %v526 = vpop.f32.mrb[0].mxu0
      %v527 = vadd.f32 %v279, %v526
      %v528 = vpop.f32.mrb[0].mxu0
      %529 = vmatprep.mubr.bf16.mxu0 0
      %530 = vmatmul.mubr.bf16.gmra.mrb[0].mxu0 %v354
      %v531 = vpop.f32.mrb[0].mxu0
      %v532 = vadd.f32 %v279, %v531
      %v533 = vpop.f32.mrb[0].mxu0
      %v534 = vpop.f32.mrb[0].mxu0
      %v535 = vadd.f32 %v279, %v534
      %v536 = vpop.f32.mrb[0].mxu0
      %537 = vmatprep.mubr.bf16.mxu0 0
      %538 = vmatmul.mubr.bf16.gmra.mrb[0].mxu0 %v355
      %v539 = vpop.f32.mrb[0].mxu0
      %v540 = vadd.f32 %v279, %v539
      %v541 = vpop.f32.mrb[0].mxu0
      %v542 = vpop.f32.mrb[0].mxu0
      %v543 = vadd.f32 %v279, %v542
      %v544 = vpop.f32.mrb[0].mxu0
      %545 = vmatprep.mubr.bf16.mxu0 0
      %546 = vmatmul.mubr.bf16.gmra.mrb[0].mxu0 %v356
      %v547 = vpop.f32.mrb[0].mxu0
      %v548 = vadd.f32 %v279, %v547
      %v549 = vpop.f32.mrb[0].mxu0
      %v550 = vpop.f32.mrb[0].mxu0
      %v551 = vadd.f32 %v279, %v550
      %v552 = vpop.f32.mrb[0].mxu0
      %553 = vmatprep.mubr.bf16.mxu0 0
      %554 = vmatmul.mubr.bf16.gmra.mrb[0].mxu0 %v357
      %v555 = vpop.f32.mrb[0].mxu0
      %v556 = vadd.f32 %v279, %v555
      %v557 = vpop.f32.mrb[0].mxu0
      %v558 = vpop.f32.mrb[0].mxu0
      %v559 = vadd.f32 %v279, %v558
      %v560 = vpop.f32.mrb[0].mxu0
      %561 = vmatprep.mubr.bf16.mxu0 0
      %562 = vmatmul.mubr.bf16.gmra.mrb[0].mxu0 %v358
      %v563 = vpop.f32.mrb[0].mxu0
      %v564 = vadd.f32 %v279, %v563
      %v565 = vpop.f32.mrb[0].mxu0
      %v566 = vpop.f32.mrb[0].mxu0
      %v567 = vadd.f32 %v279, %v566
      %v568 = vpop.f32.mrb[0].mxu0
      %569 = vmatprep.mubr.bf16.mxu0 0
      %570 = vmatmul.mubr.bf16.gmra.mrb[0].mxu0 %v359
      %v571 = vpop.f32.mrb[0].mxu0
      %v572 = vadd.f32 %v279, %v571
      %v573 = vpop.f32.mrb[0].mxu0
      %v574 = vpop.f32.mrb[0].mxu0
      %v575 = vadd.f32 %v279, %v574
      %v576 = vpop.f32.mrb[0].mxu0
      %577 = vmatprep.mubr.bf16.mxu0 0
      %578 = vmatmul.mubr.bf16.gmra.mrb[0].mxu0 %v360
      %v579 = vpop.f32.mrb[0].mxu0
      %v580 = vadd.f32 %v279, %v579
      %v581 = vpop.f32.mrb[0].mxu0
      %v582 = vpop.f32.mrb[0].mxu0
      %v583 = vadd.f32 %v279, %v582
      %v584 = vpop.f32.mrb[0].mxu0
      %585 = vdwg.mxu0
      %v586 = vadd.f32 %v460, %v463
      %v587 = vadd.f32 %v586, %v468
      %v588 = vadd.f32 %v587, %v471
      %v589 = vadd.f32 %v588, %v476
      %v590 = vadd.f32 %v589, %v479
      %v591 = vadd.f32 %v590, %v484
      %v592 = vadd.f32 %v591, %v487
      %v593 = vadd.f32 %v592, %v492
      %v594 = vadd.f32 %v593, %v495
      %v595 = vadd.f32 %v594, %v500
      %v596 = vadd.f32 %v595, %v503
      %v597 = vadd.f32 %v596, %v508
      %v598 = vadd.f32 %v597, %v511
      %v599 = vadd.f32 %v598, %v516
      %v600 = vadd.f32 %v599, %v519
      %v601 = vadd.f32 %v600, %v524
      %v602 = vadd.f32 %v601, %v527
      %v603 = vadd.f32 %v602, %v532
      %v604 = vadd.f32 %v603, %v535
      %v605 = vadd.f32 %v604, %v540
      %v606 = vadd.f32 %v605, %v543
      %v607 = vadd.f32 %v606, %v548
      %v608 = vadd.f32 %v607, %v551
      %v609 = vadd.f32 %v608, %v556
      %v610 = vadd.f32 %v609, %v559
      %v611 = vadd.f32 %v610, %v564
      %v612 = vadd.f32 %v611, %v567
      %v613 = vadd.f32 %v612, %v572
      %v614 = vadd.f32 %v613, %v575
      %v615 = vadd.f32 %v614, %v580
      %v616 = vadd.f32 %v615, %v583
      %v617 = vrot.slane %v616, 4
      %v618 = vadd.f32 %v616, %v617
      %v619 = vrot.slane %v618, 2
      %v620 = vadd.f32 %v618, %v619
      %v621 = vrot.slane %v620, 1
      %v622 = vadd.f32 %v620, %v621
      %v623 = vmul.f32 %v622, 0.00390625
      %v624 = vsub.f32 %v460, %v623
      %v625 = vsub.f32 %v463, %v623
      %v626 = vsub.f32 %v468, %v623
      %v627 = vsub.f32 %v471, %v623
      %v628 = vsub.f32 %v476, %v623
      %v629 = vsub.f32 %v479, %v623
      %v630 = vsub.f32 %v484, %v623
      %v631 = vsub.f32 %v487, %v623
      %v632 = vsub.f32 %v492, %v623
      %v633 = vsub.f32 %v495, %v623
      %v634 = vsub.f32 %v500, %v623
      %v635 = vsub.f32 %v503, %v623
      %v636 = vsub.f32 %v508, %v623
      %v637 = vsub.f32 %v511, %v623
      %v638 = vsub.f32 %v516, %v623
      %v639 = vsub.f32 %v519, %v623
      %v640 = vsub.f32 %v524, %v623
      %v641 = vsub.f32 %v527, %v623
      %v642 = vsub.f32 %v532, %v623
      %v643 = vsub.f32 %v535, %v623
      %v644 = vsub.f32 %v540, %v623
      %v645 = vsub.f32 %v543, %v623
      %v646 = vsub.f32 %v548, %v623
      %v647 = vsub.f32 %v551, %v623
      %v648 = vsub.f32 %v556, %v623
      %v649 = vsub.f32 %v559, %v623
      %v650 = vsub.f32 %v564, %v623
      %v651 = vsub.f32 %v567, %v623
      %v652 = vsub.f32 %v572, %v623
      %v653 = vsub.f32 %v575, %v623
      %v654 = vsub.f32 %v580, %v623
      %v655 = vsub.f32 %v583, %v623
      %v656 = vmul.f32 %v624, %v624
      %v657 = vmul.f32 %v625, %v625
      %v658 = vmul.f32 %v626, %v626
      %v659 = vmul.f32 %v627, %v627
      %v660 = vmul.f32 %v628, %v628
      %v661 = vmul.f32 %v629, %v629
      %v662 = vmul.f32 %v630, %v630
      %v663 = vmul.f32 %v631, %v631
      %v664 = vmul.f32 %v632, %v632
      %v665 = vmul.f32 %v633, %v633
      %v666 = vmul.f32 %v634, %v634
      %v667 = vmul.f32 %v635, %v635
      %v668 = vmul.f32 %v636, %v636
      %v669 = vmul.f32 %v637, %v637
      %v670 = vmul.f32 %v638, %v638
      %v671 = vmul.f32 %v639, %v639
      %v672 = vmul.f32 %v640, %v640
      %v673 = vmul.f32 %v641, %v641
      %v674 = vmul.f32 %v642, %v642
      %v675 = vmul.f32 %v643, %v643
      %v676 = vmul.f32 %v644, %v644
      %v677 = vmul.f32 %v645, %v645
      %v678 = vmul.f32 %v646, %v646
      %v679 = vmul.f32 %v647, %v647
      %v680 = vmul.f32 %v648, %v648
      %v681 = vmul.f32 %v649, %v649
      %v682 = vmul.f32 %v650, %v650
      %v683 = vmul.f32 %v651, %v651
      %v684 = vmul.f32 %v652, %v652
      %v685 = vmul.f32 %v653, %v653
      %v686 = vmul.f32 %v654, %v654
      %v687 = vmul.f32 %v655, %v655
      %v688 = vadd.f32 %v656, %v657
      %v689 = vadd.f32 %v688, %v658
      %v690 = vadd.f32 %v689, %v659
      %v691 = vadd.f32 %v690, %v660
      %v692 = vadd.f32 %v691, %v661
      %v693 = vadd.f32 %v692, %v662
      %v694 = vadd.f32 %v693, %v663
      %v695 = vadd.f32 %v694, %v664
      %v696 = vadd.f32 %v695, %v665
      %v697 = vadd.f32 %v696, %v666
      %v698 = vadd.f32 %v697, %v667
      %v699 = vadd.f32 %v698, %v668
      %v700 = vadd.f32 %v699, %v669
      %v701 = vadd.f32 %v700, %v670
      %v702 = vadd.f32 %v701, %v671
      %v703 = vadd.f32 %v702, %v672
      %v704 = vadd.f32 %v703, %v673
      %v705 = vadd.f32 %v704, %v674
      %v706 = vadd.f32 %v705, %v675
      %v707 = vadd.f32 %v706, %v676
      %v708 = vadd.f32 %v707, %v677
      %v709 = vadd.f32 %v708, %v678
      %v710 = vadd.f32 %v709, %v679
      %v711 = vadd.f32 %v710, %v680
      %v712 = vadd.f32 %v711, %v681
      %v713 = vadd.f32 %v712, %v682
      %v714 = vadd.f32 %v713, %v683
      %v715 = vadd.f32 %v714, %v684
      %v716 = vadd.f32 %v715, %v685
      %v717 = vadd.f32 %v716, %v686
      %v718 = vadd.f32 %v717, %v687
      %v719 = vrot.slane %v718, 4
      %v720 = vadd.f32 %v718, %v719
      %v721 = vrot.slane %v720, 2
      %v722 = vadd.f32 %v720, %v721
      %v723 = vrot.slane %v722, 1
      %v724 = vadd.f32 %v722, %v723
      %v725 = vmul.f32 %v724, 0.00390625
      %v726 = vadd.f32 %v725, 1e-05
      %v727 = vrsqrt.pop %v726
      %v728 = vmul.f32 %v624, %v727
      %v729 = vmul.f32 %v625, %v727
      %v730 = vmul.f32 %v626, %v727
      %v731 = vmul.f32 %v627, %v727
      %v732 = vmul.f32 %v628, %v727
      %v733 = vmul.f32 %v629, %v727
      %v734 = vmul.f32 %v630, %v727
      %v735 = vmul.f32 %v631, %v727
      %v736 = vmul.f32 %v632, %v727
      %v737 = vmul.f32 %v633, %v727
      %v738 = vmul.f32 %v634, %v727
      %v739 = vmul.f32 %v635, %v727
      %v740 = vmul.f32 %v636, %v727
      %v741 = vmul.f32 %v637, %v727
      %v742 = vmul.f32 %v638, %v727
      %v743 = vmul.f32 %v639, %v727
      %v744 = vmul.f32 %v640, %v727
      %v745 = vmul.f32 %v641, %v727
      %v746 = vmul.f32 %v642, %v727
      %v747 = vmul.f32 %v643, %v727
      %v748 = vmul.f32 %v644, %v727
      %v749 = vmul.f32 %v645, %v727
      %v750 = vmul.f32 %v646, %v727
      %v751 = vmul.f32 %v647, %v727
      %v752 = vmul.f32 %v648, %v727
      %v753 = vmul.f32 %v649, %v727
      %v754 = vmul.f32 %v650, %v727
      %v755 = vmul.f32 %v651, %v727
      %v756 = vmul.f32 %v652, %v727
      %v757 = vmul.f32 %v653, %v727
      %v758 = vmul.f32 %v654, %v727
      %v759 = vmul.f32 %v655, %v727
      %v760 = vld [vmem:[%s3] sm:$0x1]
      %v762 = vlaneseq
      %v763 = vshrl.u32 %v762, 7
      %v764 = vsub.s32 0, %v763
      %v765 = vrot.slane %v760, %v764
      %v767 = vmul.f32 %v728, %v765
      %v768 = vmul.f32 %v729, %v765
      %v769 = vmul.f32 %v730, %v765
      %v770 = vmul.f32 %v731, %v765
      %v771 = vmul.f32 %v732, %v765
      %v772 = vmul.f32 %v733, %v765
      %v773 = vmul.f32 %v734, %v765
      %v774 = vmul.f32 %v735, %v765
      %v775 = vmul.f32 %v736, %v765
      %v776 = vmul.f32 %v737, %v765
      %v777 = vmul.f32 %v738, %v765
      %v778 = vmul.f32 %v739, %v765
      %v779 = vmul.f32 %v740, %v765
      %v780 = vmul.f32 %v741, %v765
      %v781 = vmul.f32 %v742, %v765
      %v782 = vmul.f32 %v743, %v765
      %v783 = vmul.f32 %v744, %v765
      %v784 = vmul.f32 %v745, %v765
      %v785 = vmul.f32 %v746, %v765
      %v786 = vmul.f32 %v747, %v765
      %v787 = vmul.f32 %v748, %v765
      %v788 = vmul.f32 %v749, %v765
      %v789 = vmul.f32 %v750, %v765
      %v790 = vmul.f32 %v751, %v765
      %v791 = vmul.f32 %v752, %v765
      %v792 = vmul.f32 %v753, %v765
      %v793 = vmul.f32 %v754, %v765
      %v794 = vmul.f32 %v755, %v765
      %v795 = vmul.f32 %v756, %v765
      %v796 = vmul.f32 %v757, %v765
      %v797 = vmul.f32 %v758, %v765
      %v798 = vmul.f32 %v759, %v765
      %v799 = vld [vmem:[%s4] sm:$0x1]
      %v801 = vlaneseq
      %v802 = vshrl.u32 %v801, 7
      %v803 = vsub.s32 0, %v802
      %v804 = vrot.slane %v799, %v803
      %v806 = vadd.f32 %v767, %v804
      %v807 = vadd.f32 %v768, %v804
      %v808 = vadd.f32 %v769, %v804
      %v809 = vadd.f32 %v770, %v804
      %v810 = vadd.f32 %v771, %v804
      %v811 = vadd.f32 %v772, %v804
      %v812 = vadd.f32 %v773, %v804
      %v813 = vadd.f32 %v774, %v804
      %v814 = vadd.f32 %v775, %v804
      %v815 = vadd.f32 %v776, %v804
      %v816 = vadd.f32 %v777, %v804
      %v817 = vadd.f32 %v778, %v804
      %v818 = vadd.f32 %v779, %v804
      %v819 = vadd.f32 %v780, %v804
      %v820 = vadd.f32 %v781, %v804
      %v821 = vadd.f32 %v782, %v804
      %v822 = vadd.f32 %v783, %v804
      %v823 = vadd.f32 %v784, %v804
      %v824 = vadd.f32 %v785, %v804
      %v825 = vadd.f32 %v786, %v804
      %v826 = vadd.f32 %v787, %v804
      %v827 = vadd.f32 %v788, %v804
      %v828 = vadd.f32 %v789, %v804
      %v829 = vadd.f32 %v790, %v804
      %v830 = vadd.f32 %v791, %v804
      %v831 = vadd.f32 %v792, %v804
      %v832 = vadd.f32 %v793, %v804
      %v833 = vadd.f32 %v794, %v804
      %v834 = vadd.f32 %v795, %v804
      %v835 = vadd.f32 %v796, %v804
      %v836 = vadd.f32 %v797, %v804
      %v837 = vadd.f32 %v798, %v804
      %v838 = vmax.f32 %v806, 0.0
      %v839 = vmax.f32 %v807, 0.0
      %v840 = vmax.f32 %v808, 0.0
      %v841 = vmax.f32 %v809, 0.0
      %v842 = vmax.f32 %v810, 0.0
      %v843 = vmax.f32 %v811, 0.0
      %v844 = vmax.f32 %v812, 0.0
      %v845 = vmax.f32 %v813, 0.0
      %v846 = vmax.f32 %v814, 0.0
      %v847 = vmax.f32 %v815, 0.0
      %v848 = vmax.f32 %v816, 0.0
      %v849 = vmax.f32 %v817, 0.0
      %v850 = vmax.f32 %v818, 0.0
      %v851 = vmax.f32 %v819, 0.0
      %v852 = vmax.f32 %v820, 0.0
      %v853 = vmax.f32 %v821, 0.0
      %v854 = vmax.f32 %v822, 0.0
      %v855 = vmax.f32 %v823, 0.0
      %v856 = vmax.f32 %v824, 0.0
      %v857 = vmax.f32 %v825, 0.0
      %v858 = vmax.f32 %v826, 0.0
      %v859 = vmax.f32 %v827, 0.0
      %v860 = vmax.f32 %v828, 0.0
      %v861 = vmax.f32 %v829, 0.0
      %v862 = vmax.f32 %v830, 0.0
      %v863 = vmax.f32 %v831, 0.0
      %v864 = vmax.f32 %v832, 0.0
      %v865 = vmax.f32 %v833, 0.0
      %v866 = vmax.f32 %v834, 0.0
      %v867 = vmax.f32 %v835, 0.0
      %v868 = vmax.f32 %v836, 0.0
      %v869 = vmax.f32 %v837, 0.0
      %870 = vst [vmem:[%s224] sm:$0xff] %v838
      %871 = vst [vmem:[%s224 + $0x8] sm:$0xff] %v839
      %872 = vst [vmem:[%s224 + $0x10] sm:$0xff] %v840
      %873 = vst [vmem:[%s224 + $0x18] sm:$0xff] %v841
      %874 = vst [vmem:[%s224 + $0x20] sm:$0xff] %v842
      %875 = vst [vmem:[%s224 + $0x28] sm:$0xff] %v843
      %876 = vst [vmem:[%s224 + $0x30] sm:$0xff] %v844
      %877 = vst [vmem:[%s224 + $0x38] sm:$0xff] %v845
      %878 = vst [vmem:[%s224 + $0x40] sm:$0xff] %v846
      %879 = vst [vmem:[%s224 + $0x48] sm:$0xff] %v847
      %880 = vst [vmem:[%s224 + $0x50] sm:$0xff] %v848
      %881 = vst [vmem:[%s224 + $0x58] sm:$0xff] %v849
      %882 = vst [vmem:[%s224 + $0x60] sm:$0xff] %v850
      %883 = vst [vmem:[%s224 + $0x68] sm:$0xff] %v851
      %884 = vst [vmem:[%s224 + $0x70] sm:$0xff] %v852
      %885 = vst [vmem:[%s224 + $0x78] sm:$0xff] %v853
      %886 = vst [vmem:[%s224 + $0x80] sm:$0xff] %v854
      %887 = vst [vmem:[%s224 + $0x88] sm:$0xff] %v855
      %888 = vst [vmem:[%s224 + $0x90] sm:$0xff] %v856
      %889 = vst [vmem:[%s224 + $0x98] sm:$0xff] %v857
      %890 = vst [vmem:[%s224 + $0xa0] sm:$0xff] %v858
      %891 = vst [vmem:[%s224 + $0xa8] sm:$0xff] %v859
      %892 = vst [vmem:[%s224 + $0xb0] sm:$0xff] %v860
      %893 = vst [vmem:[%s224 + $0xb8] sm:$0xff] %v861
      %894 = vst [vmem:[%s224 + $0xc0] sm:$0xff] %v862
      %895 = vst [vmem:[%s224 + $0xc8] sm:$0xff] %v863
      %896 = vst [vmem:[%s224 + $0xd0] sm:$0xff] %v864
      %897 = vst [vmem:[%s224 + $0xd8] sm:$0xff] %v865
      %898 = vst [vmem:[%s224 + $0xe0] sm:$0xff] %v866
      %899 = vst [vmem:[%s224 + $0xe8] sm:$0xff] %v867
      %900 = vst [vmem:[%s224 + $0xf0] sm:$0xff] %v868
      %901 = vst [vmem:[%s224 + $0xf8] sm:$0xff] %v869
      %p902 = scmp.lt.s32.totalorder %s16, 1
      %s903 = scalar_select %p902, %s16, 1
      %s904 = smul.addr %s903, 32
      %s905 = smul.addr %s904, 8
      %s906 = scalar_lea.vmem %s5, %s905
      // Predicated region
      $region41: #{resnet_generator_forward.13} parent=39 // pred_check
        %p907 = pneg %p144
      $region42: #{resnet_generator_forward.13} parent=39 // pred_check_branch
        %909 = sbr.rel (%p907) target = $region44
      $region43: #{resnet_generator_forward.13} parent=39 // pred_region
        _
      $region44: #{resnet_generator_forward.13} parent=39 // pred_fallthru
        _
    $region40: #{resnet_generator_forward.13} parent=5 // pred_fallthru
      _
    %p910 = scmp.le.s32.totalorder 2, %s11
    // Predicated region
    $region45: #{resnet_generator_forward.13} parent=5 // pred_check
      %p911 = pneg %p910
    $region46: #{resnet_generator_forward.13} parent=5 // pred_check_branch
      %913 = sbr.rel (%p911) target = $region48
    $region47: #{resnet_generator_forward.13} parent=5 // pred_region
      %s914 = ssub.s32 %s11, 2
      // Predicated region
      $region49: #{resnet_generator_forward.13} parent=47 // pred_check
        %p915 = pneg %p150
      $region50: #{resnet_generator_forward.13} parent=47 // pred_check_branch
        %917 = sbr.rel (%p915) target = $region52
      $region51: #{resnet_generator_forward.13} parent=47 // pred_region
        %p918 = scmp.lt.s32.totalorder %s17, 1
        %s919 = scalar_select %p918, %s17, 1
        %s920 = smul.addr %s919, 32
        %s921 = smul.addr %s920, 8
        %s922 = scalar_lea.vmem %s5, %s921
      $region52: #{resnet_generator_forward.13} parent=47 // pred_fallthru
        _
    $region48: #{resnet_generator_forward.13} parent=5 // pred_fallthru
      _
  $region6: #{resnet_generator_forward.13} parent=0 // loop_footer
    %s15 = sadd.s32 1, %s11
  $region7: #{resnet_generator_forward.13} parent=0 // loop_footer_branch
    %10 = sbr.rel target = $region3
  $region8: #{resnet_generator_forward.13} parent=0 // loop_exit
    _

// kernel: resnet_generator_forward.14
$region0: #{resnet_generator_forward.14}
  #allocation0 [shape = 'u32[]', space=smem, size = 0x4, offset = 0x4, fixed_abs, tag = 'smem constant byte address 0x4 - core index']
  #allocation1 [shape = 'u32[144,128]{1,0:T(1,128)}', space=vmem, size = 0x12000, scoped, tag = 'internal scratch']
  %s0 = inlined_call_operand.vmem [shape: bf16[2,64,256], index: 0, kind: input, shape index: {}]
  %s1 = inlined_call_operand.vmem [shape: bf16[256,128], index: 1, kind: input, shape index: {}]
  %s2 = inlined_call_operand.vmem [shape: f32[1,128], index: 2, kind: input, shape index: {}]
  %s3 = inlined_call_operand.vmem [shape: f32[1,128], index: 3, kind: input, shape index: {}]
  %s4 = inlined_call_operand.vmem [shape: f32[1,128], index: 4, kind: input, shape index: {}]
  %s5 = inlined_call_operand.vmem [shape: f32[2,64,128], index: 5, kind: output, shape index: {}]
  %s6 = sld [smem:[#allocation0]]
  $region53: #{resnet_generator_forward.14} parent=0
    _
  %s8 = ssub.s32 1, %s6
  %s9 = scalar_select 0, %s8, %s6
  loop: start=0, step=1, limit=4
  $region2: #{resnet_generator_forward.14} parent=0 // loop_pre_header
    _
  $region3: #{resnet_generator_forward.14} parent=0 // loop_header
    %s11 = sphi 0, %s15
    %p12 = scmp.ge.s32.totalorder %s11, 4
    %s21 = sphi 0, %s23
    %s24 = sphi 0, %s21
    %s25 = sphi 0, %s24
    %s41 = sphi 0, %s25
    %s45 = sphi 0, %s45
    %s47 = sphi 0, %s45
    %s48 = sphi 0, %s47
    %s62 = sphi 0, %s48
    %s66 = sphi 0, %s66
    %s68 = sphi 0, %s66
    %s69 = sphi 0, %s68
    %s83 = sphi 0, %s69
    %s87 = sphi 0, %s87
    %s89 = sphi 0, %s87
    %s90 = sphi 0, %s89
    %s104 = sphi 0, %s90
    %s108 = sphi 0, %s108
    %s110 = sphi 0, %s108
    %s111 = sphi 0, %s110
    %s125 = sphi 0, %s111
    %s131 = sphi 0, %s133
    %s134 = sphi 0, %s131
    %s135 = sphi 0, %s134
    %s151 = sphi 0, %s135
  $region4: #{resnet_generator_forward.14} parent=0 // loop_header_branch
    %14 = sbr.rel (%p12) target = $region8
  $region5: #{resnet_generator_forward.14} parent=0 // loop_body
    %s16 = ssub.s32 %s11, 1
    %s17 = ssub.s32 %s11, 2
    %s18 = sadd.s32 %s11, 1
    %s19 = ssub.s32 %s11, %s18
    %p20 = scmp.eq.s32.totalorder %s19, 0
    %s22 = sadd.s32 %s21, 1
    %s23 = scalar_select %p20, %s21, %s22
    %p26 = pneg %p20
    %p27 = scmp.eq.s32.totalorder %s11, 1
    %p28 = por %p26, %p27
    %p29 = scmp.ne.s32.totalorder %s21, %s24
    %p30 = scmp.eq.s32.totalorder %s11, 0
    %p31 = por %p29, %p30
    %p32 = scmp.ne.s32.totalorder %s21, %s24
    %p33 = scmp.eq.s32.totalorder %s16, 1
    %p34 = por %p32, %p33
    %p35 = scmp.ne.s32.totalorder %s24, %s25
    %p36 = scmp.eq.s32.totalorder %s16, 0
    %p37 = por %p35, %p36
    %p38 = scmp.ne.s32.totalorder %s24, %s25
    %p39 = scmp.eq.s32.totalorder %s17, 1
    %p40 = por %p38, %p39
    %p42 = scmp.ne.s32.totalorder %s25, %s41
    %p43 = scmp.eq.s32.totalorder %s17, 0
    %p44 = por %p42, %p43
    %s46 = sadd.s32 %s45, 1
    %p49 = scmp.eq.s32.totalorder %s11, 1
    %p50 = scmp.ne.s32.totalorder %s45, %s47
    %p51 = scmp.eq.s32.totalorder %s11, 0
    %p52 = por %p50, %p51
    %p53 = scmp.ne.s32.totalorder %s45, %s47
    %p54 = scmp.eq.s32.totalorder %s16, 1
    %p55 = por %p53, %p54
    %p56 = scmp.ne.s32.totalorder %s47, %s48
    %p57 = scmp.eq.s32.totalorder %s16, 0
    %p58 = por %p56, %p57
    %p59 = scmp.ne.s32.totalorder %s47, %s48
    %p60 = scmp.eq.s32.totalorder %s17, 1
    %p61 = por %p59, %p60
    %p63 = scmp.ne.s32.totalorder %s48, %s62
    %p64 = scmp.eq.s32.totalorder %s17, 0
    %p65 = por %p63, %p64
    %s67 = sadd.s32 %s66, 1
    %p70 = scmp.eq.s32.totalorder %s11, 1
    %p71 = scmp.ne.s32.totalorder %s66, %s68
    %p72 = scmp.eq.s32.totalorder %s11, 0
    %p73 = por %p71, %p72
    %p74 = scmp.ne.s32.totalorder %s66, %s68
    %p75 = scmp.eq.s32.totalorder %s16, 1
    %p76 = por %p74, %p75
    %p77 = scmp.ne.s32.totalorder %s68, %s69
    %p78 = scmp.eq.s32.totalorder %s16, 0
    %p79 = por %p77, %p78
    %p80 = scmp.ne.s32.totalorder %s68, %s69
    %p81 = scmp.eq.s32.totalorder %s17, 1
    %p82 = por %p80, %p81
    %p84 = scmp.ne.s32.totalorder %s69, %s83
    %p85 = scmp.eq.s32.totalorder %s17, 0
    %p86 = por %p84, %p85
    %s88 = sadd.s32 %s87, 1
    %p91 = scmp.eq.s32.totalorder %s11, 1
    %p92 = scmp.ne.s32.totalorder %s87, %s89
    %p93 = scmp.eq.s32.totalorder %s11, 0
    %p94 = por %p92, %p93
    %p95 = scmp.ne.s32.totalorder %s87, %s89
    %p96 = scmp.eq.s32.totalorder %s16, 1
    %p97 = por %p95, %p96
    %p98 = scmp.ne.s32.totalorder %s89, %s90
    %p99 = scmp.eq.s32.totalorder %s16, 0
    %p100 = por %p98, %p99
    %p101 = scmp.ne.s32.totalorder %s89, %s90
    %p102 = scmp.eq.s32.totalorder %s17, 1
    %p103 = por %p101, %p102
    %p105 = scmp.ne.s32.totalorder %s90, %s104
    %p106 = scmp.eq.s32.totalorder %s17, 0
    %p107 = por %p105, %p106
    %s109 = sadd.s32 %s108, 1
    %p112 = scmp.eq.s32.totalorder %s11, 1
    %p113 = scmp.ne.s32.totalorder %s108, %s110
    %p114 = scmp.eq.s32.totalorder %s11, 0
    %p115 = por %p113, %p114
    %p116 = scmp.ne.s32.totalorder %s108, %s110
    %p117 = scmp.eq.s32.totalorder %s16, 1
    %p118 = por %p116, %p117
    %p119 = scmp.ne.s32.totalorder %s110, %s111
    %p120 = scmp.eq.s32.totalorder %s16, 0
    %p121 = por %p119, %p120
    %p122 = scmp.ne.s32.totalorder %s110, %s111
    %p123 = scmp.eq.s32.totalorder %s17, 1
    %p124 = por %p122, %p123
    %p126 = scmp.ne.s32.totalorder %s111, %s125
    %p127 = scmp.eq.s32.totalorder %s17, 0
    %p128 = por %p126, %p127
    %s129 = ssub.s32 %s11, %s18
    %p130 = scmp.eq.s32.totalorder %s129, 0
    %s132 = sadd.s32 %s131, 1
    %s133 = scalar_select %p130, %s131, %s132
    %p136 = pneg %p130
    %p137 = scmp.eq.s32.totalorder %s11, 1
    %p138 = por %p136, %p137
    %p139 = scmp.ne.s32.totalorder %s131, %s134
    %p140 = scmp.eq.s32.totalorder %s11, 0
    %p141 = por %p139, %p140
    %p142 = scmp.ne.s32.totalorder %s131, %s134
    %p143 = scmp.eq.s32.totalorder %s16, 1
    %p144 = por %p142, %p143
    %p145 = scmp.ne.s32.totalorder %s134, %s135
    %p146 = scmp.eq.s32.totalorder %s16, 0
    %p147 = por %p145, %p146
    %p148 = scmp.ne.s32.totalorder %s134, %s135
    %p149 = scmp.eq.s32.totalorder %s17, 1
    %p150 = por %p148, %p149
    %p152 = scmp.ne.s32.totalorder %s135, %s151
    %p153 = scmp.eq.s32.totalorder %s17, 0
    %p154 = por %p152, %p153
    %p155 = scmp.le.s32.totalorder 1, %s11
    %p156 = scmp.lt.s32.totalorder %s11, 3
    %p157 = pnand %p155, %p156
    %p158 = pneg %p157
    // Predicated region
    $region9: #{resnet_generator_forward.14} parent=5 // pred_check
      _
    $region10: #{resnet_generator_forward.14} parent=5 // pred_check_branch
      %160 = sbr.rel (%p157) target = $region12
    $region11: #{resnet_generator_forward.14} parent=5 // pred_region
      %s161 = ssub.s32 %s11, 1
      // Predicated region
      $region13: #{resnet_generator_forward.14} parent=11 // pred_check
        %p162 = pneg %p58
      $region14: #{resnet_generator_forward.14} parent=11 // pred_check_branch
        %164 = sbr.rel (%p162) target = $region16
      $region15: #{resnet_generator_forward.14} parent=11 // pred_region
        _
      $region16: #{resnet_generator_forward.14} parent=11 // pred_fallthru
        _
      // Predicated region
      $region17: #{resnet_generator_forward.14} parent=11 // pred_check
        %p165 = pneg %p79
      $region18: #{resnet_generator_forward.14} parent=11 // pred_check_branch
        %167 = sbr.rel (%p165) target = $region20
      $region19: #{resnet_generator_forward.14} parent=11 // pred_region
        _
      $region20: #{resnet_generator_forward.14} parent=11 // pred_fallthru
        _
      // Predicated region
      $region21: #{resnet_generator_forward.14} parent=11 // pred_check
        %p168 = pneg %p100
      $region22: #{resnet_generator_forward.14} parent=11 // pred_check_branch
        %170 = sbr.rel (%p168) target = $region24
      $region23: #{resnet_generator_forward.14} parent=11 // pred_region
        _
      $region24: #{resnet_generator_forward.14} parent=11 // pred_fallthru
        _
      // Predicated region
      $region25: #{resnet_generator_forward.14} parent=11 // pred_check
        %p171 = pneg %p121
      $region26: #{resnet_generator_forward.14} parent=11 // pred_check_branch
        %173 = sbr.rel (%p171) target = $region28
      $region27: #{resnet_generator_forward.14} parent=11 // pred_region
        _
      $region28: #{resnet_generator_forward.14} parent=11 // pred_fallthru
        _
    $region12: #{resnet_generator_forward.14} parent=5 // pred_fallthru
      _
    %p174 = scmp.lt.s32.totalorder %s11, 2
    // Predicated region
    $region29: #{resnet_generator_forward.14} parent=5 // pred_check
      %p175 = pneg %p174
    $region30: #{resnet_generator_forward.14} parent=5 // pred_check_branch
      %177 = sbr.rel (%p175) target = $region32
    $region31: #{resnet_generator_forward.14} parent=5 // pred_region
      // Predicated region
      $region33: #{resnet_generator_forward.14} parent=31 // pred_check
        %p178 = pneg %p31
      $region34: #{resnet_generator_forward.14} parent=31 // pred_check_branch
        %180 = sbr.rel (%p178) target = $region36
      $region35: #{resnet_generator_forward.14} parent=31 // pred_region
        %p181 = scmp.lt.s32.totalorder %s11, 1
        %s182 = scalar_select %p181, %s11, 1
        %s183 = smul.addr %s182, 16
        %s184 = smul.addr %s183, 4
        %s185 = scalar_lea.vmem %s0, %s184
      $region36: #{resnet_generator_forward.14} parent=31 // pred_fallthru
        _
    $region32: #{resnet_generator_forward.14} parent=5 // pred_fallthru
      _
    %p186 = scmp.le.s32.totalorder 1, %s11
    %p187 = scmp.lt.s32.totalorder %s11, 3
    %p188 = pnand %p186, %p187
    %p189 = pneg %p188
    // Predicated region
    $region37: #{resnet_generator_forward.14} parent=5 // pred_check
      _
    $region38: #{resnet_generator_forward.14} parent=5 // pred_check_branch
      %191 = sbr.rel (%p188) target = $region40
    $region39: #{resnet_generator_forward.14} parent=5 // pred_region
      %s192 = ssub.s32 %s11, 1
      %p193 = scmp.lt.s32.totalorder %s16, 1
      %s194 = scalar_select %p193, %s16, 1
      %s195 = smul.addr %s194, 16
      %s196 = smul.addr %s195, 4
      %s197 = scalar_lea.vmem %s0, %s196
      %p198 = pneg %p37
      %p199 = pneg %p34
      %p200 = pneg %p58
      %p201 = pneg %p55
      %p202 = pneg %p79
      %p203 = pneg %p76
      %p204 = pneg %p100
      %p205 = pneg %p97
      %p206 = pneg %p121
      %p207 = pneg %p118
      %p208 = pneg %p147
      %p209 = pneg %p144
      %p210 = scmp.lt.s32.totalorder %s16, 1
      %s211 = scalar_select %p210, %s16, 1
      %s212 = smul.addr %s211, 8
      %s213 = smul.addr %s212, 8
      %s214 = scalar_lea.vmem %s5, %s213
      %p215 = scmp.lt.s32.totalorder %s16, 1
      %s216 = scalar_select %p215, %s16, 1
      %s217 = smul.addr %s216, 16
      %s218 = smul.addr %s217, 4
      %s219 = scalar_lea.vmem %s0, %s218
      %p220 = scmp.lt.s32.totalorder %s16, 1
      %s221 = scalar_select %p220, %s16, 1
      %s222 = smul.addr %s221, 8
      %s223 = smul.addr %s222, 8
      %s224 = scalar_lea.vmem %s5, %s223
      %v226 = vld [vmem:[%s219] sm:$0xff]
      %v227 = vld [vmem:[%s219 + $0x8] sm:$0xff]
      %v228 = vld [vmem:[%s219 + $0x10] sm:$0xff]
      %v229 = vld [vmem:[%s219 + $0x18] sm:$0xff]
      %v230 = vld [vmem:[%s219 + $0x20] sm:$0xff]
      %v231 = vld [vmem:[%s219 + $0x28] sm:$0xff]
      %v232 = vld [vmem:[%s219 + $0x30] sm:$0xff]
      %v233 = vld [vmem:[%s219 + $0x38] sm:$0xff]
      %v234 = vld [vmem:[%s1] sm:$0xf]
      %v235 = vld [vmem:[%s1 + $0x4] sm:$0xf]
      %v236 = vld [vmem:[%s1 + $0x8] sm:$0xf]
      %v237 = vld [vmem:[%s1 + $0xc] sm:$0xf]
      %v238 = vld [vmem:[%s1 + $0x10] sm:$0xf]
      %v239 = vld [vmem:[%s1 + $0x14] sm:$0xf]
      %v240 = vld [vmem:[%s1 + $0x18] sm:$0xf]
      %v241 = vld [vmem:[%s1 + $0x1c] sm:$0xf]
      %v242 = vld [vmem:[%s1 + $0x20] sm:$0xf]
      %v243 = vld [vmem:[%s1 + $0x24] sm:$0xf]
      %v244 = vld [vmem:[%s1 + $0x28] sm:$0xf]
      %v245 = vld [vmem:[%s1 + $0x2c] sm:$0xf]
      %v246 = vld [vmem:[%s1 + $0x30] sm:$0xf]
      %v247 = vld [vmem:[%s1 + $0x34] sm:$0xf]
      %v248 = vld [vmem:[%s1 + $0x38] sm:$0xf]
      %v249 = vld [vmem:[%s1 + $0x3c] sm:$0xf]
      %v250 = vld [vmem:[%s1 + $0x40] sm:$0xf]
      %v251 = vld [vmem:[%s1 + $0x44] sm:$0xf]
      %v252 = vld [vmem:[%s1 + $0x48] sm:$0xf]
      %v253 = vld [vmem:[%s1 + $0x4c] sm:$0xf]
      %v254 = vld [vmem:[%s1 + $0x50] sm:$0xf]
      %v255 = vld [vmem:[%s1 + $0x54] sm:$0xf]
      %v256 = vld [vmem:[%s1 + $0x58] sm:$0xf]
      %v257 = vld [vmem:[%s1 + $0x5c] sm:$0xf]
      %v258 = vld [vmem:[%s1 + $0x60] sm:$0xf]
      %v259 = vld [vmem:[%s1 + $0x64] sm:$0xf]
      %v260 = vld [vmem:[%s1 + $0x68] sm:$0xf]
      %v261 = vld [vmem:[%s1 + $0x6c] sm:$0xf]
      %v262 = vld [vmem:[%s1 + $0x70] sm:$0xf]
      %v263 = vld [vmem:[%s1 + $0x74] sm:$0xf]
      %v264 = vld [vmem:[%s1 + $0x78] sm:$0xf]
      %v265 = vld [vmem:[%s1 + $0x7c] sm:$0xf]
      %v266 = vld [vmem:[%s2] sm:$0x1]
      %v268 = vlaneseq
      %v269 = vshrl.u32 %v268, 7
      %v270 = vsub.s32 0, %v269
      %v271 = vrot.slane %v266, %v270
      %v281 = vunpack.c.l.b16 %v226
      %v282 = vunpack.c.h.b16 %v226
      %v283 = vunpack.c.l.b16 %v227
      %v284 = vunpack.c.h.b16 %v227
      %v285 = vunpack.c.l.b16 %v228
      %v286 = vunpack.c.h.b16 %v228
      %v287 = vunpack.c.l.b16 %v229
      %v288 = vunpack.c.h.b16 %v229
      %v289 = vunpack.c.l.b16 %v230
      %v290 = vunpack.c.h.b16 %v230
      %v291 = vunpack.c.l.b16 %v231
      %v292 = vunpack.c.h.b16 %v231
      %v293 = vunpack.c.l.b16 %v232
      %v294 = vunpack.c.h.b16 %v232
      %v295 = vunpack.c.l.b16 %v233
      %v296 = vunpack.c.h.b16 %v233
      %v297 = vpack.c.b16 %v283, %v281
      %v298 = vpack.c.b16 %v284, %v282
      %v299 = vpack.c.b16 %v287, %v285
      %v300 = vpack.c.b16 %v288, %v286
      %v301 = vpack.c.b16 %v291, %v289
      %v302 = vpack.c.b16 %v292, %v290
      %v303 = vpack.c.b16 %v295, %v293
      %v304 = vpack.c.b16 %v296, %v294
      %v345 = vunpack.c.l.b16 %v234
      %v346 = vunpack.c.l.b16 %v235
      %v347 = vunpack.c.l.b16 %v236
      %v348 = vunpack.c.l.b16 %v237
      %v349 = vunpack.c.l.b16 %v238
      %v350 = vunpack.c.l.b16 %v239
      %v351 = vunpack.c.l.b16 %v240
      %v352 = vunpack.c.l.b16 %v241
      %v353 = vunpack.c.l.b16 %v242
      %v354 = vunpack.c.l.b16 %v243
      %v355 = vunpack.c.l.b16 %v244
      %v356 = vunpack.c.l.b16 %v245
      %v357 = vunpack.c.l.b16 %v246
      %v358 = vunpack.c.l.b16 %v247
      %v359 = vunpack.c.l.b16 %v248
      %v360 = vunpack.c.l.b16 %v249
      %v361 = vunpack.c.l.b16 %v250
      %v362 = vunpack.c.l.b16 %v251
      %v363 = vunpack.c.l.b16 %v252
      %v364 = vunpack.c.l.b16 %v253
      %v365 = vunpack.c.l.b16 %v254
      %v366 = vunpack.c.l.b16 %v255
      %v367 = vunpack.c.l.b16 %v256
      %v368 = vunpack.c.l.b16 %v257
      %v369 = vunpack.c.l.b16 %v258
      %v370 = vunpack.c.l.b16 %v259
      %v371 = vunpack.c.l.b16 %v260
      %v372 = vunpack.c.l.b16 %v261
      %v373 = vunpack.c.l.b16 %v262
      %v374 = vunpack.c.l.b16 %v263
      %v375 = vunpack.c.l.b16 %v264
      %v376 = vunpack.c.l.b16 %v265
      %v377 = vpack.c.b16 %v346, %v345
      %v378 = vpack.c.b16 %v348, %v347
      %v379 = vpack.c.b16 %v350, %v349
      %v380 = vpack.c.b16 %v352, %v351
      %v381 = vpack.c.b16 %v354, %v353
      %v382 = vpack.c.b16 %v356, %v355
      %v383 = vpack.c.b16 %v358, %v357
      %v384 = vpack.c.b16 %v360, %v359
      %v385 = vpack.c.b16 %v362, %v361
      %v386 = vpack.c.b16 %v364, %v363
      %v387 = vpack.c.b16 %v366, %v365
      %v388 = vpack.c.b16 %v368, %v367
      %v389 = vpack.c.b16 %v370, %v369
      %v390 = vpack.c.b16 %v372, %v371
      %v391 = vpack.c.b16 %v374, %v373
      %v392 = vpack.c.b16 %v376, %v375
      %409 = vmatprep.subr.bf16.mxu0 0
      %410 = vmatpush1.bf16.msra.mxu0 %v377
      %411 = vmatprep.subr.bf16.mxu0 0
      %412 = vmatpush1.bf16.msra.mxu0 %v378
      %413 = vmatprep.subr.bf16.mxu0 0
      %414 = vmatpush1.bf16.msra.mxu0 %v379
      %415 = vmatprep.subr.bf16.mxu0 0
      %416 = vmatpush1.bf16.msra.mxu0 %v380
      %417 = vmatprep.subr.bf16.mxu0 0
      %418 = vmatpush1.bf16.msra.mxu0 %v381
      %419 = vmatprep.subr.bf16.mxu0 0
      %420 = vmatpush1.bf16.msra.mxu0 %v382
      %421 = vmatprep.subr.bf16.mxu0 0
      %422 = vmatpush1.bf16.msra.mxu0 %v383
      %423 = vmatprep.subr.bf16.mxu0 0
      %424 = vmatpush1.bf16.msra.mxu0 %v384
      %425 = vmatprep.subr.bf16.mxu0 0
      %426 = vmatpush1.bf16.msra.mxu0 %v385
      %427 = vmatprep.subr.bf16.mxu0 0
      %428 = vmatpush1.bf16.msra.mxu0 %v386
      %429 = vmatprep.subr.bf16.mxu0 0
      %430 = vmatpush1.bf16.msra.mxu0 %v387
      %431 = vmatprep.subr.bf16.mxu0 0
      %432 = vmatpush1.bf16.msra.mxu0 %v388
      %433 = vmatprep.subr.bf16.mxu0 0
      %434 = vmatpush1.bf16.msra.mxu0 %v389
      %435 = vmatprep.subr.bf16.mxu0 0
      %436 = vmatpush1.bf16.msra.mxu0 %v390
      %437 = vmatprep.subr.bf16.mxu0 0
      %438 = vmatpush1.bf16.msra.mxu0 %v391
      %439 = vmatprep.subr.bf16.mxu0 0
      %440 = vmatpush1.bf16.msra.mxu0 %v392
      %441 = vmatprep.mubr.bf16.mxu0 %v298
      %442 = vmatmul.mubr.bf16.gmra.mrb[0].mxu0 %v297
      %v443 = vpop.f32.mrb[0].mxu0
      %v444 = vadd.f32 %v271, %v443
      %v445 = vpop.f32.mrb[0].mxu0
      %v446 = vpop.f32.mrb[0].mxu0
      %v447 = vadd.f32 %v271, %v446
      %v448 = vpop.f32.mrb[0].mxu0
      %449 = vmatprep.mubr.bf16.mxu0 %v300
      %450 = vmatmul.mubr.bf16.gmra.mrb[0].mxu0 %v299
      %v451 = vpop.f32.mrb[0].mxu0
      %v452 = vadd.f32 %v271, %v451
      %v453 = vpop.f32.mrb[0].mxu0
      %v454 = vpop.f32.mrb[0].mxu0
      %v455 = vadd.f32 %v271, %v454
      %v456 = vpop.f32.mrb[0].mxu0
      %457 = vmatprep.mubr.bf16.mxu0 %v302
      %458 = vmatmul.mubr.bf16.gmra.mrb[0].mxu0 %v301
      %v459 = vpop.f32.mrb[0].mxu0
      %v460 = vadd.f32 %v271, %v459
      %v461 = vpop.f32.mrb[0].mxu0
      %v462 = vpop.f32.mrb[0].mxu0
      %v463 = vadd.f32 %v271, %v462
      %v464 = vpop.f32.mrb[0].mxu0
      %465 = vmatprep.mubr.bf16.mxu0 %v304
      %466 = vmatmul.mubr.bf16.gmra.mrb[0].mxu0 %v303
      %v467 = vpop.f32.mrb[0].mxu0
      %v468 = vadd.f32 %v271, %v467
      %v469 = vpop.f32.mrb[0].mxu0
      %v470 = vpop.f32.mrb[0].mxu0
      %v471 = vadd.f32 %v271, %v470
      %v472 = vpop.f32.mrb[0].mxu0
      %473 = vdwg.mxu0
      %v474 = vadd.f32 %v444, %v447
      %v475 = vadd.f32 %v474, %v452
      %v476 = vadd.f32 %v475, %v455
      %v477 = vadd.f32 %v476, %v460
      %v478 = vadd.f32 %v477, %v463
      %v479 = vadd.f32 %v478, %v468
      %v480 = vadd.f32 %v479, %v471
      %v481 = vrot.slane %v480, 4
      %v482 = vadd.f32 %v480, %v481
      %v483 = vrot.slane %v482, 2
      %v484 = vadd.f32 %v482, %v483
      %v485 = vrot.slane %v484, 1
      %v486 = vadd.f32 %v484, %v485
      %v487 = vmul.f32 %v486, 0.015625
      %v488 = vsub.f32 %v444, %v487
      %v489 = vsub.f32 %v447, %v487
      %v490 = vsub.f32 %v452, %v487
      %v491 = vsub.f32 %v455, %v487
      %v492 = vsub.f32 %v460, %v487
      %v493 = vsub.f32 %v463, %v487
      %v494 = vsub.f32 %v468, %v487
      %v495 = vsub.f32 %v471, %v487
      %v496 = vmul.f32 %v488, %v488
      %v497 = vmul.f32 %v489, %v489
      %v498 = vmul.f32 %v490, %v490
      %v499 = vmul.f32 %v491, %v491
      %v500 = vmul.f32 %v492, %v492
      %v501 = vmul.f32 %v493, %v493
      %v502 = vmul.f32 %v494, %v494
      %v503 = vmul.f32 %v495, %v495
      %v504 = vadd.f32 %v496, %v497
      %v505 = vadd.f32 %v504, %v498
      %v506 = vadd.f32 %v505, %v499
      %v507 = vadd.f32 %v506, %v500
      %v508 = vadd.f32 %v507, %v501
      %v509 = vadd.f32 %v508, %v502
      %v510 = vadd.f32 %v509, %v503
      %v511 = vrot.slane %v510, 4
      %v512 = vadd.f32 %v510, %v511
      %v513 = vrot.slane %v512, 2
      %v514 = vadd.f32 %v512, %v513
      %v515 = vrot.slane %v514, 1
      %v516 = vadd.f32 %v514, %v515
      %v517 = vmul.f32 %v516, 0.015625
      %v518 = vadd.f32 %v517, 1e-05
      %v519 = vrsqrt.pop %v518
      %v520 = vmul.f32 %v488, %v519
      %v521 = vmul.f32 %v489, %v519
      %v522 = vmul.f32 %v490, %v519
      %v523 = vmul.f32 %v491, %v519
      %v524 = vmul.f32 %v492, %v519
      %v525 = vmul.f32 %v493, %v519
      %v526 = vmul.f32 %v494, %v519
      %v527 = vmul.f32 %v495, %v519
      %v528 = vld [vmem:[%s3] sm:$0x1]
      %v530 = vlaneseq
      %v531 = vshrl.u32 %v530, 7
      %v532 = vsub.s32 0, %v531
      %v533 = vrot.slane %v528, %v532
      %v535 = vmul.f32 %v520, %v533
      %v536 = vmul.f32 %v521, %v533
      %v537 = vmul.f32 %v522, %v533
      %v538 = vmul.f32 %v523, %v533
      %v539 = vmul.f32 %v524, %v533
      %v540 = vmul.f32 %v525, %v533
      %v541 = vmul.f32 %v526, %v533
      %v542 = vmul.f32 %v527, %v533
      %v543 = vld [vmem:[%s4] sm:$0x1]
      %v545 = vlaneseq
      %v546 = vshrl.u32 %v545, 7
      %v547 = vsub.s32 0, %v546
      %v548 = vrot.slane %v543, %v547
      %v550 = vadd.f32 %v535, %v548
      %v551 = vadd.f32 %v536, %v548
      %v552 = vadd.f32 %v537, %v548
      %v553 = vadd.f32 %v538, %v548
      %v554 = vadd.f32 %v539, %v548
      %v555 = vadd.f32 %v540, %v548
      %v556 = vadd.f32 %v541, %v548
      %v557 = vadd.f32 %v542, %v548
      %v558 = vmax.f32 %v550, 0.0
      %v559 = vmax.f32 %v551, 0.0
      %v560 = vmax.f32 %v552, 0.0
      %v561 = vmax.f32 %v553, 0.0
      %v562 = vmax.f32 %v554, 0.0
      %v563 = vmax.f32 %v555, 0.0
      %v564 = vmax.f32 %v556, 0.0
      %v565 = vmax.f32 %v557, 0.0
      %566 = vst [vmem:[%s224] sm:$0xff] %v558
      %567 = vst [vmem:[%s224 + $0x8] sm:$0xff] %v559
      %568 = vst [vmem:[%s224 + $0x10] sm:$0xff] %v560
      %569 = vst [vmem:[%s224 + $0x18] sm:$0xff] %v561
      %570 = vst [vmem:[%s224 + $0x20] sm:$0xff] %v562
      %571 = vst [vmem:[%s224 + $0x28] sm:$0xff] %v563
      %572 = vst [vmem:[%s224 + $0x30] sm:$0xff] %v564
      %573 = vst [vmem:[%s224 + $0x38] sm:$0xff] %v565
      %p574 = scmp.lt.s32.totalorder %s16, 1
      %s575 = scalar_select %p574, %s16, 1
      %s576 = smul.addr %s575, 8
      %s577 = smul.addr %s576, 8
      %s578 = scalar_lea.vmem %s5, %s577
      // Predicated region
      $region41: #{resnet_generator_forward.14} parent=39 // pred_check
        %p579 = pneg %p144
      $region42: #{resnet_generator_forward.14} parent=39 // pred_check_branch
        %581 = sbr.rel (%p579) target = $region44
      $region43: #{resnet_generator_forward.14} parent=39 // pred_region
        _
      $region44: #{resnet_generator_forward.14} parent=39 // pred_fallthru
        _
    $region40: #{resnet_generator_forward.14} parent=5 // pred_fallthru
      _
    %p582 = scmp.le.s32.totalorder 2, %s11
    // Predicated region
    $region45: #{resnet_generator_forward.14} parent=5 // pred_check
      %p583 = pneg %p582
    $region46: #{resnet_generator_forward.14} parent=5 // pred_check_branch
      %585 = sbr.rel (%p583) target = $region48
    $region47: #{resnet_generator_forward.14} parent=5 // pred_region
      %s586 = ssub.s32 %s11, 2
      // Predicated region
      $region49: #{resnet_generator_forward.14} parent=47 // pred_check
        %p587 = pneg %p150
      $region50: #{resnet_generator_forward.14} parent=47 // pred_check_branch
        %589 = sbr.rel (%p587) target = $region52
      $region51: #{resnet_generator_forward.14} parent=47 // pred_region
        %p590 = scmp.lt.s32.totalorder %s17, 1
        %s591 = scalar_select %p590, %s17, 1
        %s592 = smul.addr %s591, 8
        %s593 = smul.addr %s592, 8
        %s594 = scalar_lea.vmem %s5, %s593
      $region52: #{resnet_generator_forward.14} parent=47 // pred_fallthru
        _
    $region48: #{resnet_generator_forward.14} parent=5 // pred_fallthru
      _
  $region6: #{resnet_generator_forward.14} parent=0 // loop_footer
    %s15 = sadd.s32 1, %s11
  $region7: #{resnet_generator_forward.14} parent=0 // loop_footer_branch
    %10 = sbr.rel target = $region3
  $region8: #{resnet_generator_forward.14} parent=0 // loop_exit
    _

// kernel: resnet_generator_forward.15
$region0: #{resnet_generator_forward.15}
  #allocation0 [shape = 'u32[]', space=smem, size = 0x4, offset = 0x4, fixed_abs, tag = 'smem constant byte address 0x4 - core index']
  #allocation1 [shape = 'u32[144,128]{1,0:T(1,128)}', space=vmem, size = 0x12000, scoped, tag = 'internal scratch']
  %s0 = inlined_call_operand.vmem [shape: bf16[2,64,384], index: 0, kind: input, shape index: {}]
  %s1 = inlined_call_operand.vmem [shape: bf16[384,128], index: 1, kind: input, shape index: {}]
  %s2 = inlined_call_operand.vmem [shape: f32[1,128], index: 2, kind: input, shape index: {}]
  %s3 = inlined_call_operand.vmem [shape: f32[1,128], index: 3, kind: input, shape index: {}]
  %s4 = inlined_call_operand.vmem [shape: f32[1,128], index: 4, kind: input, shape index: {}]
  %s5 = inlined_call_operand.vmem [shape: f32[2,64,128], index: 5, kind: output, shape index: {}]
  %s6 = sld [smem:[#allocation0]]
  $region53: #{resnet_generator_forward.15} parent=0
    _
  %s8 = ssub.s32 1, %s6
  %s9 = scalar_select 0, %s8, %s6
  loop: start=0, step=1, limit=4
  $region2: #{resnet_generator_forward.15} parent=0 // loop_pre_header
    _
  $region3: #{resnet_generator_forward.15} parent=0 // loop_header
    %s11 = sphi 0, %s15
    %p12 = scmp.ge.s32.totalorder %s11, 4
    %s21 = sphi 0, %s23
    %s24 = sphi 0, %s21
    %s25 = sphi 0, %s24
    %s41 = sphi 0, %s25
    %s45 = sphi 0, %s45
    %s47 = sphi 0, %s45
    %s48 = sphi 0, %s47
    %s62 = sphi 0, %s48
    %s66 = sphi 0, %s66
    %s68 = sphi 0, %s66
    %s69 = sphi 0, %s68
    %s83 = sphi 0, %s69
    %s87 = sphi 0, %s87
    %s89 = sphi 0, %s87
    %s90 = sphi 0, %s89
    %s104 = sphi 0, %s90
    %s108 = sphi 0, %s108
    %s110 = sphi 0, %s108
    %s111 = sphi 0, %s110
    %s125 = sphi 0, %s111
    %s131 = sphi 0, %s133
    %s134 = sphi 0, %s131
    %s135 = sphi 0, %s134
    %s151 = sphi 0, %s135
  $region4: #{resnet_generator_forward.15} parent=0 // loop_header_branch
    %14 = sbr.rel (%p12) target = $region8
  $region5: #{resnet_generator_forward.15} parent=0 // loop_body
    %s16 = ssub.s32 %s11, 1
    %s17 = ssub.s32 %s11, 2
    %s18 = sadd.s32 %s11, 1
    %s19 = ssub.s32 %s11, %s18
    %p20 = scmp.eq.s32.totalorder %s19, 0
    %s22 = sadd.s32 %s21, 1
    %s23 = scalar_select %p20, %s21, %s22
    %p26 = pneg %p20
    %p27 = scmp.eq.s32.totalorder %s11, 1
    %p28 = por %p26, %p27
    %p29 = scmp.ne.s32.totalorder %s21, %s24
    %p30 = scmp.eq.s32.totalorder %s11, 0
    %p31 = por %p29, %p30
    %p32 = scmp.ne.s32.totalorder %s21, %s24
    %p33 = scmp.eq.s32.totalorder %s16, 1
    %p34 = por %p32, %p33
    %p35 = scmp.ne.s32.totalorder %s24, %s25
    %p36 = scmp.eq.s32.totalorder %s16, 0
    %p37 = por %p35, %p36
    %p38 = scmp.ne.s32.totalorder %s24, %s25
    %p39 = scmp.eq.s32.totalorder %s17, 1
    %p40 = por %p38, %p39
    %p42 = scmp.ne.s32.totalorder %s25, %s41
    %p43 = scmp.eq.s32.totalorder %s17, 0
    %p44 = por %p42, %p43
    %s46 = sadd.s32 %s45, 1
    %p49 = scmp.eq.s32.totalorder %s11, 1
    %p50 = scmp.ne.s32.totalorder %s45, %s47
    %p51 = scmp.eq.s32.totalorder %s11, 0
    %p52 = por %p50, %p51
    %p53 = scmp.ne.s32.totalorder %s45, %s47
    %p54 = scmp.eq.s32.totalorder %s16, 1
    %p55 = por %p53, %p54
    %p56 = scmp.ne.s32.totalorder %s47, %s48
    %p57 = scmp.eq.s32.totalorder %s16, 0
    %p58 = por %p56, %p57
    %p59 = scmp.ne.s32.totalorder %s47, %s48
    %p60 = scmp.eq.s32.totalorder %s17, 1
    %p61 = por %p59, %p60
    %p63 = scmp.ne.s32.totalorder %s48, %s62
    %p64 = scmp.eq.s32.totalorder %s17, 0
    %p65 = por %p63, %p64
    %s67 = sadd.s32 %s66, 1
    %p70 = scmp.eq.s32.totalorder %s11, 1
    %p71 = scmp.ne.s32.totalorder %s66, %s68
    %p72 = scmp.eq.s32.totalorder %s11, 0
    %p73 = por %p71, %p72
    %p74 = scmp.ne.s32.totalorder %s66, %s68
    %p75 = scmp.eq.s32.totalorder %s16, 1
    %p76 = por %p74, %p75
    %p77 = scmp.ne.s32.totalorder %s68, %s69
    %p78 = scmp.eq.s32.totalorder %s16, 0
    %p79 = por %p77, %p78
    %p80 = scmp.ne.s32.totalorder %s68, %s69
    %p81 = scmp.eq.s32.totalorder %s17, 1
    %p82 = por %p80, %p81
    %p84 = scmp.ne.s32.totalorder %s69, %s83
    %p85 = scmp.eq.s32.totalorder %s17, 0
    %p86 = por %p84, %p85
    %s88 = sadd.s32 %s87, 1
    %p91 = scmp.eq.s32.totalorder %s11, 1
    %p92 = scmp.ne.s32.totalorder %s87, %s89
    %p93 = scmp.eq.s32.totalorder %s11, 0
    %p94 = por %p92, %p93
    %p95 = scmp.ne.s32.totalorder %s87, %s89
    %p96 = scmp.eq.s32.totalorder %s16, 1
    %p97 = por %p95, %p96
    %p98 = scmp.ne.s32.totalorder %s89, %s90
    %p99 = scmp.eq.s32.totalorder %s16, 0
    %p100 = por %p98, %p99
    %p101 = scmp.ne.s32.totalorder %s89, %s90
    %p102 = scmp.eq.s32.totalorder %s17, 1
    %p103 = por %p101, %p102
    %p105 = scmp.ne.s32.totalorder %s90, %s104
    %p106 = scmp.eq.s32.totalorder %s17, 0
    %p107 = por %p105, %p106
    %s109 = sadd.s32 %s108, 1
    %p112 = scmp.eq.s32.totalorder %s11, 1
    %p113 = scmp.ne.s32.totalorder %s108, %s110
    %p114 = scmp.eq.s32.totalorder %s11, 0
    %p115 = por %p113, %p114
    %p116 = scmp.ne.s32.totalorder %s108, %s110
    %p117 = scmp.eq.s32.totalorder %s16, 1
    %p118 = por %p116, %p117
    %p119 = scmp.ne.s32.totalorder %s110, %s111
    %p120 = scmp.eq.s32.totalorder %s16, 0
    %p121 = por %p119, %p120
    %p122 = scmp.ne.s32.totalorder %s110, %s111
    %p123 = scmp.eq.s32.totalorder %s17, 1
    %p124 = por %p122, %p123
    %p126 = scmp.ne.s32.totalorder %s111, %s125
    %p127 = scmp.eq.s32.totalorder %s17, 0
    %p128 = por %p126, %p127
    %s129 = ssub.s32 %s11, %s18
    %p130 = scmp.eq.s32.totalorder %s129, 0
    %s132 = sadd.s32 %s131, 1
    %s133 = scalar_select %p130, %s131, %s132
    %p136 = pneg %p130
    %p137 = scmp.eq.s32.totalorder %s11, 1
    %p138 = por %p136, %p137
    %p139 = scmp.ne.s32.totalorder %s131, %s134
    %p140 = scmp.eq.s32.totalorder %s11, 0
    %p141 = por %p139, %p140
    %p142 = scmp.ne.s32.totalorder %s131, %s134
    %p143 = scmp.eq.s32.totalorder %s16, 1
    %p144 = por %p142, %p143
    %p145 = scmp.ne.s32.totalorder %s134, %s135
    %p146 = scmp.eq.s32.totalorder %s16, 0
    %p147 = por %p145, %p146
    %p148 = scmp.ne.s32.totalorder %s134, %s135
    %p149 = scmp.eq.s32.totalorder %s17, 1
    %p150 = por %p148, %p149
    %p152 = scmp.ne.s32.totalorder %s135, %s151
    %p153 = scmp.eq.s32.totalorder %s17, 0
    %p154 = por %p152, %p153
    %p155 = scmp.le.s32.totalorder 1, %s11
    %p156 = scmp.lt.s32.totalorder %s11, 3
    %p157 = pnand %p155, %p156
    %p158 = pneg %p157
    // Predicated region
    $region9: #{resnet_generator_forward.15} parent=5 // pred_check
      _
    $region10: #{resnet_generator_forward.15} parent=5 // pred_check_branch
      %160 = sbr.rel (%p157) target = $region12
    $region11: #{resnet_generator_forward.15} parent=5 // pred_region
      %s161 = ssub.s32 %s11, 1
      // Predicated region
      $region13: #{resnet_generator_forward.15} parent=11 // pred_check
        %p162 = pneg %p58
      $region14: #{resnet_generator_forward.15} parent=11 // pred_check_branch
        %164 = sbr.rel (%p162) target = $region16
      $region15: #{resnet_generator_forward.15} parent=11 // pred_region
        _
      $region16: #{resnet_generator_forward.15} parent=11 // pred_fallthru
        _
      // Predicated region
      $region17: #{resnet_generator_forward.15} parent=11 // pred_check
        %p165 = pneg %p79
      $region18: #{resnet_generator_forward.15} parent=11 // pred_check_branch
        %167 = sbr.rel (%p165) target = $region20
      $region19: #{resnet_generator_forward.15} parent=11 // pred_region
        _
      $region20: #{resnet_generator_forward.15} parent=11 // pred_fallthru
        _
      // Predicated region
      $region21: #{resnet_generator_forward.15} parent=11 // pred_check
        %p168 = pneg %p100
      $region22: #{resnet_generator_forward.15} parent=11 // pred_check_branch
        %170 = sbr.rel (%p168) target = $region24
      $region23: #{resnet_generator_forward.15} parent=11 // pred_region
        _
      $region24: #{resnet_generator_forward.15} parent=11 // pred_fallthru
        _
      // Predicated region
      $region25: #{resnet_generator_forward.15} parent=11 // pred_check
        %p171 = pneg %p121
      $region26: #{resnet_generator_forward.15} parent=11 // pred_check_branch
        %173 = sbr.rel (%p171) target = $region28
      $region27: #{resnet_generator_forward.15} parent=11 // pred_region
        _
      $region28: #{resnet_generator_forward.15} parent=11 // pred_fallthru
        _
    $region12: #{resnet_generator_forward.15} parent=5 // pred_fallthru
      _
    %p174 = scmp.lt.s32.totalorder %s11, 2
    // Predicated region
    $region29: #{resnet_generator_forward.15} parent=5 // pred_check
      %p175 = pneg %p174
    $region30: #{resnet_generator_forward.15} parent=5 // pred_check_branch
      %177 = sbr.rel (%p175) target = $region32
    $region31: #{resnet_generator_forward.15} parent=5 // pred_region
      // Predicated region
      $region33: #{resnet_generator_forward.15} parent=31 // pred_check
        %p178 = pneg %p31
      $region34: #{resnet_generator_forward.15} parent=31 // pred_check_branch
        %180 = sbr.rel (%p178) target = $region36
      $region35: #{resnet_generator_forward.15} parent=31 // pred_region
        %p181 = scmp.lt.s32.totalorder %s11, 1
        %s182 = scalar_select %p181, %s11, 1
        %s183 = smul.addr %s182, 24
        %s184 = smul.addr %s183, 4
        %s185 = scalar_lea.vmem %s0, %s184
      $region36: #{resnet_generator_forward.15} parent=31 // pred_fallthru
        _
    $region32: #{resnet_generator_forward.15} parent=5 // pred_fallthru
      _
    %p186 = scmp.le.s32.totalorder 1, %s11
    %p187 = scmp.lt.s32.totalorder %s11, 3
    %p188 = pnand %p186, %p187
    %p189 = pneg %p188
    // Predicated region
    $region37: #{resnet_generator_forward.15} parent=5 // pred_check
      _
    $region38: #{resnet_generator_forward.15} parent=5 // pred_check_branch
      %191 = sbr.rel (%p188) target = $region40
    $region39: #{resnet_generator_forward.15} parent=5 // pred_region
      %s192 = ssub.s32 %s11, 1
      %p193 = scmp.lt.s32.totalorder %s16, 1
      %s194 = scalar_select %p193, %s16, 1
      %s195 = smul.addr %s194, 24
      %s196 = smul.addr %s195, 4
      %s197 = scalar_lea.vmem %s0, %s196
      %p198 = pneg %p37
      %p199 = pneg %p34
      %p200 = pneg %p58
      %p201 = pneg %p55
      %p202 = pneg %p79
      %p203 = pneg %p76
      %p204 = pneg %p100
      %p205 = pneg %p97
      %p206 = pneg %p121
      %p207 = pneg %p118
      %p208 = pneg %p147
      %p209 = pneg %p144
      %p210 = scmp.lt.s32.totalorder %s16, 1
      %s211 = scalar_select %p210, %s16, 1
      %s212 = smul.addr %s211, 8
      %s213 = smul.addr %s212, 8
      %s214 = scalar_lea.vmem %s5, %s213
      %p215 = scmp.lt.s32.totalorder %s16, 1
      %s216 = scalar_select %p215, %s16, 1
      %s217 = smul.addr %s216, 24
      %s218 = smul.addr %s217, 4
      %s219 = scalar_lea.vmem %s0, %s218
      %p220 = scmp.lt.s32.totalorder %s16, 1
      %s221 = scalar_select %p220, %s16, 1
      %s222 = smul.addr %s221, 8
      %s223 = smul.addr %s222, 8
      %s224 = scalar_lea.vmem %s5, %s223
      %v226 = vld [vmem:[%s219] sm:$0xff]
      %v227 = vld [vmem:[%s219 + $0x8] sm:$0xf]
      %v228 = vld [vmem:[%s219 + $0xc] sm:$0xff]
      %v229 = vld [vmem:[%s219 + $0x14] sm:$0xf]
      %v230 = vld [vmem:[%s219 + $0x18] sm:$0xff]
      %v231 = vld [vmem:[%s219 + $0x20] sm:$0xf]
      %v232 = vld [vmem:[%s219 + $0x24] sm:$0xff]
      %v233 = vld [vmem:[%s219 + $0x2c] sm:$0xf]
      %v234 = vld [vmem:[%s219 + $0x30] sm:$0xff]
      %v235 = vld [vmem:[%s219 + $0x38] sm:$0xf]
      %v236 = vld [vmem:[%s219 + $0x3c] sm:$0xff]
      %v237 = vld [vmem:[%s219 + $0x44] sm:$0xf]
      %v238 = vld [vmem:[%s219 + $0x48] sm:$0xff]
      %v239 = vld [vmem:[%s219 + $0x50] sm:$0xf]
      %v240 = vld [vmem:[%s219 + $0x54] sm:$0xff]
      %v241 = vld [vmem:[%s219 + $0x5c] sm:$0xf]
      %v242 = vld [vmem:[%s1] sm:$0xf]
      %v243 = vld [vmem:[%s1 + $0x4] sm:$0xf]
      %v244 = vld [vmem:[%s1 + $0x8] sm:$0xf]
      %v245 = vld [vmem:[%s1 + $0xc] sm:$0xf]
      %v246 = vld [vmem:[%s1 + $0x10] sm:$0xf]
      %v247 = vld [vmem:[%s1 + $0x14] sm:$0xf]
      %v248 = vld [vmem:[%s1 + $0x18] sm:$0xf]
      %v249 = vld [vmem:[%s1 + $0x1c] sm:$0xf]
      %v250 = vld [vmem:[%s1 + $0x20] sm:$0xf]
      %v251 = vld [vmem:[%s1 + $0x24] sm:$0xf]
      %v252 = vld [vmem:[%s1 + $0x28] sm:$0xf]
      %v253 = vld [vmem:[%s1 + $0x2c] sm:$0xf]
      %v254 = vld [vmem:[%s1 + $0x30] sm:$0xf]
      %v255 = vld [vmem:[%s1 + $0x34] sm:$0xf]
      %v256 = vld [vmem:[%s1 + $0x38] sm:$0xf]
      %v257 = vld [vmem:[%s1 + $0x3c] sm:$0xf]
      %v258 = vld [vmem:[%s1 + $0x40] sm:$0xf]
      %v259 = vld [vmem:[%s1 + $0x44] sm:$0xf]
      %v260 = vld [vmem:[%s1 + $0x48] sm:$0xf]
      %v261 = vld [vmem:[%s1 + $0x4c] sm:$0xf]
      %v262 = vld [vmem:[%s1 + $0x50] sm:$0xf]
      %v263 = vld [vmem:[%s1 + $0x54] sm:$0xf]
      %v264 = vld [vmem:[%s1 + $0x58] sm:$0xf]
      %v265 = vld [vmem:[%s1 + $0x5c] sm:$0xf]
      %v266 = vld [vmem:[%s1 + $0x60] sm:$0xf]
      %v267 = vld [vmem:[%s1 + $0x64] sm:$0xf]
      %v268 = vld [vmem:[%s1 + $0x68] sm:$0xf]
      %v269 = vld [vmem:[%s1 + $0x6c] sm:$0xf]
      %v270 = vld [vmem:[%s1 + $0x70] sm:$0xf]
      %v271 = vld [vmem:[%s1 + $0x74] sm:$0xf]
      %v272 = vld [vmem:[%s1 + $0x78] sm:$0xf]
      %v273 = vld [vmem:[%s1 + $0x7c] sm:$0xf]
      %v274 = vld [vmem:[%s1 + $0x80] sm:$0xf]
      %v275 = vld [vmem:[%s1 + $0x84] sm:$0xf]
      %v276 = vld [vmem:[%s1 + $0x88] sm:$0xf]
      %v277 = vld [vmem:[%s1 + $0x8c] sm:$0xf]
      %v278 = vld [vmem:[%s1 + $0x90] sm:$0xf]
      %v279 = vld [vmem:[%s1 + $0x94] sm:$0xf]
      %v280 = vld [vmem:[%s1 + $0x98] sm:$0xf]
      %v281 = vld [vmem:[%s1 + $0x9c] sm:$0xf]
      %v282 = vld [vmem:[%s1 + $0xa0] sm:$0xf]
      %v283 = vld [vmem:[%s1 + $0xa4] sm:$0xf]
      %v284 = vld [vmem:[%s1 + $0xa8] sm:$0xf]
      %v285 = vld [vmem:[%s1 + $0xac] sm:$0xf]
      %v286 = vld [vmem:[%s1 + $0xb0] sm:$0xf]
      %v287 = vld [vmem:[%s1 + $0xb4] sm:$0xf]
      %v288 = vld [vmem:[%s1 + $0xb8] sm:$0xf]
      %v289 = vld [vmem:[%s1 + $0xbc] sm:$0xf]
      %v290 = vld [vmem:[%s2] sm:$0x1]
      %v292 = vlaneseq
      %v293 = vshrl.u32 %v292, 7
      %v294 = vsub.s32 0, %v293
      %v295 = vrot.slane %v290, %v294
      %v313 = vunpack.c.l.b16 %v226
      %v314 = vunpack.c.h.b16 %v226
      %v315 = vunpack.c.l.b16 %v227
      %v316 = vunpack.c.l.b16 %v228
      %v317 = vunpack.c.h.b16 %v228
      %v318 = vunpack.c.l.b16 %v229
      %v319 = vunpack.c.l.b16 %v230
      %v320 = vunpack.c.h.b16 %v230
      %v321 = vunpack.c.l.b16 %v231
      %v322 = vunpack.c.l.b16 %v232
      %v323 = vunpack.c.h.b16 %v232
      %v324 = vunpack.c.l.b16 %v233
      %v325 = vunpack.c.l.b16 %v234
      %v326 = vunpack.c.h.b16 %v234
      %v327 = vunpack.c.l.b16 %v235
      %v328 = vunpack.c.l.b16 %v236
      %v329 = vunpack.c.h.b16 %v236
      %v330 = vunpack.c.l.b16 %v237
      %v331 = vunpack.c.l.b16 %v238
      %v332 = vunpack.c.h.b16 %v238
      %v333 = vunpack.c.l.b16 %v239
      %v334 = vunpack.c.l.b16 %v240
      %v335 = vunpack.c.h.b16 %v240
      %v336 = vunpack.c.l.b16 %v241
      %v337 = vpack.c.b16 %v316, %v313
      %v338 = vpack.c.b16 %v317, %v314
      %v339 = vpack.c.b16 %v318, %v315
      %v340 = vpack.c.b16 %v322, %v319
      %v341 = vpack.c.b16 %v323, %v320
      %v342 = vpack.c.b16 %v324, %v321
      %v343 = vpack.c.b16 %v328, %v325
      %v344 = vpack.c.b16 %v329, %v326
      %v345 = vpack.c.b16 %v330, %v327
      %v346 = vpack.c.b16 %v334, %v331
      %v347 = vpack.c.b16 %v335, %v332
      %v348 = vpack.c.b16 %v336, %v333
      %v409 = vunpack.c.l.b16 %v242
      %v410 = vunpack.c.l.b16 %v243
      %v411 = vunpack.c.l.b16 %v244
      %v412 = vunpack.c.l.b16 %v245
      %v413 = vunpack.c.l.b16 %v246
      %v414 = vunpack.c.l.b16 %v247
      %v415 = vunpack.c.l.b16 %v248
      %v416 = vunpack.c.l.b16 %v249
      %v417 = vunpack.c.l.b16 %v250
      %v418 = vunpack.c.l.b16 %v251
      %v419 = vunpack.c.l.b16 %v252
      %v420 = vunpack.c.l.b16 %v253
      %v421 = vunpack.c.l.b16 %v254
      %v422 = vunpack.c.l.b16 %v255
      %v423 = vunpack.c.l.b16 %v256
      %v424 = vunpack.c.l.b16 %v257
      %v425 = vunpack.c.l.b16 %v258
      %v426 = vunpack.c.l.b16 %v259
      %v427 = vunpack.c.l.b16 %v260
      %v428 = vunpack.c.l.b16 %v261
      %v429 = vunpack.c.l.b16 %v262
      %v430 = vunpack.c.l.b16 %v263
      %v431 = vunpack.c.l.b16 %v264
      %v432 = vunpack.c.l.b16 %v265
      %v433 = vunpack.c.l.b16 %v266
      %v434 = vunpack.c.l.b16 %v267
      %v435 = vunpack.c.l.b16 %v268
      %v436 = vunpack.c.l.b16 %v269
      %v437 = vunpack.c.l.b16 %v270
      %v438 = vunpack.c.l.b16 %v271
      %v439 = vunpack.c.l.b16 %v272
      %v440 = vunpack.c.l.b16 %v273
      %v441 = vunpack.c.l.b16 %v274
      %v442 = vunpack.c.l.b16 %v275
      %v443 = vunpack.c.l.b16 %v276
      %v444 = vunpack.c.l.b16 %v277
      %v445 = vunpack.c.l.b16 %v278
      %v446 = vunpack.c.l.b16 %v279
      %v447 = vunpack.c.l.b16 %v280
      %v448 = vunpack.c.l.b16 %v281
      %v449 = vunpack.c.l.b16 %v282
      %v450 = vunpack.c.l.b16 %v283
      %v451 = vunpack.c.l.b16 %v284
      %v452 = vunpack.c.l.b16 %v285
      %v453 = vunpack.c.l.b16 %v286
      %v454 = vunpack.c.l.b16 %v287
      %v455 = vunpack.c.l.b16 %v288
      %v456 = vunpack.c.l.b16 %v289
      %v457 = vpack.c.b16 %v410, %v409
      %v458 = vpack.c.b16 %v412, %v411
      %v459 = vpack.c.b16 %v414, %v413
      %v460 = vpack.c.b16 %v416, %v415
      %v461 = vpack.c.b16 %v418, %v417
      %v462 = vpack.c.b16 %v420, %v419
      %v463 = vpack.c.b16 %v422, %v421
      %v464 = vpack.c.b16 %v424, %v423
      %v465 = vpack.c.b16 %v426, %v425
      %v466 = vpack.c.b16 %v428, %v427
      %v467 = vpack.c.b16 %v430, %v429
      %v468 = vpack.c.b16 %v432, %v431
      %v469 = vpack.c.b16 %v434, %v433
      %v470 = vpack.c.b16 %v436, %v435
      %v471 = vpack.c.b16 %v438, %v437
      %v472 = vpack.c.b16 %v440, %v439
      %v473 = vpack.c.b16 %v442, %v441
      %v474 = vpack.c.b16 %v444, %v443
      %v475 = vpack.c.b16 %v446, %v445
      %v476 = vpack.c.b16 %v448, %v447
      %v477 = vpack.c.b16 %v450, %v449
      %v478 = vpack.c.b16 %v452, %v451
      %v479 = vpack.c.b16 %v454, %v453
      %v480 = vpack.c.b16 %v456, %v455
      %505 = vmatprep.subr.bf16.mxu0 0
      %506 = vmatpush1.bf16.msra.mxu0 %v457
      %507 = vmatprep.subr.bf16.mxu0 0
      %508 = vmatpush1.bf16.msra.mxu0 %v458
      %509 = vmatprep.subr.bf16.mxu0 0
      %510 = vmatpush1.bf16.msra.mxu0 %v459
      %511 = vmatprep.subr.bf16.mxu0 0
      %512 = vmatpush1.bf16.msra.mxu0 %v460
      %513 = vmatprep.subr.bf16.mxu0 0
      %514 = vmatpush1.bf16.msra.mxu0 %v461
      %515 = vmatprep.subr.bf16.mxu0 0
      %516 = vmatpush1.bf16.msra.mxu0 %v462
      %517 = vmatprep.subr.bf16.mxu0 0
      %518 = vmatpush1.bf16.msra.mxu0 %v463
      %519 = vmatprep.subr.bf16.mxu0 0
      %520 = vmatpush1.bf16.msra.mxu0 %v464
      %521 = vmatprep.subr.bf16.mxu0 0
      %522 = vmatpush1.bf16.msra.mxu0 %v465
      %523 = vmatprep.subr.bf16.mxu0 0
      %524 = vmatpush1.bf16.msra.mxu0 %v466
      %525 = vmatprep.subr.bf16.mxu0 0
      %526 = vmatpush1.bf16.msra.mxu0 %v467
      %527 = vmatprep.subr.bf16.mxu0 0
      %528 = vmatpush1.bf16.msra.mxu0 %v468
      %529 = vmatprep.subr.bf16.mxu0 0
      %530 = vmatpush1.bf16.msra.mxu0 %v469
      %531 = vmatprep.subr.bf16.mxu0 0
      %532 = vmatpush1.bf16.msra.mxu0 %v470
      %533 = vmatprep.subr.bf16.mxu0 0
      %534 = vmatpush1.bf16.msra.mxu0 %v471
      %535 = vmatprep.subr.bf16.mxu0 0
      %536 = vmatpush1.bf16.msra.mxu0 %v472
      %537 = vmatprep.mubr.bf16.mxu0 %v338
      %538 = vmatmul.mubr.bf16.gmra.mrb[0].mxu0 %v337
      %v539 = vpop.f32.mrb[0].mxu0
      %v540 = vadd.f32 %v295, %v539
      %v541 = vpop.f32.mrb[0].mxu0
      %v542 = vpop.f32.mrb[0].mxu0
      %v543 = vadd.f32 %v295, %v542
      %v544 = vpop.f32.mrb[0].mxu0
      %545 = vmatprep.mubr.bf16.mxu0 %v341
      %546 = vmatmul.mubr.bf16.gmra.mrb[0].mxu0 %v340
      %v547 = vpop.f32.mrb[0].mxu0
      %v548 = vadd.f32 %v295, %v547
      %v549 = vpop.f32.mrb[0].mxu0
      %v550 = vpop.f32.mrb[0].mxu0
      %v551 = vadd.f32 %v295, %v550
      %v552 = vpop.f32.mrb[0].mxu0
      %553 = vmatprep.mubr.bf16.mxu0 %v344
      %554 = vmatmul.mubr.bf16.gmra.mrb[0].mxu0 %v343
      %v555 = vpop.f32.mrb[0].mxu0
      %v556 = vadd.f32 %v295, %v555
      %v557 = vpop.f32.mrb[0].mxu0
      %v558 = vpop.f32.mrb[0].mxu0
      %v559 = vadd.f32 %v295, %v558
      %v560 = vpop.f32.mrb[0].mxu0
      %561 = vmatprep.mubr.bf16.mxu0 %v347
      %562 = vmatmul.mubr.bf16.gmra.mrb[0].mxu0 %v346
      %v563 = vpop.f32.mrb[0].mxu0
      %v564 = vadd.f32 %v295, %v563
      %v565 = vpop.f32.mrb[0].mxu0
      %v566 = vpop.f32.mrb[0].mxu0
      %v567 = vadd.f32 %v295, %v566
      %v568 = vpop.f32.mrb[0].mxu0
      %569 = vdwg.mxu0
      %570 = vmatprep.subr.bf16.mxu0 0
      %571 = vmatpush1.bf16.msra.mxu0 %v473
      %572 = vmatprep.subr.bf16.mxu0 0
      %573 = vmatpush1.bf16.msra.mxu0 %v474
      %574 = vmatprep.subr.bf16.mxu0 0
      %575 = vmatpush1.bf16.msra.mxu0 %v475
      %576 = vmatprep.subr.bf16.mxu0 0
      %577 = vmatpush1.bf16.msra.mxu0 %v476
      %578 = vmatprep.subr.bf16.mxu0 0
      %579 = vmatpush1.bf16.msra.mxu0 %v477
      %580 = vmatprep.subr.bf16.mxu0 0
      %581 = vmatpush1.bf16.msra.mxu0 %v478
      %582 = vmatprep.subr.bf16.mxu0 0
      %583 = vmatpush1.bf16.msra.mxu0 %v479
      %584 = vmatprep.subr.bf16.mxu0 0
      %585 = vmatpush1.bf16.msra.mxu0 %v480
      %586 = vmatprep.subr.bf16.mxu0 0
      %587 = vmatpush1.bf16.msra.mxu0 0
      %588 = vmatprep.subr.bf16.mxu0 0
      %589 = vmatpush1.bf16.msra.mxu0 0
      %590 = vmatprep.subr.bf16.mxu0 0
      %591 = vmatpush1.bf16.msra.mxu0 0
      %592 = vmatprep.subr.bf16.mxu0 0
      %593 = vmatpush1.bf16.msra.mxu0 0
      %594 = vmatprep.subr.bf16.mxu0 0
      %595 = vmatpush1.bf16.msra.mxu0 0
      %596 = vmatprep.subr.bf16.mxu0 0
      %597 = vmatpush1.bf16.msra.mxu0 0
      %598 = vmatprep.subr.bf16.mxu0 0
      %599 = vmatpush1.bf16.msra.mxu0 0
      %600 = vmatprep.subr.bf16.mxu0 0
      %601 = vmatpush1.bf16.msra.mxu0 0
      %602 = vmatprep.mubr.bf16.mxu0 0
      %603 = vmatmul.mubr.bf16.gmra.mrb[0].mxu0 %v339
      %v604 = vpop.f32.mrb[0].mxu0
      %v605 = vadd.f32 %v540, %v604
      %v606 = vpop.f32.mrb[0].mxu0
      %v607 = vpop.f32.mrb[0].mxu0
      %v608 = vadd.f32 %v543, %v607
      %v609 = vpop.f32.mrb[0].mxu0
      %610 = vmatprep.mubr.bf16.mxu0 0
      %611 = vmatmul.mubr.bf16.gmra.mrb[0].mxu0 %v342
      %v612 = vpop.f32.mrb[0].mxu0
      %v613 = vadd.f32 %v548, %v612
      %v614 = vpop.f32.mrb[0].mxu0
      %v615 = vpop.f32.mrb[0].mxu0
      %v616 = vadd.f32 %v551, %v615
      %v617 = vpop.f32.mrb[0].mxu0
      %618 = vmatprep.mubr.bf16.mxu0 0
      %619 = vmatmul.mubr.bf16.gmra.mrb[0].mxu0 %v345
      %v620 = vpop.f32.mrb[0].mxu0
      %v621 = vadd.f32 %v556, %v620
      %v622 = vpop.f32.mrb[0].mxu0
      %v623 = vpop.f32.mrb[0].mxu0
      %v624 = vadd.f32 %v559, %v623
      %v625 = vpop.f32.mrb[0].mxu0
      %626 = vmatprep.mubr.bf16.mxu0 0
      %627 = vmatmul.mubr.bf16.gmra.mrb[0].mxu0 %v348
      %v628 = vpop.f32.mrb[0].mxu0
      %v629 = vadd.f32 %v564, %v628
      %v630 = vpop.f32.mrb[0].mxu0
      %v631 = vpop.f32.mrb[0].mxu0
      %v632 = vadd.f32 %v567, %v631
      %v633 = vpop.f32.mrb[0].mxu0
      %634 = vdwg.mxu0
      %v635 = vadd.f32 %v605, %v608
      %v636 = vadd.f32 %v635, %v613
      %v637 = vadd.f32 %v636, %v616
      %v638 = vadd.f32 %v637, %v621
      %v639 = vadd.f32 %v638, %v624
      %v640 = vadd.f32 %v639, %v629
      %v641 = vadd.f32 %v640, %v632
      %v642 = vrot.slane %v641, 4
      %v643 = vadd.f32 %v641, %v642
      %v644 = vrot.slane %v643, 2
      %v645 = vadd.f32 %v643, %v644
      %v646 = vrot.slane %v645, 1
      %v647 = vadd.f32 %v645, %v646
      %v648 = vmul.f32 %v647, 0.015625
      %v649 = vsub.f32 %v605, %v648
      %v650 = vsub.f32 %v608, %v648
      %v651 = vsub.f32 %v613, %v648
      %v652 = vsub.f32 %v616, %v648
      %v653 = vsub.f32 %v621, %v648
      %v654 = vsub.f32 %v624, %v648
      %v655 = vsub.f32 %v629, %v648
      %v656 = vsub.f32 %v632, %v648
      %v657 = vmul.f32 %v649, %v649
      %v658 = vmul.f32 %v650, %v650
      %v659 = vmul.f32 %v651, %v651
      %v660 = vmul.f32 %v652, %v652
      %v661 = vmul.f32 %v653, %v653
      %v662 = vmul.f32 %v654, %v654
      %v663 = vmul.f32 %v655, %v655
      %v664 = vmul.f32 %v656, %v656
      %v665 = vadd.f32 %v657, %v658
      %v666 = vadd.f32 %v665, %v659
      %v667 = vadd.f32 %v666, %v660
      %v668 = vadd.f32 %v667, %v661
      %v669 = vadd.f32 %v668, %v662
      %v670 = vadd.f32 %v669, %v663
      %v671 = vadd.f32 %v670, %v664
      %v672 = vrot.slane %v671, 4
      %v673 = vadd.f32 %v671, %v672
      %v674 = vrot.slane %v673, 2
      %v675 = vadd.f32 %v673, %v674
      %v676 = vrot.slane %v675, 1
      %v677 = vadd.f32 %v675, %v676
      %v678 = vmul.f32 %v677, 0.015625
      %v679 = vadd.f32 %v678, 1e-05
      %v680 = vrsqrt.pop %v679
      %v681 = vmul.f32 %v649, %v680
      %v682 = vmul.f32 %v650, %v680
      %v683 = vmul.f32 %v651, %v680
      %v684 = vmul.f32 %v652, %v680
      %v685 = vmul.f32 %v653, %v680
      %v686 = vmul.f32 %v654, %v680
      %v687 = vmul.f32 %v655, %v680
      %v688 = vmul.f32 %v656, %v680
      %v689 = vld [vmem:[%s3] sm:$0x1]
      %v691 = vlaneseq
      %v692 = vshrl.u32 %v691, 7
      %v693 = vsub.s32 0, %v692
      %v694 = vrot.slane %v689, %v693
      %v696 = vmul.f32 %v681, %v694
      %v697 = vmul.f32 %v682, %v694
      %v698 = vmul.f32 %v683, %v694
      %v699 = vmul.f32 %v684, %v694
      %v700 = vmul.f32 %v685, %v694
      %v701 = vmul.f32 %v686, %v694
      %v702 = vmul.f32 %v687, %v694
      %v703 = vmul.f32 %v688, %v694
      %v704 = vld [vmem:[%s4] sm:$0x1]
      %v706 = vlaneseq
      %v707 = vshrl.u32 %v706, 7
      %v708 = vsub.s32 0, %v707
      %v709 = vrot.slane %v704, %v708
      %v711 = vadd.f32 %v696, %v709
      %v712 = vadd.f32 %v697, %v709
      %v713 = vadd.f32 %v698, %v709
      %v714 = vadd.f32 %v699, %v709
      %v715 = vadd.f32 %v700, %v709
      %v716 = vadd.f32 %v701, %v709
      %v717 = vadd.f32 %v702, %v709
      %v718 = vadd.f32 %v703, %v709
      %v719 = vmax.f32 %v711, 0.0
      %v720 = vmax.f32 %v712, 0.0
      %v721 = vmax.f32 %v713, 0.0
      %v722 = vmax.f32 %v714, 0.0
      %v723 = vmax.f32 %v715, 0.0
      %v724 = vmax.f32 %v716, 0.0
      %v725 = vmax.f32 %v717, 0.0
      %v726 = vmax.f32 %v718, 0.0
      %727 = vst [vmem:[%s224] sm:$0xff] %v719
      %728 = vst [vmem:[%s224 + $0x8] sm:$0xff] %v720
      %729 = vst [vmem:[%s224 + $0x10] sm:$0xff] %v721
      %730 = vst [vmem:[%s224 + $0x18] sm:$0xff] %v722
      %731 = vst [vmem:[%s224 + $0x20] sm:$0xff] %v723
      %732 = vst [vmem:[%s224 + $0x28] sm:$0xff] %v724
      %733 = vst [vmem:[%s224 + $0x30] sm:$0xff] %v725
      %734 = vst [vmem:[%s224 + $0x38] sm:$0xff] %v726
      %p735 = scmp.lt.s32.totalorder %s16, 1
      %s736 = scalar_select %p735, %s16, 1
      %s737 = smul.addr %s736, 8
      %s738 = smul.addr %s737, 8
      %s739 = scalar_lea.vmem %s5, %s738
      // Predicated region
      $region41: #{resnet_generator_forward.15} parent=39 // pred_check
        %p740 = pneg %p144
      $region42: #{resnet_generator_forward.15} parent=39 // pred_check_branch
        %742 = sbr.rel (%p740) target = $region44
      $region43: #{resnet_generator_forward.15} parent=39 // pred_region
        _
      $region44: #{resnet_generator_forward.15} parent=39 // pred_fallthru
        _
    $region40: #{resnet_generator_forward.15} parent=5 // pred_fallthru
      _
    %p743 = scmp.le.s32.totalorder 2, %s11
    // Predicated region
    $region45: #{resnet_generator_forward.15} parent=5 // pred_check
      %p744 = pneg %p743
    $region46: #{resnet_generator_forward.15} parent=5 // pred_check_branch
      %746 = sbr.rel (%p744) target = $region48
    $region47: #{resnet_generator_forward.15} parent=5 // pred_region
      %s747 = ssub.s32 %s11, 2
      // Predicated region
      $region49: #{resnet_generator_forward.15} parent=47 // pred_check
        %p748 = pneg %p150
      $region50: #{resnet_generator_forward.15} parent=47 // pred_check_branch
        %750 = sbr.rel (%p748) target = $region52
      $region51: #{resnet_generator_forward.15} parent=47 // pred_region
        %p751 = scmp.lt.s32.totalorder %s17, 1
        %s752 = scalar_select %p751, %s17, 1
        %s753 = smul.addr %s752, 8
        %s754 = smul.addr %s753, 8
        %s755 = scalar_lea.vmem %s5, %s754
      $region52: #{resnet_generator_forward.15} parent=47 // pred_fallthru
        _
    $region48: #{resnet_generator_forward.15} parent=5 // pred_fallthru
      _
  $region6: #{resnet_generator_forward.15} parent=0 // loop_footer
    %s15 = sadd.s32 1, %s11
  $region7: #{resnet_generator_forward.15} parent=0 // loop_footer_branch
    %10 = sbr.rel target = $region3
  $region8: #{resnet_generator_forward.15} parent=0 // loop_exit
    _

// kernel: resnet_generator_forward.16
$region0: #{resnet_generator_forward.16}
  #allocation0 [shape = 'u32[]', space=smem, size = 0x4, offset = 0x4, fixed_abs, tag = 'smem constant byte address 0x4 - core index']
  #allocation1 [shape = 'u32[144,128]{1,0:T(1,128)}', space=vmem, size = 0x12000, scoped, tag = 'internal scratch']
  %s0 = inlined_call_operand.vmem [shape: bf16[2,64,384], index: 0, kind: input, shape index: {}]
  %s1 = inlined_call_operand.vmem [shape: bf16[384,128], index: 1, kind: input, shape index: {}]
  %s2 = inlined_call_operand.vmem [shape: f32[1,128], index: 2, kind: input, shape index: {}]
  %s3 = inlined_call_operand.vmem [shape: f32[1,128], index: 3, kind: input, shape index: {}]
  %s4 = inlined_call_operand.vmem [shape: f32[1,128], index: 4, kind: input, shape index: {}]
  %s5 = inlined_call_operand.vmem [shape: f32[2,64,128], index: 5, kind: input, shape index: {}]
  %s6 = inlined_call_operand.vmem [shape: f32[2,64,128], index: 6, kind: output, shape index: {}]
  %s7 = sld [smem:[#allocation0]]
  $region57: #{resnet_generator_forward.16} parent=0
    _
  %s9 = ssub.s32 1, %s7
  %s10 = scalar_select 0, %s9, %s7
  loop: start=0, step=1, limit=4
  $region2: #{resnet_generator_forward.16} parent=0 // loop_pre_header
    _
  $region3: #{resnet_generator_forward.16} parent=0 // loop_header
    %s12 = sphi 0, %s16
    %p13 = scmp.ge.s32.totalorder %s12, 4
    %s22 = sphi 0, %s24
    %s25 = sphi 0, %s22
    %s26 = sphi 0, %s25
    %s42 = sphi 0, %s26
    %s46 = sphi 0, %s46
    %s48 = sphi 0, %s46
    %s49 = sphi 0, %s48
    %s63 = sphi 0, %s49
    %s67 = sphi 0, %s67
    %s69 = sphi 0, %s67
    %s70 = sphi 0, %s69
    %s84 = sphi 0, %s70
    %s88 = sphi 0, %s88
    %s90 = sphi 0, %s88
    %s91 = sphi 0, %s90
    %s105 = sphi 0, %s91
    %s109 = sphi 0, %s109
    %s111 = sphi 0, %s109
    %s112 = sphi 0, %s111
    %s126 = sphi 0, %s112
    %s132 = sphi 0, %s134
    %s135 = sphi 0, %s132
    %s136 = sphi 0, %s135
    %s152 = sphi 0, %s136
    %s158 = sphi 0, %s160
    %s161 = sphi 0, %s158
    %s162 = sphi 0, %s161
    %s178 = sphi 0, %s162
  $region4: #{resnet_generator_forward.16} parent=0 // loop_header_branch
    %15 = sbr.rel (%p13) target = $region8
  $region5: #{resnet_generator_forward.16} parent=0 // loop_body
    %s17 = ssub.s32 %s12, 1
    %s18 = ssub.s32 %s12, 2
    %s19 = sadd.s32 %s12, 1
    %s20 = ssub.s32 %s12, %s19
    %p21 = scmp.eq.s32.totalorder %s20, 0
    %s23 = sadd.s32 %s22, 1
    %s24 = scalar_select %p21, %s22, %s23
    %p27 = pneg %p21
    %p28 = scmp.eq.s32.totalorder %s12, 1
    %p29 = por %p27, %p28
    %p30 = scmp.ne.s32.totalorder %s22, %s25
    %p31 = scmp.eq.s32.totalorder %s12, 0
    %p32 = por %p30, %p31
    %p33 = scmp.ne.s32.totalorder %s22, %s25
    %p34 = scmp.eq.s32.totalorder %s17, 1
    %p35 = por %p33, %p34
    %p36 = scmp.ne.s32.totalorder %s25, %s26
    %p37 = scmp.eq.s32.totalorder %s17, 0
    %p38 = por %p36, %p37
    %p39 = scmp.ne.s32.totalorder %s25, %s26
    %p40 = scmp.eq.s32.totalorder %s18, 1
    %p41 = por %p39, %p40
    %p43 = scmp.ne.s32.totalorder %s26, %s42
    %p44 = scmp.eq.s32.totalorder %s18, 0
    %p45 = por %p43, %p44
    %s47 = sadd.s32 %s46, 1
    %p50 = scmp.eq.s32.totalorder %s12, 1
    %p51 = scmp.ne.s32.totalorder %s46, %s48
    %p52 = scmp.eq.s32.totalorder %s12, 0
    %p53 = por %p51, %p52
    %p54 = scmp.ne.s32.totalorder %s46, %s48
    %p55 = scmp.eq.s32.totalorder %s17, 1
    %p56 = por %p54, %p55
    %p57 = scmp.ne.s32.totalorder %s48, %s49
    %p58 = scmp.eq.s32.totalorder %s17, 0
    %p59 = por %p57, %p58
    %p60 = scmp.ne.s32.totalorder %s48, %s49
    %p61 = scmp.eq.s32.totalorder %s18, 1
    %p62 = por %p60, %p61
    %p64 = scmp.ne.s32.totalorder %s49, %s63
    %p65 = scmp.eq.s32.totalorder %s18, 0
    %p66 = por %p64, %p65
    %s68 = sadd.s32 %s67, 1
    %p71 = scmp.eq.s32.totalorder %s12, 1
    %p72 = scmp.ne.s32.totalorder %s67, %s69
    %p73 = scmp.eq.s32.totalorder %s12, 0
    %p74 = por %p72, %p73
    %p75 = scmp.ne.s32.totalorder %s67, %s69
    %p76 = scmp.eq.s32.totalorder %s17, 1
    %p77 = por %p75, %p76
    %p78 = scmp.ne.s32.totalorder %s69, %s70
    %p79 = scmp.eq.s32.totalorder %s17, 0
    %p80 = por %p78, %p79
    %p81 = scmp.ne.s32.totalorder %s69, %s70
    %p82 = scmp.eq.s32.totalorder %s18, 1
    %p83 = por %p81, %p82
    %p85 = scmp.ne.s32.totalorder %s70, %s84
    %p86 = scmp.eq.s32.totalorder %s18, 0
    %p87 = por %p85, %p86
    %s89 = sadd.s32 %s88, 1
    %p92 = scmp.eq.s32.totalorder %s12, 1
    %p93 = scmp.ne.s32.totalorder %s88, %s90
    %p94 = scmp.eq.s32.totalorder %s12, 0
    %p95 = por %p93, %p94
    %p96 = scmp.ne.s32.totalorder %s88, %s90
    %p97 = scmp.eq.s32.totalorder %s17, 1
    %p98 = por %p96, %p97
    %p99 = scmp.ne.s32.totalorder %s90, %s91
    %p100 = scmp.eq.s32.totalorder %s17, 0
    %p101 = por %p99, %p100
    %p102 = scmp.ne.s32.totalorder %s90, %s91
    %p103 = scmp.eq.s32.totalorder %s18, 1
    %p104 = por %p102, %p103
    %p106 = scmp.ne.s32.totalorder %s91, %s105
    %p107 = scmp.eq.s32.totalorder %s18, 0
    %p108 = por %p106, %p107
    %s110 = sadd.s32 %s109, 1
    %p113 = scmp.eq.s32.totalorder %s12, 1
    %p114 = scmp.ne.s32.totalorder %s109, %s111
    %p115 = scmp.eq.s32.totalorder %s12, 0
    %p116 = por %p114, %p115
    %p117 = scmp.ne.s32.totalorder %s109, %s111
    %p118 = scmp.eq.s32.totalorder %s17, 1
    %p119 = por %p117, %p118
    %p120 = scmp.ne.s32.totalorder %s111, %s112
    %p121 = scmp.eq.s32.totalorder %s17, 0
    %p122 = por %p120, %p121
    %p123 = scmp.ne.s32.totalorder %s111, %s112
    %p124 = scmp.eq.s32.totalorder %s18, 1
    %p125 = por %p123, %p124
    %p127 = scmp.ne.s32.totalorder %s112, %s126
    %p128 = scmp.eq.s32.totalorder %s18, 0
    %p129 = por %p127, %p128
    %s130 = ssub.s32 %s12, %s19
    %p131 = scmp.eq.s32.totalorder %s130, 0
    %s133 = sadd.s32 %s132, 1
    %s134 = scalar_select %p131, %s132, %s133
    %p137 = pneg %p131
    %p138 = scmp.eq.s32.totalorder %s12, 1
    %p139 = por %p137, %p138
    %p140 = scmp.ne.s32.totalorder %s132, %s135
    %p141 = scmp.eq.s32.totalorder %s12, 0
    %p142 = por %p140, %p141
    %p143 = scmp.ne.s32.totalorder %s132, %s135
    %p144 = scmp.eq.s32.totalorder %s17, 1
    %p145 = por %p143, %p144
    %p146 = scmp.ne.s32.totalorder %s135, %s136
    %p147 = scmp.eq.s32.totalorder %s17, 0
    %p148 = por %p146, %p147
    %p149 = scmp.ne.s32.totalorder %s135, %s136
    %p150 = scmp.eq.s32.totalorder %s18, 1
    %p151 = por %p149, %p150
    %p153 = scmp.ne.s32.totalorder %s136, %s152
    %p154 = scmp.eq.s32.totalorder %s18, 0
    %p155 = por %p153, %p154
    %s156 = ssub.s32 %s12, %s19
    %p157 = scmp.eq.s32.totalorder %s156, 0
    %s159 = sadd.s32 %s158, 1
    %s160 = scalar_select %p157, %s158, %s159
    %p163 = pneg %p157
    %p164 = scmp.eq.s32.totalorder %s12, 1
    %p165 = por %p163, %p164
    %p166 = scmp.ne.s32.totalorder %s158, %s161
    %p167 = scmp.eq.s32.totalorder %s12, 0
    %p168 = por %p166, %p167
    %p169 = scmp.ne.s32.totalorder %s158, %s161
    %p170 = scmp.eq.s32.totalorder %s17, 1
    %p171 = por %p169, %p170
    %p172 = scmp.ne.s32.totalorder %s161, %s162
    %p173 = scmp.eq.s32.totalorder %s17, 0
    %p174 = por %p172, %p173
    %p175 = scmp.ne.s32.totalorder %s161, %s162
    %p176 = scmp.eq.s32.totalorder %s18, 1
    %p177 = por %p175, %p176
    %p179 = scmp.ne.s32.totalorder %s162, %s178
    %p180 = scmp.eq.s32.totalorder %s18, 0
    %p181 = por %p179, %p180
    %p182 = scmp.le.s32.totalorder 1, %s12
    %p183 = scmp.lt.s32.totalorder %s12, 3
    %p184 = pnand %p182, %p183
    %p185 = pneg %p184
    // Predicated region
    $region9: #{resnet_generator_forward.16} parent=5 // pred_check
      _
    $region10: #{resnet_generator_forward.16} parent=5 // pred_check_branch
      %187 = sbr.rel (%p184) target = $region12
    $region11: #{resnet_generator_forward.16} parent=5 // pred_region
      %s188 = ssub.s32 %s12, 1
      // Predicated region
      $region13: #{resnet_generator_forward.16} parent=11 // pred_check
        %p189 = pneg %p59
      $region14: #{resnet_generator_forward.16} parent=11 // pred_check_branch
        %191 = sbr.rel (%p189) target = $region16
      $region15: #{resnet_generator_forward.16} parent=11 // pred_region
        _
      $region16: #{resnet_generator_forward.16} parent=11 // pred_fallthru
        _
      // Predicated region
      $region17: #{resnet_generator_forward.16} parent=11 // pred_check
        %p192 = pneg %p80
      $region18: #{resnet_generator_forward.16} parent=11 // pred_check_branch
        %194 = sbr.rel (%p192) target = $region20
      $region19: #{resnet_generator_forward.16} parent=11 // pred_region
        _
      $region20: #{resnet_generator_forward.16} parent=11 // pred_fallthru
        _
      // Predicated region
      $region21: #{resnet_generator_forward.16} parent=11 // pred_check
        %p195 = pneg %p101
      $region22: #{resnet_generator_forward.16} parent=11 // pred_check_branch
        %197 = sbr.rel (%p195) target = $region24
      $region23: #{resnet_generator_forward.16} parent=11 // pred_region
        _
      $region24: #{resnet_generator_forward.16} parent=11 // pred_fallthru
        _
      // Predicated region
      $region25: #{resnet_generator_forward.16} parent=11 // pred_check
        %p198 = pneg %p122
      $region26: #{resnet_generator_forward.16} parent=11 // pred_check_branch
        %200 = sbr.rel (%p198) target = $region28
      $region27: #{resnet_generator_forward.16} parent=11 // pred_region
        _
      $region28: #{resnet_generator_forward.16} parent=11 // pred_fallthru
        _
    $region12: #{resnet_generator_forward.16} parent=5 // pred_fallthru
      _
    %p201 = scmp.lt.s32.totalorder %s12, 2
    // Predicated region
    $region29: #{resnet_generator_forward.16} parent=5 // pred_check
      %p202 = pneg %p201
    $region30: #{resnet_generator_forward.16} parent=5 // pred_check_branch
      %204 = sbr.rel (%p202) target = $region32
    $region31: #{resnet_generator_forward.16} parent=5 // pred_region
      // Predicated region
      $region33: #{resnet_generator_forward.16} parent=31 // pred_check
        %p205 = pneg %p32
      $region34: #{resnet_generator_forward.16} parent=31 // pred_check_branch
        %207 = sbr.rel (%p205) target = $region36
      $region35: #{resnet_generator_forward.16} parent=31 // pred_region
        %p208 = scmp.lt.s32.totalorder %s12, 1
        %s209 = scalar_select %p208, %s12, 1
        %s210 = smul.addr %s209, 24
        %s211 = smul.addr %s210, 4
        %s212 = scalar_lea.vmem %s0, %s211
      $region36: #{resnet_generator_forward.16} parent=31 // pred_fallthru
        _
      // Predicated region
      $region37: #{resnet_generator_forward.16} parent=31 // pred_check
        %p213 = pneg %p142
      $region38: #{resnet_generator_forward.16} parent=31 // pred_check_branch
        %215 = sbr.rel (%p213) target = $region40
      $region39: #{resnet_generator_forward.16} parent=31 // pred_region
        %p216 = scmp.lt.s32.totalorder %s12, 1
        %s217 = scalar_select %p216, %s12, 1
        %s218 = smul.addr %s217, 8
        %s219 = smul.addr %s218, 8
        %s220 = scalar_lea.vmem %s5, %s219
      $region40: #{resnet_generator_forward.16} parent=31 // pred_fallthru
        _
    $region32: #{resnet_generator_forward.16} parent=5 // pred_fallthru
      _
    %p221 = scmp.le.s32.totalorder 1, %s12
    %p222 = scmp.lt.s32.totalorder %s12, 3
    %p223 = pnand %p221, %p222
    %p224 = pneg %p223
    // Predicated region
    $region41: #{resnet_generator_forward.16} parent=5 // pred_check
      _
    $region42: #{resnet_generator_forward.16} parent=5 // pred_check_branch
      %226 = sbr.rel (%p223) target = $region44
    $region43: #{resnet_generator_forward.16} parent=5 // pred_region
      %s227 = ssub.s32 %s12, 1
      %p228 = scmp.lt.s32.totalorder %s17, 1
      %s229 = scalar_select %p228, %s17, 1
      %s230 = smul.addr %s229, 24
      %s231 = smul.addr %s230, 4
      %s232 = scalar_lea.vmem %s0, %s231
      %p233 = pneg %p38
      %p234 = pneg %p35
      %p235 = pneg %p59
      %p236 = pneg %p56
      %p237 = pneg %p80
      %p238 = pneg %p77
      %p239 = pneg %p101
      %p240 = pneg %p98
      %p241 = pneg %p122
      %p242 = pneg %p119
      %p243 = scmp.lt.s32.totalorder %s17, 1
      %s244 = scalar_select %p243, %s17, 1
      %s245 = smul.addr %s244, 8
      %s246 = smul.addr %s245, 8
      %s247 = scalar_lea.vmem %s5, %s246
      %p248 = pneg %p148
      %p249 = pneg %p145
      %p250 = pneg %p174
      %p251 = pneg %p171
      %p252 = scmp.lt.s32.totalorder %s17, 1
      %s253 = scalar_select %p252, %s17, 1
      %s254 = smul.addr %s253, 8
      %s255 = smul.addr %s254, 8
      %s256 = scalar_lea.vmem %s6, %s255
      %p257 = scmp.lt.s32.totalorder %s17, 1
      %s258 = scalar_select %p257, %s17, 1
      %s259 = smul.addr %s258, 24
      %s260 = smul.addr %s259, 4
      %s261 = scalar_lea.vmem %s0, %s260
      %p262 = scmp.lt.s32.totalorder %s17, 1
      %s263 = scalar_select %p262, %s17, 1
      %s264 = smul.addr %s263, 8
      %s265 = smul.addr %s264, 8
      %s266 = scalar_lea.vmem %s5, %s265
      %p267 = scmp.lt.s32.totalorder %s17, 1
      %s268 = scalar_select %p267, %s17, 1
      %s269 = smul.addr %s268, 8
      %s270 = smul.addr %s269, 8
      %s271 = scalar_lea.vmem %s6, %s270
      %v273 = vld [vmem:[%s261] sm:$0xff]
      %v274 = vld [vmem:[%s261 + $0x8] sm:$0xf]
      %v275 = vld [vmem:[%s261 + $0xc] sm:$0xff]
      %v276 = vld [vmem:[%s261 + $0x14] sm:$0xf]
      %v277 = vld [vmem:[%s261 + $0x18] sm:$0xff]
      %v278 = vld [vmem:[%s261 + $0x20] sm:$0xf]
      %v279 = vld [vmem:[%s261 + $0x24] sm:$0xff]
      %v280 = vld [vmem:[%s261 + $0x2c] sm:$0xf]
      %v281 = vld [vmem:[%s261 + $0x30] sm:$0xff]
      %v282 = vld [vmem:[%s261 + $0x38] sm:$0xf]
      %v283 = vld [vmem:[%s261 + $0x3c] sm:$0xff]
      %v284 = vld [vmem:[%s261 + $0x44] sm:$0xf]
      %v285 = vld [vmem:[%s261 + $0x48] sm:$0xff]
      %v286 = vld [vmem:[%s261 + $0x50] sm:$0xf]
      %v287 = vld [vmem:[%s261 + $0x54] sm:$0xff]
      %v288 = vld [vmem:[%s261 + $0x5c] sm:$0xf]
      %v289 = vld [vmem:[%s1] sm:$0xf]
      %v290 = vld [vmem:[%s1 + $0x4] sm:$0xf]
      %v291 = vld [vmem:[%s1 + $0x8] sm:$0xf]
      %v292 = vld [vmem:[%s1 + $0xc] sm:$0xf]
      %v293 = vld [vmem:[%s1 + $0x10] sm:$0xf]
      %v294 = vld [vmem:[%s1 + $0x14] sm:$0xf]
      %v295 = vld [vmem:[%s1 + $0x18] sm:$0xf]
      %v296 = vld [vmem:[%s1 + $0x1c] sm:$0xf]
      %v297 = vld [vmem:[%s1 + $0x20] sm:$0xf]
      %v298 = vld [vmem:[%s1 + $0x24] sm:$0xf]
      %v299 = vld [vmem:[%s1 + $0x28] sm:$0xf]
      %v300 = vld [vmem:[%s1 + $0x2c] sm:$0xf]
      %v301 = vld [vmem:[%s1 + $0x30] sm:$0xf]
      %v302 = vld [vmem:[%s1 + $0x34] sm:$0xf]
      %v303 = vld [vmem:[%s1 + $0x38] sm:$0xf]
      %v304 = vld [vmem:[%s1 + $0x3c] sm:$0xf]
      %v305 = vld [vmem:[%s1 + $0x40] sm:$0xf]
      %v306 = vld [vmem:[%s1 + $0x44] sm:$0xf]
      %v307 = vld [vmem:[%s1 + $0x48] sm:$0xf]
      %v308 = vld [vmem:[%s1 + $0x4c] sm:$0xf]
      %v309 = vld [vmem:[%s1 + $0x50] sm:$0xf]
      %v310 = vld [vmem:[%s1 + $0x54] sm:$0xf]
      %v311 = vld [vmem:[%s1 + $0x58] sm:$0xf]
      %v312 = vld [vmem:[%s1 + $0x5c] sm:$0xf]
      %v313 = vld [vmem:[%s1 + $0x60] sm:$0xf]
      %v314 = vld [vmem:[%s1 + $0x64] sm:$0xf]
      %v315 = vld [vmem:[%s1 + $0x68] sm:$0xf]
      %v316 = vld [vmem:[%s1 + $0x6c] sm:$0xf]
      %v317 = vld [vmem:[%s1 + $0x70] sm:$0xf]
      %v318 = vld [vmem:[%s1 + $0x74] sm:$0xf]
      %v319 = vld [vmem:[%s1 + $0x78] sm:$0xf]
      %v320 = vld [vmem:[%s1 + $0x7c] sm:$0xf]
      %v321 = vld [vmem:[%s1 + $0x80] sm:$0xf]
      %v322 = vld [vmem:[%s1 + $0x84] sm:$0xf]
      %v323 = vld [vmem:[%s1 + $0x88] sm:$0xf]
      %v324 = vld [vmem:[%s1 + $0x8c] sm:$0xf]
      %v325 = vld [vmem:[%s1 + $0x90] sm:$0xf]
      %v326 = vld [vmem:[%s1 + $0x94] sm:$0xf]
      %v327 = vld [vmem:[%s1 + $0x98] sm:$0xf]
      %v328 = vld [vmem:[%s1 + $0x9c] sm:$0xf]
      %v329 = vld [vmem:[%s1 + $0xa0] sm:$0xf]
      %v330 = vld [vmem:[%s1 + $0xa4] sm:$0xf]
      %v331 = vld [vmem:[%s1 + $0xa8] sm:$0xf]
      %v332 = vld [vmem:[%s1 + $0xac] sm:$0xf]
      %v333 = vld [vmem:[%s1 + $0xb0] sm:$0xf]
      %v334 = vld [vmem:[%s1 + $0xb4] sm:$0xf]
      %v335 = vld [vmem:[%s1 + $0xb8] sm:$0xf]
      %v336 = vld [vmem:[%s1 + $0xbc] sm:$0xf]
      %v337 = vld [vmem:[%s2] sm:$0x1]
      %v339 = vlaneseq
      %v340 = vshrl.u32 %v339, 7
      %v341 = vsub.s32 0, %v340
      %v342 = vrot.slane %v337, %v341
      %v360 = vunpack.c.l.b16 %v273
      %v361 = vunpack.c.h.b16 %v273
      %v362 = vunpack.c.l.b16 %v274
      %v363 = vunpack.c.l.b16 %v275
      %v364 = vunpack.c.h.b16 %v275
      %v365 = vunpack.c.l.b16 %v276
      %v366 = vunpack.c.l.b16 %v277
      %v367 = vunpack.c.h.b16 %v277
      %v368 = vunpack.c.l.b16 %v278
      %v369 = vunpack.c.l.b16 %v279
      %v370 = vunpack.c.h.b16 %v279
      %v371 = vunpack.c.l.b16 %v280
      %v372 = vunpack.c.l.b16 %v281
      %v373 = vunpack.c.h.b16 %v281
      %v374 = vunpack.c.l.b16 %v282
      %v375 = vunpack.c.l.b16 %v283
      %v376 = vunpack.c.h.b16 %v283
      %v377 = vunpack.c.l.b16 %v284
      %v378 = vunpack.c.l.b16 %v285
      %v379 = vunpack.c.h.b16 %v285
      %v380 = vunpack.c.l.b16 %v286
      %v381 = vunpack.c.l.b16 %v287
      %v382 = vunpack.c.h.b16 %v287
      %v383 = vunpack.c.l.b16 %v288
      %v384 = vpack.c.b16 %v363, %v360
      %v385 = vpack.c.b16 %v364, %v361
      %v386 = vpack.c.b16 %v365, %v362
      %v387 = vpack.c.b16 %v369, %v366
      %v388 = vpack.c.b16 %v370, %v367
      %v389 = vpack.c.b16 %v371, %v368
      %v390 = vpack.c.b16 %v375, %v372
      %v391 = vpack.c.b16 %v376, %v373
      %v392 = vpack.c.b16 %v377, %v374
      %v393 = vpack.c.b16 %v381, %v378
      %v394 = vpack.c.b16 %v382, %v379
      %v395 = vpack.c.b16 %v383, %v380
      %v456 = vunpack.c.l.b16 %v289
      %v457 = vunpack.c.l.b16 %v290
      %v458 = vunpack.c.l.b16 %v291
      %v459 = vunpack.c.l.b16 %v292
      %v460 = vunpack.c.l.b16 %v293
      %v461 = vunpack.c.l.b16 %v294
      %v462 = vunpack.c.l.b16 %v295
      %v463 = vunpack.c.l.b16 %v296
      %v464 = vunpack.c.l.b16 %v297
      %v465 = vunpack.c.l.b16 %v298
      %v466 = vunpack.c.l.b16 %v299
      %v467 = vunpack.c.l.b16 %v300
      %v468 = vunpack.c.l.b16 %v301
      %v469 = vunpack.c.l.b16 %v302
      %v470 = vunpack.c.l.b16 %v303
      %v471 = vunpack.c.l.b16 %v304
      %v472 = vunpack.c.l.b16 %v305
      %v473 = vunpack.c.l.b16 %v306
      %v474 = vunpack.c.l.b16 %v307
      %v475 = vunpack.c.l.b16 %v308
      %v476 = vunpack.c.l.b16 %v309
      %v477 = vunpack.c.l.b16 %v310
      %v478 = vunpack.c.l.b16 %v311
      %v479 = vunpack.c.l.b16 %v312
      %v480 = vunpack.c.l.b16 %v313
      %v481 = vunpack.c.l.b16 %v314
      %v482 = vunpack.c.l.b16 %v315
      %v483 = vunpack.c.l.b16 %v316
      %v484 = vunpack.c.l.b16 %v317
      %v485 = vunpack.c.l.b16 %v318
      %v486 = vunpack.c.l.b16 %v319
      %v487 = vunpack.c.l.b16 %v320
      %v488 = vunpack.c.l.b16 %v321
      %v489 = vunpack.c.l.b16 %v322
      %v490 = vunpack.c.l.b16 %v323
      %v491 = vunpack.c.l.b16 %v324
      %v492 = vunpack.c.l.b16 %v325
      %v493 = vunpack.c.l.b16 %v326
      %v494 = vunpack.c.l.b16 %v327
      %v495 = vunpack.c.l.b16 %v328
      %v496 = vunpack.c.l.b16 %v329
      %v497 = vunpack.c.l.b16 %v330
      %v498 = vunpack.c.l.b16 %v331
      %v499 = vunpack.c.l.b16 %v332
      %v500 = vunpack.c.l.b16 %v333
      %v501 = vunpack.c.l.b16 %v334
      %v502 = vunpack.c.l.b16 %v335
      %v503 = vunpack.c.l.b16 %v336
      %v504 = vpack.c.b16 %v457, %v456
      %v505 = vpack.c.b16 %v459, %v458
      %v506 = vpack.c.b16 %v461, %v460
      %v507 = vpack.c.b16 %v463, %v462
      %v508 = vpack.c.b16 %v465, %v464
      %v509 = vpack.c.b16 %v467, %v466
      %v510 = vpack.c.b16 %v469, %v468
      %v511 = vpack.c.b16 %v471, %v470
      %v512 = vpack.c.b16 %v473, %v472
      %v513 = vpack.c.b16 %v475, %v474
      %v514 = vpack.c.b16 %v477, %v476
      %v515 = vpack.c.b16 %v479, %v478
      %v516 = vpack.c.b16 %v481, %v480
      %v517 = vpack.c.b16 %v483, %v482
      %v518 = vpack.c.b16 %v485, %v484
      %v519 = vpack.c.b16 %v487, %v486
      %v520 = vpack.c.b16 %v489, %v488
      %v521 = vpack.c.b16 %v491, %v490
      %v522 = vpack.c.b16 %v493, %v492
      %v523 = vpack.c.b16 %v495, %v494
      %v524 = vpack.c.b16 %v497, %v496
      %v525 = vpack.c.b16 %v499, %v498
      %v526 = vpack.c.b16 %v501, %v500
      %v527 = vpack.c.b16 %v503, %v502
      %552 = vmatprep.subr.bf16.mxu0 0
      %553 = vmatpush1.bf16.msra.mxu0 %v504
      %554 = vmatprep.subr.bf16.mxu0 0
      %555 = vmatpush1.bf16.msra.mxu0 %v505
      %556 = vmatprep.subr.bf16.mxu0 0
      %557 = vmatpush1.bf16.msra.mxu0 %v506
      %558 = vmatprep.subr.bf16.mxu0 0
      %559 = vmatpush1.bf16.msra.mxu0 %v507
      %560 = vmatprep.subr.bf16.mxu0 0
      %561 = vmatpush1.bf16.msra.mxu0 %v508
      %562 = vmatprep.subr.bf16.mxu0 0
      %563 = vmatpush1.bf16.msra.mxu0 %v509
      %564 = vmatprep.subr.bf16.mxu0 0
      %565 = vmatpush1.bf16.msra.mxu0 %v510
      %566 = vmatprep.subr.bf16.mxu0 0
      %567 = vmatpush1.bf16.msra.mxu0 %v511
      %568 = vmatprep.subr.bf16.mxu0 0
      %569 = vmatpush1.bf16.msra.mxu0 %v512
      %570 = vmatprep.subr.bf16.mxu0 0
      %571 = vmatpush1.bf16.msra.mxu0 %v513
      %572 = vmatprep.subr.bf16.mxu0 0
      %573 = vmatpush1.bf16.msra.mxu0 %v514
      %574 = vmatprep.subr.bf16.mxu0 0
      %575 = vmatpush1.bf16.msra.mxu0 %v515
      %576 = vmatprep.subr.bf16.mxu0 0
      %577 = vmatpush1.bf16.msra.mxu0 %v516
      %578 = vmatprep.subr.bf16.mxu0 0
      %579 = vmatpush1.bf16.msra.mxu0 %v517
      %580 = vmatprep.subr.bf16.mxu0 0
      %581 = vmatpush1.bf16.msra.mxu0 %v518
      %582 = vmatprep.subr.bf16.mxu0 0
      %583 = vmatpush1.bf16.msra.mxu0 %v519
      %584 = vmatprep.mubr.bf16.mxu0 %v385
      %585 = vmatmul.mubr.bf16.gmra.mrb[0].mxu0 %v384
      %v586 = vpop.f32.mrb[0].mxu0
      %v587 = vadd.f32 %v342, %v586
      %v588 = vpop.f32.mrb[0].mxu0
      %v589 = vpop.f32.mrb[0].mxu0
      %v590 = vadd.f32 %v342, %v589
      %v591 = vpop.f32.mrb[0].mxu0
      %592 = vmatprep.mubr.bf16.mxu0 %v388
      %593 = vmatmul.mubr.bf16.gmra.mrb[0].mxu0 %v387
      %v594 = vpop.f32.mrb[0].mxu0
      %v595 = vadd.f32 %v342, %v594
      %v596 = vpop.f32.mrb[0].mxu0
      %v597 = vpop.f32.mrb[0].mxu0
      %v598 = vadd.f32 %v342, %v597
      %v599 = vpop.f32.mrb[0].mxu0
      %600 = vmatprep.mubr.bf16.mxu0 %v391
      %601 = vmatmul.mubr.bf16.gmra.mrb[0].mxu0 %v390
      %v602 = vpop.f32.mrb[0].mxu0
      %v603 = vadd.f32 %v342, %v602
      %v604 = vpop.f32.mrb[0].mxu0
      %v605 = vpop.f32.mrb[0].mxu0
      %v606 = vadd.f32 %v342, %v605
      %v607 = vpop.f32.mrb[0].mxu0
      %608 = vmatprep.mubr.bf16.mxu0 %v394
      %609 = vmatmul.mubr.bf16.gmra.mrb[0].mxu0 %v393
      %v610 = vpop.f32.mrb[0].mxu0
      %v611 = vadd.f32 %v342, %v610
      %v612 = vpop.f32.mrb[0].mxu0
      %v613 = vpop.f32.mrb[0].mxu0
      %v614 = vadd.f32 %v342, %v613
      %v615 = vpop.f32.mrb[0].mxu0
      %616 = vdwg.mxu0
      %617 = vmatprep.subr.bf16.mxu0 0
      %618 = vmatpush1.bf16.msra.mxu0 %v520
      %619 = vmatprep.subr.bf16.mxu0 0
      %620 = vmatpush1.bf16.msra.mxu0 %v521
      %621 = vmatprep.subr.bf16.mxu0 0
      %622 = vmatpush1.bf16.msra.mxu0 %v522
      %623 = vmatprep.subr.bf16.mxu0 0
      %624 = vmatpush1.bf16.msra.mxu0 %v523
      %625 = vmatprep.subr.bf16.mxu0 0
      %626 = vmatpush1.bf16.msra.mxu0 %v524
      %627 = vmatprep.subr.bf16.mxu0 0
      %628 = vmatpush1.bf16.msra.mxu0 %v525
      %629 = vmatprep.subr.bf16.mxu0 0
      %630 = vmatpush1.bf16.msra.mxu0 %v526
      %631 = vmatprep.subr.bf16.mxu0 0
      %632 = vmatpush1.bf16.msra.mxu0 %v527
      %633 = vmatprep.subr.bf16.mxu0 0
      %634 = vmatpush1.bf16.msra.mxu0 0
      %635 = vmatprep.subr.bf16.mxu0 0
      %636 = vmatpush1.bf16.msra.mxu0 0
      %637 = vmatprep.subr.bf16.mxu0 0
      %638 = vmatpush1.bf16.msra.mxu0 0
      %639 = vmatprep.subr.bf16.mxu0 0
      %640 = vmatpush1.bf16.msra.mxu0 0
      %641 = vmatprep.subr.bf16.mxu0 0
      %642 = vmatpush1.bf16.msra.mxu0 0
      %643 = vmatprep.subr.bf16.mxu0 0
      %644 = vmatpush1.bf16.msra.mxu0 0
      %645 = vmatprep.subr.bf16.mxu0 0
      %646 = vmatpush1.bf16.msra.mxu0 0
      %647 = vmatprep.subr.bf16.mxu0 0
      %648 = vmatpush1.bf16.msra.mxu0 0
      %649 = vmatprep.mubr.bf16.mxu0 0
      %650 = vmatmul.mubr.bf16.gmra.mrb[0].mxu0 %v386
      %v651 = vpop.f32.mrb[0].mxu0
      %v652 = vadd.f32 %v587, %v651
      %v653 = vpop.f32.mrb[0].mxu0
      %v654 = vpop.f32.mrb[0].mxu0
      %v655 = vadd.f32 %v590, %v654
      %v656 = vpop.f32.mrb[0].mxu0
      %657 = vmatprep.mubr.bf16.mxu0 0
      %658 = vmatmul.mubr.bf16.gmra.mrb[0].mxu0 %v389
      %v659 = vpop.f32.mrb[0].mxu0
      %v660 = vadd.f32 %v595, %v659
      %v661 = vpop.f32.mrb[0].mxu0
      %v662 = vpop.f32.mrb[0].mxu0
      %v663 = vadd.f32 %v598, %v662
      %v664 = vpop.f32.mrb[0].mxu0
      %665 = vmatprep.mubr.bf16.mxu0 0
      %666 = vmatmul.mubr.bf16.gmra.mrb[0].mxu0 %v392
      %v667 = vpop.f32.mrb[0].mxu0
      %v668 = vadd.f32 %v603, %v667
      %v669 = vpop.f32.mrb[0].mxu0
      %v670 = vpop.f32.mrb[0].mxu0
      %v671 = vadd.f32 %v606, %v670
      %v672 = vpop.f32.mrb[0].mxu0
      %673 = vmatprep.mubr.bf16.mxu0 0
      %674 = vmatmul.mubr.bf16.gmra.mrb[0].mxu0 %v395
      %v675 = vpop.f32.mrb[0].mxu0
      %v676 = vadd.f32 %v611, %v675
      %v677 = vpop.f32.mrb[0].mxu0
      %v678 = vpop.f32.mrb[0].mxu0
      %v679 = vadd.f32 %v614, %v678
      %v680 = vpop.f32.mrb[0].mxu0
      %681 = vdwg.mxu0
      %v682 = vadd.f32 %v652, %v655
      %v683 = vadd.f32 %v682, %v660
      %v684 = vadd.f32 %v683, %v663
      %v685 = vadd.f32 %v684, %v668
      %v686 = vadd.f32 %v685, %v671
      %v687 = vadd.f32 %v686, %v676
      %v688 = vadd.f32 %v687, %v679
      %v689 = vrot.slane %v688, 4
      %v690 = vadd.f32 %v688, %v689
      %v691 = vrot.slane %v690, 2
      %v692 = vadd.f32 %v690, %v691
      %v693 = vrot.slane %v692, 1
      %v694 = vadd.f32 %v692, %v693
      %v695 = vmul.f32 %v694, 0.015625
      %v696 = vsub.f32 %v652, %v695
      %v697 = vsub.f32 %v655, %v695
      %v698 = vsub.f32 %v660, %v695
      %v699 = vsub.f32 %v663, %v695
      %v700 = vsub.f32 %v668, %v695
      %v701 = vsub.f32 %v671, %v695
      %v702 = vsub.f32 %v676, %v695
      %v703 = vsub.f32 %v679, %v695
      %v704 = vmul.f32 %v696, %v696
      %v705 = vmul.f32 %v697, %v697
      %v706 = vmul.f32 %v698, %v698
      %v707 = vmul.f32 %v699, %v699
      %v708 = vmul.f32 %v700, %v700
      %v709 = vmul.f32 %v701, %v701
      %v710 = vmul.f32 %v702, %v702
      %v711 = vmul.f32 %v703, %v703
      %v712 = vadd.f32 %v704, %v705
      %v713 = vadd.f32 %v712, %v706
      %v714 = vadd.f32 %v713, %v707
      %v715 = vadd.f32 %v714, %v708
      %v716 = vadd.f32 %v715, %v709
      %v717 = vadd.f32 %v716, %v710
      %v718 = vadd.f32 %v717, %v711
      %v719 = vrot.slane %v718, 4
      %v720 = vadd.f32 %v718, %v719
      %v721 = vrot.slane %v720, 2
      %v722 = vadd.f32 %v720, %v721
      %v723 = vrot.slane %v722, 1
      %v724 = vadd.f32 %v722, %v723
      %v725 = vmul.f32 %v724, 0.015625
      %v726 = vadd.f32 %v725, 1e-05
      %v727 = vrsqrt.pop %v726
      %v728 = vmul.f32 %v696, %v727
      %v729 = vmul.f32 %v697, %v727
      %v730 = vmul.f32 %v698, %v727
      %v731 = vmul.f32 %v699, %v727
      %v732 = vmul.f32 %v700, %v727
      %v733 = vmul.f32 %v701, %v727
      %v734 = vmul.f32 %v702, %v727
      %v735 = vmul.f32 %v703, %v727
      %v736 = vld [vmem:[%s3] sm:$0x1]
      %v738 = vlaneseq
      %v739 = vshrl.u32 %v738, 7
      %v740 = vsub.s32 0, %v739
      %v741 = vrot.slane %v736, %v740
      %v743 = vmul.f32 %v728, %v741
      %v744 = vmul.f32 %v729, %v741
      %v745 = vmul.f32 %v730, %v741
      %v746 = vmul.f32 %v731, %v741
      %v747 = vmul.f32 %v732, %v741
      %v748 = vmul.f32 %v733, %v741
      %v749 = vmul.f32 %v734, %v741
      %v750 = vmul.f32 %v735, %v741
      %v751 = vld [vmem:[%s4] sm:$0x1]
      %v753 = vlaneseq
      %v754 = vshrl.u32 %v753, 7
      %v755 = vsub.s32 0, %v754
      %v756 = vrot.slane %v751, %v755
      %v758 = vadd.f32 %v743, %v756
      %v759 = vadd.f32 %v744, %v756
      %v760 = vadd.f32 %v745, %v756
      %v761 = vadd.f32 %v746, %v756
      %v762 = vadd.f32 %v747, %v756
      %v763 = vadd.f32 %v748, %v756
      %v764 = vadd.f32 %v749, %v756
      %v765 = vadd.f32 %v750, %v756
      %v766 = vld [vmem:[%s266] sm:$0xff]
      %v767 = vld [vmem:[%s266 + $0x8] sm:$0xff]
      %v768 = vld [vmem:[%s266 + $0x10] sm:$0xff]
      %v769 = vld [vmem:[%s266 + $0x18] sm:$0xff]
      %v770 = vld [vmem:[%s266 + $0x20] sm:$0xff]
      %v771 = vld [vmem:[%s266 + $0x28] sm:$0xff]
      %v772 = vld [vmem:[%s266 + $0x30] sm:$0xff]
      %v773 = vld [vmem:[%s266 + $0x38] sm:$0xff]
      %v774 = vadd.f32 %v758, %v766
      %v775 = vadd.f32 %v759, %v767
      %v776 = vadd.f32 %v760, %v768
      %v777 = vadd.f32 %v761, %v769
      %v778 = vadd.f32 %v762, %v770
      %v779 = vadd.f32 %v763, %v771
      %v780 = vadd.f32 %v764, %v772
      %v781 = vadd.f32 %v765, %v773
      %782 = vst [vmem:[%s271] sm:$0xff] %v774
      %783 = vst [vmem:[%s271 + $0x8] sm:$0xff] %v775
      %784 = vst [vmem:[%s271 + $0x10] sm:$0xff] %v776
      %785 = vst [vmem:[%s271 + $0x18] sm:$0xff] %v777
      %786 = vst [vmem:[%s271 + $0x20] sm:$0xff] %v778
      %787 = vst [vmem:[%s271 + $0x28] sm:$0xff] %v779
      %788 = vst [vmem:[%s271 + $0x30] sm:$0xff] %v780
      %789 = vst [vmem:[%s271 + $0x38] sm:$0xff] %v781
      %p790 = scmp.lt.s32.totalorder %s17, 1
      %s791 = scalar_select %p790, %s17, 1
      %s792 = smul.addr %s791, 8
      %s793 = smul.addr %s792, 8
      %s794 = scalar_lea.vmem %s6, %s793
      // Predicated region
      $region45: #{resnet_generator_forward.16} parent=43 // pred_check
        %p795 = pneg %p171
      $region46: #{resnet_generator_forward.16} parent=43 // pred_check_branch
        %797 = sbr.rel (%p795) target = $region48
      $region47: #{resnet_generator_forward.16} parent=43 // pred_region
        _
      $region48: #{resnet_generator_forward.16} parent=43 // pred_fallthru
        _
    $region44: #{resnet_generator_forward.16} parent=5 // pred_fallthru
      _
    %p798 = scmp.le.s32.totalorder 2, %s12
    // Predicated region
    $region49: #{resnet_generator_forward.16} parent=5 // pred_check
      %p799 = pneg %p798
    $region50: #{resnet_generator_forward.16} parent=5 // pred_check_branch
      %801 = sbr.rel (%p799) target = $region52
    $region51: #{resnet_generator_forward.16} parent=5 // pred_region
      %s802 = ssub.s32 %s12, 2
      // Predicated region
      $region53: #{resnet_generator_forward.16} parent=51 // pred_check
        %p803 = pneg %p177
      $region54: #{resnet_generator_forward.16} parent=51 // pred_check_branch
        %805 = sbr.rel (%p803) target = $region56
      $region55: #{resnet_generator_forward.16} parent=51 // pred_region
        %p806 = scmp.lt.s32.totalorder %s18, 1
        %s807 = scalar_select %p806, %s18, 1
        %s808 = smul.addr %s807, 8
        %s809 = smul.addr %s808, 8
        %s810 = scalar_lea.vmem %s6, %s809
      $region56: #{resnet_generator_forward.16} parent=51 // pred_fallthru
        _
    $region52: #{resnet_generator_forward.16} parent=5 // pred_fallthru
      _
  $region6: #{resnet_generator_forward.16} parent=0 // loop_footer
    %s16 = sadd.s32 1, %s12
  $region7: #{resnet_generator_forward.16} parent=0 // loop_footer_branch
    %11 = sbr.rel target = $region3
  $region8: #{resnet_generator_forward.16} parent=0 // loop_exit
    _

// kernel: resnet_generator_forward.21
$region0: #{resnet_generator_forward.21}
  #allocation0 [shape = 'u32[]', space=smem, size = 0x4, offset = 0x4, fixed_abs, tag = 'smem constant byte address 0x4 - core index']
  #allocation1 [shape = 'u32[144,128]{1,0:T(1,128)}', space=vmem, size = 0x12000, scoped, tag = 'internal scratch']
  %s0 = inlined_call_operand.vmem [shape: bf16[2,256,384], index: 0, kind: input, shape index: {}]
  %s1 = inlined_call_operand.vmem [shape: bf16[384,128], index: 1, kind: input, shape index: {}]
  %s2 = inlined_call_operand.vmem [shape: f32[1,128], index: 2, kind: input, shape index: {}]
  %s3 = inlined_call_operand.vmem [shape: f32[1,128], index: 3, kind: input, shape index: {}]
  %s4 = inlined_call_operand.vmem [shape: f32[1,128], index: 4, kind: input, shape index: {}]
  %s5 = inlined_call_operand.vmem [shape: f32[2,256,128], index: 5, kind: output, shape index: {}]
  %s6 = sld [smem:[#allocation0]]
  $region53: #{resnet_generator_forward.21} parent=0
    _
  %s8 = ssub.s32 1, %s6
  %s9 = scalar_select 0, %s8, %s6
  loop: start=0, step=1, limit=4
  $region2: #{resnet_generator_forward.21} parent=0 // loop_pre_header
    _
  $region3: #{resnet_generator_forward.21} parent=0 // loop_header
    %s11 = sphi 0, %s15
    %p12 = scmp.ge.s32.totalorder %s11, 4
    %s21 = sphi 0, %s23
    %s24 = sphi 0, %s21
    %s25 = sphi 0, %s24
    %s41 = sphi 0, %s25
    %s45 = sphi 0, %s45
    %s47 = sphi 0, %s45
    %s48 = sphi 0, %s47
    %s62 = sphi 0, %s48
    %s66 = sphi 0, %s66
    %s68 = sphi 0, %s66
    %s69 = sphi 0, %s68
    %s83 = sphi 0, %s69
    %s87 = sphi 0, %s87
    %s89 = sphi 0, %s87
    %s90 = sphi 0, %s89
    %s104 = sphi 0, %s90
    %s108 = sphi 0, %s108
    %s110 = sphi 0, %s108
    %s111 = sphi 0, %s110
    %s125 = sphi 0, %s111
    %s131 = sphi 0, %s133
    %s134 = sphi 0, %s131
    %s135 = sphi 0, %s134
    %s151 = sphi 0, %s135
  $region4: #{resnet_generator_forward.21} parent=0 // loop_header_branch
    %14 = sbr.rel (%p12) target = $region8
  $region5: #{resnet_generator_forward.21} parent=0 // loop_body
    %s16 = ssub.s32 %s11, 1
    %s17 = ssub.s32 %s11, 2
    %s18 = sadd.s32 %s11, 1
    %s19 = ssub.s32 %s11, %s18
    %p20 = scmp.eq.s32.totalorder %s19, 0
    %s22 = sadd.s32 %s21, 1
    %s23 = scalar_select %p20, %s21, %s22
    %p26 = pneg %p20
    %p27 = scmp.eq.s32.totalorder %s11, 1
    %p28 = por %p26, %p27
    %p29 = scmp.ne.s32.totalorder %s21, %s24
    %p30 = scmp.eq.s32.totalorder %s11, 0
    %p31 = por %p29, %p30
    %p32 = scmp.ne.s32.totalorder %s21, %s24
    %p33 = scmp.eq.s32.totalorder %s16, 1
    %p34 = por %p32, %p33
    %p35 = scmp.ne.s32.totalorder %s24, %s25
    %p36 = scmp.eq.s32.totalorder %s16, 0
    %p37 = por %p35, %p36
    %p38 = scmp.ne.s32.totalorder %s24, %s25
    %p39 = scmp.eq.s32.totalorder %s17, 1
    %p40 = por %p38, %p39
    %p42 = scmp.ne.s32.totalorder %s25, %s41
    %p43 = scmp.eq.s32.totalorder %s17, 0
    %p44 = por %p42, %p43
    %s46 = sadd.s32 %s45, 1
    %p49 = scmp.eq.s32.totalorder %s11, 1
    %p50 = scmp.ne.s32.totalorder %s45, %s47
    %p51 = scmp.eq.s32.totalorder %s11, 0
    %p52 = por %p50, %p51
    %p53 = scmp.ne.s32.totalorder %s45, %s47
    %p54 = scmp.eq.s32.totalorder %s16, 1
    %p55 = por %p53, %p54
    %p56 = scmp.ne.s32.totalorder %s47, %s48
    %p57 = scmp.eq.s32.totalorder %s16, 0
    %p58 = por %p56, %p57
    %p59 = scmp.ne.s32.totalorder %s47, %s48
    %p60 = scmp.eq.s32.totalorder %s17, 1
    %p61 = por %p59, %p60
    %p63 = scmp.ne.s32.totalorder %s48, %s62
    %p64 = scmp.eq.s32.totalorder %s17, 0
    %p65 = por %p63, %p64
    %s67 = sadd.s32 %s66, 1
    %p70 = scmp.eq.s32.totalorder %s11, 1
    %p71 = scmp.ne.s32.totalorder %s66, %s68
    %p72 = scmp.eq.s32.totalorder %s11, 0
    %p73 = por %p71, %p72
    %p74 = scmp.ne.s32.totalorder %s66, %s68
    %p75 = scmp.eq.s32.totalorder %s16, 1
    %p76 = por %p74, %p75
    %p77 = scmp.ne.s32.totalorder %s68, %s69
    %p78 = scmp.eq.s32.totalorder %s16, 0
    %p79 = por %p77, %p78
    %p80 = scmp.ne.s32.totalorder %s68, %s69
    %p81 = scmp.eq.s32.totalorder %s17, 1
    %p82 = por %p80, %p81
    %p84 = scmp.ne.s32.totalorder %s69, %s83
    %p85 = scmp.eq.s32.totalorder %s17, 0
    %p86 = por %p84, %p85
    %s88 = sadd.s32 %s87, 1
    %p91 = scmp.eq.s32.totalorder %s11, 1
    %p92 = scmp.ne.s32.totalorder %s87, %s89
    %p93 = scmp.eq.s32.totalorder %s11, 0
    %p94 = por %p92, %p93
    %p95 = scmp.ne.s32.totalorder %s87, %s89
    %p96 = scmp.eq.s32.totalorder %s16, 1
    %p97 = por %p95, %p96
    %p98 = scmp.ne.s32.totalorder %s89, %s90
    %p99 = scmp.eq.s32.totalorder %s16, 0
    %p100 = por %p98, %p99
    %p101 = scmp.ne.s32.totalorder %s89, %s90
    %p102 = scmp.eq.s32.totalorder %s17, 1
    %p103 = por %p101, %p102
    %p105 = scmp.ne.s32.totalorder %s90, %s104
    %p106 = scmp.eq.s32.totalorder %s17, 0
    %p107 = por %p105, %p106
    %s109 = sadd.s32 %s108, 1
    %p112 = scmp.eq.s32.totalorder %s11, 1
    %p113 = scmp.ne.s32.totalorder %s108, %s110
    %p114 = scmp.eq.s32.totalorder %s11, 0
    %p115 = por %p113, %p114
    %p116 = scmp.ne.s32.totalorder %s108, %s110
    %p117 = scmp.eq.s32.totalorder %s16, 1
    %p118 = por %p116, %p117
    %p119 = scmp.ne.s32.totalorder %s110, %s111
    %p120 = scmp.eq.s32.totalorder %s16, 0
    %p121 = por %p119, %p120
    %p122 = scmp.ne.s32.totalorder %s110, %s111
    %p123 = scmp.eq.s32.totalorder %s17, 1
    %p124 = por %p122, %p123
    %p126 = scmp.ne.s32.totalorder %s111, %s125
    %p127 = scmp.eq.s32.totalorder %s17, 0
    %p128 = por %p126, %p127
    %s129 = ssub.s32 %s11, %s18
    %p130 = scmp.eq.s32.totalorder %s129, 0
    %s132 = sadd.s32 %s131, 1
    %s133 = scalar_select %p130, %s131, %s132
    %p136 = pneg %p130
    %p137 = scmp.eq.s32.totalorder %s11, 1
    %p138 = por %p136, %p137
    %p139 = scmp.ne.s32.totalorder %s131, %s134
    %p140 = scmp.eq.s32.totalorder %s11, 0
    %p141 = por %p139, %p140
    %p142 = scmp.ne.s32.totalorder %s131, %s134
    %p143 = scmp.eq.s32.totalorder %s16, 1
    %p144 = por %p142, %p143
    %p145 = scmp.ne.s32.totalorder %s134, %s135
    %p146 = scmp.eq.s32.totalorder %s16, 0
    %p147 = por %p145, %p146
    %p148 = scmp.ne.s32.totalorder %s134, %s135
    %p149 = scmp.eq.s32.totalorder %s17, 1
    %p150 = por %p148, %p149
    %p152 = scmp.ne.s32.totalorder %s135, %s151
    %p153 = scmp.eq.s32.totalorder %s17, 0
    %p154 = por %p152, %p153
    %p155 = scmp.le.s32.totalorder 1, %s11
    %p156 = scmp.lt.s32.totalorder %s11, 3
    %p157 = pnand %p155, %p156
    %p158 = pneg %p157
    // Predicated region
    $region9: #{resnet_generator_forward.21} parent=5 // pred_check
      _
    $region10: #{resnet_generator_forward.21} parent=5 // pred_check_branch
      %160 = sbr.rel (%p157) target = $region12
    $region11: #{resnet_generator_forward.21} parent=5 // pred_region
      %s161 = ssub.s32 %s11, 1
      // Predicated region
      $region13: #{resnet_generator_forward.21} parent=11 // pred_check
        %p162 = pneg %p58
      $region14: #{resnet_generator_forward.21} parent=11 // pred_check_branch
        %164 = sbr.rel (%p162) target = $region16
      $region15: #{resnet_generator_forward.21} parent=11 // pred_region
        _
      $region16: #{resnet_generator_forward.21} parent=11 // pred_fallthru
        _
      // Predicated region
      $region17: #{resnet_generator_forward.21} parent=11 // pred_check
        %p165 = pneg %p79
      $region18: #{resnet_generator_forward.21} parent=11 // pred_check_branch
        %167 = sbr.rel (%p165) target = $region20
      $region19: #{resnet_generator_forward.21} parent=11 // pred_region
        _
      $region20: #{resnet_generator_forward.21} parent=11 // pred_fallthru
        _
      // Predicated region
      $region21: #{resnet_generator_forward.21} parent=11 // pred_check
        %p168 = pneg %p100
      $region22: #{resnet_generator_forward.21} parent=11 // pred_check_branch
        %170 = sbr.rel (%p168) target = $region24
      $region23: #{resnet_generator_forward.21} parent=11 // pred_region
        _
      $region24: #{resnet_generator_forward.21} parent=11 // pred_fallthru
        _
      // Predicated region
      $region25: #{resnet_generator_forward.21} parent=11 // pred_check
        %p171 = pneg %p121
      $region26: #{resnet_generator_forward.21} parent=11 // pred_check_branch
        %173 = sbr.rel (%p171) target = $region28
      $region27: #{resnet_generator_forward.21} parent=11 // pred_region
        _
      $region28: #{resnet_generator_forward.21} parent=11 // pred_fallthru
        _
    $region12: #{resnet_generator_forward.21} parent=5 // pred_fallthru
      _
    %p174 = scmp.lt.s32.totalorder %s11, 2
    // Predicated region
    $region29: #{resnet_generator_forward.21} parent=5 // pred_check
      %p175 = pneg %p174
    $region30: #{resnet_generator_forward.21} parent=5 // pred_check_branch
      %177 = sbr.rel (%p175) target = $region32
    $region31: #{resnet_generator_forward.21} parent=5 // pred_region
      // Predicated region
      $region33: #{resnet_generator_forward.21} parent=31 // pred_check
        %p178 = pneg %p31
      $region34: #{resnet_generator_forward.21} parent=31 // pred_check_branch
        %180 = sbr.rel (%p178) target = $region36
      $region35: #{resnet_generator_forward.21} parent=31 // pred_region
        %p181 = scmp.lt.s32.totalorder %s11, 1
        %s182 = scalar_select %p181, %s11, 1
        %s183 = smul.addr %s182, 96
        %s184 = smul.addr %s183, 4
        %s185 = scalar_lea.vmem %s0, %s184
      $region36: #{resnet_generator_forward.21} parent=31 // pred_fallthru
        _
    $region32: #{resnet_generator_forward.21} parent=5 // pred_fallthru
      _
    %p186 = scmp.le.s32.totalorder 1, %s11
    %p187 = scmp.lt.s32.totalorder %s11, 3
    %p188 = pnand %p186, %p187
    %p189 = pneg %p188
    // Predicated region
    $region37: #{resnet_generator_forward.21} parent=5 // pred_check
      _
    $region38: #{resnet_generator_forward.21} parent=5 // pred_check_branch
      %191 = sbr.rel (%p188) target = $region40
    $region39: #{resnet_generator_forward.21} parent=5 // pred_region
      %s192 = ssub.s32 %s11, 1
      %p193 = scmp.lt.s32.totalorder %s16, 1
      %s194 = scalar_select %p193, %s16, 1
      %s195 = smul.addr %s194, 96
      %s196 = smul.addr %s195, 4
      %s197 = scalar_lea.vmem %s0, %s196
      %p198 = pneg %p37
      %p199 = pneg %p34
      %p200 = pneg %p58
      %p201 = pneg %p55
      %p202 = pneg %p79
      %p203 = pneg %p76
      %p204 = pneg %p100
      %p205 = pneg %p97
      %p206 = pneg %p121
      %p207 = pneg %p118
      %p208 = pneg %p147
      %p209 = pneg %p144
      %p210 = scmp.lt.s32.totalorder %s16, 1
      %s211 = scalar_select %p210, %s16, 1
      %s212 = smul.addr %s211, 32
      %s213 = smul.addr %s212, 8
      %s214 = scalar_lea.vmem %s5, %s213
      %p215 = scmp.lt.s32.totalorder %s16, 1
      %s216 = scalar_select %p215, %s16, 1
      %s217 = smul.addr %s216, 96
      %s218 = smul.addr %s217, 4
      %s219 = scalar_lea.vmem %s0, %s218
      %p220 = scmp.lt.s32.totalorder %s16, 1
      %s221 = scalar_select %p220, %s16, 1
      %s222 = smul.addr %s221, 32
      %s223 = smul.addr %s222, 8
      %s224 = scalar_lea.vmem %s5, %s223
      %v226 = vld [vmem:[%s219] sm:$0xff]
      %v227 = vld [vmem:[%s219 + $0x8] sm:$0xf]
      %v228 = vld [vmem:[%s219 + $0xc] sm:$0xff]
      %v229 = vld [vmem:[%s219 + $0x14] sm:$0xf]
      %v230 = vld [vmem:[%s219 + $0x18] sm:$0xff]
      %v231 = vld [vmem:[%s219 + $0x20] sm:$0xf]
      %v232 = vld [vmem:[%s219 + $0x24] sm:$0xff]
      %v233 = vld [vmem:[%s219 + $0x2c] sm:$0xf]
      %v234 = vld [vmem:[%s219 + $0x30] sm:$0xff]
      %v235 = vld [vmem:[%s219 + $0x38] sm:$0xf]
      %v236 = vld [vmem:[%s219 + $0x3c] sm:$0xff]
      %v237 = vld [vmem:[%s219 + $0x44] sm:$0xf]
      %v238 = vld [vmem:[%s219 + $0x48] sm:$0xff]
      %v239 = vld [vmem:[%s219 + $0x50] sm:$0xf]
      %v240 = vld [vmem:[%s219 + $0x54] sm:$0xff]
      %v241 = vld [vmem:[%s219 + $0x5c] sm:$0xf]
      %v242 = vld [vmem:[%s219 + $0x60] sm:$0xff]
      %v243 = vld [vmem:[%s219 + $0x68] sm:$0xf]
      %v244 = vld [vmem:[%s219 + $0x6c] sm:$0xff]
      %v245 = vld [vmem:[%s219 + $0x74] sm:$0xf]
      %v246 = vld [vmem:[%s219 + $0x78] sm:$0xff]
      %v247 = vld [vmem:[%s219 + $0x80] sm:$0xf]
      %v248 = vld [vmem:[%s219 + $0x84] sm:$0xff]
      %v249 = vld [vmem:[%s219 + $0x8c] sm:$0xf]
      %v250 = vld [vmem:[%s219 + $0x90] sm:$0xff]
      %v251 = vld [vmem:[%s219 + $0x98] sm:$0xf]
      %v252 = vld [vmem:[%s219 + $0x9c] sm:$0xff]
      %v253 = vld [vmem:[%s219 + $0xa4] sm:$0xf]
      %v254 = vld [vmem:[%s219 + $0xa8] sm:$0xff]
      %v255 = vld [vmem:[%s219 + $0xb0] sm:$0xf]
      %v256 = vld [vmem:[%s219 + $0xb4] sm:$0xff]
      %v257 = vld [vmem:[%s219 + $0xbc] sm:$0xf]
      %v258 = vld [vmem:[%s219 + $0xc0] sm:$0xff]
      %v259 = vld [vmem:[%s219 + $0xc8] sm:$0xf]
      %v260 = vld [vmem:[%s219 + $0xcc] sm:$0xff]
      %v261 = vld [vmem:[%s219 + $0xd4] sm:$0xf]
      %v262 = vld [vmem:[%s219 + $0xd8] sm:$0xff]
      %v263 = vld [vmem:[%s219 + $0xe0] sm:$0xf]
      %v264 = vld [vmem:[%s219 + $0xe4] sm:$0xff]
      %v265 = vld [vmem:[%s219 + $0xec] sm:$0xf]
      %v266 = vld [vmem:[%s219 + $0xf0] sm:$0xff]
      %v267 = vld [vmem:[%s219 + $0xf8] sm:$0xf]
      %v268 = vld [vmem:[%s219 + $0xfc] sm:$0xff]
      %v269 = vld [vmem:[%s219 + $0x104] sm:$0xf]
      %v270 = vld [vmem:[%s219 + $0x108] sm:$0xff]
      %v271 = vld [vmem:[%s219 + $0x110] sm:$0xf]
      %v272 = vld [vmem:[%s219 + $0x114] sm:$0xff]
      %v273 = vld [vmem:[%s219 + $0x11c] sm:$0xf]
      %v274 = vld [vmem:[%s219 + $0x120] sm:$0xff]
      %v275 = vld [vmem:[%s219 + $0x128] sm:$0xf]
      %v276 = vld [vmem:[%s219 + $0x12c] sm:$0xff]
      %v277 = vld [vmem:[%s219 + $0x134] sm:$0xf]
      %v278 = vld [vmem:[%s219 + $0x138] sm:$0xff]
      %v279 = vld [vmem:[%s219 + $0x140] sm:$0xf]
      %v280 = vld [vmem:[%s219 + $0x144] sm:$0xff]
      %v281 = vld [vmem:[%s219 + $0x14c] sm:$0xf]
      %v282 = vld [vmem:[%s219 + $0x150] sm:$0xff]
      %v283 = vld [vmem:[%s219 + $0x158] sm:$0xf]
      %v284 = vld [vmem:[%s219 + $0x15c] sm:$0xff]
      %v285 = vld [vmem:[%s219 + $0x164] sm:$0xf]
      %v286 = vld [vmem:[%s219 + $0x168] sm:$0xff]
      %v287 = vld [vmem:[%s219 + $0x170] sm:$0xf]
      %v288 = vld [vmem:[%s219 + $0x174] sm:$0xff]
      %v289 = vld [vmem:[%s219 + $0x17c] sm:$0xf]
      %v290 = vld [vmem:[%s1] sm:$0xf]
      %v291 = vld [vmem:[%s1 + $0x4] sm:$0xf]
      %v292 = vld [vmem:[%s1 + $0x8] sm:$0xf]
      %v293 = vld [vmem:[%s1 + $0xc] sm:$0xf]
      %v294 = vld [vmem:[%s1 + $0x10] sm:$0xf]
      %v295 = vld [vmem:[%s1 + $0x14] sm:$0xf]
      %v296 = vld [vmem:[%s1 + $0x18] sm:$0xf]
      %v297 = vld [vmem:[%s1 + $0x1c] sm:$0xf]
      %v298 = vld [vmem:[%s1 + $0x20] sm:$0xf]
      %v299 = vld [vmem:[%s1 + $0x24] sm:$0xf]
      %v300 = vld [vmem:[%s1 + $0x28] sm:$0xf]
      %v301 = vld [vmem:[%s1 + $0x2c] sm:$0xf]
      %v302 = vld [vmem:[%s1 + $0x30] sm:$0xf]
      %v303 = vld [vmem:[%s1 + $0x34] sm:$0xf]
      %v304 = vld [vmem:[%s1 + $0x38] sm:$0xf]
      %v305 = vld [vmem:[%s1 + $0x3c] sm:$0xf]
      %v306 = vld [vmem:[%s1 + $0x40] sm:$0xf]
      %v307 = vld [vmem:[%s1 + $0x44] sm:$0xf]
      %v308 = vld [vmem:[%s1 + $0x48] sm:$0xf]
      %v309 = vld [vmem:[%s1 + $0x4c] sm:$0xf]
      %v310 = vld [vmem:[%s1 + $0x50] sm:$0xf]
      %v311 = vld [vmem:[%s1 + $0x54] sm:$0xf]
      %v312 = vld [vmem:[%s1 + $0x58] sm:$0xf]
      %v313 = vld [vmem:[%s1 + $0x5c] sm:$0xf]
      %v314 = vld [vmem:[%s1 + $0x60] sm:$0xf]
      %v315 = vld [vmem:[%s1 + $0x64] sm:$0xf]
      %v316 = vld [vmem:[%s1 + $0x68] sm:$0xf]
      %v317 = vld [vmem:[%s1 + $0x6c] sm:$0xf]
      %v318 = vld [vmem:[%s1 + $0x70] sm:$0xf]
      %v319 = vld [vmem:[%s1 + $0x74] sm:$0xf]
      %v320 = vld [vmem:[%s1 + $0x78] sm:$0xf]
      %v321 = vld [vmem:[%s1 + $0x7c] sm:$0xf]
      %v322 = vld [vmem:[%s1 + $0x80] sm:$0xf]
      %v323 = vld [vmem:[%s1 + $0x84] sm:$0xf]
      %v324 = vld [vmem:[%s1 + $0x88] sm:$0xf]
      %v325 = vld [vmem:[%s1 + $0x8c] sm:$0xf]
      %v326 = vld [vmem:[%s1 + $0x90] sm:$0xf]
      %v327 = vld [vmem:[%s1 + $0x94] sm:$0xf]
      %v328 = vld [vmem:[%s1 + $0x98] sm:$0xf]
      %v329 = vld [vmem:[%s1 + $0x9c] sm:$0xf]
      %v330 = vld [vmem:[%s1 + $0xa0] sm:$0xf]
      %v331 = vld [vmem:[%s1 + $0xa4] sm:$0xf]
      %v332 = vld [vmem:[%s1 + $0xa8] sm:$0xf]
      %v333 = vld [vmem:[%s1 + $0xac] sm:$0xf]
      %v334 = vld [vmem:[%s1 + $0xb0] sm:$0xf]
      %v335 = vld [vmem:[%s1 + $0xb4] sm:$0xf]
      %v336 = vld [vmem:[%s1 + $0xb8] sm:$0xf]
      %v337 = vld [vmem:[%s1 + $0xbc] sm:$0xf]
      %v338 = vld [vmem:[%s2] sm:$0x1]
      %v340 = vlaneseq
      %v341 = vshrl.u32 %v340, 7
      %v342 = vsub.s32 0, %v341
      %v343 = vrot.slane %v338, %v342
      %v409 = vunpack.c.l.b16 %v226
      %v410 = vunpack.c.h.b16 %v226
      %v411 = vunpack.c.l.b16 %v227
      %v412 = vunpack.c.l.b16 %v228
      %v413 = vunpack.c.h.b16 %v228
      %v414 = vunpack.c.l.b16 %v229
      %v415 = vunpack.c.l.b16 %v230
      %v416 = vunpack.c.h.b16 %v230
      %v417 = vunpack.c.l.b16 %v231
      %v418 = vunpack.c.l.b16 %v232
      %v419 = vunpack.c.h.b16 %v232
      %v420 = vunpack.c.l.b16 %v233
      %v421 = vunpack.c.l.b16 %v234
      %v422 = vunpack.c.h.b16 %v234
      %v423 = vunpack.c.l.b16 %v235
      %v424 = vunpack.c.l.b16 %v236
      %v425 = vunpack.c.h.b16 %v236
      %v426 = vunpack.c.l.b16 %v237
      %v427 = vunpack.c.l.b16 %v238
      %v428 = vunpack.c.h.b16 %v238
      %v429 = vunpack.c.l.b16 %v239
      %v430 = vunpack.c.l.b16 %v240
      %v431 = vunpack.c.h.b16 %v240
      %v432 = vunpack.c.l.b16 %v241
      %v433 = vunpack.c.l.b16 %v242
      %v434 = vunpack.c.h.b16 %v242
      %v435 = vunpack.c.l.b16 %v243
      %v436 = vunpack.c.l.b16 %v244
      %v437 = vunpack.c.h.b16 %v244
      %v438 = vunpack.c.l.b16 %v245
      %v439 = vunpack.c.l.b16 %v246
      %v440 = vunpack.c.h.b16 %v246
      %v441 = vunpack.c.l.b16 %v247
      %v442 = vunpack.c.l.b16 %v248
      %v443 = vunpack.c.h.b16 %v248
      %v444 = vunpack.c.l.b16 %v249
      %v445 = vunpack.c.l.b16 %v250
      %v446 = vunpack.c.h.b16 %v250
      %v447 = vunpack.c.l.b16 %v251
      %v448 = vunpack.c.l.b16 %v252
      %v449 = vunpack.c.h.b16 %v252
      %v450 = vunpack.c.l.b16 %v253
      %v451 = vunpack.c.l.b16 %v254
      %v452 = vunpack.c.h.b16 %v254
      %v453 = vunpack.c.l.b16 %v255
      %v454 = vunpack.c.l.b16 %v256
      %v455 = vunpack.c.h.b16 %v256
      %v456 = vunpack.c.l.b16 %v257
      %v457 = vunpack.c.l.b16 %v258
      %v458 = vunpack.c.h.b16 %v258
      %v459 = vunpack.c.l.b16 %v259
      %v460 = vunpack.c.l.b16 %v260
      %v461 = vunpack.c.h.b16 %v260
      %v462 = vunpack.c.l.b16 %v261
      %v463 = vunpack.c.l.b16 %v262
      %v464 = vunpack.c.h.b16 %v262
      %v465 = vunpack.c.l.b16 %v263
      %v466 = vunpack.c.l.b16 %v264
      %v467 = vunpack.c.h.b16 %v264
      %v468 = vunpack.c.l.b16 %v265
      %v469 = vunpack.c.l.b16 %v266
      %v470 = vunpack.c.h.b16 %v266
      %v471 = vunpack.c.l.b16 %v267
      %v472 = vunpack.c.l.b16 %v268
      %v473 = vunpack.c.h.b16 %v268
      %v474 = vunpack.c.l.b16 %v269
      %v475 = vunpack.c.l.b16 %v270
      %v476 = vunpack.c.h.b16 %v270
      %v477 = vunpack.c.l.b16 %v271
      %v478 = vunpack.c.l.b16 %v272
      %v479 = vunpack.c.h.b16 %v272
      %v480 = vunpack.c.l.b16 %v273
      %v481 = vunpack.c.l.b16 %v274
      %v482 = vunpack.c.h.b16 %v274
      %v483 = vunpack.c.l.b16 %v275
      %v484 = vunpack.c.l.b16 %v276
      %v485 = vunpack.c.h.b16 %v276
      %v486 = vunpack.c.l.b16 %v277
      %v487 = vunpack.c.l.b16 %v278
      %v488 = vunpack.c.h.b16 %v278
      %v489 = vunpack.c.l.b16 %v279
      %v490 = vunpack.c.l.b16 %v280
      %v491 = vunpack.c.h.b16 %v280
      %v492 = vunpack.c.l.b16 %v281
      %v493 = vunpack.c.l.b16 %v282
      %v494 = vunpack.c.h.b16 %v282
      %v495 = vunpack.c.l.b16 %v283
      %v496 = vunpack.c.l.b16 %v284
      %v497 = vunpack.c.h.b16 %v284
      %v498 = vunpack.c.l.b16 %v285
      %v499 = vunpack.c.l.b16 %v286
      %v500 = vunpack.c.h.b16 %v286
      %v501 = vunpack.c.l.b16 %v287
      %v502 = vunpack.c.l.b16 %v288
      %v503 = vunpack.c.h.b16 %v288
      %v504 = vunpack.c.l.b16 %v289
      %v505 = vpack.c.b16 %v412, %v409
      %v506 = vpack.c.b16 %v413, %v410
      %v507 = vpack.c.b16 %v414, %v411
      %v508 = vpack.c.b16 %v418, %v415
      %v509 = vpack.c.b16 %v419, %v416
      %v510 = vpack.c.b16 %v420, %v417
      %v511 = vpack.c.b16 %v424, %v421
      %v512 = vpack.c.b16 %v425, %v422
      %v513 = vpack.c.b16 %v426, %v423
      %v514 = vpack.c.b16 %v430, %v427
      %v515 = vpack.c.b16 %v431, %v428
      %v516 = vpack.c.b16 %v432, %v429
      %v517 = vpack.c.b16 %v436, %v433
      %v518 = vpack.c.b16 %v437, %v434
      %v519 = vpack.c.b16 %v438, %v435
      %v520 = vpack.c.b16 %v442, %v439
      %v521 = vpack.c.b16 %v443, %v440
      %v522 = vpack.c.b16 %v444, %v441
      %v523 = vpack.c.b16 %v448, %v445
      %v524 = vpack.c.b16 %v449, %v446
      %v525 = vpack.c.b16 %v450, %v447
      %v526 = vpack.c.b16 %v454, %v451
      %v527 = vpack.c.b16 %v455, %v452
      %v528 = vpack.c.b16 %v456, %v453
      %v529 = vpack.c.b16 %v460, %v457
      %v530 = vpack.c.b16 %v461, %v458
      %v531 = vpack.c.b16 %v462, %v459
      %v532 = vpack.c.b16 %v466, %v463
      %v533 = vpack.c.b16 %v467, %v464
      %v534 = vpack.c.b16 %v468, %v465
      %v535 = vpack.c.b16 %v472, %v469
      %v536 = vpack.c.b16 %v473, %v470
      %v537 = vpack.c.b16 %v474, %v471
      %v538 = vpack.c.b16 %v478, %v475
      %v539 = vpack.c.b16 %v479, %v476
      %v540 = vpack.c.b16 %v480, %v477
      %v541 = vpack.c.b16 %v484, %v481
      %v542 = vpack.c.b16 %v485, %v482
      %v543 = vpack.c.b16 %v486, %v483
      %v544 = vpack.c.b16 %v490, %v487
      %v545 = vpack.c.b16 %v491, %v488
      %v546 = vpack.c.b16 %v492, %v489
      %v547 = vpack.c.b16 %v496, %v493
      %v548 = vpack.c.b16 %v497, %v494
      %v549 = vpack.c.b16 %v498, %v495
      %v550 = vpack.c.b16 %v502, %v499
      %v551 = vpack.c.b16 %v503, %v500
      %v552 = vpack.c.b16 %v504, %v501
      %v649 = vunpack.c.l.b16 %v290
      %v650 = vunpack.c.l.b16 %v291
      %v651 = vunpack.c.l.b16 %v292
      %v652 = vunpack.c.l.b16 %v293
      %v653 = vunpack.c.l.b16 %v294
      %v654 = vunpack.c.l.b16 %v295
      %v655 = vunpack.c.l.b16 %v296
      %v656 = vunpack.c.l.b16 %v297
      %v657 = vunpack.c.l.b16 %v298
      %v658 = vunpack.c.l.b16 %v299
      %v659 = vunpack.c.l.b16 %v300
      %v660 = vunpack.c.l.b16 %v301
      %v661 = vunpack.c.l.b16 %v302
      %v662 = vunpack.c.l.b16 %v303
      %v663 = vunpack.c.l.b16 %v304
      %v664 = vunpack.c.l.b16 %v305
      %v665 = vunpack.c.l.b16 %v306
      %v666 = vunpack.c.l.b16 %v307
      %v667 = vunpack.c.l.b16 %v308
      %v668 = vunpack.c.l.b16 %v309
      %v669 = vunpack.c.l.b16 %v310
      %v670 = vunpack.c.l.b16 %v311
      %v671 = vunpack.c.l.b16 %v312
      %v672 = vunpack.c.l.b16 %v313
      %v673 = vunpack.c.l.b16 %v314
      %v674 = vunpack.c.l.b16 %v315
      %v675 = vunpack.c.l.b16 %v316
      %v676 = vunpack.c.l.b16 %v317
      %v677 = vunpack.c.l.b16 %v318
      %v678 = vunpack.c.l.b16 %v319
      %v679 = vunpack.c.l.b16 %v320
      %v680 = vunpack.c.l.b16 %v321
      %v681 = vunpack.c.l.b16 %v322
      %v682 = vunpack.c.l.b16 %v323
      %v683 = vunpack.c.l.b16 %v324
      %v684 = vunpack.c.l.b16 %v325
      %v685 = vunpack.c.l.b16 %v326
      %v686 = vunpack.c.l.b16 %v327
      %v687 = vunpack.c.l.b16 %v328
      %v688 = vunpack.c.l.b16 %v329
      %v689 = vunpack.c.l.b16 %v330
      %v690 = vunpack.c.l.b16 %v331
      %v691 = vunpack.c.l.b16 %v332
      %v692 = vunpack.c.l.b16 %v333
      %v693 = vunpack.c.l.b16 %v334
      %v694 = vunpack.c.l.b16 %v335
      %v695 = vunpack.c.l.b16 %v336
      %v696 = vunpack.c.l.b16 %v337
      %v697 = vpack.c.b16 %v650, %v649
      %v698 = vpack.c.b16 %v652, %v651
      %v699 = vpack.c.b16 %v654, %v653
      %v700 = vpack.c.b16 %v656, %v655
      %v701 = vpack.c.b16 %v658, %v657
      %v702 = vpack.c.b16 %v660, %v659
      %v703 = vpack.c.b16 %v662, %v661
      %v704 = vpack.c.b16 %v664, %v663
      %v705 = vpack.c.b16 %v666, %v665
      %v706 = vpack.c.b16 %v668, %v667
      %v707 = vpack.c.b16 %v670, %v669
      %v708 = vpack.c.b16 %v672, %v671
      %v709 = vpack.c.b16 %v674, %v673
      %v710 = vpack.c.b16 %v676, %v675
      %v711 = vpack.c.b16 %v678, %v677
      %v712 = vpack.c.b16 %v680, %v679
      %v713 = vpack.c.b16 %v682, %v681
      %v714 = vpack.c.b16 %v684, %v683
      %v715 = vpack.c.b16 %v686, %v685
      %v716 = vpack.c.b16 %v688, %v687
      %v717 = vpack.c.b16 %v690, %v689
      %v718 = vpack.c.b16 %v692, %v691
      %v719 = vpack.c.b16 %v694, %v693
      %v720 = vpack.c.b16 %v696, %v695
      %745 = vmatprep.subr.bf16.mxu0 0
      %746 = vmatpush1.bf16.msra.mxu0 %v697
      %747 = vmatprep.subr.bf16.mxu0 0
      %748 = vmatpush1.bf16.msra.mxu0 %v698
      %749 = vmatprep.subr.bf16.mxu0 0
      %750 = vmatpush1.bf16.msra.mxu0 %v699
      %751 = vmatprep.subr.bf16.mxu0 0
      %752 = vmatpush1.bf16.msra.mxu0 %v700
      %753 = vmatprep.subr.bf16.mxu0 0
      %754 = vmatpush1.bf16.msra.mxu0 %v701
      %755 = vmatprep.subr.bf16.mxu0 0
      %756 = vmatpush1.bf16.msra.mxu0 %v702
      %757 = vmatprep.subr.bf16.mxu0 0
      %758 = vmatpush1.bf16.msra.mxu0 %v703
      %759 = vmatprep.subr.bf16.mxu0 0
      %760 = vmatpush1.bf16.msra.mxu0 %v704
      %761 = vmatprep.subr.bf16.mxu0 0
      %762 = vmatpush1.bf16.msra.mxu0 %v705
      %763 = vmatprep.subr.bf16.mxu0 0
      %764 = vmatpush1.bf16.msra.mxu0 %v706
      %765 = vmatprep.subr.bf16.mxu0 0
      %766 = vmatpush1.bf16.msra.mxu0 %v707
      %767 = vmatprep.subr.bf16.mxu0 0
      %768 = vmatpush1.bf16.msra.mxu0 %v708
      %769 = vmatprep.subr.bf16.mxu0 0
      %770 = vmatpush1.bf16.msra.mxu0 %v709
      %771 = vmatprep.subr.bf16.mxu0 0
      %772 = vmatpush1.bf16.msra.mxu0 %v710
      %773 = vmatprep.subr.bf16.mxu0 0
      %774 = vmatpush1.bf16.msra.mxu0 %v711
      %775 = vmatprep.subr.bf16.mxu0 0
      %776 = vmatpush1.bf16.msra.mxu0 %v712
      %777 = vmatprep.mubr.bf16.mxu0 %v506
      %778 = vmatmul.mubr.bf16.gmra.mrb[0].mxu0 %v505
      %v779 = vpop.f32.mrb[0].mxu0
      %v780 = vadd.f32 %v343, %v779
      %v781 = vpop.f32.mrb[0].mxu0
      %v782 = vpop.f32.mrb[0].mxu0
      %v783 = vadd.f32 %v343, %v782
      %v784 = vpop.f32.mrb[0].mxu0
      %785 = vmatprep.mubr.bf16.mxu0 %v509
      %786 = vmatmul.mubr.bf16.gmra.mrb[0].mxu0 %v508
      %v787 = vpop.f32.mrb[0].mxu0
      %v788 = vadd.f32 %v343, %v787
      %v789 = vpop.f32.mrb[0].mxu0
      %v790 = vpop.f32.mrb[0].mxu0
      %v791 = vadd.f32 %v343, %v790
      %v792 = vpop.f32.mrb[0].mxu0
      %793 = vmatprep.mubr.bf16.mxu0 %v512
      %794 = vmatmul.mubr.bf16.gmra.mrb[0].mxu0 %v511
      %v795 = vpop.f32.mrb[0].mxu0
      %v796 = vadd.f32 %v343, %v795
      %v797 = vpop.f32.mrb[0].mxu0
      %v798 = vpop.f32.mrb[0].mxu0
      %v799 = vadd.f32 %v343, %v798
      %v800 = vpop.f32.mrb[0].mxu0
      %801 = vmatprep.mubr.bf16.mxu0 %v515
      %802 = vmatmul.mubr.bf16.gmra.mrb[0].mxu0 %v514
      %v803 = vpop.f32.mrb[0].mxu0
      %v804 = vadd.f32 %v343, %v803
      %v805 = vpop.f32.mrb[0].mxu0
      %v806 = vpop.f32.mrb[0].mxu0
      %v807 = vadd.f32 %v343, %v806
      %v808 = vpop.f32.mrb[0].mxu0
      %809 = vmatprep.mubr.bf16.mxu0 %v518
      %810 = vmatmul.mubr.bf16.gmra.mrb[0].mxu0 %v517
      %v811 = vpop.f32.mrb[0].mxu0
      %v812 = vadd.f32 %v343, %v811
      %v813 = vpop.f32.mrb[0].mxu0
      %v814 = vpop.f32.mrb[0].mxu0
      %v815 = vadd.f32 %v343, %v814
      %v816 = vpop.f32.mrb[0].mxu0
      %817 = vmatprep.mubr.bf16.mxu0 %v521
      %818 = vmatmul.mubr.bf16.gmra.mrb[0].mxu0 %v520
      %v819 = vpop.f32.mrb[0].mxu0
      %v820 = vadd.f32 %v343, %v819
      %v821 = vpop.f32.mrb[0].mxu0
      %v822 = vpop.f32.mrb[0].mxu0
      %v823 = vadd.f32 %v343, %v822
      %v824 = vpop.f32.mrb[0].mxu0
      %825 = vmatprep.mubr.bf16.mxu0 %v524
      %826 = vmatmul.mubr.bf16.gmra.mrb[0].mxu0 %v523
      %v827 = vpop.f32.mrb[0].mxu0
      %v828 = vadd.f32 %v343, %v827
      %v829 = vpop.f32.mrb[0].mxu0
      %v830 = vpop.f32.mrb[0].mxu0
      %v831 = vadd.f32 %v343, %v830
      %v832 = vpop.f32.mrb[0].mxu0
      %833 = vmatprep.mubr.bf16.mxu0 %v527
      %834 = vmatmul.mubr.bf16.gmra.mrb[0].mxu0 %v526
      %v835 = vpop.f32.mrb[0].mxu0
      %v836 = vadd.f32 %v343, %v835
      %v837 = vpop.f32.mrb[0].mxu0
      %v838 = vpop.f32.mrb[0].mxu0
      %v839 = vadd.f32 %v343, %v838
      %v840 = vpop.f32.mrb[0].mxu0
      %841 = vmatprep.mubr.bf16.mxu0 %v530
      %842 = vmatmul.mubr.bf16.gmra.mrb[0].mxu0 %v529
      %v843 = vpop.f32.mrb[0].mxu0
      %v844 = vadd.f32 %v343, %v843
      %v845 = vpop.f32.mrb[0].mxu0
      %v846 = vpop.f32.mrb[0].mxu0
      %v847 = vadd.f32 %v343, %v846
      %v848 = vpop.f32.mrb[0].mxu0
      %849 = vmatprep.mubr.bf16.mxu0 %v533
      %850 = vmatmul.mubr.bf16.gmra.mrb[0].mxu0 %v532
      %v851 = vpop.f32.mrb[0].mxu0
      %v852 = vadd.f32 %v343, %v851
      %v853 = vpop.f32.mrb[0].mxu0
      %v854 = vpop.f32.mrb[0].mxu0
      %v855 = vadd.f32 %v343, %v854
      %v856 = vpop.f32.mrb[0].mxu0
      %857 = vmatprep.mubr.bf16.mxu0 %v536
      %858 = vmatmul.mubr.bf16.gmra.mrb[0].mxu0 %v535
      %v859 = vpop.f32.mrb[0].mxu0
      %v860 = vadd.f32 %v343, %v859
      %v861 = vpop.f32.mrb[0].mxu0
      %v862 = vpop.f32.mrb[0].mxu0
      %v863 = vadd.f32 %v343, %v862
      %v864 = vpop.f32.mrb[0].mxu0
      %865 = vmatprep.mubr.bf16.mxu0 %v539
      %866 = vmatmul.mubr.bf16.gmra.mrb[0].mxu0 %v538
      %v867 = vpop.f32.mrb[0].mxu0
      %v868 = vadd.f32 %v343, %v867
      %v869 = vpop.f32.mrb[0].mxu0
      %v870 = vpop.f32.mrb[0].mxu0
      %v871 = vadd.f32 %v343, %v870
      %v872 = vpop.f32.mrb[0].mxu0
      %873 = vmatprep.mubr.bf16.mxu0 %v542
      %874 = vmatmul.mubr.bf16.gmra.mrb[0].mxu0 %v541
      %v875 = vpop.f32.mrb[0].mxu0
      %v876 = vadd.f32 %v343, %v875
      %v877 = vpop.f32.mrb[0].mxu0
      %v878 = vpop.f32.mrb[0].mxu0
      %v879 = vadd.f32 %v343, %v878
      %v880 = vpop.f32.mrb[0].mxu0
      %881 = vmatprep.mubr.bf16.mxu0 %v545
      %882 = vmatmul.mubr.bf16.gmra.mrb[0].mxu0 %v544
      %v883 = vpop.f32.mrb[0].mxu0
      %v884 = vadd.f32 %v343, %v883
      %v885 = vpop.f32.mrb[0].mxu0
      %v886 = vpop.f32.mrb[0].mxu0
      %v887 = vadd.f32 %v343, %v886
      %v888 = vpop.f32.mrb[0].mxu0
      %889 = vmatprep.mubr.bf16.mxu0 %v548
      %890 = vmatmul.mubr.bf16.gmra.mrb[0].mxu0 %v547
      %v891 = vpop.f32.mrb[0].mxu0
      %v892 = vadd.f32 %v343, %v891
      %v893 = vpop.f32.mrb[0].mxu0
      %v894 = vpop.f32.mrb[0].mxu0
      %v895 = vadd.f32 %v343, %v894
      %v896 = vpop.f32.mrb[0].mxu0
      %897 = vmatprep.mubr.bf16.mxu0 %v551
      %898 = vmatmul.mubr.bf16.gmra.mrb[0].mxu0 %v550
      %v899 = vpop.f32.mrb[0].mxu0
      %v900 = vadd.f32 %v343, %v899
      %v901 = vpop.f32.mrb[0].mxu0
      %v902 = vpop.f32.mrb[0].mxu0
      %v903 = vadd.f32 %v343, %v902
      %v904 = vpop.f32.mrb[0].mxu0
      %905 = vdwg.mxu0
      %906 = vmatprep.subr.bf16.mxu0 0
      %907 = vmatpush1.bf16.msra.mxu0 %v713
      %908 = vmatprep.subr.bf16.mxu0 0
      %909 = vmatpush1.bf16.msra.mxu0 %v714
      %910 = vmatprep.subr.bf16.mxu0 0
      %911 = vmatpush1.bf16.msra.mxu0 %v715
      %912 = vmatprep.subr.bf16.mxu0 0
      %913 = vmatpush1.bf16.msra.mxu0 %v716
      %914 = vmatprep.subr.bf16.mxu0 0
      %915 = vmatpush1.bf16.msra.mxu0 %v717
      %916 = vmatprep.subr.bf16.mxu0 0
      %917 = vmatpush1.bf16.msra.mxu0 %v718
      %918 = vmatprep.subr.bf16.mxu0 0
      %919 = vmatpush1.bf16.msra.mxu0 %v719
      %920 = vmatprep.subr.bf16.mxu0 0
      %921 = vmatpush1.bf16.msra.mxu0 %v720
      %922 = vmatprep.subr.bf16.mxu0 0
      %923 = vmatpush1.bf16.msra.mxu0 0
      %924 = vmatprep.subr.bf16.mxu0 0
      %925 = vmatpush1.bf16.msra.mxu0 0
      %926 = vmatprep.subr.bf16.mxu0 0
      %927 = vmatpush1.bf16.msra.mxu0 0
      %928 = vmatprep.subr.bf16.mxu0 0
      %929 = vmatpush1.bf16.msra.mxu0 0
      %930 = vmatprep.subr.bf16.mxu0 0
      %931 = vmatpush1.bf16.msra.mxu0 0
      %932 = vmatprep.subr.bf16.mxu0 0
      %933 = vmatpush1.bf16.msra.mxu0 0
      %934 = vmatprep.subr.bf16.mxu0 0
      %935 = vmatpush1.bf16.msra.mxu0 0
      %936 = vmatprep.subr.bf16.mxu0 0
      %937 = vmatpush1.bf16.msra.mxu0 0
      %938 = vmatprep.mubr.bf16.mxu0 0
      %939 = vmatmul.mubr.bf16.gmra.mrb[0].mxu0 %v507
      %v940 = vpop.f32.mrb[0].mxu0
      %v941 = vadd.f32 %v780, %v940
      %v942 = vpop.f32.mrb[0].mxu0
      %v943 = vpop.f32.mrb[0].mxu0
      %v944 = vadd.f32 %v783, %v943
      %v945 = vpop.f32.mrb[0].mxu0
      %946 = vmatprep.mubr.bf16.mxu0 0
      %947 = vmatmul.mubr.bf16.gmra.mrb[0].mxu0 %v510
      %v948 = vpop.f32.mrb[0].mxu0
      %v949 = vadd.f32 %v788, %v948
      %v950 = vpop.f32.mrb[0].mxu0
      %v951 = vpop.f32.mrb[0].mxu0
      %v952 = vadd.f32 %v791, %v951
      %v953 = vpop.f32.mrb[0].mxu0
      %954 = vmatprep.mubr.bf16.mxu0 0
      %955 = vmatmul.mubr.bf16.gmra.mrb[0].mxu0 %v513
      %v956 = vpop.f32.mrb[0].mxu0
      %v957 = vadd.f32 %v796, %v956
      %v958 = vpop.f32.mrb[0].mxu0
      %v959 = vpop.f32.mrb[0].mxu0
      %v960 = vadd.f32 %v799, %v959
      %v961 = vpop.f32.mrb[0].mxu0
      %962 = vmatprep.mubr.bf16.mxu0 0
      %963 = vmatmul.mubr.bf16.gmra.mrb[0].mxu0 %v516
      %v964 = vpop.f32.mrb[0].mxu0
      %v965 = vadd.f32 %v804, %v964
      %v966 = vpop.f32.mrb[0].mxu0
      %v967 = vpop.f32.mrb[0].mxu0
      %v968 = vadd.f32 %v807, %v967
      %v969 = vpop.f32.mrb[0].mxu0
      %970 = vmatprep.mubr.bf16.mxu0 0
      %971 = vmatmul.mubr.bf16.gmra.mrb[0].mxu0 %v519
      %v972 = vpop.f32.mrb[0].mxu0
      %v973 = vadd.f32 %v812, %v972
      %v974 = vpop.f32.mrb[0].mxu0
      %v975 = vpop.f32.mrb[0].mxu0
      %v976 = vadd.f32 %v815, %v975
      %v977 = vpop.f32.mrb[0].mxu0
      %978 = vmatprep.mubr.bf16.mxu0 0
      %979 = vmatmul.mubr.bf16.gmra.mrb[0].mxu0 %v522
      %v980 = vpop.f32.mrb[0].mxu0
      %v981 = vadd.f32 %v820, %v980
      %v982 = vpop.f32.mrb[0].mxu0
      %v983 = vpop.f32.mrb[0].mxu0
      %v984 = vadd.f32 %v823, %v983
      %v985 = vpop.f32.mrb[0].mxu0
      %986 = vmatprep.mubr.bf16.mxu0 0
      %987 = vmatmul.mubr.bf16.gmra.mrb[0].mxu0 %v525
      %v988 = vpop.f32.mrb[0].mxu0
      %v989 = vadd.f32 %v828, %v988
      %v990 = vpop.f32.mrb[0].mxu0
      %v991 = vpop.f32.mrb[0].mxu0
      %v992 = vadd.f32 %v831, %v991
      %v993 = vpop.f32.mrb[0].mxu0
      %994 = vmatprep.mubr.bf16.mxu0 0
      %995 = vmatmul.mubr.bf16.gmra.mrb[0].mxu0 %v528
      %v996 = vpop.f32.mrb[0].mxu0
      %v997 = vadd.f32 %v836, %v996
      %v998 = vpop.f32.mrb[0].mxu0
      %v999 = vpop.f32.mrb[0].mxu0
      %v1000 = vadd.f32 %v839, %v999
      %v1001 = vpop.f32.mrb[0].mxu0
      %1002 = vmatprep.mubr.bf16.mxu0 0
      %1003 = vmatmul.mubr.bf16.gmra.mrb[0].mxu0 %v531
      %v1004 = vpop.f32.mrb[0].mxu0
      %v1005 = vadd.f32 %v844, %v1004
      %v1006 = vpop.f32.mrb[0].mxu0
      %v1007 = vpop.f32.mrb[0].mxu0
      %v1008 = vadd.f32 %v847, %v1007
      %v1009 = vpop.f32.mrb[0].mxu0
      %1010 = vmatprep.mubr.bf16.mxu0 0
      %1011 = vmatmul.mubr.bf16.gmra.mrb[0].mxu0 %v534
      %v1012 = vpop.f32.mrb[0].mxu0
      %v1013 = vadd.f32 %v852, %v1012
      %v1014 = vpop.f32.mrb[0].mxu0
      %v1015 = vpop.f32.mrb[0].mxu0
      %v1016 = vadd.f32 %v855, %v1015
      %v1017 = vpop.f32.mrb[0].mxu0
      %1018 = vmatprep.mubr.bf16.mxu0 0
      %1019 = vmatmul.mubr.bf16.gmra.mrb[0].mxu0 %v537
      %v1020 = vpop.f32.mrb[0].mxu0
      %v1021 = vadd.f32 %v860, %v1020
      %v1022 = vpop.f32.mrb[0].mxu0
      %v1023 = vpop.f32.mrb[0].mxu0
      %v1024 = vadd.f32 %v863, %v1023
      %v1025 = vpop.f32.mrb[0].mxu0
      %1026 = vmatprep.mubr.bf16.mxu0 0
      %1027 = vmatmul.mubr.bf16.gmra.mrb[0].mxu0 %v540
      %v1028 = vpop.f32.mrb[0].mxu0
      %v1029 = vadd.f32 %v868, %v1028
      %v1030 = vpop.f32.mrb[0].mxu0
      %v1031 = vpop.f32.mrb[0].mxu0
      %v1032 = vadd.f32 %v871, %v1031
      %v1033 = vpop.f32.mrb[0].mxu0
      %1034 = vmatprep.mubr.bf16.mxu0 0
      %1035 = vmatmul.mubr.bf16.gmra.mrb[0].mxu0 %v543
      %v1036 = vpop.f32.mrb[0].mxu0
      %v1037 = vadd.f32 %v876, %v1036
      %v1038 = vpop.f32.mrb[0].mxu0
      %v1039 = vpop.f32.mrb[0].mxu0
      %v1040 = vadd.f32 %v879, %v1039
      %v1041 = vpop.f32.mrb[0].mxu0
      %1042 = vmatprep.mubr.bf16.mxu0 0
      %1043 = vmatmul.mubr.bf16.gmra.mrb[0].mxu0 %v546
      %v1044 = vpop.f32.mrb[0].mxu0
      %v1045 = vadd.f32 %v884, %v1044
      %v1046 = vpop.f32.mrb[0].mxu0
      %v1047 = vpop.f32.mrb[0].mxu0
      %v1048 = vadd.f32 %v887, %v1047
      %v1049 = vpop.f32.mrb[0].mxu0
      %1050 = vmatprep.mubr.bf16.mxu0 0
      %1051 = vmatmul.mubr.bf16.gmra.mrb[0].mxu0 %v549
      %v1052 = vpop.f32.mrb[0].mxu0
      %v1053 = vadd.f32 %v892, %v1052
      %v1054 = vpop.f32.mrb[0].mxu0
      %v1055 = vpop.f32.mrb[0].mxu0
      %v1056 = vadd.f32 %v895, %v1055
      %v1057 = vpop.f32.mrb[0].mxu0
      %1058 = vmatprep.mubr.bf16.mxu0 0
      %1059 = vmatmul.mubr.bf16.gmra.mrb[0].mxu0 %v552
      %v1060 = vpop.f32.mrb[0].mxu0
      %v1061 = vadd.f32 %v900, %v1060
      %v1062 = vpop.f32.mrb[0].mxu0
      %v1063 = vpop.f32.mrb[0].mxu0
      %v1064 = vadd.f32 %v903, %v1063
      %v1065 = vpop.f32.mrb[0].mxu0
      %1066 = vdwg.mxu0
      %v1067 = vadd.f32 %v941, %v944
      %v1068 = vadd.f32 %v1067, %v949
      %v1069 = vadd.f32 %v1068, %v952
      %v1070 = vadd.f32 %v1069, %v957
      %v1071 = vadd.f32 %v1070, %v960
      %v1072 = vadd.f32 %v1071, %v965
      %v1073 = vadd.f32 %v1072, %v968
      %v1074 = vadd.f32 %v1073, %v973
      %v1075 = vadd.f32 %v1074, %v976
      %v1076 = vadd.f32 %v1075, %v981
      %v1077 = vadd.f32 %v1076, %v984
      %v1078 = vadd.f32 %v1077, %v989
      %v1079 = vadd.f32 %v1078, %v992
      %v1080 = vadd.f32 %v1079, %v997
      %v1081 = vadd.f32 %v1080, %v1000
      %v1082 = vadd.f32 %v1081, %v1005
      %v1083 = vadd.f32 %v1082, %v1008
      %v1084 = vadd.f32 %v1083, %v1013
      %v1085 = vadd.f32 %v1084, %v1016
      %v1086 = vadd.f32 %v1085, %v1021
      %v1087 = vadd.f32 %v1086, %v1024
      %v1088 = vadd.f32 %v1087, %v1029
      %v1089 = vadd.f32 %v1088, %v1032
      %v1090 = vadd.f32 %v1089, %v1037
      %v1091 = vadd.f32 %v1090, %v1040
      %v1092 = vadd.f32 %v1091, %v1045
      %v1093 = vadd.f32 %v1092, %v1048
      %v1094 = vadd.f32 %v1093, %v1053
      %v1095 = vadd.f32 %v1094, %v1056
      %v1096 = vadd.f32 %v1095, %v1061
      %v1097 = vadd.f32 %v1096, %v1064
      %v1098 = vrot.slane %v1097, 4
      %v1099 = vadd.f32 %v1097, %v1098
      %v1100 = vrot.slane %v1099, 2
      %v1101 = vadd.f32 %v1099, %v1100
      %v1102 = vrot.slane %v1101, 1
      %v1103 = vadd.f32 %v1101, %v1102
      %v1104 = vmul.f32 %v1103, 0.00390625
      %v1105 = vsub.f32 %v941, %v1104
      %v1106 = vsub.f32 %v944, %v1104
      %v1107 = vsub.f32 %v949, %v1104
      %v1108 = vsub.f32 %v952, %v1104
      %v1109 = vsub.f32 %v957, %v1104
      %v1110 = vsub.f32 %v960, %v1104
      %v1111 = vsub.f32 %v965, %v1104
      %v1112 = vsub.f32 %v968, %v1104
      %v1113 = vsub.f32 %v973, %v1104
      %v1114 = vsub.f32 %v976, %v1104
      %v1115 = vsub.f32 %v981, %v1104
      %v1116 = vsub.f32 %v984, %v1104
      %v1117 = vsub.f32 %v989, %v1104
      %v1118 = vsub.f32 %v992, %v1104
      %v1119 = vsub.f32 %v997, %v1104
      %v1120 = vsub.f32 %v1000, %v1104
      %v1121 = vsub.f32 %v1005, %v1104
      %v1122 = vsub.f32 %v1008, %v1104
      %v1123 = vsub.f32 %v1013, %v1104
      %v1124 = vsub.f32 %v1016, %v1104
      %v1125 = vsub.f32 %v1021, %v1104
      %v1126 = vsub.f32 %v1024, %v1104
      %v1127 = vsub.f32 %v1029, %v1104
      %v1128 = vsub.f32 %v1032, %v1104
      %v1129 = vsub.f32 %v1037, %v1104
      %v1130 = vsub.f32 %v1040, %v1104
      %v1131 = vsub.f32 %v1045, %v1104
      %v1132 = vsub.f32 %v1048, %v1104
      %v1133 = vsub.f32 %v1053, %v1104
      %v1134 = vsub.f32 %v1056, %v1104
      %v1135 = vsub.f32 %v1061, %v1104
      %v1136 = vsub.f32 %v1064, %v1104
      %v1137 = vmul.f32 %v1105, %v1105
      %v1138 = vmul.f32 %v1106, %v1106
      %v1139 = vmul.f32 %v1107, %v1107
      %v1140 = vmul.f32 %v1108, %v1108
      %v1141 = vmul.f32 %v1109, %v1109
      %v1142 = vmul.f32 %v1110, %v1110
      %v1143 = vmul.f32 %v1111, %v1111
      %v1144 = vmul.f32 %v1112, %v1112
      %v1145 = vmul.f32 %v1113, %v1113
      %v1146 = vmul.f32 %v1114, %v1114
      %v1147 = vmul.f32 %v1115, %v1115
      %v1148 = vmul.f32 %v1116, %v1116
      %v1149 = vmul.f32 %v1117, %v1117
      %v1150 = vmul.f32 %v1118, %v1118
      %v1151 = vmul.f32 %v1119, %v1119
      %v1152 = vmul.f32 %v1120, %v1120
      %v1153 = vmul.f32 %v1121, %v1121
      %v1154 = vmul.f32 %v1122, %v1122
      %v1155 = vmul.f32 %v1123, %v1123
      %v1156 = vmul.f32 %v1124, %v1124
      %v1157 = vmul.f32 %v1125, %v1125
      %v1158 = vmul.f32 %v1126, %v1126
      %v1159 = vmul.f32 %v1127, %v1127
      %v1160 = vmul.f32 %v1128, %v1128
      %v1161 = vmul.f32 %v1129, %v1129
      %v1162 = vmul.f32 %v1130, %v1130
      %v1163 = vmul.f32 %v1131, %v1131
      %v1164 = vmul.f32 %v1132, %v1132
      %v1165 = vmul.f32 %v1133, %v1133
      %v1166 = vmul.f32 %v1134, %v1134
      %v1167 = vmul.f32 %v1135, %v1135
      %v1168 = vmul.f32 %v1136, %v1136
      %v1169 = vadd.f32 %v1137, %v1138
      %v1170 = vadd.f32 %v1169, %v1139
      %v1171 = vadd.f32 %v1170, %v1140
      %v1172 = vadd.f32 %v1171, %v1141
      %v1173 = vadd.f32 %v1172, %v1142
      %v1174 = vadd.f32 %v1173, %v1143
      %v1175 = vadd.f32 %v1174, %v1144
      %v1176 = vadd.f32 %v1175, %v1145
      %v1177 = vadd.f32 %v1176, %v1146
      %v1178 = vadd.f32 %v1177, %v1147
      %v1179 = vadd.f32 %v1178, %v1148
      %v1180 = vadd.f32 %v1179, %v1149
      %v1181 = vadd.f32 %v1180, %v1150
      %v1182 = vadd.f32 %v1181, %v1151
      %v1183 = vadd.f32 %v1182, %v1152
      %v1184 = vadd.f32 %v1183, %v1153
      %v1185 = vadd.f32 %v1184, %v1154
      %v1186 = vadd.f32 %v1185, %v1155
      %v1187 = vadd.f32 %v1186, %v1156
      %v1188 = vadd.f32 %v1187, %v1157
      %v1189 = vadd.f32 %v1188, %v1158
      %v1190 = vadd.f32 %v1189, %v1159
      %v1191 = vadd.f32 %v1190, %v1160
      %v1192 = vadd.f32 %v1191, %v1161
      %v1193 = vadd.f32 %v1192, %v1162
      %v1194 = vadd.f32 %v1193, %v1163
      %v1195 = vadd.f32 %v1194, %v1164
      %v1196 = vadd.f32 %v1195, %v1165
      %v1197 = vadd.f32 %v1196, %v1166
      %v1198 = vadd.f32 %v1197, %v1167
      %v1199 = vadd.f32 %v1198, %v1168
      %v1200 = vrot.slane %v1199, 4
      %v1201 = vadd.f32 %v1199, %v1200
      %v1202 = vrot.slane %v1201, 2
      %v1203 = vadd.f32 %v1201, %v1202
      %v1204 = vrot.slane %v1203, 1
      %v1205 = vadd.f32 %v1203, %v1204
      %v1206 = vmul.f32 %v1205, 0.00390625
      %v1207 = vadd.f32 %v1206, 1e-05
      %v1208 = vrsqrt.pop %v1207
      %v1209 = vmul.f32 %v1105, %v1208
      %v1210 = vmul.f32 %v1106, %v1208
      %v1211 = vmul.f32 %v1107, %v1208
      %v1212 = vmul.f32 %v1108, %v1208
      %v1213 = vmul.f32 %v1109, %v1208
      %v1214 = vmul.f32 %v1110, %v1208
      %v1215 = vmul.f32 %v1111, %v1208
      %v1216 = vmul.f32 %v1112, %v1208
      %v1217 = vmul.f32 %v1113, %v1208
      %v1218 = vmul.f32 %v1114, %v1208
      %v1219 = vmul.f32 %v1115, %v1208
      %v1220 = vmul.f32 %v1116, %v1208
      %v1221 = vmul.f32 %v1117, %v1208
      %v1222 = vmul.f32 %v1118, %v1208
      %v1223 = vmul.f32 %v1119, %v1208
      %v1224 = vmul.f32 %v1120, %v1208
      %v1225 = vmul.f32 %v1121, %v1208
      %v1226 = vmul.f32 %v1122, %v1208
      %v1227 = vmul.f32 %v1123, %v1208
      %v1228 = vmul.f32 %v1124, %v1208
      %v1229 = vmul.f32 %v1125, %v1208
      %v1230 = vmul.f32 %v1126, %v1208
      %v1231 = vmul.f32 %v1127, %v1208
      %v1232 = vmul.f32 %v1128, %v1208
      %v1233 = vmul.f32 %v1129, %v1208
      %v1234 = vmul.f32 %v1130, %v1208
      %v1235 = vmul.f32 %v1131, %v1208
      %v1236 = vmul.f32 %v1132, %v1208
      %v1237 = vmul.f32 %v1133, %v1208
      %v1238 = vmul.f32 %v1134, %v1208
      %v1239 = vmul.f32 %v1135, %v1208
      %v1240 = vmul.f32 %v1136, %v1208
      %v1241 = vld [vmem:[%s3] sm:$0x1]
      %v1243 = vlaneseq
      %v1244 = vshrl.u32 %v1243, 7
      %v1245 = vsub.s32 0, %v1244
      %v1246 = vrot.slane %v1241, %v1245
      %v1248 = vmul.f32 %v1209, %v1246
      %v1249 = vmul.f32 %v1210, %v1246
      %v1250 = vmul.f32 %v1211, %v1246
      %v1251 = vmul.f32 %v1212, %v1246
      %v1252 = vmul.f32 %v1213, %v1246
      %v1253 = vmul.f32 %v1214, %v1246
      %v1254 = vmul.f32 %v1215, %v1246
      %v1255 = vmul.f32 %v1216, %v1246
      %v1256 = vmul.f32 %v1217, %v1246
      %v1257 = vmul.f32 %v1218, %v1246
      %v1258 = vmul.f32 %v1219, %v1246
      %v1259 = vmul.f32 %v1220, %v1246
      %v1260 = vmul.f32 %v1221, %v1246
      %v1261 = vmul.f32 %v1222, %v1246
      %v1262 = vmul.f32 %v1223, %v1246
      %v1263 = vmul.f32 %v1224, %v1246
      %v1264 = vmul.f32 %v1225, %v1246
      %v1265 = vmul.f32 %v1226, %v1246
      %v1266 = vmul.f32 %v1227, %v1246
      %v1267 = vmul.f32 %v1228, %v1246
      %v1268 = vmul.f32 %v1229, %v1246
      %v1269 = vmul.f32 %v1230, %v1246
      %v1270 = vmul.f32 %v1231, %v1246
      %v1271 = vmul.f32 %v1232, %v1246
      %v1272 = vmul.f32 %v1233, %v1246
      %v1273 = vmul.f32 %v1234, %v1246
      %v1274 = vmul.f32 %v1235, %v1246
      %v1275 = vmul.f32 %v1236, %v1246
      %v1276 = vmul.f32 %v1237, %v1246
      %v1277 = vmul.f32 %v1238, %v1246
      %v1278 = vmul.f32 %v1239, %v1246
      %v1279 = vmul.f32 %v1240, %v1246
      %v1280 = vld [vmem:[%s4] sm:$0x1]
      %v1282 = vlaneseq
      %v1283 = vshrl.u32 %v1282, 7
      %v1284 = vsub.s32 0, %v1283
      %v1285 = vrot.slane %v1280, %v1284
      %v1287 = vadd.f32 %v1248, %v1285
      %v1288 = vadd.f32 %v1249, %v1285
      %v1289 = vadd.f32 %v1250, %v1285
      %v1290 = vadd.f32 %v1251, %v1285
      %v1291 = vadd.f32 %v1252, %v1285
      %v1292 = vadd.f32 %v1253, %v1285
      %v1293 = vadd.f32 %v1254, %v1285
      %v1294 = vadd.f32 %v1255, %v1285
      %v1295 = vadd.f32 %v1256, %v1285
      %v1296 = vadd.f32 %v1257, %v1285
      %v1297 = vadd.f32 %v1258, %v1285
      %v1298 = vadd.f32 %v1259, %v1285
      %v1299 = vadd.f32 %v1260, %v1285
      %v1300 = vadd.f32 %v1261, %v1285
      %v1301 = vadd.f32 %v1262, %v1285
      %v1302 = vadd.f32 %v1263, %v1285
      %v1303 = vadd.f32 %v1264, %v1285
      %v1304 = vadd.f32 %v1265, %v1285
      %v1305 = vadd.f32 %v1266, %v1285
      %v1306 = vadd.f32 %v1267, %v1285
      %v1307 = vadd.f32 %v1268, %v1285
      %v1308 = vadd.f32 %v1269, %v1285
      %v1309 = vadd.f32 %v1270, %v1285
      %v1310 = vadd.f32 %v1271, %v1285
      %v1311 = vadd.f32 %v1272, %v1285
      %v1312 = vadd.f32 %v1273, %v1285
      %v1313 = vadd.f32 %v1274, %v1285
      %v1314 = vadd.f32 %v1275, %v1285
      %v1315 = vadd.f32 %v1276, %v1285
      %v1316 = vadd.f32 %v1277, %v1285
      %v1317 = vadd.f32 %v1278, %v1285
      %v1318 = vadd.f32 %v1279, %v1285
      %v1319 = vmax.f32 %v1287, 0.0
      %v1320 = vmax.f32 %v1288, 0.0
      %v1321 = vmax.f32 %v1289, 0.0
      %v1322 = vmax.f32 %v1290, 0.0
      %v1323 = vmax.f32 %v1291, 0.0
      %v1324 = vmax.f32 %v1292, 0.0
      %v1325 = vmax.f32 %v1293, 0.0
      %v1326 = vmax.f32 %v1294, 0.0
      %v1327 = vmax.f32 %v1295, 0.0
      %v1328 = vmax.f32 %v1296, 0.0
      %v1329 = vmax.f32 %v1297, 0.0
      %v1330 = vmax.f32 %v1298, 0.0
      %v1331 = vmax.f32 %v1299, 0.0
      %v1332 = vmax.f32 %v1300, 0.0
      %v1333 = vmax.f32 %v1301, 0.0
      %v1334 = vmax.f32 %v1302, 0.0
      %v1335 = vmax.f32 %v1303, 0.0
      %v1336 = vmax.f32 %v1304, 0.0
      %v1337 = vmax.f32 %v1305, 0.0
      %v1338 = vmax.f32 %v1306, 0.0
      %v1339 = vmax.f32 %v1307, 0.0
      %v1340 = vmax.f32 %v1308, 0.0
      %v1341 = vmax.f32 %v1309, 0.0
      %v1342 = vmax.f32 %v1310, 0.0
      %v1343 = vmax.f32 %v1311, 0.0
      %v1344 = vmax.f32 %v1312, 0.0
      %v1345 = vmax.f32 %v1313, 0.0
      %v1346 = vmax.f32 %v1314, 0.0
      %v1347 = vmax.f32 %v1315, 0.0
      %v1348 = vmax.f32 %v1316, 0.0
      %v1349 = vmax.f32 %v1317, 0.0
      %v1350 = vmax.f32 %v1318, 0.0
      %1351 = vst [vmem:[%s224] sm:$0xff] %v1319
      %1352 = vst [vmem:[%s224 + $0x8] sm:$0xff] %v1320
      %1353 = vst [vmem:[%s224 + $0x10] sm:$0xff] %v1321
      %1354 = vst [vmem:[%s224 + $0x18] sm:$0xff] %v1322
      %1355 = vst [vmem:[%s224 + $0x20] sm:$0xff] %v1323
      %1356 = vst [vmem:[%s224 + $0x28] sm:$0xff] %v1324
      %1357 = vst [vmem:[%s224 + $0x30] sm:$0xff] %v1325
      %1358 = vst [vmem:[%s224 + $0x38] sm:$0xff] %v1326
      %1359 = vst [vmem:[%s224 + $0x40] sm:$0xff] %v1327
      %1360 = vst [vmem:[%s224 + $0x48] sm:$0xff] %v1328
      %1361 = vst [vmem:[%s224 + $0x50] sm:$0xff] %v1329
      %1362 = vst [vmem:[%s224 + $0x58] sm:$0xff] %v1330
      %1363 = vst [vmem:[%s224 + $0x60] sm:$0xff] %v1331
      %1364 = vst [vmem:[%s224 + $0x68] sm:$0xff] %v1332
      %1365 = vst [vmem:[%s224 + $0x70] sm:$0xff] %v1333
      %1366 = vst [vmem:[%s224 + $0x78] sm:$0xff] %v1334
      %1367 = vst [vmem:[%s224 + $0x80] sm:$0xff] %v1335
      %1368 = vst [vmem:[%s224 + $0x88] sm:$0xff] %v1336
      %1369 = vst [vmem:[%s224 + $0x90] sm:$0xff] %v1337
      %1370 = vst [vmem:[%s224 + $0x98] sm:$0xff] %v1338
      %1371 = vst [vmem:[%s224 + $0xa0] sm:$0xff] %v1339
      %1372 = vst [vmem:[%s224 + $0xa8] sm:$0xff] %v1340
      %1373 = vst [vmem:[%s224 + $0xb0] sm:$0xff] %v1341
      %1374 = vst [vmem:[%s224 + $0xb8] sm:$0xff] %v1342
      %1375 = vst [vmem:[%s224 + $0xc0] sm:$0xff] %v1343
      %1376 = vst [vmem:[%s224 + $0xc8] sm:$0xff] %v1344
      %1377 = vst [vmem:[%s224 + $0xd0] sm:$0xff] %v1345
      %1378 = vst [vmem:[%s224 + $0xd8] sm:$0xff] %v1346
      %1379 = vst [vmem:[%s224 + $0xe0] sm:$0xff] %v1347
      %1380 = vst [vmem:[%s224 + $0xe8] sm:$0xff] %v1348
      %1381 = vst [vmem:[%s224 + $0xf0] sm:$0xff] %v1349
      %1382 = vst [vmem:[%s224 + $0xf8] sm:$0xff] %v1350
      %p1383 = scmp.lt.s32.totalorder %s16, 1
      %s1384 = scalar_select %p1383, %s16, 1
      %s1385 = smul.addr %s1384, 32
      %s1386 = smul.addr %s1385, 8
      %s1387 = scalar_lea.vmem %s5, %s1386
      // Predicated region
      $region41: #{resnet_generator_forward.21} parent=39 // pred_check
        %p1388 = pneg %p144
      $region42: #{resnet_generator_forward.21} parent=39 // pred_check_branch
        %1390 = sbr.rel (%p1388) target = $region44
      $region43: #{resnet_generator_forward.21} parent=39 // pred_region
        _
      $region44: #{resnet_generator_forward.21} parent=39 // pred_fallthru
        _
    $region40: #{resnet_generator_forward.21} parent=5 // pred_fallthru
      _
    %p1391 = scmp.le.s32.totalorder 2, %s11
    // Predicated region
    $region45: #{resnet_generator_forward.21} parent=5 // pred_check
      %p1392 = pneg %p1391
    $region46: #{resnet_generator_forward.21} parent=5 // pred_check_branch
      %1394 = sbr.rel (%p1392) target = $region48
    $region47: #{resnet_generator_forward.21} parent=5 // pred_region
      %s1395 = ssub.s32 %s11, 2
      // Predicated region
      $region49: #{resnet_generator_forward.21} parent=47 // pred_check
        %p1396 = pneg %p150
      $region50: #{resnet_generator_forward.21} parent=47 // pred_check_branch
        %1398 = sbr.rel (%p1396) target = $region52
      $region51: #{resnet_generator_forward.21} parent=47 // pred_region
        %p1399 = scmp.lt.s32.totalorder %s17, 1
        %s1400 = scalar_select %p1399, %s17, 1
        %s1401 = smul.addr %s1400, 32
        %s1402 = smul.addr %s1401, 8
        %s1403 = scalar_lea.vmem %s5, %s1402
      $region52: #{resnet_generator_forward.21} parent=47 // pred_fallthru
        _
    $region48: #{resnet_generator_forward.21} parent=5 // pred_fallthru
      _
  $region6: #{resnet_generator_forward.21} parent=0 // loop_footer
    %s15 = sadd.s32 1, %s11
  $region7: #{resnet_generator_forward.21} parent=0 // loop_footer_branch
    %10 = sbr.rel target = $region3
  $region8: #{resnet_generator_forward.21} parent=0 // loop_exit
    _

// kernel: resnet_generator_forward.23
$region0: #{resnet_generator_forward.23}
  #allocation0 [shape = 'u32[]', space=smem, size = 0x4, offset = 0x4, fixed_abs, tag = 'smem constant byte address 0x4 - core index']
  #allocation1 [shape = 'u32[144,128]{1,0:T(1,128)}', space=vmem, size = 0x12000, scoped, tag = 'internal scratch']
  %s0 = inlined_call_operand.vmem [shape: bf16[2,256,512], index: 0, kind: input, shape index: {}]
  %s1 = inlined_call_operand.vmem [shape: bf16[512,128], index: 1, kind: input, shape index: {}]
  %s2 = inlined_call_operand.vmem [shape: f32[1,128], index: 2, kind: input, shape index: {}]
  %s3 = inlined_call_operand.vmem [shape: f32[2,256,128], index: 3, kind: output, shape index: {}]
  %s4 = sld [smem:[#allocation0]]
  $region45: #{resnet_generator_forward.23} parent=0
    _
  %s6 = ssub.s32 1, %s4
  %s7 = scalar_select 0, %s6, %s4
  loop: start=0, step=1, limit=4
  $region2: #{resnet_generator_forward.23} parent=0 // loop_pre_header
    _
  $region3: #{resnet_generator_forward.23} parent=0 // loop_header
    %s9 = sphi 0, %s13
    %p10 = scmp.ge.s32.totalorder %s9, 4
    %s19 = sphi 0, %s21
    %s22 = sphi 0, %s19
    %s23 = sphi 0, %s22
    %s39 = sphi 0, %s23
    %s43 = sphi 0, %s43
    %s45 = sphi 0, %s43
    %s46 = sphi 0, %s45
    %s60 = sphi 0, %s46
    %s64 = sphi 0, %s64
    %s66 = sphi 0, %s64
    %s67 = sphi 0, %s66
    %s81 = sphi 0, %s67
    %s87 = sphi 0, %s89
    %s90 = sphi 0, %s87
    %s91 = sphi 0, %s90
    %s107 = sphi 0, %s91
  $region4: #{resnet_generator_forward.23} parent=0 // loop_header_branch
    %12 = sbr.rel (%p10) target = $region8
  $region5: #{resnet_generator_forward.23} parent=0 // loop_body
    %s14 = ssub.s32 %s9, 1
    %s15 = ssub.s32 %s9, 2
    %s16 = sadd.s32 %s9, 1
    %s17 = ssub.s32 %s9, %s16
    %p18 = scmp.eq.s32.totalorder %s17, 0
    %s20 = sadd.s32 %s19, 1
    %s21 = scalar_select %p18, %s19, %s20
    %p24 = pneg %p18
    %p25 = scmp.eq.s32.totalorder %s9, 1
    %p26 = por %p24, %p25
    %p27 = scmp.ne.s32.totalorder %s19, %s22
    %p28 = scmp.eq.s32.totalorder %s9, 0
    %p29 = por %p27, %p28
    %p30 = scmp.ne.s32.totalorder %s19, %s22
    %p31 = scmp.eq.s32.totalorder %s14, 1
    %p32 = por %p30, %p31
    %p33 = scmp.ne.s32.totalorder %s22, %s23
    %p34 = scmp.eq.s32.totalorder %s14, 0
    %p35 = por %p33, %p34
    %p36 = scmp.ne.s32.totalorder %s22, %s23
    %p37 = scmp.eq.s32.totalorder %s15, 1
    %p38 = por %p36, %p37
    %p40 = scmp.ne.s32.totalorder %s23, %s39
    %p41 = scmp.eq.s32.totalorder %s15, 0
    %p42 = por %p40, %p41
    %s44 = sadd.s32 %s43, 1
    %p47 = scmp.eq.s32.totalorder %s9, 1
    %p48 = scmp.ne.s32.totalorder %s43, %s45
    %p49 = scmp.eq.s32.totalorder %s9, 0
    %p50 = por %p48, %p49
    %p51 = scmp.ne.s32.totalorder %s43, %s45
    %p52 = scmp.eq.s32.totalorder %s14, 1
    %p53 = por %p51, %p52
    %p54 = scmp.ne.s32.totalorder %s45, %s46
    %p55 = scmp.eq.s32.totalorder %s14, 0
    %p56 = por %p54, %p55
    %p57 = scmp.ne.s32.totalorder %s45, %s46
    %p58 = scmp.eq.s32.totalorder %s15, 1
    %p59 = por %p57, %p58
    %p61 = scmp.ne.s32.totalorder %s46, %s60
    %p62 = scmp.eq.s32.totalorder %s15, 0
    %p63 = por %p61, %p62
    %s65 = sadd.s32 %s64, 1
    %p68 = scmp.eq.s32.totalorder %s9, 1
    %p69 = scmp.ne.s32.totalorder %s64, %s66
    %p70 = scmp.eq.s32.totalorder %s9, 0
    %p71 = por %p69, %p70
    %p72 = scmp.ne.s32.totalorder %s64, %s66
    %p73 = scmp.eq.s32.totalorder %s14, 1
    %p74 = por %p72, %p73
    %p75 = scmp.ne.s32.totalorder %s66, %s67
    %p76 = scmp.eq.s32.totalorder %s14, 0
    %p77 = por %p75, %p76
    %p78 = scmp.ne.s32.totalorder %s66, %s67
    %p79 = scmp.eq.s32.totalorder %s15, 1
    %p80 = por %p78, %p79
    %p82 = scmp.ne.s32.totalorder %s67, %s81
    %p83 = scmp.eq.s32.totalorder %s15, 0
    %p84 = por %p82, %p83
    %s85 = ssub.s32 %s9, %s16
    %p86 = scmp.eq.s32.totalorder %s85, 0
    %s88 = sadd.s32 %s87, 1
    %s89 = scalar_select %p86, %s87, %s88
    %p92 = pneg %p86
    %p93 = scmp.eq.s32.totalorder %s9, 1
    %p94 = por %p92, %p93
    %p95 = scmp.ne.s32.totalorder %s87, %s90
    %p96 = scmp.eq.s32.totalorder %s9, 0
    %p97 = por %p95, %p96
    %p98 = scmp.ne.s32.totalorder %s87, %s90
    %p99 = scmp.eq.s32.totalorder %s14, 1
    %p100 = por %p98, %p99
    %p101 = scmp.ne.s32.totalorder %s90, %s91
    %p102 = scmp.eq.s32.totalorder %s14, 0
    %p103 = por %p101, %p102
    %p104 = scmp.ne.s32.totalorder %s90, %s91
    %p105 = scmp.eq.s32.totalorder %s15, 1
    %p106 = por %p104, %p105
    %p108 = scmp.ne.s32.totalorder %s91, %s107
    %p109 = scmp.eq.s32.totalorder %s15, 0
    %p110 = por %p108, %p109
    %p111 = scmp.le.s32.totalorder 1, %s9
    %p112 = scmp.lt.s32.totalorder %s9, 3
    %p113 = pnand %p111, %p112
    %p114 = pneg %p113
    // Predicated region
    $region9: #{resnet_generator_forward.23} parent=5 // pred_check
      _
    $region10: #{resnet_generator_forward.23} parent=5 // pred_check_branch
      %116 = sbr.rel (%p113) target = $region12
    $region11: #{resnet_generator_forward.23} parent=5 // pred_region
      %s117 = ssub.s32 %s9, 1
      // Predicated region
      $region13: #{resnet_generator_forward.23} parent=11 // pred_check
        %p118 = pneg %p56
      $region14: #{resnet_generator_forward.23} parent=11 // pred_check_branch
        %120 = sbr.rel (%p118) target = $region16
      $region15: #{resnet_generator_forward.23} parent=11 // pred_region
        _
      $region16: #{resnet_generator_forward.23} parent=11 // pred_fallthru
        _
      // Predicated region
      $region17: #{resnet_generator_forward.23} parent=11 // pred_check
        %p121 = pneg %p77
      $region18: #{resnet_generator_forward.23} parent=11 // pred_check_branch
        %123 = sbr.rel (%p121) target = $region20
      $region19: #{resnet_generator_forward.23} parent=11 // pred_region
        _
      $region20: #{resnet_generator_forward.23} parent=11 // pred_fallthru
        _
    $region12: #{resnet_generator_forward.23} parent=5 // pred_fallthru
      _
    %p124 = scmp.lt.s32.totalorder %s9, 2
    // Predicated region
    $region21: #{resnet_generator_forward.23} parent=5 // pred_check
      %p125 = pneg %p124
    $region22: #{resnet_generator_forward.23} parent=5 // pred_check_branch
      %127 = sbr.rel (%p125) target = $region24
    $region23: #{resnet_generator_forward.23} parent=5 // pred_region
      // Predicated region
      $region25: #{resnet_generator_forward.23} parent=23 // pred_check
        %p128 = pneg %p29
      $region26: #{resnet_generator_forward.23} parent=23 // pred_check_branch
        %130 = sbr.rel (%p128) target = $region28
      $region27: #{resnet_generator_forward.23} parent=23 // pred_region
        %p131 = scmp.lt.s32.totalorder %s9, 1
        %s132 = scalar_select %p131, %s9, 1
        %s133 = smul.addr %s132, 128
        %s134 = smul.addr %s133, 4
        %s135 = scalar_lea.vmem %s0, %s134
      $region28: #{resnet_generator_forward.23} parent=23 // pred_fallthru
        _
    $region24: #{resnet_generator_forward.23} parent=5 // pred_fallthru
      _
    %p136 = scmp.le.s32.totalorder 1, %s9
    %p137 = scmp.lt.s32.totalorder %s9, 3
    %p138 = pnand %p136, %p137
    %p139 = pneg %p138
    // Predicated region
    $region29: #{resnet_generator_forward.23} parent=5 // pred_check
      _
    $region30: #{resnet_generator_forward.23} parent=5 // pred_check_branch
      %141 = sbr.rel (%p138) target = $region32
    $region31: #{resnet_generator_forward.23} parent=5 // pred_region
      %s142 = ssub.s32 %s9, 1
      %p143 = scmp.lt.s32.totalorder %s14, 1
      %s144 = scalar_select %p143, %s14, 1
      %s145 = smul.addr %s144, 128
      %s146 = smul.addr %s145, 4
      %s147 = scalar_lea.vmem %s0, %s146
      %p148 = pneg %p35
      %p149 = pneg %p32
      %p150 = pneg %p56
      %p151 = pneg %p53
      %p152 = pneg %p77
      %p153 = pneg %p74
      %p154 = pneg %p103
      %p155 = pneg %p100
      %p156 = scmp.lt.s32.totalorder %s14, 1
      %s157 = scalar_select %p156, %s14, 1
      %s158 = smul.addr %s157, 32
      %s159 = smul.addr %s158, 8
      %s160 = scalar_lea.vmem %s3, %s159
      %p161 = scmp.lt.s32.totalorder %s14, 1
      %s162 = scalar_select %p161, %s14, 1
      %s163 = smul.addr %s162, 128
      %s164 = smul.addr %s163, 4
      %s165 = scalar_lea.vmem %s0, %s164
      %p166 = scmp.lt.s32.totalorder %s14, 1
      %s167 = scalar_select %p166, %s14, 1
      %s168 = smul.addr %s167, 32
      %s169 = smul.addr %s168, 8
      %s170 = scalar_lea.vmem %s3, %s169
      %v172 = vld [vmem:[%s165] sm:$0xff]
      %v173 = vld [vmem:[%s165 + $0x8] sm:$0xff]
      %v174 = vld [vmem:[%s165 + $0x10] sm:$0xff]
      %v175 = vld [vmem:[%s165 + $0x18] sm:$0xff]
      %v176 = vld [vmem:[%s165 + $0x20] sm:$0xff]
      %v177 = vld [vmem:[%s165 + $0x28] sm:$0xff]
      %v178 = vld [vmem:[%s165 + $0x30] sm:$0xff]
      %v179 = vld [vmem:[%s165 + $0x38] sm:$0xff]
      %v180 = vld [vmem:[%s165 + $0x40] sm:$0xff]
      %v181 = vld [vmem:[%s165 + $0x48] sm:$0xff]
      %v182 = vld [vmem:[%s165 + $0x50] sm:$0xff]
      %v183 = vld [vmem:[%s165 + $0x58] sm:$0xff]
      %v184 = vld [vmem:[%s165 + $0x60] sm:$0xff]
      %v185 = vld [vmem:[%s165 + $0x68] sm:$0xff]
      %v186 = vld [vmem:[%s165 + $0x70] sm:$0xff]
      %v187 = vld [vmem:[%s165 + $0x78] sm:$0xff]
      %v188 = vld [vmem:[%s165 + $0x80] sm:$0xff]
      %v189 = vld [vmem:[%s165 + $0x88] sm:$0xff]
      %v190 = vld [vmem:[%s165 + $0x90] sm:$0xff]
      %v191 = vld [vmem:[%s165 + $0x98] sm:$0xff]
      %v192 = vld [vmem:[%s165 + $0xa0] sm:$0xff]
      %v193 = vld [vmem:[%s165 + $0xa8] sm:$0xff]
      %v194 = vld [vmem:[%s165 + $0xb0] sm:$0xff]
      %v195 = vld [vmem:[%s165 + $0xb8] sm:$0xff]
      %v196 = vld [vmem:[%s165 + $0xc0] sm:$0xff]
      %v197 = vld [vmem:[%s165 + $0xc8] sm:$0xff]
      %v198 = vld [vmem:[%s165 + $0xd0] sm:$0xff]
      %v199 = vld [vmem:[%s165 + $0xd8] sm:$0xff]
      %v200 = vld [vmem:[%s165 + $0xe0] sm:$0xff]
      %v201 = vld [vmem:[%s165 + $0xe8] sm:$0xff]
      %v202 = vld [vmem:[%s165 + $0xf0] sm:$0xff]
      %v203 = vld [vmem:[%s165 + $0xf8] sm:$0xff]
      %v204 = vld [vmem:[%s165 + $0x100] sm:$0xff]
      %v205 = vld [vmem:[%s165 + $0x108] sm:$0xff]
      %v206 = vld [vmem:[%s165 + $0x110] sm:$0xff]
      %v207 = vld [vmem:[%s165 + $0x118] sm:$0xff]
      %v208 = vld [vmem:[%s165 + $0x120] sm:$0xff]
      %v209 = vld [vmem:[%s165 + $0x128] sm:$0xff]
      %v210 = vld [vmem:[%s165 + $0x130] sm:$0xff]
      %v211 = vld [vmem:[%s165 + $0x138] sm:$0xff]
      %v212 = vld [vmem:[%s165 + $0x140] sm:$0xff]
      %v213 = vld [vmem:[%s165 + $0x148] sm:$0xff]
      %v214 = vld [vmem:[%s165 + $0x150] sm:$0xff]
      %v215 = vld [vmem:[%s165 + $0x158] sm:$0xff]
      %v216 = vld [vmem:[%s165 + $0x160] sm:$0xff]
      %v217 = vld [vmem:[%s165 + $0x168] sm:$0xff]
      %v218 = vld [vmem:[%s165 + $0x170] sm:$0xff]
      %v219 = vld [vmem:[%s165 + $0x178] sm:$0xff]
      %v220 = vld [vmem:[%s165 + $0x180] sm:$0xff]
      %v221 = vld [vmem:[%s165 + $0x188] sm:$0xff]
      %v222 = vld [vmem:[%s165 + $0x190] sm:$0xff]
      %v223 = vld [vmem:[%s165 + $0x198] sm:$0xff]
      %v224 = vld [vmem:[%s165 + $0x1a0] sm:$0xff]
      %v225 = vld [vmem:[%s165 + $0x1a8] sm:$0xff]
      %v226 = vld [vmem:[%s165 + $0x1b0] sm:$0xff]
      %v227 = vld [vmem:[%s165 + $0x1b8] sm:$0xff]
      %v228 = vld [vmem:[%s165 + $0x1c0] sm:$0xff]
      %v229 = vld [vmem:[%s165 + $0x1c8] sm:$0xff]
      %v230 = vld [vmem:[%s165 + $0x1d0] sm:$0xff]
      %v231 = vld [vmem:[%s165 + $0x1d8] sm:$0xff]
      %v232 = vld [vmem:[%s165 + $0x1e0] sm:$0xff]
      %v233 = vld [vmem:[%s165 + $0x1e8] sm:$0xff]
      %v234 = vld [vmem:[%s165 + $0x1f0] sm:$0xff]
      %v235 = vld [vmem:[%s165 + $0x1f8] sm:$0xff]
      %v236 = vld [vmem:[%s1] sm:$0xf]
      %v237 = vld [vmem:[%s1 + $0x4] sm:$0xf]
      %v238 = vld [vmem:[%s1 + $0x8] sm:$0xf]
      %v239 = vld [vmem:[%s1 + $0xc] sm:$0xf]
      %v240 = vld [vmem:[%s1 + $0x10] sm:$0xf]
      %v241 = vld [vmem:[%s1 + $0x14] sm:$0xf]
      %v242 = vld [vmem:[%s1 + $0x18] sm:$0xf]
      %v243 = vld [vmem:[%s1 + $0x1c] sm:$0xf]
      %v244 = vld [vmem:[%s1 + $0x20] sm:$0xf]
      %v245 = vld [vmem:[%s1 + $0x24] sm:$0xf]
      %v246 = vld [vmem:[%s1 + $0x28] sm:$0xf]
      %v247 = vld [vmem:[%s1 + $0x2c] sm:$0xf]
      %v248 = vld [vmem:[%s1 + $0x30] sm:$0xf]
      %v249 = vld [vmem:[%s1 + $0x34] sm:$0xf]
      %v250 = vld [vmem:[%s1 + $0x38] sm:$0xf]
      %v251 = vld [vmem:[%s1 + $0x3c] sm:$0xf]
      %v252 = vld [vmem:[%s1 + $0x40] sm:$0xf]
      %v253 = vld [vmem:[%s1 + $0x44] sm:$0xf]
      %v254 = vld [vmem:[%s1 + $0x48] sm:$0xf]
      %v255 = vld [vmem:[%s1 + $0x4c] sm:$0xf]
      %v256 = vld [vmem:[%s1 + $0x50] sm:$0xf]
      %v257 = vld [vmem:[%s1 + $0x54] sm:$0xf]
      %v258 = vld [vmem:[%s1 + $0x58] sm:$0xf]
      %v259 = vld [vmem:[%s1 + $0x5c] sm:$0xf]
      %v260 = vld [vmem:[%s1 + $0x60] sm:$0xf]
      %v261 = vld [vmem:[%s1 + $0x64] sm:$0xf]
      %v262 = vld [vmem:[%s1 + $0x68] sm:$0xf]
      %v263 = vld [vmem:[%s1 + $0x6c] sm:$0xf]
      %v264 = vld [vmem:[%s1 + $0x70] sm:$0xf]
      %v265 = vld [vmem:[%s1 + $0x74] sm:$0xf]
      %v266 = vld [vmem:[%s1 + $0x78] sm:$0xf]
      %v267 = vld [vmem:[%s1 + $0x7c] sm:$0xf]
      %v268 = vld [vmem:[%s1 + $0x80] sm:$0xf]
      %v269 = vld [vmem:[%s1 + $0x84] sm:$0xf]
      %v270 = vld [vmem:[%s1 + $0x88] sm:$0xf]
      %v271 = vld [vmem:[%s1 + $0x8c] sm:$0xf]
      %v272 = vld [vmem:[%s1 + $0x90] sm:$0xf]
      %v273 = vld [vmem:[%s1 + $0x94] sm:$0xf]
      %v274 = vld [vmem:[%s1 + $0x98] sm:$0xf]
      %v275 = vld [vmem:[%s1 + $0x9c] sm:$0xf]
      %v276 = vld [vmem:[%s1 + $0xa0] sm:$0xf]
      %v277 = vld [vmem:[%s1 + $0xa4] sm:$0xf]
      %v278 = vld [vmem:[%s1 + $0xa8] sm:$0xf]
      %v279 = vld [vmem:[%s1 + $0xac] sm:$0xf]
      %v280 = vld [vmem:[%s1 + $0xb0] sm:$0xf]
      %v281 = vld [vmem:[%s1 + $0xb4] sm:$0xf]
      %v282 = vld [vmem:[%s1 + $0xb8] sm:$0xf]
      %v283 = vld [vmem:[%s1 + $0xbc] sm:$0xf]
      %v284 = vld [vmem:[%s1 + $0xc0] sm:$0xf]
      %v285 = vld [vmem:[%s1 + $0xc4] sm:$0xf]
      %v286 = vld [vmem:[%s1 + $0xc8] sm:$0xf]
      %v287 = vld [vmem:[%s1 + $0xcc] sm:$0xf]
      %v288 = vld [vmem:[%s1 + $0xd0] sm:$0xf]
      %v289 = vld [vmem:[%s1 + $0xd4] sm:$0xf]
      %v290 = vld [vmem:[%s1 + $0xd8] sm:$0xf]
      %v291 = vld [vmem:[%s1 + $0xdc] sm:$0xf]
      %v292 = vld [vmem:[%s1 + $0xe0] sm:$0xf]
      %v293 = vld [vmem:[%s1 + $0xe4] sm:$0xf]
      %v294 = vld [vmem:[%s1 + $0xe8] sm:$0xf]
      %v295 = vld [vmem:[%s1 + $0xec] sm:$0xf]
      %v296 = vld [vmem:[%s1 + $0xf0] sm:$0xf]
      %v297 = vld [vmem:[%s1 + $0xf4] sm:$0xf]
      %v298 = vld [vmem:[%s1 + $0xf8] sm:$0xf]
      %v299 = vld [vmem:[%s1 + $0xfc] sm:$0xf]
      %v300 = vld [vmem:[%s2] sm:$0x1]
      %v302 = vlaneseq
      %v303 = vshrl.u32 %v302, 7
      %v304 = vsub.s32 0, %v303
      %v305 = vrot.slane %v300, %v304
      %v371 = vunpack.c.l.b16 %v172
      %v372 = vunpack.c.h.b16 %v172
      %v373 = vunpack.c.l.b16 %v173
      %v374 = vunpack.c.h.b16 %v173
      %v375 = vunpack.c.l.b16 %v174
      %v376 = vunpack.c.h.b16 %v174
      %v377 = vunpack.c.l.b16 %v175
      %v378 = vunpack.c.h.b16 %v175
      %v379 = vunpack.c.l.b16 %v176
      %v380 = vunpack.c.h.b16 %v176
      %v381 = vunpack.c.l.b16 %v177
      %v382 = vunpack.c.h.b16 %v177
      %v383 = vunpack.c.l.b16 %v178
      %v384 = vunpack.c.h.b16 %v178
      %v385 = vunpack.c.l.b16 %v179
      %v386 = vunpack.c.h.b16 %v179
      %v387 = vunpack.c.l.b16 %v180
      %v388 = vunpack.c.h.b16 %v180
      %v389 = vunpack.c.l.b16 %v181
      %v390 = vunpack.c.h.b16 %v181
      %v391 = vunpack.c.l.b16 %v182
      %v392 = vunpack.c.h.b16 %v182
      %v393 = vunpack.c.l.b16 %v183
      %v394 = vunpack.c.h.b16 %v183
      %v395 = vunpack.c.l.b16 %v184
      %v396 = vunpack.c.h.b16 %v184
      %v397 = vunpack.c.l.b16 %v185
      %v398 = vunpack.c.h.b16 %v185
      %v399 = vunpack.c.l.b16 %v186
      %v400 = vunpack.c.h.b16 %v186
      %v401 = vunpack.c.l.b16 %v187
      %v402 = vunpack.c.h.b16 %v187
      %v403 = vunpack.c.l.b16 %v188
      %v404 = vunpack.c.h.b16 %v188
      %v405 = vunpack.c.l.b16 %v189
      %v406 = vunpack.c.h.b16 %v189
      %v407 = vunpack.c.l.b16 %v190
      %v408 = vunpack.c.h.b16 %v190
      %v409 = vunpack.c.l.b16 %v191
      %v410 = vunpack.c.h.b16 %v191
      %v411 = vunpack.c.l.b16 %v192
      %v412 = vunpack.c.h.b16 %v192
      %v413 = vunpack.c.l.b16 %v193
      %v414 = vunpack.c.h.b16 %v193
      %v415 = vunpack.c.l.b16 %v194
      %v416 = vunpack.c.h.b16 %v194
      %v417 = vunpack.c.l.b16 %v195
      %v418 = vunpack.c.h.b16 %v195
      %v419 = vunpack.c.l.b16 %v196
      %v420 = vunpack.c.h.b16 %v196
      %v421 = vunpack.c.l.b16 %v197
      %v422 = vunpack.c.h.b16 %v197
      %v423 = vunpack.c.l.b16 %v198
      %v424 = vunpack.c.h.b16 %v198
      %v425 = vunpack.c.l.b16 %v199
      %v426 = vunpack.c.h.b16 %v199
      %v427 = vunpack.c.l.b16 %v200
      %v428 = vunpack.c.h.b16 %v200
      %v429 = vunpack.c.l.b16 %v201
      %v430 = vunpack.c.h.b16 %v201
      %v431 = vunpack.c.l.b16 %v202
      %v432 = vunpack.c.h.b16 %v202
      %v433 = vunpack.c.l.b16 %v203
      %v434 = vunpack.c.h.b16 %v203
      %v435 = vunpack.c.l.b16 %v204
      %v436 = vunpack.c.h.b16 %v204
      %v437 = vunpack.c.l.b16 %v205
      %v438 = vunpack.c.h.b16 %v205
      %v439 = vunpack.c.l.b16 %v206
      %v440 = vunpack.c.h.b16 %v206
      %v441 = vunpack.c.l.b16 %v207
      %v442 = vunpack.c.h.b16 %v207
      %v443 = vunpack.c.l.b16 %v208
      %v444 = vunpack.c.h.b16 %v208
      %v445 = vunpack.c.l.b16 %v209
      %v446 = vunpack.c.h.b16 %v209
      %v447 = vunpack.c.l.b16 %v210
      %v448 = vunpack.c.h.b16 %v210
      %v449 = vunpack.c.l.b16 %v211
      %v450 = vunpack.c.h.b16 %v211
      %v451 = vunpack.c.l.b16 %v212
      %v452 = vunpack.c.h.b16 %v212
      %v453 = vunpack.c.l.b16 %v213
      %v454 = vunpack.c.h.b16 %v213
      %v455 = vunpack.c.l.b16 %v214
      %v456 = vunpack.c.h.b16 %v214
      %v457 = vunpack.c.l.b16 %v215
      %v458 = vunpack.c.h.b16 %v215
      %v459 = vunpack.c.l.b16 %v216
      %v460 = vunpack.c.h.b16 %v216
      %v461 = vunpack.c.l.b16 %v217
      %v462 = vunpack.c.h.b16 %v217
      %v463 = vunpack.c.l.b16 %v218
      %v464 = vunpack.c.h.b16 %v218
      %v465 = vunpack.c.l.b16 %v219
      %v466 = vunpack.c.h.b16 %v219
      %v467 = vunpack.c.l.b16 %v220
      %v468 = vunpack.c.h.b16 %v220
      %v469 = vunpack.c.l.b16 %v221
      %v470 = vunpack.c.h.b16 %v221
      %v471 = vunpack.c.l.b16 %v222
      %v472 = vunpack.c.h.b16 %v222
      %v473 = vunpack.c.l.b16 %v223
      %v474 = vunpack.c.h.b16 %v223
      %v475 = vunpack.c.l.b16 %v224
      %v476 = vunpack.c.h.b16 %v224
      %v477 = vunpack.c.l.b16 %v225
      %v478 = vunpack.c.h.b16 %v225
      %v479 = vunpack.c.l.b16 %v226
      %v480 = vunpack.c.h.b16 %v226
      %v481 = vunpack.c.l.b16 %v227
      %v482 = vunpack.c.h.b16 %v227
      %v483 = vunpack.c.l.b16 %v228
      %v484 = vunpack.c.h.b16 %v228
      %v485 = vunpack.c.l.b16 %v229
      %v486 = vunpack.c.h.b16 %v229
      %v487 = vunpack.c.l.b16 %v230
      %v488 = vunpack.c.h.b16 %v230
      %v489 = vunpack.c.l.b16 %v231
      %v490 = vunpack.c.h.b16 %v231
      %v491 = vunpack.c.l.b16 %v232
      %v492 = vunpack.c.h.b16 %v232
      %v493 = vunpack.c.l.b16 %v233
      %v494 = vunpack.c.h.b16 %v233
      %v495 = vunpack.c.l.b16 %v234
      %v496 = vunpack.c.h.b16 %v234
      %v497 = vunpack.c.l.b16 %v235
      %v498 = vunpack.c.h.b16 %v235
      %v499 = vpack.c.b16 %v375, %v371
      %v500 = vpack.c.b16 %v376, %v372
      %v501 = vpack.c.b16 %v377, %v373
      %v502 = vpack.c.b16 %v378, %v374
      %v503 = vpack.c.b16 %v383, %v379
      %v504 = vpack.c.b16 %v384, %v380
      %v505 = vpack.c.b16 %v385, %v381
      %v506 = vpack.c.b16 %v386, %v382
      %v507 = vpack.c.b16 %v391, %v387
      %v508 = vpack.c.b16 %v392, %v388
      %v509 = vpack.c.b16 %v393, %v389
      %v510 = vpack.c.b16 %v394, %v390
      %v511 = vpack.c.b16 %v399, %v395
      %v512 = vpack.c.b16 %v400, %v396
      %v513 = vpack.c.b16 %v401, %v397
      %v514 = vpack.c.b16 %v402, %v398
      %v515 = vpack.c.b16 %v407, %v403
      %v516 = vpack.c.b16 %v408, %v404
      %v517 = vpack.c.b16 %v409, %v405
      %v518 = vpack.c.b16 %v410, %v406
      %v519 = vpack.c.b16 %v415, %v411
      %v520 = vpack.c.b16 %v416, %v412
      %v521 = vpack.c.b16 %v417, %v413
      %v522 = vpack.c.b16 %v418, %v414
      %v523 = vpack.c.b16 %v423, %v419
      %v524 = vpack.c.b16 %v424, %v420
      %v525 = vpack.c.b16 %v425, %v421
      %v526 = vpack.c.b16 %v426, %v422
      %v527 = vpack.c.b16 %v431, %v427
      %v528 = vpack.c.b16 %v432, %v428
      %v529 = vpack.c.b16 %v433, %v429
      %v530 = vpack.c.b16 %v434, %v430
      %v531 = vpack.c.b16 %v439, %v435
      %v532 = vpack.c.b16 %v440, %v436
      %v533 = vpack.c.b16 %v441, %v437
      %v534 = vpack.c.b16 %v442, %v438
      %v535 = vpack.c.b16 %v447, %v443
      %v536 = vpack.c.b16 %v448, %v444
      %v537 = vpack.c.b16 %v449, %v445
      %v538 = vpack.c.b16 %v450, %v446
      %v539 = vpack.c.b16 %v455, %v451
      %v540 = vpack.c.b16 %v456, %v452
      %v541 = vpack.c.b16 %v457, %v453
      %v542 = vpack.c.b16 %v458, %v454
      %v543 = vpack.c.b16 %v463, %v459
      %v544 = vpack.c.b16 %v464, %v460
      %v545 = vpack.c.b16 %v465, %v461
      %v546 = vpack.c.b16 %v466, %v462
      %v547 = vpack.c.b16 %v471, %v467
      %v548 = vpack.c.b16 %v472, %v468
      %v549 = vpack.c.b16 %v473, %v469
      %v550 = vpack.c.b16 %v474, %v470
      %v551 = vpack.c.b16 %v479, %v475
      %v552 = vpack.c.b16 %v480, %v476
      %v553 = vpack.c.b16 %v481, %v477
      %v554 = vpack.c.b16 %v482, %v478
      %v555 = vpack.c.b16 %v487, %v483
      %v556 = vpack.c.b16 %v488, %v484
      %v557 = vpack.c.b16 %v489, %v485
      %v558 = vpack.c.b16 %v490, %v486
      %v559 = vpack.c.b16 %v495, %v491
      %v560 = vpack.c.b16 %v496, %v492
      %v561 = vpack.c.b16 %v497, %v493
      %v562 = vpack.c.b16 %v498, %v494
      %v691 = vunpack.c.l.b16 %v236
      %v692 = vunpack.c.l.b16 %v237
      %v693 = vunpack.c.l.b16 %v238
      %v694 = vunpack.c.l.b16 %v239
      %v695 = vunpack.c.l.b16 %v240
      %v696 = vunpack.c.l.b16 %v241
      %v697 = vunpack.c.l.b16 %v242
      %v698 = vunpack.c.l.b16 %v243
      %v699 = vunpack.c.l.b16 %v244
      %v700 = vunpack.c.l.b16 %v245
      %v701 = vunpack.c.l.b16 %v246
      %v702 = vunpack.c.l.b16 %v247
      %v703 = vunpack.c.l.b16 %v248
      %v704 = vunpack.c.l.b16 %v249
      %v705 = vunpack.c.l.b16 %v250
      %v706 = vunpack.c.l.b16 %v251
      %v707 = vunpack.c.l.b16 %v252
      %v708 = vunpack.c.l.b16 %v253
      %v709 = vunpack.c.l.b16 %v254
      %v710 = vunpack.c.l.b16 %v255
      %v711 = vunpack.c.l.b16 %v256
      %v712 = vunpack.c.l.b16 %v257
      %v713 = vunpack.c.l.b16 %v258
      %v714 = vunpack.c.l.b16 %v259
      %v715 = vunpack.c.l.b16 %v260
      %v716 = vunpack.c.l.b16 %v261
      %v717 = vunpack.c.l.b16 %v262
      %v718 = vunpack.c.l.b16 %v263
      %v719 = vunpack.c.l.b16 %v264
      %v720 = vunpack.c.l.b16 %v265
      %v721 = vunpack.c.l.b16 %v266
      %v722 = vunpack.c.l.b16 %v267
      %v723 = vunpack.c.l.b16 %v268
      %v724 = vunpack.c.l.b16 %v269
      %v725 = vunpack.c.l.b16 %v270
      %v726 = vunpack.c.l.b16 %v271
      %v727 = vunpack.c.l.b16 %v272
      %v728 = vunpack.c.l.b16 %v273
      %v729 = vunpack.c.l.b16 %v274
      %v730 = vunpack.c.l.b16 %v275
      %v731 = vunpack.c.l.b16 %v276
      %v732 = vunpack.c.l.b16 %v277
      %v733 = vunpack.c.l.b16 %v278
      %v734 = vunpack.c.l.b16 %v279
      %v735 = vunpack.c.l.b16 %v280
      %v736 = vunpack.c.l.b16 %v281
      %v737 = vunpack.c.l.b16 %v282
      %v738 = vunpack.c.l.b16 %v283
      %v739 = vunpack.c.l.b16 %v284
      %v740 = vunpack.c.l.b16 %v285
      %v741 = vunpack.c.l.b16 %v286
      %v742 = vunpack.c.l.b16 %v287
      %v743 = vunpack.c.l.b16 %v288
      %v744 = vunpack.c.l.b16 %v289
      %v745 = vunpack.c.l.b16 %v290
      %v746 = vunpack.c.l.b16 %v291
      %v747 = vunpack.c.l.b16 %v292
      %v748 = vunpack.c.l.b16 %v293
      %v749 = vunpack.c.l.b16 %v294
      %v750 = vunpack.c.l.b16 %v295
      %v751 = vunpack.c.l.b16 %v296
      %v752 = vunpack.c.l.b16 %v297
      %v753 = vunpack.c.l.b16 %v298
      %v754 = vunpack.c.l.b16 %v299
      %v755 = vpack.c.b16 %v692, %v691
      %v756 = vpack.c.b16 %v694, %v693
      %v757 = vpack.c.b16 %v696, %v695
      %v758 = vpack.c.b16 %v698, %v697
      %v759 = vpack.c.b16 %v700, %v699
      %v760 = vpack.c.b16 %v702, %v701
      %v761 = vpack.c.b16 %v704, %v703
      %v762 = vpack.c.b16 %v706, %v705
      %v763 = vpack.c.b16 %v708, %v707
      %v764 = vpack.c.b16 %v710, %v709
      %v765 = vpack.c.b16 %v712, %v711
      %v766 = vpack.c.b16 %v714, %v713
      %v767 = vpack.c.b16 %v716, %v715
      %v768 = vpack.c.b16 %v718, %v717
      %v769 = vpack.c.b16 %v720, %v719
      %v770 = vpack.c.b16 %v722, %v721
      %v771 = vpack.c.b16 %v724, %v723
      %v772 = vpack.c.b16 %v726, %v725
      %v773 = vpack.c.b16 %v728, %v727
      %v774 = vpack.c.b16 %v730, %v729
      %v775 = vpack.c.b16 %v732, %v731
      %v776 = vpack.c.b16 %v734, %v733
      %v777 = vpack.c.b16 %v736, %v735
      %v778 = vpack.c.b16 %v738, %v737
      %v779 = vpack.c.b16 %v740, %v739
      %v780 = vpack.c.b16 %v742, %v741
      %v781 = vpack.c.b16 %v744, %v743
      %v782 = vpack.c.b16 %v746, %v745
      %v783 = vpack.c.b16 %v748, %v747
      %v784 = vpack.c.b16 %v750, %v749
      %v785 = vpack.c.b16 %v752, %v751
      %v786 = vpack.c.b16 %v754, %v753
      %819 = vmatprep.subr.bf16.mxu0 0
      %820 = vmatpush1.bf16.msra.mxu0 %v755
      %821 = vmatprep.subr.bf16.mxu0 0
      %822 = vmatpush1.bf16.msra.mxu0 %v756
      %823 = vmatprep.subr.bf16.mxu0 0
      %824 = vmatpush1.bf16.msra.mxu0 %v757
      %825 = vmatprep.subr.bf16.mxu0 0
      %826 = vmatpush1.bf16.msra.mxu0 %v758
      %827 = vmatprep.subr.bf16.mxu0 0
      %828 = vmatpush1.bf16.msra.mxu0 %v759
      %829 = vmatprep.subr.bf16.mxu0 0
      %830 = vmatpush1.bf16.msra.mxu0 %v760
      %831 = vmatprep.subr.bf16.mxu0 0
      %832 = vmatpush1.bf16.msra.mxu0 %v761
      %833 = vmatprep.subr.bf16.mxu0 0
      %834 = vmatpush1.bf16.msra.mxu0 %v762
      %835 = vmatprep.subr.bf16.mxu0 0
      %836 = vmatpush1.bf16.msra.mxu0 %v763
      %837 = vmatprep.subr.bf16.mxu0 0
      %838 = vmatpush1.bf16.msra.mxu0 %v764
      %839 = vmatprep.subr.bf16.mxu0 0
      %840 = vmatpush1.bf16.msra.mxu0 %v765
      %841 = vmatprep.subr.bf16.mxu0 0
      %842 = vmatpush1.bf16.msra.mxu0 %v766
      %843 = vmatprep.subr.bf16.mxu0 0
      %844 = vmatpush1.bf16.msra.mxu0 %v767
      %845 = vmatprep.subr.bf16.mxu0 0
      %846 = vmatpush1.bf16.msra.mxu0 %v768
      %847 = vmatprep.subr.bf16.mxu0 0
      %848 = vmatpush1.bf16.msra.mxu0 %v769
      %849 = vmatprep.subr.bf16.mxu0 0
      %850 = vmatpush1.bf16.msra.mxu0 %v770
      %851 = vmatprep.mubr.bf16.mxu0 %v500
      %852 = vmatmul.mubr.bf16.gmra.mrb[0].mxu0 %v499
      %v853 = vpop.f32.mrb[0].mxu0
      %v854 = vadd.f32 %v305, %v853
      %v855 = vpop.f32.mrb[0].mxu0
      %v856 = vpop.f32.mrb[0].mxu0
      %v857 = vadd.f32 %v305, %v856
      %v858 = vpop.f32.mrb[0].mxu0
      %859 = vmatprep.mubr.bf16.mxu0 %v504
      %860 = vmatmul.mubr.bf16.gmra.mrb[0].mxu0 %v503
      %v861 = vpop.f32.mrb[0].mxu0
      %v862 = vadd.f32 %v305, %v861
      %v863 = vpop.f32.mrb[0].mxu0
      %v864 = vpop.f32.mrb[0].mxu0
      %v865 = vadd.f32 %v305, %v864
      %v866 = vpop.f32.mrb[0].mxu0
      %867 = vmatprep.mubr.bf16.mxu0 %v508
      %868 = vmatmul.mubr.bf16.gmra.mrb[0].mxu0 %v507
      %v869 = vpop.f32.mrb[0].mxu0
      %v870 = vadd.f32 %v305, %v869
      %v871 = vpop.f32.mrb[0].mxu0
      %v872 = vpop.f32.mrb[0].mxu0
      %v873 = vadd.f32 %v305, %v872
      %v874 = vpop.f32.mrb[0].mxu0
      %875 = vmatprep.mubr.bf16.mxu0 %v512
      %876 = vmatmul.mubr.bf16.gmra.mrb[0].mxu0 %v511
      %v877 = vpop.f32.mrb[0].mxu0
      %v878 = vadd.f32 %v305, %v877
      %v879 = vpop.f32.mrb[0].mxu0
      %v880 = vpop.f32.mrb[0].mxu0
      %v881 = vadd.f32 %v305, %v880
      %v882 = vpop.f32.mrb[0].mxu0
      %883 = vmatprep.mubr.bf16.mxu0 %v516
      %884 = vmatmul.mubr.bf16.gmra.mrb[0].mxu0 %v515
      %v885 = vpop.f32.mrb[0].mxu0
      %v886 = vadd.f32 %v305, %v885
      %v887 = vpop.f32.mrb[0].mxu0
      %v888 = vpop.f32.mrb[0].mxu0
      %v889 = vadd.f32 %v305, %v888
      %v890 = vpop.f32.mrb[0].mxu0
      %891 = vmatprep.mubr.bf16.mxu0 %v520
      %892 = vmatmul.mubr.bf16.gmra.mrb[0].mxu0 %v519
      %v893 = vpop.f32.mrb[0].mxu0
      %v894 = vadd.f32 %v305, %v893
      %v895 = vpop.f32.mrb[0].mxu0
      %v896 = vpop.f32.mrb[0].mxu0
      %v897 = vadd.f32 %v305, %v896
      %v898 = vpop.f32.mrb[0].mxu0
      %899 = vmatprep.mubr.bf16.mxu0 %v524
      %900 = vmatmul.mubr.bf16.gmra.mrb[0].mxu0 %v523
      %v901 = vpop.f32.mrb[0].mxu0
      %v902 = vadd.f32 %v305, %v901
      %v903 = vpop.f32.mrb[0].mxu0
      %v904 = vpop.f32.mrb[0].mxu0
      %v905 = vadd.f32 %v305, %v904
      %v906 = vpop.f32.mrb[0].mxu0
      %907 = vmatprep.mubr.bf16.mxu0 %v528
      %908 = vmatmul.mubr.bf16.gmra.mrb[0].mxu0 %v527
      %v909 = vpop.f32.mrb[0].mxu0
      %v910 = vadd.f32 %v305, %v909
      %v911 = vpop.f32.mrb[0].mxu0
      %v912 = vpop.f32.mrb[0].mxu0
      %v913 = vadd.f32 %v305, %v912
      %v914 = vpop.f32.mrb[0].mxu0
      %915 = vmatprep.mubr.bf16.mxu0 %v532
      %916 = vmatmul.mubr.bf16.gmra.mrb[0].mxu0 %v531
      %v917 = vpop.f32.mrb[0].mxu0
      %v918 = vadd.f32 %v305, %v917
      %v919 = vpop.f32.mrb[0].mxu0
      %v920 = vpop.f32.mrb[0].mxu0
      %v921 = vadd.f32 %v305, %v920
      %v922 = vpop.f32.mrb[0].mxu0
      %923 = vmatprep.mubr.bf16.mxu0 %v536
      %924 = vmatmul.mubr.bf16.gmra.mrb[0].mxu0 %v535
      %v925 = vpop.f32.mrb[0].mxu0
      %v926 = vadd.f32 %v305, %v925
      %v927 = vpop.f32.mrb[0].mxu0
      %v928 = vpop.f32.mrb[0].mxu0
      %v929 = vadd.f32 %v305, %v928
      %v930 = vpop.f32.mrb[0].mxu0
      %931 = vmatprep.mubr.bf16.mxu0 %v540
      %932 = vmatmul.mubr.bf16.gmra.mrb[0].mxu0 %v539
      %v933 = vpop.f32.mrb[0].mxu0
      %v934 = vadd.f32 %v305, %v933
      %v935 = vpop.f32.mrb[0].mxu0
      %v936 = vpop.f32.mrb[0].mxu0
      %v937 = vadd.f32 %v305, %v936
      %v938 = vpop.f32.mrb[0].mxu0
      %939 = vmatprep.mubr.bf16.mxu0 %v544
      %940 = vmatmul.mubr.bf16.gmra.mrb[0].mxu0 %v543
      %v941 = vpop.f32.mrb[0].mxu0
      %v942 = vadd.f32 %v305, %v941
      %v943 = vpop.f32.mrb[0].mxu0
      %v944 = vpop.f32.mrb[0].mxu0
      %v945 = vadd.f32 %v305, %v944
      %v946 = vpop.f32.mrb[0].mxu0
      %947 = vmatprep.mubr.bf16.mxu0 %v548
      %948 = vmatmul.mubr.bf16.gmra.mrb[0].mxu0 %v547
      %v949 = vpop.f32.mrb[0].mxu0
      %v950 = vadd.f32 %v305, %v949
      %v951 = vpop.f32.mrb[0].mxu0
      %v952 = vpop.f32.mrb[0].mxu0
      %v953 = vadd.f32 %v305, %v952
      %v954 = vpop.f32.mrb[0].mxu0
      %955 = vmatprep.mubr.bf16.mxu0 %v552
      %956 = vmatmul.mubr.bf16.gmra.mrb[0].mxu0 %v551
      %v957 = vpop.f32.mrb[0].mxu0
      %v958 = vadd.f32 %v305, %v957
      %v959 = vpop.f32.mrb[0].mxu0
      %v960 = vpop.f32.mrb[0].mxu0
      %v961 = vadd.f32 %v305, %v960
      %v962 = vpop.f32.mrb[0].mxu0
      %963 = vmatprep.mubr.bf16.mxu0 %v556
      %964 = vmatmul.mubr.bf16.gmra.mrb[0].mxu0 %v555
      %v965 = vpop.f32.mrb[0].mxu0
      %v966 = vadd.f32 %v305, %v965
      %v967 = vpop.f32.mrb[0].mxu0
      %v968 = vpop.f32.mrb[0].mxu0
      %v969 = vadd.f32 %v305, %v968
      %v970 = vpop.f32.mrb[0].mxu0
      %971 = vmatprep.mubr.bf16.mxu0 %v560
      %972 = vmatmul.mubr.bf16.gmra.mrb[0].mxu0 %v559
      %v973 = vpop.f32.mrb[0].mxu0
      %v974 = vadd.f32 %v305, %v973
      %v975 = vpop.f32.mrb[0].mxu0
      %v976 = vpop.f32.mrb[0].mxu0
      %v977 = vadd.f32 %v305, %v976
      %v978 = vpop.f32.mrb[0].mxu0
      %979 = vdwg.mxu0
      %980 = vmatprep.subr.bf16.mxu0 0
      %981 = vmatpush1.bf16.msra.mxu0 %v771
      %982 = vmatprep.subr.bf16.mxu0 0
      %983 = vmatpush1.bf16.msra.mxu0 %v772
      %984 = vmatprep.subr.bf16.mxu0 0
      %985 = vmatpush1.bf16.msra.mxu0 %v773
      %986 = vmatprep.subr.bf16.mxu0 0
      %987 = vmatpush1.bf16.msra.mxu0 %v774
      %988 = vmatprep.subr.bf16.mxu0 0
      %989 = vmatpush1.bf16.msra.mxu0 %v775
      %990 = vmatprep.subr.bf16.mxu0 0
      %991 = vmatpush1.bf16.msra.mxu0 %v776
      %992 = vmatprep.subr.bf16.mxu0 0
      %993 = vmatpush1.bf16.msra.mxu0 %v777
      %994 = vmatprep.subr.bf16.mxu0 0
      %995 = vmatpush1.bf16.msra.mxu0 %v778
      %996 = vmatprep.subr.bf16.mxu0 0
      %997 = vmatpush1.bf16.msra.mxu0 %v779
      %998 = vmatprep.subr.bf16.mxu0 0
      %999 = vmatpush1.bf16.msra.mxu0 %v780
      %1000 = vmatprep.subr.bf16.mxu0 0
      %1001 = vmatpush1.bf16.msra.mxu0 %v781
      %1002 = vmatprep.subr.bf16.mxu0 0
      %1003 = vmatpush1.bf16.msra.mxu0 %v782
      %1004 = vmatprep.subr.bf16.mxu0 0
      %1005 = vmatpush1.bf16.msra.mxu0 %v783
      %1006 = vmatprep.subr.bf16.mxu0 0
      %1007 = vmatpush1.bf16.msra.mxu0 %v784
      %1008 = vmatprep.subr.bf16.mxu0 0
      %1009 = vmatpush1.bf16.msra.mxu0 %v785
      %1010 = vmatprep.subr.bf16.mxu0 0
      %1011 = vmatpush1.bf16.msra.mxu0 %v786
      %1012 = vmatprep.mubr.bf16.mxu0 %v502
      %1013 = vmatmul.mubr.bf16.gmra.mrb[0].mxu0 %v501
      %v1014 = vpop.f32.mrb[0].mxu0
      %v1015 = vadd.f32 %v854, %v1014
      %v1016 = vpop.f32.mrb[0].mxu0
      %v1017 = vpop.f32.mrb[0].mxu0
      %v1018 = vadd.f32 %v857, %v1017
      %v1019 = vpop.f32.mrb[0].mxu0
      %1020 = vmatprep.mubr.bf16.mxu0 %v506
      %1021 = vmatmul.mubr.bf16.gmra.mrb[0].mxu0 %v505
      %v1022 = vpop.f32.mrb[0].mxu0
      %v1023 = vadd.f32 %v862, %v1022
      %v1024 = vpop.f32.mrb[0].mxu0
      %v1025 = vpop.f32.mrb[0].mxu0
      %v1026 = vadd.f32 %v865, %v1025
      %v1027 = vpop.f32.mrb[0].mxu0
      %1028 = vmatprep.mubr.bf16.mxu0 %v510
      %1029 = vmatmul.mubr.bf16.gmra.mrb[0].mxu0 %v509
      %v1030 = vpop.f32.mrb[0].mxu0
      %v1031 = vadd.f32 %v870, %v1030
      %v1032 = vpop.f32.mrb[0].mxu0
      %v1033 = vpop.f32.mrb[0].mxu0
      %v1034 = vadd.f32 %v873, %v1033
      %v1035 = vpop.f32.mrb[0].mxu0
      %1036 = vmatprep.mubr.bf16.mxu0 %v514
      %1037 = vmatmul.mubr.bf16.gmra.mrb[0].mxu0 %v513
      %v1038 = vpop.f32.mrb[0].mxu0
      %v1039 = vadd.f32 %v878, %v1038
      %v1040 = vpop.f32.mrb[0].mxu0
      %v1041 = vpop.f32.mrb[0].mxu0
      %v1042 = vadd.f32 %v881, %v1041
      %v1043 = vpop.f32.mrb[0].mxu0
      %1044 = vmatprep.mubr.bf16.mxu0 %v518
      %1045 = vmatmul.mubr.bf16.gmra.mrb[0].mxu0 %v517
      %v1046 = vpop.f32.mrb[0].mxu0
      %v1047 = vadd.f32 %v886, %v1046
      %v1048 = vpop.f32.mrb[0].mxu0
      %v1049 = vpop.f32.mrb[0].mxu0
      %v1050 = vadd.f32 %v889, %v1049
      %v1051 = vpop.f32.mrb[0].mxu0
      %1052 = vmatprep.mubr.bf16.mxu0 %v522
      %1053 = vmatmul.mubr.bf16.gmra.mrb[0].mxu0 %v521
      %v1054 = vpop.f32.mrb[0].mxu0
      %v1055 = vadd.f32 %v894, %v1054
      %v1056 = vpop.f32.mrb[0].mxu0
      %v1057 = vpop.f32.mrb[0].mxu0
      %v1058 = vadd.f32 %v897, %v1057
      %v1059 = vpop.f32.mrb[0].mxu0
      %1060 = vmatprep.mubr.bf16.mxu0 %v526
      %1061 = vmatmul.mubr.bf16.gmra.mrb[0].mxu0 %v525
      %v1062 = vpop.f32.mrb[0].mxu0
      %v1063 = vadd.f32 %v902, %v1062
      %v1064 = vpop.f32.mrb[0].mxu0
      %v1065 = vpop.f32.mrb[0].mxu0
      %v1066 = vadd.f32 %v905, %v1065
      %v1067 = vpop.f32.mrb[0].mxu0
      %1068 = vmatprep.mubr.bf16.mxu0 %v530
      %1069 = vmatmul.mubr.bf16.gmra.mrb[0].mxu0 %v529
      %v1070 = vpop.f32.mrb[0].mxu0
      %v1071 = vadd.f32 %v910, %v1070
      %v1072 = vpop.f32.mrb[0].mxu0
      %v1073 = vpop.f32.mrb[0].mxu0
      %v1074 = vadd.f32 %v913, %v1073
      %v1075 = vpop.f32.mrb[0].mxu0
      %1076 = vmatprep.mubr.bf16.mxu0 %v534
      %1077 = vmatmul.mubr.bf16.gmra.mrb[0].mxu0 %v533
      %v1078 = vpop.f32.mrb[0].mxu0
      %v1079 = vadd.f32 %v918, %v1078
      %v1080 = vpop.f32.mrb[0].mxu0
      %v1081 = vpop.f32.mrb[0].mxu0
      %v1082 = vadd.f32 %v921, %v1081
      %v1083 = vpop.f32.mrb[0].mxu0
      %1084 = vmatprep.mubr.bf16.mxu0 %v538
      %1085 = vmatmul.mubr.bf16.gmra.mrb[0].mxu0 %v537
      %v1086 = vpop.f32.mrb[0].mxu0
      %v1087 = vadd.f32 %v926, %v1086
      %v1088 = vpop.f32.mrb[0].mxu0
      %v1089 = vpop.f32.mrb[0].mxu0
      %v1090 = vadd.f32 %v929, %v1089
      %v1091 = vpop.f32.mrb[0].mxu0
      %1092 = vmatprep.mubr.bf16.mxu0 %v542
      %1093 = vmatmul.mubr.bf16.gmra.mrb[0].mxu0 %v541
      %v1094 = vpop.f32.mrb[0].mxu0
      %v1095 = vadd.f32 %v934, %v1094
      %v1096 = vpop.f32.mrb[0].mxu0
      %v1097 = vpop.f32.mrb[0].mxu0
      %v1098 = vadd.f32 %v937, %v1097
      %v1099 = vpop.f32.mrb[0].mxu0
      %1100 = vmatprep.mubr.bf16.mxu0 %v546
      %1101 = vmatmul.mubr.bf16.gmra.mrb[0].mxu0 %v545
      %v1102 = vpop.f32.mrb[0].mxu0
      %v1103 = vadd.f32 %v942, %v1102
      %v1104 = vpop.f32.mrb[0].mxu0
      %v1105 = vpop.f32.mrb[0].mxu0
      %v1106 = vadd.f32 %v945, %v1105
      %v1107 = vpop.f32.mrb[0].mxu0
      %1108 = vmatprep.mubr.bf16.mxu0 %v550
      %1109 = vmatmul.mubr.bf16.gmra.mrb[0].mxu0 %v549
      %v1110 = vpop.f32.mrb[0].mxu0
      %v1111 = vadd.f32 %v950, %v1110
      %v1112 = vpop.f32.mrb[0].mxu0
      %v1113 = vpop.f32.mrb[0].mxu0
      %v1114 = vadd.f32 %v953, %v1113
      %v1115 = vpop.f32.mrb[0].mxu0
      %1116 = vmatprep.mubr.bf16.mxu0 %v554
      %1117 = vmatmul.mubr.bf16.gmra.mrb[0].mxu0 %v553
      %v1118 = vpop.f32.mrb[0].mxu0
      %v1119 = vadd.f32 %v958, %v1118
      %v1120 = vpop.f32.mrb[0].mxu0
      %v1121 = vpop.f32.mrb[0].mxu0
      %v1122 = vadd.f32 %v961, %v1121
      %v1123 = vpop.f32.mrb[0].mxu0
      %1124 = vmatprep.mubr.bf16.mxu0 %v558
      %1125 = vmatmul.mubr.bf16.gmra.mrb[0].mxu0 %v557
      %v1126 = vpop.f32.mrb[0].mxu0
      %v1127 = vadd.f32 %v966, %v1126
      %v1128 = vpop.f32.mrb[0].mxu0
      %v1129 = vpop.f32.mrb[0].mxu0
      %v1130 = vadd.f32 %v969, %v1129
      %v1131 = vpop.f32.mrb[0].mxu0
      %1132 = vmatprep.mubr.bf16.mxu0 %v562
      %1133 = vmatmul.mubr.bf16.gmra.mrb[0].mxu0 %v561
      %v1134 = vpop.f32.mrb[0].mxu0
      %v1135 = vadd.f32 %v974, %v1134
      %v1136 = vpop.f32.mrb[0].mxu0
      %v1137 = vpop.f32.mrb[0].mxu0
      %v1138 = vadd.f32 %v977, %v1137
      %v1139 = vpop.f32.mrb[0].mxu0
      %1140 = vdwg.mxu0
      %v1141 = vtanh.pop %v1015
      %v1142 = vtanh.pop %v1018
      %v1143 = vtanh.pop %v1023
      %v1144 = vtanh.pop %v1026
      %v1145 = vtanh.pop %v1031
      %v1146 = vtanh.pop %v1034
      %v1147 = vtanh.pop %v1039
      %v1148 = vtanh.pop %v1042
      %v1149 = vtanh.pop %v1047
      %v1150 = vtanh.pop %v1050
      %v1151 = vtanh.pop %v1055
      %v1152 = vtanh.pop %v1058
      %v1153 = vtanh.pop %v1063
      %v1154 = vtanh.pop %v1066
      %v1155 = vtanh.pop %v1071
      %v1156 = vtanh.pop %v1074
      %v1157 = vtanh.pop %v1079
      %v1158 = vtanh.pop %v1082
      %v1159 = vtanh.pop %v1087
      %v1160 = vtanh.pop %v1090
      %v1161 = vtanh.pop %v1095
      %v1162 = vtanh.pop %v1098
      %v1163 = vtanh.pop %v1103
      %v1164 = vtanh.pop %v1106
      %v1165 = vtanh.pop %v1111
      %v1166 = vtanh.pop %v1114
      %v1167 = vtanh.pop %v1119
      %v1168 = vtanh.pop %v1122
      %v1169 = vtanh.pop %v1127
      %v1170 = vtanh.pop %v1130
      %v1171 = vtanh.pop %v1135
      %v1172 = vtanh.pop %v1138
      %1173 = vst [vmem:[%s170] sm:$0xff] %v1141
      %1174 = vst [vmem:[%s170 + $0x8] sm:$0xff] %v1142
      %1175 = vst [vmem:[%s170 + $0x10] sm:$0xff] %v1143
      %1176 = vst [vmem:[%s170 + $0x18] sm:$0xff] %v1144
      %1177 = vst [vmem:[%s170 + $0x20] sm:$0xff] %v1145
      %1178 = vst [vmem:[%s170 + $0x28] sm:$0xff] %v1146
      %1179 = vst [vmem:[%s170 + $0x30] sm:$0xff] %v1147
      %1180 = vst [vmem:[%s170 + $0x38] sm:$0xff] %v1148
      %1181 = vst [vmem:[%s170 + $0x40] sm:$0xff] %v1149
      %1182 = vst [vmem:[%s170 + $0x48] sm:$0xff] %v1150
      %1183 = vst [vmem:[%s170 + $0x50] sm:$0xff] %v1151
      %1184 = vst [vmem:[%s170 + $0x58] sm:$0xff] %v1152
      %1185 = vst [vmem:[%s170 + $0x60] sm:$0xff] %v1153
      %1186 = vst [vmem:[%s170 + $0x68] sm:$0xff] %v1154
      %1187 = vst [vmem:[%s170 + $0x70] sm:$0xff] %v1155
      %1188 = vst [vmem:[%s170 + $0x78] sm:$0xff] %v1156
      %1189 = vst [vmem:[%s170 + $0x80] sm:$0xff] %v1157
      %1190 = vst [vmem:[%s170 + $0x88] sm:$0xff] %v1158
      %1191 = vst [vmem:[%s170 + $0x90] sm:$0xff] %v1159
      %1192 = vst [vmem:[%s170 + $0x98] sm:$0xff] %v1160
      %1193 = vst [vmem:[%s170 + $0xa0] sm:$0xff] %v1161
      %1194 = vst [vmem:[%s170 + $0xa8] sm:$0xff] %v1162
      %1195 = vst [vmem:[%s170 + $0xb0] sm:$0xff] %v1163
      %1196 = vst [vmem:[%s170 + $0xb8] sm:$0xff] %v1164
      %1197 = vst [vmem:[%s170 + $0xc0] sm:$0xff] %v1165
      %1198 = vst [vmem:[%s170 + $0xc8] sm:$0xff] %v1166
      %1199 = vst [vmem:[%s170 + $0xd0] sm:$0xff] %v1167
      %1200 = vst [vmem:[%s170 + $0xd8] sm:$0xff] %v1168
      %1201 = vst [vmem:[%s170 + $0xe0] sm:$0xff] %v1169
      %1202 = vst [vmem:[%s170 + $0xe8] sm:$0xff] %v1170
      %1203 = vst [vmem:[%s170 + $0xf0] sm:$0xff] %v1171
      %1204 = vst [vmem:[%s170 + $0xf8] sm:$0xff] %v1172
      %p1205 = scmp.lt.s32.totalorder %s14, 1
      %s1206 = scalar_select %p1205, %s14, 1
      %s1207 = smul.addr %s1206, 32
      %s1208 = smul.addr %s1207, 8
      %s1209 = scalar_lea.vmem %s3, %s1208
      // Predicated region
      $region33: #{resnet_generator_forward.23} parent=31 // pred_check
        %p1210 = pneg %p100
      $region34: #{resnet_generator_forward.23} parent=31 // pred_check_branch
        %1212 = sbr.rel (%p1210) target = $region36
      $region35: #{resnet_generator_forward.23} parent=31 // pred_region
        _
      $region36: #{resnet_generator_forward.23} parent=31 // pred_fallthru
        _
    $region32: #{resnet_generator_forward.23} parent=5 // pred_fallthru
      _
    %p1213 = scmp.le.s32.totalorder 2, %s9
    // Predicated region
    $region37: #{resnet_generator_forward.23} parent=5 // pred_check
      %p1214 = pneg %p1213
    $region38: #{resnet_generator_forward.23} parent=5 // pred_check_branch
      %1216 = sbr.rel (%p1214) target = $region40
    $region39: #{resnet_generator_forward.23} parent=5 // pred_region
      %s1217 = ssub.s32 %s9, 2
      // Predicated region
      $region41: #{resnet_generator_forward.23} parent=39 // pred_check
        %p1218 = pneg %p106
      $region42: #{resnet_generator_forward.23} parent=39 // pred_check_branch
        %1220 = sbr.rel (%p1218) target = $region44
      $region43: #{resnet_generator_forward.23} parent=39 // pred_region
        %p1221 = scmp.lt.s32.totalorder %s15, 1
        %s1222 = scalar_select %p1221, %s15, 1
        %s1223 = smul.addr %s1222, 32
        %s1224 = smul.addr %s1223, 8
        %s1225 = scalar_lea.vmem %s3, %s1224
      $region44: #{resnet_generator_forward.23} parent=39 // pred_fallthru
        _
    $region40: #{resnet_generator_forward.23} parent=5 // pred_fallthru
      _
  $region6: #{resnet_generator_forward.23} parent=0 // loop_footer
    %s13 = sadd.s32 1, %s9
  $region7: #{resnet_generator_forward.23} parent=0 // loop_footer_branch
    %8 = sbr.rel target = $region3
  $region8: #{resnet_generator_forward.23} parent=0 // loop_exit
    _

</llo_original>
